<compile_context>
chip_gen: v6e
topology: v6e:2x2x1
jax: 0.10.0
libtpu: 0.0.40
codegen_flags: <defaults>
</compile_context>

<pallas_src>
import functools

import jax
import jax.numpy as jnp
from jax.experimental import pallas as pl
from jax.experimental.pallas import tpu as pltpu


# -----------------------------------------------------------------------------
# In-kernel helpers
# -----------------------------------------------------------------------------
def _fill_padded(pad_ref, interior):
    """Zero a (h+2, w+2, C) VMEM scratch and write `interior` at offset (1,1)."""
    pad_ref[...] = jnp.zeros(pad_ref.shape, pad_ref.dtype)
    h, w, _ = interior.shape
    pad_ref[1:1 + h, 1:1 + w, :] = interior.astype(pad_ref.dtype)


def _conv3x3(pad_ref, col_ref, w_ref, b_ref, h, w):
    """3x3 same conv via im2col into VMEM scratch + one deep-K MXU matmul.

    pad_ref : (h+2, w+2, Cin)  bf16, zero-padded input
    col_ref : (h*w, 9*Cin)     bf16 im2col scratch
    w_ref   : (9*Cin, Cout)    bf16 (row order = kh, kw, cin)
    b_ref   : (1, Cout)        f32
    returns : (h*w, Cout)      f32  (bias added, no ReLU)
    """
    cin = pad_ref.shape[-1]
    for kh in range(3):
        for kw in range(3):
            off = (kh * 3 + kw) * cin
            col_ref[:, off:off + cin] = (
                pad_ref[kh:kh + h, kw:kw + w, :].reshape(h * w, cin))
    acc = jnp.dot(col_ref[...], w_ref[...], preferred_element_type=jnp.float32)
    return acc + b_ref[...]


def _maxpool2x2(y):
    """(H, W, C) -> (H//2, W//2, C), 2x2 max pool, stride 2."""
    h, w, c = y.shape
    t = y.reshape(h // 2, 2, w, c)
    v = jnp.maximum(t[:, 0], t[:, 1])                  # (h//2, w, c)
    t2 = v.reshape(h // 2, w // 2, 2, c)
    return jnp.maximum(t2[:, :, 0, :], t2[:, :, 1, :])  # (h//2, w//2, c)


# -----------------------------------------------------------------------------
# Fused VGG layers 0..10 kernel (one image per grid step)
# -----------------------------------------------------------------------------
def _vgg_fused_kernel(x9_ref,
                      w0_ref, b0_ref, w2_ref, b2_ref, w5_ref, b5_ref,
                      w7_ref, b7_ref, w10_ref, b10_ref,
                      f0_ref, f5_ref, f10_ref,
                      pad2, col2, pad5, col5, pad7, col7, pad10, col10,
                      *, H, W):
    H2, W2 = H // 2, W // 2
    H4, W4 = H // 4, W // 4
    relu = lambda t: jnp.maximum(t, 0.0)

    # ---- layer 0: conv1_1 (input pre-im2col'd in the wrapper, K padded to 32)
    x9 = x9_ref[0].reshape(H * W, x9_ref.shape[-1])            # (H*W, 32) bf16
    a0 = jnp.dot(x9, w0_ref[...], preferred_element_type=jnp.float32)
    a0 = a0 + b0_ref[...]                                      # (H*W, 64) f32
    f0_ref[0] = a0.reshape(H, W, 64).astype(f0_ref.dtype)

    # ---- layers 1..4: relu -> conv1_2 -> relu -> maxpool
    _fill_padded(pad2, relu(a0).reshape(H, W, 64))
    a2 = _conv3x3(pad2, col2, w2_ref, b2_ref, H, W)            # (H*W, 64)
    p2 = _maxpool2x2(relu(a2).reshape(H, W, 64))               # (H2, W2, 64)

    # ---- layer 5: conv2_1
    _fill_padded(pad5, p2)
    a5 = _conv3x3(pad5, col5, w5_ref, b5_ref, H2, W2)          # (H2*W2, 128)
    f5_ref[0] = a5.reshape(H2, W2, 128).astype(f5_ref.dtype)

    # ---- layers 6..9: relu -> conv2_2 -> relu -> maxpool
    _fill_padded(pad7, relu(a5).reshape(H2, W2, 128))
    a7 = _conv3x3(pad7, col7, w7_ref, b7_ref, H2, W2)          # (H2*W2, 128)
    p7 = _maxpool2x2(relu(a7).reshape(H2, W2, 128))            # (H4, W4, 128)

    # ---- layer 10: conv3_1
    _fill_padded(pad10, p7)
    a10 = _conv3x3(pad10, col10, w10_ref, b10_ref, H4, W4)     # (H4*W4, 256)
    f10_ref[0] = a10.reshape(H4, W4, 256).astype(f10_ref.dtype)


# -----------------------------------------------------------------------------
# Host-side wrapper
# -----------------------------------------------------------------------------
_K0 = 32  # layer-0 contraction depth: 9 taps * 3 channels = 27, padded to 32


def _im2col_input(x_nhwc):
    """(N,H,W,3) -> (N,H,W,32): the 9 shifted 3x3 taps of the RGB input."""
    N, H, W, C = x_nhwc.shape
    xp = jnp.pad(x_nhwc, ((0, 0), (1, 1), (1, 1), (0, 0)))
    taps = [xp[:, kh:kh + H, kw:kw + W, :]
            for kh in range(3) for kw in range(3)]
    col = jnp.concatenate(taps, axis=-1)                       # (N,H,W,27)
    return jnp.pad(col, ((0, 0), (0, 0), (0, 0), (0, _K0 - 9 * C)))


def init_params(key):
    """Deterministic synthetic VGG19 conv weights for layers 0,2,5,7,10."""
    shapes = {"w0": (3, 64), "w2": (64, 64), "w5": (64, 128),
              "w7": (128, 128), "w10": (128, 256)}
    params = {}
    keys = jax.random.split(key, len(shapes))
    for (name, (cin, cout)), k in zip(shapes.items(), keys):
        params[name] = 0.05 * jax.random.normal(k, (3, 3, cin, cout),
                                                jnp.float32)
        params[name.replace("w", "b")] = jnp.zeros((cout,), jnp.float32)
    return params


def vgg_features(x_nchw, params):
    """x_nchw: (N, 3, H, W) float32 -> [f0, f5, f10] in NCHW (like PyTorch)."""
    N, C, H, W = x_nchw.shape
    assert C == 3 and H % 4 == 0 and W % 4 == 0
    H2, W2, H4, W4 = H // 2, W // 2, H // 4, W // 4

    x = jnp.transpose(x_nchw, (0, 2, 3, 1))                    # NCHW -> NHWC
    x9 = _im2col_input(x).astype(jnp.bfloat16)                 # (N,H,W,32)

    bf = jnp.bfloat16
    w0 = jnp.pad(params["w0"].reshape(27, 64), ((0, _K0 - 27), (0, 0))).astype(bf)
    w2 = params["w2"].reshape(9 * 64, 64).astype(bf)
    w5 = params["w5"].reshape(9 * 64, 128).astype(bf)
    w7 = params["w7"].reshape(9 * 128, 128).astype(bf)
    w10 = params["w10"].reshape(9 * 128, 256).astype(bf)
    b0 = params["b0"].reshape(1, 64)
    b2 = params["b2"].reshape(1, 64)
    b5 = params["b5"].reshape(1, 128)
    b7 = params["b7"].reshape(1, 128)
    b10 = params["b10"].reshape(1, 256)

    kern = functools.partial(_vgg_fused_kernel, H=H, W=W)
    const2d = lambda n: (0, 0)

    f0, f5, f10 = pl.pallas_call(
        kern,
        out_shape=(jax.ShapeDtypeStruct((N, H, W, 64), jnp.float32),
                   jax.ShapeDtypeStruct((N, H2, W2, 128), jnp.float32),
                   jax.ShapeDtypeStruct((N, H4, W4, 256), jnp.float32)),
        grid_spec=pltpu.PrefetchScalarGridSpec(
            num_scalar_prefetch=0,
            grid=(N,),
            in_specs=[
                pl.BlockSpec((1, H, W, _K0), lambda n: (n, 0, 0, 0)),
                pl.BlockSpec((_K0, 64), const2d),
                pl.BlockSpec((1, 64), const2d),
                pl.BlockSpec((9 * 64, 64), const2d),
                pl.BlockSpec((1, 64), const2d),
                pl.BlockSpec((9 * 64, 128), const2d),
                pl.BlockSpec((1, 128), const2d),
                pl.BlockSpec((9 * 128, 128), const2d),
                pl.BlockSpec((1, 128), const2d),
                pl.BlockSpec((9 * 128, 256), const2d),
                pl.BlockSpec((1, 256), const2d),
            ],
            out_specs=(
                pl.BlockSpec((1, H, W, 64), lambda n: (n, 0, 0, 0)),
                pl.BlockSpec((1, H2, W2, 128), lambda n: (n, 0, 0, 0)),
                pl.BlockSpec((1, H4, W4, 256), lambda n: (n, 0, 0, 0)),
            ),
            scratch_shapes=[
                pltpu.VMEM((H + 2, W + 2, 64), jnp.bfloat16),    # pad2
                pltpu.VMEM((H * W, 9 * 64), jnp.bfloat16),       # col2
                pltpu.VMEM((H2 + 2, W2 + 2, 64), jnp.bfloat16),  # pad5
                pltpu.VMEM((H2 * W2, 9 * 64), jnp.bfloat16),     # col5
                pltpu.VMEM((H2 + 2, W2 + 2, 128), jnp.bfloat16),  # pad7
                pltpu.VMEM((H2 * W2, 9 * 128), jnp.bfloat16),    # col7
                pltpu.VMEM((H4 + 2, W4 + 2, 128), jnp.bfloat16),  # pad10
                pltpu.VMEM((H4 * W4, 9 * 128), jnp.bfloat16),    # col10
            ]),
        compiler_params=pltpu.CompilerParams(
            dimension_semantics=("parallel",)),
    )(x9, w0, b0, w2, b2, w5, b5, w7, b7, w10, b10)

    # TODO(synk): PyTorch forward also runs vgg19 layers 11..36 whose outputs
    # are discarded; they do not affect the returned features so are skipped.
    to_nchw = lambda t: jnp.transpose(t, (0, 3, 1, 2))
    return [to_nchw(f0), to_nchw(f5), to_nchw(f10)]


# -----------------------------------------------------------------------------
# Pure-JAX (f32) reference for a sanity check
# -----------------------------------------------------------------------------
def _vgg_features_ref(x_nchw, params):
    x = jnp.transpose(x_nchw, (0, 2, 3, 1))
    conv = lambda h, w, b: jax.lax.conv_general_dilated(
        h, w, (1, 1), "SAME",
        dimension_numbers=("NHWC", "HWIO", "NHWC")) + b
    pool = lambda h: jax.lax.reduce_window(
        h, -jnp.inf, jax.lax.max, (1, 2, 2, 1), (1, 2, 2, 1), "VALID")
    relu = lambda t: jnp.maximum(t, 0.0)

    f0 = conv(x, params["w0"], params["b0"])
    h = pool(relu(conv(relu(f0), params["w2"], params["b2"])))
    f5 = conv(h, params["w5"], params["b5"])
    h = pool(relu(conv(relu(f5), params["w7"], params["b7"])))
    f10 = conv(h, params["w10"], params["b10"])
    to_nchw = lambda t: jnp.transpose(t, (0, 3, 1, 2))
    return [to_nchw(f0), to_nchw(f5), to_nchw(f10)]


if __name__ == "__main__":
    key = jax.random.PRNGKey(0)
    k_x, k_p = jax.random.split(key)

    N, H, W = 2, 16, 16
    x = jax.random.normal(k_x, (N, 3, H, W), jnp.float32)      # NCHW like torch
    params = init_params(k_p)

    feats = jax.jit(vgg_features)(x, params)
    feats = jax.block_until_ready(feats)

    assert feats[0].shape == (N, 64, H, W)
    assert feats[1].shape == (N, 128, H // 2, W // 2)
    assert feats[2].shape == (N, 256, H // 4, W // 4)

    # numerical sanity check vs f32 reference (kernel uses bf16 matmul inputs)
    ref = _vgg_features_ref(x, params)
    for got, want in zip(feats, ref):
        err = float(jnp.linalg.norm(got - want))
        scale = float(jnp.linalg.norm(want)) + 1e-6
        assert err / scale < 5e-2, f"relative error too large: {err / scale}"

    print("KERNEL_OK")
</pallas_src>

<mosaic_0001>
module attributes {stable_mosaic.version = 11 : i64} {
  func.func @_vgg_fused_kernel(%arg0: i32, %arg1: memref<1x16x16x32xbf16, #tpu.memory_space<vmem>>, %arg2: memref<32x64xbf16, #tpu.memory_space<vmem>>, %arg3: memref<1x64xf32, #tpu.memory_space<vmem>>, %arg4: memref<576x64xbf16, #tpu.memory_space<vmem>>, %arg5: memref<1x64xf32, #tpu.memory_space<vmem>>, %arg6: memref<576x128xbf16, #tpu.memory_space<vmem>>, %arg7: memref<1x128xf32, #tpu.memory_space<vmem>>, %arg8: memref<1152x128xbf16, #tpu.memory_space<vmem>>, %arg9: memref<1x128xf32, #tpu.memory_space<vmem>>, %arg10: memref<1152x256xbf16, #tpu.memory_space<vmem>>, %arg11: memref<1x256xf32, #tpu.memory_space<vmem>>, %arg12: memref<1x16x16x64xf32, #tpu.memory_space<vmem>>, %arg13: memref<1x8x8x128xf32, #tpu.memory_space<vmem>>, %arg14: memref<1x4x4x256xf32, #tpu.memory_space<vmem>>, %arg15: memref<18x18x64xbf16, #tpu.memory_space<vmem>>, %arg16: memref<256x576xbf16, #tpu.memory_space<vmem>>, %arg17: memref<10x10x64xbf16, #tpu.memory_space<vmem>>, %arg18: memref<64x576xbf16, #tpu.memory_space<vmem>>, %arg19: memref<10x10x128xbf16, #tpu.memory_space<vmem>>, %arg20: memref<64x1152xbf16, #tpu.memory_space<vmem>>, %arg21: memref<6x6x128xbf16, #tpu.memory_space<vmem>>, %arg22: memref<16x1152xbf16, #tpu.memory_space<vmem>>) attributes {dimension_semantics = [#tpu.dimension_semantics<parallel>], iteration_bounds = array<i64: 2>, scalar_prefetch = 0 : i64, scratch_operands = 8 : i64, tpu.core_type = #tpu.core_type<tc>, window_params = [{transform_indices = @transform_0, window_bounds = array<i64: 1, 16, 16, 32>}, {pipeline_mode = #tpu.pipeline_mode<synchronous>, transform_indices = @transform_1, window_bounds = array<i64: 32, 64>}, {pipeline_mode = #tpu.pipeline_mode<synchronous>, transform_indices = @transform_2, window_bounds = array<i64: 1, 64>}, {pipeline_mode = #tpu.pipeline_mode<synchronous>, transform_indices = @transform_3, window_bounds = array<i64: 576, 64>}, {pipeline_mode = #tpu.pipeline_mode<synchronous>, transform_indices = @transform_4, window_bounds = array<i64: 1, 64>}, {pipeline_mode = #tpu.pipeline_mode<synchronous>, transform_indices = @transform_5, window_bounds = array<i64: 576, 128>}, {pipeline_mode = #tpu.pipeline_mode<synchronous>, transform_indices = @transform_6, window_bounds = array<i64: 1, 128>}, {pipeline_mode = #tpu.pipeline_mode<synchronous>, transform_indices = @transform_7, window_bounds = array<i64: 1152, 128>}, {pipeline_mode = #tpu.pipeline_mode<synchronous>, transform_indices = @transform_8, window_bounds = array<i64: 1, 128>}, {pipeline_mode = #tpu.pipeline_mode<synchronous>, transform_indices = @transform_9, window_bounds = array<i64: 1152, 256>}, {pipeline_mode = #tpu.pipeline_mode<synchronous>, transform_indices = @transform_10, window_bounds = array<i64: 1, 256>}, {transform_indices = @transform_11, window_bounds = array<i64: 1, 16, 16, 64>}, {transform_indices = @transform_12, window_bounds = array<i64: 1, 8, 8, 128>}, {transform_indices = @transform_13, window_bounds = array<i64: 1, 4, 4, 256>}]} {
    %c0 = arith.constant 0 : index
    %c0_0 = arith.constant 0 : index
    %c0_1 = arith.constant 0 : index
    %c0_2 = arith.constant 0 : index
    %0 = vector.load %arg1[%c0, %c0_0, %c0_1, %c0_2] : memref<1x16x16x32xbf16, #tpu.memory_space<vmem>>, vector<1x16x16x32xbf16>
    %1 = vector.shape_cast %0 : vector<1x16x16x32xbf16> to vector<16x16x32xbf16>
    %2 = vector.shape_cast %1 : vector<16x16x32xbf16> to vector<256x32xbf16>
    %c0_3 = arith.constant 0 : index
    %c0_4 = arith.constant 0 : index
    %3 = vector.load %arg2[%c0_3, %c0_4] : memref<32x64xbf16, #tpu.memory_space<vmem>>, vector<32x64xbf16>
    %cst = arith.constant dense<0.000000e+00> : vector<256x64xf32>
    %4 = tpu.matmul %2, %3, %cst {dimension_numbers = #tpu.dot_dimension_numbers<[1], [0], [0], [1], [0, 0, 1, 1], [], []>} : vector<256x32xbf16>, vector<32x64xbf16>, vector<256x64xf32> -> vector<256x64xf32>
    %c0_5 = arith.constant 0 : index
    %c0_6 = arith.constant 0 : index
    %5 = vector.load %arg3[%c0_5, %c0_6] : memref<1x64xf32, #tpu.memory_space<vmem>>, vector<1x64xf32>
    %6 = vector.broadcast %5 : vector<1x64xf32> to vector<256x64xf32>
    %7 = arith.addf %4, %6 : vector<256x64xf32>
    %8 = vector.shape_cast %7 : vector<256x64xf32> to vector<16x16x64xf32>
    %c0_7 = arith.constant 0 : index
    %c0_8 = arith.constant 0 : index
    %c0_9 = arith.constant 0 : index
    %c0_10 = arith.constant 0 : index
    %9 = vector.load %arg12[%c0_7, %c0_8, %c0_9, %c0_10] : memref<1x16x16x64xf32, #tpu.memory_space<vmem>>, vector<1x16x16x64xf32>
    %10 = vector.shape_cast %9 : vector<1x16x16x64xf32> to vector<16x16x64xf32>
    %11 = vector.shape_cast %8 : vector<16x16x64xf32> to vector<1x16x16x64xf32>
    tpu.vector_store %arg12[%c0_7, %c0_8, %c0_9, %c0_10], %11 {strides = array<i32>} : memref<1x16x16x64xf32, #tpu.memory_space<vmem>>, vector<1x16x16x64xf32>,
    %cst_11 = arith.constant 0.000000e+00 : f32
    %12 = vector.broadcast %cst_11 : f32 to vector<256x64xf32>
    %13 = arith.maximumf %7, %12 : vector<256x64xf32>
    %14 = vector.shape_cast %13 : vector<256x64xf32> to vector<16x16x64xf32>
    %cst_12 = arith.constant 0.000000e+00 : bf16
    %15 = vector.broadcast %cst_12 : bf16 to vector<18x18x64xbf16>
    %c0_13 = arith.constant 0 : index
    %c0_14 = arith.constant 0 : index
    %c0_15 = arith.constant 0 : index
    %16 = vector.load %arg15[%c0_13, %c0_14, %c0_15] : memref<18x18x64xbf16, #tpu.memory_space<vmem>>, vector<18x18x64xbf16>
    tpu.vector_store %arg15[%c0_13, %c0_14, %c0_15], %15 {strides = array<i32>} : memref<18x18x64xbf16, #tpu.memory_space<vmem>>, vector<18x18x64xbf16>,
    %17 = arith.truncf %14 : vector<16x16x64xf32> to vector<16x16x64xbf16>
    %c1 = arith.constant 1 : index
    %c1_16 = arith.constant 1 : index
    %c0_17 = arith.constant 0 : index
    %18 = vector.load %arg15[%c1, %c1_16, %c0_17] : memref<18x18x64xbf16, #tpu.memory_space<vmem>>, vector<16x16x64xbf16>
    tpu.vector_store %arg15[%c1, %c1_16, %c0_17], %17 {strides = array<i32>} : memref<18x18x64xbf16, #tpu.memory_space<vmem>>, vector<16x16x64xbf16>,
    %c0_18 = arith.constant 0 : index
    %c0_19 = arith.constant 0 : index
    %c0_20 = arith.constant 0 : index
    %19 = vector.load %arg15[%c0_18, %c0_19, %c0_20] : memref<18x18x64xbf16, #tpu.memory_space<vmem>>, vector<16x16x64xbf16>
    %20 = vector.shape_cast %19 : vector<16x16x64xbf16> to vector<256x64xbf16>
    %c0_21 = arith.constant 0 : index
    %c0_22 = arith.constant 0 : index
    %21 = vector.load %arg16[%c0_21, %c0_22] : memref<256x576xbf16, #tpu.memory_space<vmem>>, vector<256x64xbf16>
    tpu.vector_store %arg16[%c0_21, %c0_22], %20 {strides = array<i32>} : memref<256x576xbf16, #tpu.memory_space<vmem>>, vector<256x64xbf16>,
    %c0_23 = arith.constant 0 : index
    %c1_24 = arith.constant 1 : index
    %c0_25 = arith.constant 0 : index
    %22 = vector.load %arg15[%c0_23, %c1_24, %c0_25] : memref<18x18x64xbf16, #tpu.memory_space<vmem>>, vector<16x16x64xbf16>
    %23 = vector.shape_cast %22 : vector<16x16x64xbf16> to vector<256x64xbf16>
    %c0_26 = arith.constant 0 : index
    %c64 = arith.constant 64 : index
    %24 = vector.load %arg16[%c0_26, %c64] : memref<256x576xbf16, #tpu.memory_space<vmem>>, vector<256x64xbf16>
    tpu.vector_store %arg16[%c0_26, %c64], %23 {strides = array<i32>} : memref<256x576xbf16, #tpu.memory_space<vmem>>, vector<256x64xbf16>,
    %c0_27 = arith.constant 0 : index
    %c2 = arith.constant 2 : index
    %c0_28 = arith.constant 0 : index
    %25 = vector.load %arg15[%c0_27, %c2, %c0_28] : memref<18x18x64xbf16, #tpu.memory_space<vmem>>, vector<16x16x64xbf16>
    %26 = vector.shape_cast %25 : vector<16x16x64xbf16> to vector<256x64xbf16>
    %c0_29 = arith.constant 0 : index
    %c128 = arith.constant 128 : index
    %27 = vector.load %arg16[%c0_29, %c128] : memref<256x576xbf16, #tpu.memory_space<vmem>>, vector<256x64xbf16>
    tpu.vector_store %arg16[%c0_29, %c128], %26 {strides = array<i32>} : memref<256x576xbf16, #tpu.memory_space<vmem>>, vector<256x64xbf16>,
    %c1_30 = arith.constant 1 : index
    %c0_31 = arith.constant 0 : index
    %c0_32 = arith.constant 0 : index
    %28 = vector.load %arg15[%c1_30, %c0_31, %c0_32] : memref<18x18x64xbf16, #tpu.memory_space<vmem>>, vector<16x16x64xbf16>
    %29 = vector.shape_cast %28 : vector<16x16x64xbf16> to vector<256x64xbf16>
    %c0_33 = arith.constant 0 : index
    %c192 = arith.constant 192 : index
    %30 = vector.load %arg16[%c0_33, %c192] : memref<256x576xbf16, #tpu.memory_space<vmem>>, vector<256x64xbf16>
    tpu.vector_store %arg16[%c0_33, %c192], %29 {strides = array<i32>} : memref<256x576xbf16, #tpu.memory_space<vmem>>, vector<256x64xbf16>,
    %c1_34 = arith.constant 1 : index
    %c1_35 = arith.constant 1 : index
    %c0_36 = arith.constant 0 : index
    %31 = vector.load %arg15[%c1_34, %c1_35, %c0_36] : memref<18x18x64xbf16, #tpu.memory_space<vmem>>, vector<16x16x64xbf16>
    %32 = vector.shape_cast %31 : vector<16x16x64xbf16> to vector<256x64xbf16>
    %c0_37 = arith.constant 0 : index
    %c256 = arith.constant 256 : index
    %33 = vector.load %arg16[%c0_37, %c256] : memref<256x576xbf16, #tpu.memory_space<vmem>>, vector<256x64xbf16>
    tpu.vector_store %arg16[%c0_37, %c256], %32 {strides = array<i32>} : memref<256x576xbf16, #tpu.memory_space<vmem>>, vector<256x64xbf16>,
    %c1_38 = arith.constant 1 : index
    %c2_39 = arith.constant 2 : index
    %c0_40 = arith.constant 0 : index
    %34 = vector.load %arg15[%c1_38, %c2_39, %c0_40] : memref<18x18x64xbf16, #tpu.memory_space<vmem>>, vector<16x16x64xbf16>
    %35 = vector.shape_cast %34 : vector<16x16x64xbf16> to vector<256x64xbf16>
    %c0_41 = arith.constant 0 : index
    %c320 = arith.constant 320 : index
    %36 = vector.load %arg16[%c0_41, %c320] : memref<256x576xbf16, #tpu.memory_space<vmem>>, vector<256x64xbf16>
    tpu.vector_store %arg16[%c0_41, %c320], %35 {strides = array<i32>} : memref<256x576xbf16, #tpu.memory_space<vmem>>, vector<256x64xbf16>,
    %c2_42 = arith.constant 2 : index
    %c0_43 = arith.constant 0 : index
    %c0_44 = arith.constant 0 : index
    %37 = vector.load %arg15[%c2_42, %c0_43, %c0_44] : memref<18x18x64xbf16, #tpu.memory_space<vmem>>, vector<16x16x64xbf16>
    %38 = vector.shape_cast %37 : vector<16x16x64xbf16> to vector<256x64xbf16>
    %c0_45 = arith.constant 0 : index
    %c384 = arith.constant 384 : index
    %39 = vector.load %arg16[%c0_45, %c384] : memref<256x576xbf16, #tpu.memory_space<vmem>>, vector<256x64xbf16>
    tpu.vector_store %arg16[%c0_45, %c384], %38 {strides = array<i32>} : memref<256x576xbf16, #tpu.memory_space<vmem>>, vector<256x64xbf16>,
    %c2_46 = arith.constant 2 : index
    %c1_47 = arith.constant 1 : index
    %c0_48 = arith.constant 0 : index
    %40 = vector.load %arg15[%c2_46, %c1_47, %c0_48] : memref<18x18x64xbf16, #tpu.memory_space<vmem>>, vector<16x16x64xbf16>
    %41 = vector.shape_cast %40 : vector<16x16x64xbf16> to vector<256x64xbf16>
    %c0_49 = arith.constant 0 : index
    %c448 = arith.constant 448 : index
    %42 = vector.load %arg16[%c0_49, %c448] : memref<256x576xbf16, #tpu.memory_space<vmem>>, vector<256x64xbf16>
    tpu.vector_store %arg16[%c0_49, %c448], %41 {strides = array<i32>} : memref<256x576xbf16, #tpu.memory_space<vmem>>, vector<256x64xbf16>,
    %c2_50 = arith.constant 2 : index
    %c2_51 = arith.constant 2 : index
    %c0_52 = arith.constant 0 : index
    %43 = vector.load %arg15[%c2_50, %c2_51, %c0_52] : memref<18x18x64xbf16, #tpu.memory_space<vmem>>, vector<16x16x64xbf16>
    %44 = vector.shape_cast %43 : vector<16x16x64xbf16> to vector<256x64xbf16>
    %c0_53 = arith.constant 0 : index
    %c512 = arith.constant 512 : index
    %45 = vector.load %arg16[%c0_53, %c512] : memref<256x576xbf16, #tpu.memory_space<vmem>>, vector<256x64xbf16>
    tpu.vector_store %arg16[%c0_53, %c512], %44 {strides = array<i32>} : memref<256x576xbf16, #tpu.memory_space<vmem>>, vector<256x64xbf16>,
    %c0_54 = arith.constant 0 : index
    %c0_55 = arith.constant 0 : index
    %46 = vector.load %arg16[%c0_54, %c0_55] : memref<256x576xbf16, #tpu.memory_space<vmem>>, vector<256x576xbf16>
    %c0_56 = arith.constant 0 : index
    %c0_57 = arith.constant 0 : index
    %47 = vector.load %arg4[%c0_56, %c0_57] : memref<576x64xbf16, #tpu.memory_space<vmem>>, vector<576x64xbf16>
    %cst_58 = arith.constant dense<0.000000e+00> : vector<256x64xf32>
    %48 = tpu.matmul %46, %47, %cst_58 {dimension_numbers = #tpu.dot_dimension_numbers<[1], [0], [0], [1], [0, 0, 1, 1], [], []>} : vector<256x576xbf16>, vector<576x64xbf16>, vector<256x64xf32> -> vector<256x64xf32>
    %c0_59 = arith.constant 0 : index
    %c0_60 = arith.constant 0 : index
    %49 = vector.load %arg5[%c0_59, %c0_60] : memref<1x64xf32, #tpu.memory_space<vmem>>, vector<1x64xf32>
    %50 = vector.broadcast %49 : vector<1x64xf32> to vector<256x64xf32>
    %51 = arith.addf %48, %50 : vector<256x64xf32>
    %cst_61 = arith.constant 0.000000e+00 : f32
    %52 = vector.broadcast %cst_61 : f32 to vector<256x64xf32>
    %53 = arith.maximumf %51, %52 : vector<256x64xf32>
    %54 = vector.shape_cast %53 : vector<256x64xf32> to vector<16x16x64xf32>
    %55 = vector.shape_cast %54 : vector<16x16x64xf32> to vector<8x2x16x64xf32>
    %56 = vector.extract_strided_slice %55 {offsets = [0, 0, 0, 0], sizes = [8, 1, 16, 64], strides = [1, 1, 1, 1]} : vector<8x2x16x64xf32> to vector<8x1x16x64xf32>
    %57 = vector.shape_cast %56 : vector<8x1x16x64xf32> to vector<8x16x64xf32>
    %58 = vector.extract_strided_slice %55 {offsets = [0, 1, 0, 0], sizes = [8, 1, 16, 64], strides = [1, 1, 1, 1]} : vector<8x2x16x64xf32> to vector<8x1x16x64xf32>
    %59 = vector.shape_cast %58 : vector<8x1x16x64xf32> to vector<8x16x64xf32>
    %60 = arith.maximumf %57, %59 : vector<8x16x64xf32>
    %61 = vector.shape_cast %60 : vector<8x16x64xf32> to vector<8x8x2x64xf32>
    %62 = vector.extract_strided_slice %61 {offsets = [0, 0, 0, 0], sizes = [8, 8, 1, 64], strides = [1, 1, 1, 1]} : vector<8x8x2x64xf32> to vector<8x8x1x64xf32>
    %63 = vector.shape_cast %62 : vector<8x8x1x64xf32> to vector<8x8x64xf32>
    %64 = vector.extract_strided_slice %61 {offsets = [0, 0, 1, 0], sizes = [8, 8, 1, 64], strides = [1, 1, 1, 1]} : vector<8x8x2x64xf32> to vector<8x8x1x64xf32>
    %65 = vector.shape_cast %64 : vector<8x8x1x64xf32> to vector<8x8x64xf32>
    %66 = arith.maximumf %63, %65 : vector<8x8x64xf32>
    %cst_62 = arith.constant 0.000000e+00 : bf16
    %67 = vector.broadcast %cst_62 : bf16 to vector<10x10x64xbf16>
    %c0_63 = arith.constant 0 : index
    %c0_64 = arith.constant 0 : index
    %c0_65 = arith.constant 0 : index
    %68 = vector.load %arg17[%c0_63, %c0_64, %c0_65] : memref<10x10x64xbf16, #tpu.memory_space<vmem>>, vector<10x10x64xbf16>
    tpu.vector_store %arg17[%c0_63, %c0_64, %c0_65], %67 {strides = array<i32>} : memref<10x10x64xbf16, #tpu.memory_space<vmem>>, vector<10x10x64xbf16>,
    %69 = arith.truncf %66 : vector<8x8x64xf32> to vector<8x8x64xbf16>
    %c1_66 = arith.constant 1 : index
    %c1_67 = arith.constant 1 : index
    %c0_68 = arith.constant 0 : index
    %70 = vector.load %arg17[%c1_66, %c1_67, %c0_68] : memref<10x10x64xbf16, #tpu.memory_space<vmem>>, vector<8x8x64xbf16>
    tpu.vector_store %arg17[%c1_66, %c1_67, %c0_68], %69 {strides = array<i32>} : memref<10x10x64xbf16, #tpu.memory_space<vmem>>, vector<8x8x64xbf16>,
    %c0_69 = arith.constant 0 : index
    %c0_70 = arith.constant 0 : index
    %c0_71 = arith.constant 0 : index
    %71 = vector.load %arg17[%c0_69, %c0_70, %c0_71] : memref<10x10x64xbf16, #tpu.memory_space<vmem>>, vector<8x8x64xbf16>
    %72 = vector.shape_cast %71 : vector<8x8x64xbf16> to vector<64x64xbf16>
    %c0_72 = arith.constant 0 : index
    %c0_73 = arith.constant 0 : index
    %73 = vector.load %arg18[%c0_72, %c0_73] : memref<64x576xbf16, #tpu.memory_space<vmem>>, vector<64x64xbf16>
    tpu.vector_store %arg18[%c0_72, %c0_73], %72 {strides = array<i32>} : memref<64x576xbf16, #tpu.memory_space<vmem>>, vector<64x64xbf16>,
    %c0_74 = arith.constant 0 : index
    %c1_75 = arith.constant 1 : index
    %c0_76 = arith.constant 0 : index
    %74 = vector.load %arg17[%c0_74, %c1_75, %c0_76] : memref<10x10x64xbf16, #tpu.memory_space<vmem>>, vector<8x8x64xbf16>
    %75 = vector.shape_cast %74 : vector<8x8x64xbf16> to vector<64x64xbf16>
    %c0_77 = arith.constant 0 : index
    %c64_78 = arith.constant 64 : index
    %76 = vector.load %arg18[%c0_77, %c64_78] : memref<64x576xbf16, #tpu.memory_space<vmem>>, vector<64x64xbf16>
    tpu.vector_store %arg18[%c0_77, %c64_78], %75 {strides = array<i32>} : memref<64x576xbf16, #tpu.memory_space<vmem>>, vector<64x64xbf16>,
    %c0_79 = arith.constant 0 : index
    %c2_80 = arith.constant 2 : index
    %c0_81 = arith.constant 0 : index
    %77 = vector.load %arg17[%c0_79, %c2_80, %c0_81] : memref<10x10x64xbf16, #tpu.memory_space<vmem>>, vector<8x8x64xbf16>
    %78 = vector.shape_cast %77 : vector<8x8x64xbf16> to vector<64x64xbf16>
    %c0_82 = arith.constant 0 : index
    %c128_83 = arith.constant 128 : index
    %79 = vector.load %arg18[%c0_82, %c128_83] : memref<64x576xbf16, #tpu.memory_space<vmem>>, vector<64x64xbf16>
    tpu.vector_store %arg18[%c0_82, %c128_83], %78 {strides = array<i32>} : memref<64x576xbf16, #tpu.memory_space<vmem>>, vector<64x64xbf16>,
    %c1_84 = arith.constant 1 : index
    %c0_85 = arith.constant 0 : index
    %c0_86 = arith.constant 0 : index
    %80 = vector.load %arg17[%c1_84, %c0_85, %c0_86] : memref<10x10x64xbf16, #tpu.memory_space<vmem>>, vector<8x8x64xbf16>
    %81 = vector.shape_cast %80 : vector<8x8x64xbf16> to vector<64x64xbf16>
    %c0_87 = arith.constant 0 : index
    %c192_88 = arith.constant 192 : index
    %82 = vector.load %arg18[%c0_87, %c192_88] : memref<64x576xbf16, #tpu.memory_space<vmem>>, vector<64x64xbf16>
    tpu.vector_store %arg18[%c0_87, %c192_88], %81 {strides = array<i32>} : memref<64x576xbf16, #tpu.memory_space<vmem>>, vector<64x64xbf16>,
    %c1_89 = arith.constant 1 : index
    %c1_90 = arith.constant 1 : index
    %c0_91 = arith.constant 0 : index
    %83 = vector.load %arg17[%c1_89, %c1_90, %c0_91] : memref<10x10x64xbf16, #tpu.memory_space<vmem>>, vector<8x8x64xbf16>
    %84 = vector.shape_cast %83 : vector<8x8x64xbf16> to vector<64x64xbf16>
    %c0_92 = arith.constant 0 : index
    %c256_93 = arith.constant 256 : index
    %85 = vector.load %arg18[%c0_92, %c256_93] : memref<64x576xbf16, #tpu.memory_space<vmem>>, vector<64x64xbf16>
    tpu.vector_store %arg18[%c0_92, %c256_93], %84 {strides = array<i32>} : memref<64x576xbf16, #tpu.memory_space<vmem>>, vector<64x64xbf16>,
    %c1_94 = arith.constant 1 : index
    %c2_95 = arith.constant 2 : index
    %c0_96 = arith.constant 0 : index
    %86 = vector.load %arg17[%c1_94, %c2_95, %c0_96] : memref<10x10x64xbf16, #tpu.memory_space<vmem>>, vector<8x8x64xbf16>
    %87 = vector.shape_cast %86 : vector<8x8x64xbf16> to vector<64x64xbf16>
    %c0_97 = arith.constant 0 : index
    %c320_98 = arith.constant 320 : index
    %88 = vector.load %arg18[%c0_97, %c320_98] : memref<64x576xbf16, #tpu.memory_space<vmem>>, vector<64x64xbf16>
    tpu.vector_store %arg18[%c0_97, %c320_98], %87 {strides = array<i32>} : memref<64x576xbf16, #tpu.memory_space<vmem>>, vector<64x64xbf16>,
    %c2_99 = arith.constant 2 : index
    %c0_100 = arith.constant 0 : index
    %c0_101 = arith.constant 0 : index
    %89 = vector.load %arg17[%c2_99, %c0_100, %c0_101] : memref<10x10x64xbf16, #tpu.memory_space<vmem>>, vector<8x8x64xbf16>
    %90 = vector.shape_cast %89 : vector<8x8x64xbf16> to vector<64x64xbf16>
    %c0_102 = arith.constant 0 : index
    %c384_103 = arith.constant 384 : index
    %91 = vector.load %arg18[%c0_102, %c384_103] : memref<64x576xbf16, #tpu.memory_space<vmem>>, vector<64x64xbf16>
    tpu.vector_store %arg18[%c0_102, %c384_103], %90 {strides = array<i32>} : memref<64x576xbf16, #tpu.memory_space<vmem>>, vector<64x64xbf16>,
    %c2_104 = arith.constant 2 : index
    %c1_105 = arith.constant 1 : index
    %c0_106 = arith.constant 0 : index
    %92 = vector.load %arg17[%c2_104, %c1_105, %c0_106] : memref<10x10x64xbf16, #tpu.memory_space<vmem>>, vector<8x8x64xbf16>
    %93 = vector.shape_cast %92 : vector<8x8x64xbf16> to vector<64x64xbf16>
    %c0_107 = arith.constant 0 : index
    %c448_108 = arith.constant 448 : index
    %94 = vector.load %arg18[%c0_107, %c448_108] : memref<64x576xbf16, #tpu.memory_space<vmem>>, vector<64x64xbf16>
    tpu.vector_store %arg18[%c0_107, %c448_108], %93 {strides = array<i32>} : memref<64x576xbf16, #tpu.memory_space<vmem>>, vector<64x64xbf16>,
    %c2_109 = arith.constant 2 : index
    %c2_110 = arith.constant 2 : index
    %c0_111 = arith.constant 0 : index
    %95 = vector.load %arg17[%c2_109, %c2_110, %c0_111] : memref<10x10x64xbf16, #tpu.memory_space<vmem>>, vector<8x8x64xbf16>
    %96 = vector.shape_cast %95 : vector<8x8x64xbf16> to vector<64x64xbf16>
    %c0_112 = arith.constant 0 : index
    %c512_113 = arith.constant 512 : index
    %97 = vector.load %arg18[%c0_112, %c512_113] : memref<64x576xbf16, #tpu.memory_space<vmem>>, vector<64x64xbf16>
    tpu.vector_store %arg18[%c0_112, %c512_113], %96 {strides = array<i32>} : memref<64x576xbf16, #tpu.memory_space<vmem>>, vector<64x64xbf16>,
    %c0_114 = arith.constant 0 : index
    %c0_115 = arith.constant 0 : index
    %98 = vector.load %arg18[%c0_114, %c0_115] : memref<64x576xbf16, #tpu.memory_space<vmem>>, vector<64x576xbf16>
    %c0_116 = arith.constant 0 : index
    %c0_117 = arith.constant 0 : index
    %99 = vector.load %arg6[%c0_116, %c0_117] : memref<576x128xbf16, #tpu.memory_space<vmem>>, vector<576x128xbf16>
    %cst_118 = arith.constant dense<0.000000e+00> : vector<64x128xf32>
    %100 = tpu.matmul %98, %99, %cst_118 {dimension_numbers = #tpu.dot_dimension_numbers<[1], [0], [0], [1], [0, 0, 1, 1], [], []>} : vector<64x576xbf16>, vector<576x128xbf16>, vector<64x128xf32> -> vector<64x128xf32>
    %c0_119 = arith.constant 0 : index
    %c0_120 = arith.constant 0 : index
    %101 = vector.load %arg7[%c0_119, %c0_120] : memref<1x128xf32, #tpu.memory_space<vmem>>, vector<1x128xf32>
    %102 = vector.broadcast %101 : vector<1x128xf32> to vector<64x128xf32>
    %103 = arith.addf %100, %102 : vector<64x128xf32>
    %104 = vector.shape_cast %103 : vector<64x128xf32> to vector<8x8x128xf32>
    %c0_121 = arith.constant 0 : index
    %c0_122 = arith.constant 0 : index
    %c0_123 = arith.constant 0 : index
    %c0_124 = arith.constant 0 : index
    %105 = vector.load %arg13[%c0_121, %c0_122, %c0_123, %c0_124] : memref<1x8x8x128xf32, #tpu.memory_space<vmem>>, vector<1x8x8x128xf32>
    %106 = vector.shape_cast %105 : vector<1x8x8x128xf32> to vector<8x8x128xf32>
    %107 = vector.shape_cast %104 : vector<8x8x128xf32> to vector<1x8x8x128xf32>
    tpu.vector_store %arg13[%c0_121, %c0_122, %c0_123, %c0_124], %107 {strides = array<i32>} : memref<1x8x8x128xf32, #tpu.memory_space<vmem>>, vector<1x8x8x128xf32>,
    %cst_125 = arith.constant 0.000000e+00 : f32
    %108 = vector.broadcast %cst_125 : f32 to vector<64x128xf32>
    %109 = arith.maximumf %103, %108 : vector<64x128xf32>
    %110 = vector.shape_cast %109 : vector<64x128xf32> to vector<8x8x128xf32>
    %cst_126 = arith.constant 0.000000e+00 : bf16
    %111 = vector.broadcast %cst_126 : bf16 to vector<10x10x128xbf16>
    %c0_127 = arith.constant 0 : index
    %c0_128 = arith.constant 0 : index
    %c0_129 = arith.constant 0 : index
    %112 = vector.load %arg19[%c0_127, %c0_128, %c0_129] : memref<10x10x128xbf16, #tpu.memory_space<vmem>>, vector<10x10x128xbf16>
    tpu.vector_store %arg19[%c0_127, %c0_128, %c0_129], %111 {strides = array<i32>} : memref<10x10x128xbf16, #tpu.memory_space<vmem>>, vector<10x10x128xbf16>,
    %113 = arith.truncf %110 : vector<8x8x128xf32> to vector<8x8x128xbf16>
    %c1_130 = arith.constant 1 : index
    %c1_131 = arith.constant 1 : index
    %c0_132 = arith.constant 0 : index
    %114 = vector.load %arg19[%c1_130, %c1_131, %c0_132] : memref<10x10x128xbf16, #tpu.memory_space<vmem>>, vector<8x8x128xbf16>
    tpu.vector_store %arg19[%c1_130, %c1_131, %c0_132], %113 {strides = array<i32>} : memref<10x10x128xbf16, #tpu.memory_space<vmem>>, vector<8x8x128xbf16>,
    %c0_133 = arith.constant 0 : index
    %c0_134 = arith.constant 0 : index
    %c0_135 = arith.constant 0 : index
    %115 = vector.load %arg19[%c0_133, %c0_134, %c0_135] : memref<10x10x128xbf16, #tpu.memory_space<vmem>>, vector<8x8x128xbf16>
    %116 = vector.shape_cast %115 : vector<8x8x128xbf16> to vector<64x128xbf16>
    %c0_136 = arith.constant 0 : index
    %c0_137 = arith.constant 0 : index
    %117 = vector.load %arg20[%c0_136, %c0_137] : memref<64x1152xbf16, #tpu.memory_space<vmem>>, vector<64x128xbf16>
    tpu.vector_store %arg20[%c0_136, %c0_137], %116 {strides = array<i32>} : memref<64x1152xbf16, #tpu.memory_space<vmem>>, vector<64x128xbf16>,
    %c0_138 = arith.constant 0 : index
    %c1_139 = arith.constant 1 : index
    %c0_140 = arith.constant 0 : index
    %118 = vector.load %arg19[%c0_138, %c1_139, %c0_140] : memref<10x10x128xbf16, #tpu.memory_space<vmem>>, vector<8x8x128xbf16>
    %119 = vector.shape_cast %118 : vector<8x8x128xbf16> to vector<64x128xbf16>
    %c0_141 = arith.constant 0 : index
    %c128_142 = arith.constant 128 : index
    %120 = vector.load %arg20[%c0_141, %c128_142] : memref<64x1152xbf16, #tpu.memory_space<vmem>>, vector<64x128xbf16>
    tpu.vector_store %arg20[%c0_141, %c128_142], %119 {strides = array<i32>} : memref<64x1152xbf16, #tpu.memory_space<vmem>>, vector<64x128xbf16>,
    %c0_143 = arith.constant 0 : index
    %c2_144 = arith.constant 2 : index
    %c0_145 = arith.constant 0 : index
    %121 = vector.load %arg19[%c0_143, %c2_144, %c0_145] : memref<10x10x128xbf16, #tpu.memory_space<vmem>>, vector<8x8x128xbf16>
    %122 = vector.shape_cast %121 : vector<8x8x128xbf16> to vector<64x128xbf16>
    %c0_146 = arith.constant 0 : index
    %c256_147 = arith.constant 256 : index
    %123 = vector.load %arg20[%c0_146, %c256_147] : memref<64x1152xbf16, #tpu.memory_space<vmem>>, vector<64x128xbf16>
    tpu.vector_store %arg20[%c0_146, %c256_147], %122 {strides = array<i32>} : memref<64x1152xbf16, #tpu.memory_space<vmem>>, vector<64x128xbf16>,
    %c1_148 = arith.constant 1 : index
    %c0_149 = arith.constant 0 : index
    %c0_150 = arith.constant 0 : index
    %124 = vector.load %arg19[%c1_148, %c0_149, %c0_150] : memref<10x10x128xbf16, #tpu.memory_space<vmem>>, vector<8x8x128xbf16>
    %125 = vector.shape_cast %124 : vector<8x8x128xbf16> to vector<64x128xbf16>
    %c0_151 = arith.constant 0 : index
    %c384_152 = arith.constant 384 : index
    %126 = vector.load %arg20[%c0_151, %c384_152] : memref<64x1152xbf16, #tpu.memory_space<vmem>>, vector<64x128xbf16>
    tpu.vector_store %arg20[%c0_151, %c384_152], %125 {strides = array<i32>} : memref<64x1152xbf16, #tpu.memory_space<vmem>>, vector<64x128xbf16>,
    %c1_153 = arith.constant 1 : index
    %c1_154 = arith.constant 1 : index
    %c0_155 = arith.constant 0 : index
    %127 = vector.load %arg19[%c1_153, %c1_154, %c0_155] : memref<10x10x128xbf16, #tpu.memory_space<vmem>>, vector<8x8x128xbf16>
    %128 = vector.shape_cast %127 : vector<8x8x128xbf16> to vector<64x128xbf16>
    %c0_156 = arith.constant 0 : index
    %c512_157 = arith.constant 512 : index
    %129 = vector.load %arg20[%c0_156, %c512_157] : memref<64x1152xbf16, #tpu.memory_space<vmem>>, vector<64x128xbf16>
    tpu.vector_store %arg20[%c0_156, %c512_157], %128 {strides = array<i32>} : memref<64x1152xbf16, #tpu.memory_space<vmem>>, vector<64x128xbf16>,
    %c1_158 = arith.constant 1 : index
    %c2_159 = arith.constant 2 : index
    %c0_160 = arith.constant 0 : index
    %130 = vector.load %arg19[%c1_158, %c2_159, %c0_160] : memref<10x10x128xbf16, #tpu.memory_space<vmem>>, vector<8x8x128xbf16>
    %131 = vector.shape_cast %130 : vector<8x8x128xbf16> to vector<64x128xbf16>
    %c0_161 = arith.constant 0 : index
    %c640 = arith.constant 640 : index
    %132 = vector.load %arg20[%c0_161, %c640] : memref<64x1152xbf16, #tpu.memory_space<vmem>>, vector<64x128xbf16>
    tpu.vector_store %arg20[%c0_161, %c640], %131 {strides = array<i32>} : memref<64x1152xbf16, #tpu.memory_space<vmem>>, vector<64x128xbf16>,
    %c2_162 = arith.constant 2 : index
    %c0_163 = arith.constant 0 : index
    %c0_164 = arith.constant 0 : index
    %133 = vector.load %arg19[%c2_162, %c0_163, %c0_164] : memref<10x10x128xbf16, #tpu.memory_space<vmem>>, vector<8x8x128xbf16>
    %134 = vector.shape_cast %133 : vector<8x8x128xbf16> to vector<64x128xbf16>
    %c0_165 = arith.constant 0 : index
    %c768 = arith.constant 768 : index
    %135 = vector.load %arg20[%c0_165, %c768] : memref<64x1152xbf16, #tpu.memory_space<vmem>>, vector<64x128xbf16>
    tpu.vector_store %arg20[%c0_165, %c768], %134 {strides = array<i32>} : memref<64x1152xbf16, #tpu.memory_space<vmem>>, vector<64x128xbf16>,
    %c2_166 = arith.constant 2 : index
    %c1_167 = arith.constant 1 : index
    %c0_168 = arith.constant 0 : index
    %136 = vector.load %arg19[%c2_166, %c1_167, %c0_168] : memref<10x10x128xbf16, #tpu.memory_space<vmem>>, vector<8x8x128xbf16>
    %137 = vector.shape_cast %136 : vector<8x8x128xbf16> to vector<64x128xbf16>
    %c0_169 = arith.constant 0 : index
    %c896 = arith.constant 896 : index
    %138 = vector.load %arg20[%c0_169, %c896] : memref<64x1152xbf16, #tpu.memory_space<vmem>>, vector<64x128xbf16>
    tpu.vector_store %arg20[%c0_169, %c896], %137 {strides = array<i32>} : memref<64x1152xbf16, #tpu.memory_space<vmem>>, vector<64x128xbf16>,
    %c2_170 = arith.constant 2 : index
    %c2_171 = arith.constant 2 : index
    %c0_172 = arith.constant 0 : index
    %139 = vector.load %arg19[%c2_170, %c2_171, %c0_172] : memref<10x10x128xbf16, #tpu.memory_space<vmem>>, vector<8x8x128xbf16>
    %140 = vector.shape_cast %139 : vector<8x8x128xbf16> to vector<64x128xbf16>
    %c0_173 = arith.constant 0 : index
    %c1024 = arith.constant 1024 : index
    %141 = vector.load %arg20[%c0_173, %c1024] : memref<64x1152xbf16, #tpu.memory_space<vmem>>, vector<64x128xbf16>
    tpu.vector_store %arg20[%c0_173, %c1024], %140 {strides = array<i32>} : memref<64x1152xbf16, #tpu.memory_space<vmem>>, vector<64x128xbf16>,
    %c0_174 = arith.constant 0 : index
    %c0_175 = arith.constant 0 : index
    %142 = vector.load %arg20[%c0_174, %c0_175] : memref<64x1152xbf16, #tpu.memory_space<vmem>>, vector<64x1152xbf16>
    %c0_176 = arith.constant 0 : index
    %c0_177 = arith.constant 0 : index
    %143 = vector.load %arg8[%c0_176, %c0_177] : memref<1152x128xbf16, #tpu.memory_space<vmem>>, vector<1152x128xbf16>
    %cst_178 = arith.constant dense<0.000000e+00> : vector<64x128xf32>
    %144 = tpu.matmul %142, %143, %cst_178 {dimension_numbers = #tpu.dot_dimension_numbers<[1], [0], [0], [1], [0, 0, 1, 1], [], []>} : vector<64x1152xbf16>, vector<1152x128xbf16>, vector<64x128xf32> -> vector<64x128xf32>
    %c0_179 = arith.constant 0 : index
    %c0_180 = arith.constant 0 : index
    %145 = vector.load %arg9[%c0_179, %c0_180] : memref<1x128xf32, #tpu.memory_space<vmem>>, vector<1x128xf32>
    %146 = vector.broadcast %145 : vector<1x128xf32> to vector<64x128xf32>
    %147 = arith.addf %144, %146 : vector<64x128xf32>
    %cst_181 = arith.constant 0.000000e+00 : f32
    %148 = vector.broadcast %cst_181 : f32 to vector<64x128xf32>
    %149 = arith.maximumf %147, %148 : vector<64x128xf32>
    %150 = vector.shape_cast %149 : vector<64x128xf32> to vector<8x8x128xf32>
    %151 = vector.shape_cast %150 : vector<8x8x128xf32> to vector<4x2x8x128xf32>
    %152 = vector.extract_strided_slice %151 {offsets = [0, 0, 0, 0], sizes = [4, 1, 8, 128], strides = [1, 1, 1, 1]} : vector<4x2x8x128xf32> to vector<4x1x8x128xf32>
    %153 = vector.shape_cast %152 : vector<4x1x8x128xf32> to vector<4x8x128xf32>
    %154 = vector.extract_strided_slice %151 {offsets = [0, 1, 0, 0], sizes = [4, 1, 8, 128], strides = [1, 1, 1, 1]} : vector<4x2x8x128xf32> to vector<4x1x8x128xf32>
    %155 = vector.shape_cast %154 : vector<4x1x8x128xf32> to vector<4x8x128xf32>
    %156 = arith.maximumf %153, %155 : vector<4x8x128xf32>
    %157 = vector.shape_cast %156 : vector<4x8x128xf32> to vector<4x4x2x128xf32>
    %158 = vector.extract_strided_slice %157 {offsets = [0, 0, 0, 0], sizes = [4, 4, 1, 128], strides = [1, 1, 1, 1]} : vector<4x4x2x128xf32> to vector<4x4x1x128xf32>
    %159 = vector.shape_cast %158 : vector<4x4x1x128xf32> to vector<4x4x128xf32>
    %160 = vector.extract_strided_slice %157 {offsets = [0, 0, 1, 0], sizes = [4, 4, 1, 128], strides = [1, 1, 1, 1]} : vector<4x4x2x128xf32> to vector<4x4x1x128xf32>
    %161 = vector.shape_cast %160 : vector<4x4x1x128xf32> to vector<4x4x128xf32>
    %162 = arith.maximumf %159, %161 : vector<4x4x128xf32>
    %cst_182 = arith.constant 0.000000e+00 : bf16
    %163 = vector.broadcast %cst_182 : bf16 to vector<6x6x128xbf16>
    %c0_183 = arith.constant 0 : index
    %c0_184 = arith.constant 0 : index
    %c0_185 = arith.constant 0 : index
    %164 = vector.load %arg21[%c0_183, %c0_184, %c0_185] : memref<6x6x128xbf16, #tpu.memory_space<vmem>>, vector<6x6x128xbf16>
    tpu.vector_store %arg21[%c0_183, %c0_184, %c0_185], %163 {strides = array<i32>} : memref<6x6x128xbf16, #tpu.memory_space<vmem>>, vector<6x6x128xbf16>,
    %165 = arith.truncf %162 : vector<4x4x128xf32> to vector<4x4x128xbf16>
    %c1_186 = arith.constant 1 : index
    %c1_187 = arith.constant 1 : index
    %c0_188 = arith.constant 0 : index
    %166 = vector.load %arg21[%c1_186, %c1_187, %c0_188] : memref<6x6x128xbf16, #tpu.memory_space<vmem>>, vector<4x4x128xbf16>
    tpu.vector_store %arg21[%c1_186, %c1_187, %c0_188], %165 {strides = array<i32>} : memref<6x6x128xbf16, #tpu.memory_space<vmem>>, vector<4x4x128xbf16>,
    %c0_189 = arith.constant 0 : index
    %c0_190 = arith.constant 0 : index
    %c0_191 = arith.constant 0 : index
    %167 = vector.load %arg21[%c0_189, %c0_190, %c0_191] : memref<6x6x128xbf16, #tpu.memory_space<vmem>>, vector<4x4x128xbf16>
    %168 = vector.shape_cast %167 : vector<4x4x128xbf16> to vector<16x128xbf16>
    %c0_192 = arith.constant 0 : index
    %c0_193 = arith.constant 0 : index
    %169 = vector.load %arg22[%c0_192, %c0_193] : memref<16x1152xbf16, #tpu.memory_space<vmem>>, vector<16x128xbf16>
    tpu.vector_store %arg22[%c0_192, %c0_193], %168 {strides = array<i32>} : memref<16x1152xbf16, #tpu.memory_space<vmem>>, vector<16x128xbf16>,
    %c0_194 = arith.constant 0 : index
    %c1_195 = arith.constant 1 : index
    %c0_196 = arith.constant 0 : index
    %170 = vector.load %arg21[%c0_194, %c1_195, %c0_196] : memref<6x6x128xbf16, #tpu.memory_space<vmem>>, vector<4x4x128xbf16>
    %171 = vector.shape_cast %170 : vector<4x4x128xbf16> to vector<16x128xbf16>
    %c0_197 = arith.constant 0 : index
    %c128_198 = arith.constant 128 : index
    %172 = vector.load %arg22[%c0_197, %c128_198] : memref<16x1152xbf16, #tpu.memory_space<vmem>>, vector<16x128xbf16>
    tpu.vector_store %arg22[%c0_197, %c128_198], %171 {strides = array<i32>} : memref<16x1152xbf16, #tpu.memory_space<vmem>>, vector<16x128xbf16>,
    %c0_199 = arith.constant 0 : index
    %c2_200 = arith.constant 2 : index
    %c0_201 = arith.constant 0 : index
    %173 = vector.load %arg21[%c0_199, %c2_200, %c0_201] : memref<6x6x128xbf16, #tpu.memory_space<vmem>>, vector<4x4x128xbf16>
    %174 = vector.shape_cast %173 : vector<4x4x128xbf16> to vector<16x128xbf16>
    %c0_202 = arith.constant 0 : index
    %c256_203 = arith.constant 256 : index
    %175 = vector.load %arg22[%c0_202, %c256_203] : memref<16x1152xbf16, #tpu.memory_space<vmem>>, vector<16x128xbf16>
    tpu.vector_store %arg22[%c0_202, %c256_203], %174 {strides = array<i32>} : memref<16x1152xbf16, #tpu.memory_space<vmem>>, vector<16x128xbf16>,
    %c1_204 = arith.constant 1 : index
    %c0_205 = arith.constant 0 : index
    %c0_206 = arith.constant 0 : index
    %176 = vector.load %arg21[%c1_204, %c0_205, %c0_206] : memref<6x6x128xbf16, #tpu.memory_space<vmem>>, vector<4x4x128xbf16>
    %177 = vector.shape_cast %176 : vector<4x4x128xbf16> to vector<16x128xbf16>
    %c0_207 = arith.constant 0 : index
    %c384_208 = arith.constant 384 : index
    %178 = vector.load %arg22[%c0_207, %c384_208] : memref<16x1152xbf16, #tpu.memory_space<vmem>>, vector<16x128xbf16>
    tpu.vector_store %arg22[%c0_207, %c384_208], %177 {strides = array<i32>} : memref<16x1152xbf16, #tpu.memory_space<vmem>>, vector<16x128xbf16>,
    %c1_209 = arith.constant 1 : index
    %c1_210 = arith.constant 1 : index
    %c0_211 = arith.constant 0 : index
    %179 = vector.load %arg21[%c1_209, %c1_210, %c0_211] : memref<6x6x128xbf16, #tpu.memory_space<vmem>>, vector<4x4x128xbf16>
    %180 = vector.shape_cast %179 : vector<4x4x128xbf16> to vector<16x128xbf16>
    %c0_212 = arith.constant 0 : index
    %c512_213 = arith.constant 512 : index
    %181 = vector.load %arg22[%c0_212, %c512_213] : memref<16x1152xbf16, #tpu.memory_space<vmem>>, vector<16x128xbf16>
    tpu.vector_store %arg22[%c0_212, %c512_213], %180 {strides = array<i32>} : memref<16x1152xbf16, #tpu.memory_space<vmem>>, vector<16x128xbf16>,
    %c1_214 = arith.constant 1 : index
    %c2_215 = arith.constant 2 : index
    %c0_216 = arith.constant 0 : index
    %182 = vector.load %arg21[%c1_214, %c2_215, %c0_216] : memref<6x6x128xbf16, #tpu.memory_space<vmem>>, vector<4x4x128xbf16>
    %183 = vector.shape_cast %182 : vector<4x4x128xbf16> to vector<16x128xbf16>
    %c0_217 = arith.constant 0 : index
    %c640_218 = arith.constant 640 : index
    %184 = vector.load %arg22[%c0_217, %c640_218] : memref<16x1152xbf16, #tpu.memory_space<vmem>>, vector<16x128xbf16>
    tpu.vector_store %arg22[%c0_217, %c640_218], %183 {strides = array<i32>} : memref<16x1152xbf16, #tpu.memory_space<vmem>>, vector<16x128xbf16>,
    %c2_219 = arith.constant 2 : index
    %c0_220 = arith.constant 0 : index
    %c0_221 = arith.constant 0 : index
    %185 = vector.load %arg21[%c2_219, %c0_220, %c0_221] : memref<6x6x128xbf16, #tpu.memory_space<vmem>>, vector<4x4x128xbf16>
    %186 = vector.shape_cast %185 : vector<4x4x128xbf16> to vector<16x128xbf16>
    %c0_222 = arith.constant 0 : index
    %c768_223 = arith.constant 768 : index
    %187 = vector.load %arg22[%c0_222, %c768_223] : memref<16x1152xbf16, #tpu.memory_space<vmem>>, vector<16x128xbf16>
    tpu.vector_store %arg22[%c0_222, %c768_223], %186 {strides = array<i32>} : memref<16x1152xbf16, #tpu.memory_space<vmem>>, vector<16x128xbf16>,
    %c2_224 = arith.constant 2 : index
    %c1_225 = arith.constant 1 : index
    %c0_226 = arith.constant 0 : index
    %188 = vector.load %arg21[%c2_224, %c1_225, %c0_226] : memref<6x6x128xbf16, #tpu.memory_space<vmem>>, vector<4x4x128xbf16>
    %189 = vector.shape_cast %188 : vector<4x4x128xbf16> to vector<16x128xbf16>
    %c0_227 = arith.constant 0 : index
    %c896_228 = arith.constant 896 : index
    %190 = vector.load %arg22[%c0_227, %c896_228] : memref<16x1152xbf16, #tpu.memory_space<vmem>>, vector<16x128xbf16>
    tpu.vector_store %arg22[%c0_227, %c896_228], %189 {strides = array<i32>} : memref<16x1152xbf16, #tpu.memory_space<vmem>>, vector<16x128xbf16>,
    %c2_229 = arith.constant 2 : index
    %c2_230 = arith.constant 2 : index
    %c0_231 = arith.constant 0 : index
    %191 = vector.load %arg21[%c2_229, %c2_230, %c0_231] : memref<6x6x128xbf16, #tpu.memory_space<vmem>>, vector<4x4x128xbf16>
    %192 = vector.shape_cast %191 : vector<4x4x128xbf16> to vector<16x128xbf16>
    %c0_232 = arith.constant 0 : index
    %c1024_233 = arith.constant 1024 : index
    %193 = vector.load %arg22[%c0_232, %c1024_233] : memref<16x1152xbf16, #tpu.memory_space<vmem>>, vector<16x128xbf16>
    tpu.vector_store %arg22[%c0_232, %c1024_233], %192 {strides = array<i32>} : memref<16x1152xbf16, #tpu.memory_space<vmem>>, vector<16x128xbf16>,
    %c0_234 = arith.constant 0 : index
    %c0_235 = arith.constant 0 : index
    %194 = vector.load %arg22[%c0_234, %c0_235] : memref<16x1152xbf16, #tpu.memory_space<vmem>>, vector<16x1152xbf16>
    %c0_236 = arith.constant 0 : index
    %c0_237 = arith.constant 0 : index
    %195 = vector.load %arg10[%c0_236, %c0_237] : memref<1152x256xbf16, #tpu.memory_space<vmem>>, vector<1152x256xbf16>
    %cst_238 = arith.constant dense<0.000000e+00> : vector<16x256xf32>
    %196 = tpu.matmul %194, %195, %cst_238 {dimension_numbers = #tpu.dot_dimension_numbers<[1], [0], [0], [1], [0, 0, 1, 1], [], []>} : vector<16x1152xbf16>, vector<1152x256xbf16>, vector<16x256xf32> -> vector<16x256xf32>
    %c0_239 = arith.constant 0 : index
    %c0_240 = arith.constant 0 : index
    %197 = vector.load %arg11[%c0_239, %c0_240] : memref<1x256xf32, #tpu.memory_space<vmem>>, vector<1x256xf32>
    %198 = vector.broadcast %197 : vector<1x256xf32> to vector<16x256xf32>
    %199 = arith.addf %196, %198 : vector<16x256xf32>
    %200 = vector.shape_cast %199 : vector<16x256xf32> to vector<4x4x256xf32>
    %c0_241 = arith.constant 0 : index
    %c0_242 = arith.constant 0 : index
    %c0_243 = arith.constant 0 : index
    %c0_244 = arith.constant 0 : index
    %201 = vector.load %arg14[%c0_241, %c0_242, %c0_243, %c0_244] : memref<1x4x4x256xf32, #tpu.memory_space<vmem>>, vector<1x4x4x256xf32>
    %202 = vector.shape_cast %201 : vector<1x4x4x256xf32> to vector<4x4x256xf32>
    %203 = vector.shape_cast %200 : vector<4x4x256xf32> to vector<1x4x4x256xf32>
    tpu.vector_store %arg14[%c0_241, %c0_242, %c0_243, %c0_244], %203 {strides = array<i32>} : memref<1x4x4x256xf32, #tpu.memory_space<vmem>>, vector<1x4x4x256xf32>,
    return
  }
  func.func @transform_0(%arg0: i32) -> (i32, i32, i32, i32) {
    %c0_i32 = arith.constant 0 : i32
    %c0_i32_0 = arith.constant 0 : i32
    %c0_i32_1 = arith.constant 0 : i32
    %c0_i32_2 = arith.constant 0 : i32
    return %arg0, %c0_i32, %c0_i32_0, %c0_i32_1 : i32, i32, i32, i32
  }
  func.func @transform_1(%arg0: i32) -> (i32, i32) {
    %c0_i32 = arith.constant 0 : i32
    %c0_i32_0 = arith.constant 0 : i32
    %c0_i32_1 = arith.constant 0 : i32
    return %c0_i32, %c0_i32_0 : i32, i32
  }
  func.func @transform_2(%arg0: i32) -> (i32, i32) {
    %c0_i32 = arith.constant 0 : i32
    %c0_i32_0 = arith.constant 0 : i32
    %c0_i32_1 = arith.constant 0 : i32
    return %c0_i32, %c0_i32_0 : i32, i32
  }
  func.func @transform_3(%arg0: i32) -> (i32, i32) {
    %c0_i32 = arith.constant 0 : i32
    %c0_i32_0 = arith.constant 0 : i32
    %c0_i32_1 = arith.constant 0 : i32
    return %c0_i32, %c0_i32_0 : i32, i32
  }
  func.func @transform_4(%arg0: i32) -> (i32, i32) {
    %c0_i32 = arith.constant 0 : i32
    %c0_i32_0 = arith.constant 0 : i32
    %c0_i32_1 = arith.constant 0 : i32
    return %c0_i32, %c0_i32_0 : i32, i32
  }
  func.func @transform_5(%arg0: i32) -> (i32, i32) {
    %c0_i32 = arith.constant 0 : i32
    %c0_i32_0 = arith.constant 0 : i32
    %c0_i32_1 = arith.constant 0 : i32
    return %c0_i32, %c0_i32_0 : i32, i32
  }
  func.func @transform_6(%arg0: i32) -> (i32, i32) {
    %c0_i32 = arith.constant 0 : i32
    %c0_i32_0 = arith.constant 0 : i32
    %c0_i32_1 = arith.constant 0 : i32
    return %c0_i32, %c0_i32_0 : i32, i32
  }
  func.func @transform_7(%arg0: i32) -> (i32, i32) {
    %c0_i32 = arith.constant 0 : i32
    %c0_i32_0 = arith.constant 0 : i32
    %c0_i32_1 = arith.constant 0 : i32
    return %c0_i32, %c0_i32_0 : i32, i32
  }
  func.func @transform_8(%arg0: i32) -> (i32, i32) {
    %c0_i32 = arith.constant 0 : i32
    %c0_i32_0 = arith.constant 0 : i32
    %c0_i32_1 = arith.constant 0 : i32
    return %c0_i32, %c0_i32_0 : i32, i32
  }
  func.func @transform_9(%arg0: i32) -> (i32, i32) {
    %c0_i32 = arith.constant 0 : i32
    %c0_i32_0 = arith.constant 0 : i32
    %c0_i32_1 = arith.constant 0 : i32
    return %c0_i32, %c0_i32_0 : i32, i32
  }
  func.func @transform_10(%arg0: i32) -> (i32, i32) {
    %c0_i32 = arith.constant 0 : i32
    %c0_i32_0 = arith.constant 0 : i32
    %c0_i32_1 = arith.constant 0 : i32
    return %c0_i32, %c0_i32_0 : i32, i32
  }
  func.func @transform_11(%arg0: i32) -> (i32, i32, i32, i32) {
    %c0_i32 = arith.constant 0 : i32
    %c0_i32_0 = arith.constant 0 : i32
    %c0_i32_1 = arith.constant 0 : i32
    %c0_i32_2 = arith.constant 0 : i32
    return %arg0, %c0_i32, %c0_i32_0, %c0_i32_1 : i32, i32, i32, i32
  }
  func.func @transform_12(%arg0: i32) -> (i32, i32, i32, i32) {
    %c0_i32 = arith.constant 0 : i32
    %c0_i32_0 = arith.constant 0 : i32
    %c0_i32_1 = arith.constant 0 : i32
    %c0_i32_2 = arith.constant 0 : i32
    return %arg0, %c0_i32, %c0_i32_0, %c0_i32_1 : i32, i32, i32, i32
  }
  func.func @transform_13(%arg0: i32) -> (i32, i32, i32, i32) {
    %c0_i32 = arith.constant 0 : i32
    %c0_i32_0 = arith.constant 0 : i32
    %c0_i32_1 = arith.constant 0 : i32
    %c0_i32_2 = arith.constant 0 : i32
    return %arg0, %c0_i32, %c0_i32_0, %c0_i32_1 : i32, i32, i32, i32
  }
}

</mosaic_0001>

<llo_original>
// kernel: vgg_features.1
$region0: #{vgg_features.1}
  #allocation0 [shape = 'u32[]', space=smem, size = 0x4, offset = 0x4, fixed_abs, tag = 'smem constant byte address 0x4 - core index']
  #allocation1 [shape = 'u32[144,128]{1,0:T(1,128)}', space=vmem, size = 0x12000, scoped, tag = 'internal scratch']
  #allocation2 [shape = 'bf16[18,18,64]{2,1,0:T(8,128)(2,1)}', space=vmem, size = 0x1b000, scoped, tag = 'scratch operand']
  #allocation3 [shape = 'bf16[256,576]{1,0:T(8,128)(2,1)}', space=vmem, size = 0x50000, scoped, tag = 'scratch operand']
  #allocation4 [shape = 'bf16[10,10,64]{2,1,0:T(8,128)(2,1)}', space=vmem, size = 0xa000, scoped, tag = 'scratch operand']
  #allocation5 [shape = 'bf16[64,576]{1,0:T(8,128)(2,1)}', space=vmem, size = 0x14000, scoped, tag = 'scratch operand']
  #allocation6 [shape = 'bf16[10,10,128]{2,1,0:T(8,128)(2,1)}', space=vmem, size = 0xa000, scoped, tag = 'scratch operand']
  #allocation7 [shape = 'bf16[64,1152]{1,0:T(8,128)(2,1)}', space=vmem, size = 0x24000, scoped, tag = 'scratch operand']
  #allocation8 [shape = 'bf16[6,6,128]{2,1,0:T(8,128)(2,1)}', space=vmem, size = 0x3000, scoped, tag = 'scratch operand']
  #allocation9 [shape = 'bf16[16,1152]{1,0:T(8,128)(2,1)}', space=vmem, size = 0x9000, scoped, tag = 'scratch operand']
  %s0 = inlined_call_operand.vmem [shape: bf16[2,16,16,32], index: 0, kind: input, shape index: {}]
  %s1 = inlined_call_operand.vmem [shape: bf16[32,64], index: 1, kind: input, shape index: {}]
  %s2 = inlined_call_operand.vmem [shape: f32[1,64], index: 2, kind: input, shape index: {}]
  %s3 = inlined_call_operand.vmem [shape: bf16[576,64], index: 3, kind: input, shape index: {}]
  %s4 = inlined_call_operand.vmem [shape: f32[1,64], index: 4, kind: input, shape index: {}]
  %s5 = inlined_call_operand.vmem [shape: bf16[576,128], index: 5, kind: input, shape index: {}]
  %s6 = inlined_call_operand.vmem [shape: f32[1,128], index: 6, kind: input, shape index: {}]
  %s7 = inlined_call_operand.vmem [shape: bf16[1152,128], index: 7, kind: input, shape index: {}]
  %s8 = inlined_call_operand.vmem [shape: f32[1,128], index: 8, kind: input, shape index: {}]
  %s9 = inlined_call_operand.vmem [shape: bf16[1152,256], index: 9, kind: input, shape index: {}]
  %s10 = inlined_call_operand.vmem [shape: f32[1,256], index: 10, kind: input, shape index: {}]
  %s11 = inlined_call_operand.hbm [shape: f32[2,16,16,64], index: 11, kind: output, shape index: {0}]
  %s12 = inlined_call_operand.hbm [shape: f32[2,8,8,128], index: 12, kind: output, shape index: {1}]
  %s13 = inlined_call_operand.hbm [shape: f32[2,4,4,256], index: 13, kind: output, shape index: {2}]
  %14 = xla_tuple %s11, %s12, %s13
  %s15 = sld [smem:[#allocation0]]
  $region93: #{vgg_features.1} parent=0
    _
  %s17 = ssub.s32 1, %s15
  %s18 = scalar_select 0, %s17, %s15
  $region1: #{vgg_features.1} parent=0
    #allocation10 [shape = 'u8[262144]{0}', space=vmem, size = 0x40000, scoped, tag = 'output window, operand 0']
    #allocation11 [shape = 's32[2]{0}', space=sflag, size = 0x8, scoped, tag = 'scoped memory for vgg_features.1']
    #allocation12 [shape = 'u8[65536]{0}', space=vmem, size = 0x10000, scoped, tag = 'output window, operand 1']
    #allocation13 [shape = 's32[2]{0}', space=sflag, size = 0x8, scoped, tag = 'scoped memory for vgg_features.1']
    #allocation14 [shape = 'u8[32768]{0}', space=vmem, size = 0x8000, scoped, tag = 'output window, operand 2']
    %19 = vsyncpa [#allocation11], 0
    %s20 = scalar_lea.sflag [#allocation11], 1
    %21 = vsyncpa %s20, 0
    %22 = vsyncpa [#allocation13], 0
    %s23 = scalar_lea.sflag [#allocation13], 1
    %24 = vsyncpa %s23, 0
    loop: start=0, step=1, limit=4
    $region2: #{vgg_features.1} parent=1 // loop_pre_header
      _
    $region3: #{vgg_features.1} parent=1 // loop_header
      %s26 = sphi 0, %s30
      %p27 = scmp.ge.s32.totalorder %s26, 4
      %s36 = sphi 0, %s38
      %s39 = sphi 0, %s36
      %s40 = sphi 0, %s39
      %s56 = sphi 0, %s40
      %s60 = sphi 0, %s60
      %s62 = sphi 0, %s60
      %s63 = sphi 0, %s62
      %s77 = sphi 0, %s63
      %s81 = sphi 0, %s81
      %s83 = sphi 0, %s81
      %s84 = sphi 0, %s83
      %s98 = sphi 0, %s84
      %s102 = sphi 0, %s102
      %s104 = sphi 0, %s102
      %s105 = sphi 0, %s104
      %s119 = sphi 0, %s105
      %s123 = sphi 0, %s123
      %s125 = sphi 0, %s123
      %s126 = sphi 0, %s125
      %s140 = sphi 0, %s126
      %s144 = sphi 0, %s144
      %s146 = sphi 0, %s144
      %s147 = sphi 0, %s146
      %s161 = sphi 0, %s147
      %s165 = sphi 0, %s165
      %s167 = sphi 0, %s165
      %s168 = sphi 0, %s167
      %s182 = sphi 0, %s168
      %s186 = sphi 0, %s186
      %s188 = sphi 0, %s186
      %s189 = sphi 0, %s188
      %s203 = sphi 0, %s189
      %s207 = sphi 0, %s207
      %s209 = sphi 0, %s207
      %s210 = sphi 0, %s209
      %s224 = sphi 0, %s210
      %s228 = sphi 0, %s228
      %s230 = sphi 0, %s228
      %s231 = sphi 0, %s230
      %s245 = sphi 0, %s231
      %s249 = sphi 0, %s249
      %s251 = sphi 0, %s249
      %s252 = sphi 0, %s251
      %s266 = sphi 0, %s252
      %s272 = sphi 0, %s274
      %s275 = sphi 0, %s272
      %s276 = sphi 0, %s275
      %s292 = sphi 0, %s276
      %s298 = sphi 0, %s300
      %s301 = sphi 0, %s298
      %s302 = sphi 0, %s301
      %s318 = sphi 0, %s302
      %s324 = sphi 0, %s326
      %s327 = sphi 0, %s324
      %s328 = sphi 0, %s327
      %s344 = sphi 0, %s328
    $region4: #{vgg_features.1} parent=1 // loop_header_branch
      %29 = sbr.rel (%p27) target = $region8
    $region5: #{vgg_features.1} parent=1 // loop_body
      %s31 = ssub.s32 %s26, 1
      %s32 = ssub.s32 %s26, 2
      %s33 = sadd.s32 %s26, 1
      %s34 = ssub.s32 %s26, %s33
      %p35 = scmp.eq.s32.totalorder %s34, 0
      %s37 = sadd.s32 %s36, 1
      %s38 = scalar_select %p35, %s36, %s37
      %p41 = pneg %p35
      %p42 = scmp.eq.s32.totalorder %s26, 1
      %p43 = por %p41, %p42
      %p44 = scmp.ne.s32.totalorder %s36, %s39
      %p45 = scmp.eq.s32.totalorder %s26, 0
      %p46 = por %p44, %p45
      %p47 = scmp.ne.s32.totalorder %s36, %s39
      %p48 = scmp.eq.s32.totalorder %s31, 1
      %p49 = por %p47, %p48
      %p50 = scmp.ne.s32.totalorder %s39, %s40
      %p51 = scmp.eq.s32.totalorder %s31, 0
      %p52 = por %p50, %p51
      %p53 = scmp.ne.s32.totalorder %s39, %s40
      %p54 = scmp.eq.s32.totalorder %s32, 1
      %p55 = por %p53, %p54
      %p57 = scmp.ne.s32.totalorder %s40, %s56
      %p58 = scmp.eq.s32.totalorder %s32, 0
      %p59 = por %p57, %p58
      %s61 = sadd.s32 %s60, 1
      %p64 = scmp.eq.s32.totalorder %s26, 1
      %p65 = scmp.ne.s32.totalorder %s60, %s62
      %p66 = scmp.eq.s32.totalorder %s26, 0
      %p67 = por %p65, %p66
      %p68 = scmp.ne.s32.totalorder %s60, %s62
      %p69 = scmp.eq.s32.totalorder %s31, 1
      %p70 = por %p68, %p69
      %p71 = scmp.ne.s32.totalorder %s62, %s63
      %p72 = scmp.eq.s32.totalorder %s31, 0
      %p73 = por %p71, %p72
      %p74 = scmp.ne.s32.totalorder %s62, %s63
      %p75 = scmp.eq.s32.totalorder %s32, 1
      %p76 = por %p74, %p75
      %p78 = scmp.ne.s32.totalorder %s63, %s77
      %p79 = scmp.eq.s32.totalorder %s32, 0
      %p80 = por %p78, %p79
      %s82 = sadd.s32 %s81, 1
      %p85 = scmp.eq.s32.totalorder %s26, 1
      %p86 = scmp.ne.s32.totalorder %s81, %s83
      %p87 = scmp.eq.s32.totalorder %s26, 0
      %p88 = por %p86, %p87
      %p89 = scmp.ne.s32.totalorder %s81, %s83
      %p90 = scmp.eq.s32.totalorder %s31, 1
      %p91 = por %p89, %p90
      %p92 = scmp.ne.s32.totalorder %s83, %s84
      %p93 = scmp.eq.s32.totalorder %s31, 0
      %p94 = por %p92, %p93
      %p95 = scmp.ne.s32.totalorder %s83, %s84
      %p96 = scmp.eq.s32.totalorder %s32, 1
      %p97 = por %p95, %p96
      %p99 = scmp.ne.s32.totalorder %s84, %s98
      %p100 = scmp.eq.s32.totalorder %s32, 0
      %p101 = por %p99, %p100
      %s103 = sadd.s32 %s102, 1
      %p106 = scmp.eq.s32.totalorder %s26, 1
      %p107 = scmp.ne.s32.totalorder %s102, %s104
      %p108 = scmp.eq.s32.totalorder %s26, 0
      %p109 = por %p107, %p108
      %p110 = scmp.ne.s32.totalorder %s102, %s104
      %p111 = scmp.eq.s32.totalorder %s31, 1
      %p112 = por %p110, %p111
      %p113 = scmp.ne.s32.totalorder %s104, %s105
      %p114 = scmp.eq.s32.totalorder %s31, 0
      %p115 = por %p113, %p114
      %p116 = scmp.ne.s32.totalorder %s104, %s105
      %p117 = scmp.eq.s32.totalorder %s32, 1
      %p118 = por %p116, %p117
      %p120 = scmp.ne.s32.totalorder %s105, %s119
      %p121 = scmp.eq.s32.totalorder %s32, 0
      %p122 = por %p120, %p121
      %s124 = sadd.s32 %s123, 1
      %p127 = scmp.eq.s32.totalorder %s26, 1
      %p128 = scmp.ne.s32.totalorder %s123, %s125
      %p129 = scmp.eq.s32.totalorder %s26, 0
      %p130 = por %p128, %p129
      %p131 = scmp.ne.s32.totalorder %s123, %s125
      %p132 = scmp.eq.s32.totalorder %s31, 1
      %p133 = por %p131, %p132
      %p134 = scmp.ne.s32.totalorder %s125, %s126
      %p135 = scmp.eq.s32.totalorder %s31, 0
      %p136 = por %p134, %p135
      %p137 = scmp.ne.s32.totalorder %s125, %s126
      %p138 = scmp.eq.s32.totalorder %s32, 1
      %p139 = por %p137, %p138
      %p141 = scmp.ne.s32.totalorder %s126, %s140
      %p142 = scmp.eq.s32.totalorder %s32, 0
      %p143 = por %p141, %p142
      %s145 = sadd.s32 %s144, 1
      %p148 = scmp.eq.s32.totalorder %s26, 1
      %p149 = scmp.ne.s32.totalorder %s144, %s146
      %p150 = scmp.eq.s32.totalorder %s26, 0
      %p151 = por %p149, %p150
      %p152 = scmp.ne.s32.totalorder %s144, %s146
      %p153 = scmp.eq.s32.totalorder %s31, 1
      %p154 = por %p152, %p153
      %p155 = scmp.ne.s32.totalorder %s146, %s147
      %p156 = scmp.eq.s32.totalorder %s31, 0
      %p157 = por %p155, %p156
      %p158 = scmp.ne.s32.totalorder %s146, %s147
      %p159 = scmp.eq.s32.totalorder %s32, 1
      %p160 = por %p158, %p159
      %p162 = scmp.ne.s32.totalorder %s147, %s161
      %p163 = scmp.eq.s32.totalorder %s32, 0
      %p164 = por %p162, %p163
      %s166 = sadd.s32 %s165, 1
      %p169 = scmp.eq.s32.totalorder %s26, 1
      %p170 = scmp.ne.s32.totalorder %s165, %s167
      %p171 = scmp.eq.s32.totalorder %s26, 0
      %p172 = por %p170, %p171
      %p173 = scmp.ne.s32.totalorder %s165, %s167
      %p174 = scmp.eq.s32.totalorder %s31, 1
      %p175 = por %p173, %p174
      %p176 = scmp.ne.s32.totalorder %s167, %s168
      %p177 = scmp.eq.s32.totalorder %s31, 0
      %p178 = por %p176, %p177
      %p179 = scmp.ne.s32.totalorder %s167, %s168
      %p180 = scmp.eq.s32.totalorder %s32, 1
      %p181 = por %p179, %p180
      %p183 = scmp.ne.s32.totalorder %s168, %s182
      %p184 = scmp.eq.s32.totalorder %s32, 0
      %p185 = por %p183, %p184
      %s187 = sadd.s32 %s186, 1
      %p190 = scmp.eq.s32.totalorder %s26, 1
      %p191 = scmp.ne.s32.totalorder %s186, %s188
      %p192 = scmp.eq.s32.totalorder %s26, 0
      %p193 = por %p191, %p192
      %p194 = scmp.ne.s32.totalorder %s186, %s188
      %p195 = scmp.eq.s32.totalorder %s31, 1
      %p196 = por %p194, %p195
      %p197 = scmp.ne.s32.totalorder %s188, %s189
      %p198 = scmp.eq.s32.totalorder %s31, 0
      %p199 = por %p197, %p198
      %p200 = scmp.ne.s32.totalorder %s188, %s189
      %p201 = scmp.eq.s32.totalorder %s32, 1
      %p202 = por %p200, %p201
      %p204 = scmp.ne.s32.totalorder %s189, %s203
      %p205 = scmp.eq.s32.totalorder %s32, 0
      %p206 = por %p204, %p205
      %s208 = sadd.s32 %s207, 1
      %p211 = scmp.eq.s32.totalorder %s26, 1
      %p212 = scmp.ne.s32.totalorder %s207, %s209
      %p213 = scmp.eq.s32.totalorder %s26, 0
      %p214 = por %p212, %p213
      %p215 = scmp.ne.s32.totalorder %s207, %s209
      %p216 = scmp.eq.s32.totalorder %s31, 1
      %p217 = por %p215, %p216
      %p218 = scmp.ne.s32.totalorder %s209, %s210
      %p219 = scmp.eq.s32.totalorder %s31, 0
      %p220 = por %p218, %p219
      %p221 = scmp.ne.s32.totalorder %s209, %s210
      %p222 = scmp.eq.s32.totalorder %s32, 1
      %p223 = por %p221, %p222
      %p225 = scmp.ne.s32.totalorder %s210, %s224
      %p226 = scmp.eq.s32.totalorder %s32, 0
      %p227 = por %p225, %p226
      %s229 = sadd.s32 %s228, 1
      %p232 = scmp.eq.s32.totalorder %s26, 1
      %p233 = scmp.ne.s32.totalorder %s228, %s230
      %p234 = scmp.eq.s32.totalorder %s26, 0
      %p235 = por %p233, %p234
      %p236 = scmp.ne.s32.totalorder %s228, %s230
      %p237 = scmp.eq.s32.totalorder %s31, 1
      %p238 = por %p236, %p237
      %p239 = scmp.ne.s32.totalorder %s230, %s231
      %p240 = scmp.eq.s32.totalorder %s31, 0
      %p241 = por %p239, %p240
      %p242 = scmp.ne.s32.totalorder %s230, %s231
      %p243 = scmp.eq.s32.totalorder %s32, 1
      %p244 = por %p242, %p243
      %p246 = scmp.ne.s32.totalorder %s231, %s245
      %p247 = scmp.eq.s32.totalorder %s32, 0
      %p248 = por %p246, %p247
      %s250 = sadd.s32 %s249, 1
      %p253 = scmp.eq.s32.totalorder %s26, 1
      %p254 = scmp.ne.s32.totalorder %s249, %s251
      %p255 = scmp.eq.s32.totalorder %s26, 0
      %p256 = por %p254, %p255
      %p257 = scmp.ne.s32.totalorder %s249, %s251
      %p258 = scmp.eq.s32.totalorder %s31, 1
      %p259 = por %p257, %p258
      %p260 = scmp.ne.s32.totalorder %s251, %s252
      %p261 = scmp.eq.s32.totalorder %s31, 0
      %p262 = por %p260, %p261
      %p263 = scmp.ne.s32.totalorder %s251, %s252
      %p264 = scmp.eq.s32.totalorder %s32, 1
      %p265 = por %p263, %p264
      %p267 = scmp.ne.s32.totalorder %s252, %s266
      %p268 = scmp.eq.s32.totalorder %s32, 0
      %p269 = por %p267, %p268
      %s270 = ssub.s32 %s26, %s33
      %p271 = scmp.eq.s32.totalorder %s270, 0
      %s273 = sadd.s32 %s272, 1
      %s274 = scalar_select %p271, %s272, %s273
      %p277 = pneg %p271
      %p278 = scmp.eq.s32.totalorder %s26, 1
      %p279 = por %p277, %p278
      %p280 = scmp.ne.s32.totalorder %s272, %s275
      %p281 = scmp.eq.s32.totalorder %s26, 0
      %p282 = por %p280, %p281
      %p283 = scmp.ne.s32.totalorder %s272, %s275
      %p284 = scmp.eq.s32.totalorder %s31, 1
      %p285 = por %p283, %p284
      %p286 = scmp.ne.s32.totalorder %s275, %s276
      %p287 = scmp.eq.s32.totalorder %s31, 0
      %p288 = por %p286, %p287
      %p289 = scmp.ne.s32.totalorder %s275, %s276
      %p290 = scmp.eq.s32.totalorder %s32, 1
      %p291 = por %p289, %p290
      %p293 = scmp.ne.s32.totalorder %s276, %s292
      %p294 = scmp.eq.s32.totalorder %s32, 0
      %p295 = por %p293, %p294
      %s296 = ssub.s32 %s26, %s33
      %p297 = scmp.eq.s32.totalorder %s296, 0
      %s299 = sadd.s32 %s298, 1
      %s300 = scalar_select %p297, %s298, %s299
      %p303 = pneg %p297
      %p304 = scmp.eq.s32.totalorder %s26, 1
      %p305 = por %p303, %p304
      %p306 = scmp.ne.s32.totalorder %s298, %s301
      %p307 = scmp.eq.s32.totalorder %s26, 0
      %p308 = por %p306, %p307
      %p309 = scmp.ne.s32.totalorder %s298, %s301
      %p310 = scmp.eq.s32.totalorder %s31, 1
      %p311 = por %p309, %p310
      %p312 = scmp.ne.s32.totalorder %s301, %s302
      %p313 = scmp.eq.s32.totalorder %s31, 0
      %p314 = por %p312, %p313
      %p315 = scmp.ne.s32.totalorder %s301, %s302
      %p316 = scmp.eq.s32.totalorder %s32, 1
      %p317 = por %p315, %p316
      %p319 = scmp.ne.s32.totalorder %s302, %s318
      %p320 = scmp.eq.s32.totalorder %s32, 0
      %p321 = por %p319, %p320
      %s322 = ssub.s32 %s26, %s33
      %p323 = scmp.eq.s32.totalorder %s322, 0
      %s325 = sadd.s32 %s324, 1
      %s326 = scalar_select %p323, %s324, %s325
      %p329 = pneg %p323
      %p330 = scmp.eq.s32.totalorder %s26, 1
      %p331 = por %p329, %p330
      %p332 = scmp.ne.s32.totalorder %s324, %s327
      %p333 = scmp.eq.s32.totalorder %s26, 0
      %p334 = por %p332, %p333
      %p335 = scmp.ne.s32.totalorder %s324, %s327
      %p336 = scmp.eq.s32.totalorder %s31, 1
      %p337 = por %p335, %p336
      %p338 = scmp.ne.s32.totalorder %s327, %s328
      %p339 = scmp.eq.s32.totalorder %s31, 0
      %p340 = por %p338, %p339
      %p341 = scmp.ne.s32.totalorder %s327, %s328
      %p342 = scmp.eq.s32.totalorder %s32, 1
      %p343 = por %p341, %p342
      %p345 = scmp.ne.s32.totalorder %s328, %s344
      %p346 = scmp.eq.s32.totalorder %s32, 0
      %p347 = por %p345, %p346
      %p348 = scmp.le.s32.totalorder 1, %s26
      %p349 = scmp.lt.s32.totalorder %s26, 3
      %p350 = pnand %p348, %p349
      %p351 = pneg %p350
      // Predicated region
      $region9: #{vgg_features.1} parent=5 // pred_check
        _
      $region10: #{vgg_features.1} parent=5 // pred_check_branch
        %353 = sbr.rel (%p350) target = $region12
      $region11: #{vgg_features.1} parent=5 // pred_region
        %s354 = ssub.s32 %s26, 1
        // Predicated region
        $region13: #{vgg_features.1} parent=11 // pred_check
          %p355 = pneg %p73
        $region14: #{vgg_features.1} parent=11 // pred_check_branch
          %357 = sbr.rel (%p355) target = $region16
        $region15: #{vgg_features.1} parent=11 // pred_region
          _
        $region16: #{vgg_features.1} parent=11 // pred_fallthru
          _
        // Predicated region
        $region17: #{vgg_features.1} parent=11 // pred_check
          %p358 = pneg %p94
        $region18: #{vgg_features.1} parent=11 // pred_check_branch
          %360 = sbr.rel (%p358) target = $region20
        $region19: #{vgg_features.1} parent=11 // pred_region
          _
        $region20: #{vgg_features.1} parent=11 // pred_fallthru
          _
        // Predicated region
        $region21: #{vgg_features.1} parent=11 // pred_check
          %p361 = pneg %p115
        $region22: #{vgg_features.1} parent=11 // pred_check_branch
          %363 = sbr.rel (%p361) target = $region24
        $region23: #{vgg_features.1} parent=11 // pred_region
          _
        $region24: #{vgg_features.1} parent=11 // pred_fallthru
          _
        // Predicated region
        $region25: #{vgg_features.1} parent=11 // pred_check
          %p364 = pneg %p136
        $region26: #{vgg_features.1} parent=11 // pred_check_branch
          %366 = sbr.rel (%p364) target = $region28
        $region27: #{vgg_features.1} parent=11 // pred_region
          _
        $region28: #{vgg_features.1} parent=11 // pred_fallthru
          _
        // Predicated region
        $region29: #{vgg_features.1} parent=11 // pred_check
          %p367 = pneg %p157
        $region30: #{vgg_features.1} parent=11 // pred_check_branch
          %369 = sbr.rel (%p367) target = $region32
        $region31: #{vgg_features.1} parent=11 // pred_region
          _
        $region32: #{vgg_features.1} parent=11 // pred_fallthru
          _
        // Predicated region
        $region33: #{vgg_features.1} parent=11 // pred_check
          %p370 = pneg %p178
        $region34: #{vgg_features.1} parent=11 // pred_check_branch
          %372 = sbr.rel (%p370) target = $region36
        $region35: #{vgg_features.1} parent=11 // pred_region
          _
        $region36: #{vgg_features.1} parent=11 // pred_fallthru
          _
        // Predicated region
        $region37: #{vgg_features.1} parent=11 // pred_check
          %p373 = pneg %p199
        $region38: #{vgg_features.1} parent=11 // pred_check_branch
          %375 = sbr.rel (%p373) target = $region40
        $region39: #{vgg_features.1} parent=11 // pred_region
          _
        $region40: #{vgg_features.1} parent=11 // pred_fallthru
          _
        // Predicated region
        $region41: #{vgg_features.1} parent=11 // pred_check
          %p376 = pneg %p220
        $region42: #{vgg_features.1} parent=11 // pred_check_branch
          %378 = sbr.rel (%p376) target = $region44
        $region43: #{vgg_features.1} parent=11 // pred_region
          _
        $region44: #{vgg_features.1} parent=11 // pred_fallthru
          _
        // Predicated region
        $region45: #{vgg_features.1} parent=11 // pred_check
          %p379 = pneg %p241
        $region46: #{vgg_features.1} parent=11 // pred_check_branch
          %381 = sbr.rel (%p379) target = $region48
        $region47: #{vgg_features.1} parent=11 // pred_region
          _
        $region48: #{vgg_features.1} parent=11 // pred_fallthru
          _
        // Predicated region
        $region49: #{vgg_features.1} parent=11 // pred_check
          %p382 = pneg %p262
        $region50: #{vgg_features.1} parent=11 // pred_check_branch
          %384 = sbr.rel (%p382) target = $region52
        $region51: #{vgg_features.1} parent=11 // pred_region
          _
        $region52: #{vgg_features.1} parent=11 // pred_fallthru
          _
      $region12: #{vgg_features.1} parent=5 // pred_fallthru
        _
      %p385 = scmp.lt.s32.totalorder %s26, 2
      // Predicated region
      $region53: #{vgg_features.1} parent=5 // pred_check
        %p386 = pneg %p385
      $region54: #{vgg_features.1} parent=5 // pred_check_branch
        %388 = sbr.rel (%p386) target = $region56
      $region55: #{vgg_features.1} parent=5 // pred_region
        // Predicated region
        $region57: #{vgg_features.1} parent=55 // pred_check
          %p389 = pneg %p46
        $region58: #{vgg_features.1} parent=55 // pred_check_branch
          %391 = sbr.rel (%p389) target = $region60
        $region59: #{vgg_features.1} parent=55 // pred_region
          %p392 = scmp.lt.s32.totalorder %s26, 1
          %s393 = scalar_select %p392, %s26, 1
          %s394 = smul.addr %s393, 32
          %s395 = smul.addr %s394, 4
          %s396 = scalar_lea.vmem %s0, %s395
        $region60: #{vgg_features.1} parent=55 // pred_fallthru
          _
      $region56: #{vgg_features.1} parent=5 // pred_fallthru
        _
      %p397 = scmp.le.s32.totalorder 1, %s26
      %p398 = scmp.lt.s32.totalorder %s26, 3
      %p399 = pnand %p397, %p398
      %p400 = pneg %p399
      // Predicated region
      $region61: #{vgg_features.1} parent=5 // pred_check
        _
      $region62: #{vgg_features.1} parent=5 // pred_check_branch
        %402 = sbr.rel (%p399) target = $region64
      $region63: #{vgg_features.1} parent=5 // pred_region
        %s403 = ssub.s32 %s26, 1
        %p404 = scmp.lt.s32.totalorder %s31, 1
        %s405 = scalar_select %p404, %s31, 1
        %s406 = smul.addr %s405, 32
        %s407 = smul.addr %s406, 4
        %s408 = scalar_lea.vmem %s0, %s407
        %p409 = pneg %p52
        %p410 = pneg %p49
        %p411 = pneg %p73
        %p412 = pneg %p70
        %p413 = pneg %p94
        %p414 = pneg %p91
        %p415 = pneg %p115
        %p416 = pneg %p112
        %p417 = pneg %p136
        %p418 = pneg %p133
        %p419 = pneg %p157
        %p420 = pneg %p154
        %p421 = pneg %p178
        %p422 = pneg %p175
        %p423 = pneg %p199
        %p424 = pneg %p196
        %p425 = pneg %p220
        %p426 = pneg %p217
        %p427 = pneg %p241
        %p428 = pneg %p238
        %p429 = pneg %p262
        %p430 = pneg %p259
        %p431 = pneg %p288
        %p432 = pneg %p285
        %s433 = sand.u32 %s275, 1
        %s434 = scalar_lea.sflag [#allocation11], %s433
        %s435 = sand.u32 %s275, 1
        %s436 = smul.addr %s435, 256
        %s437 = scalar_lea.vmem [#allocation10], %s436
        %p438 = pneg %p314
        %p439 = pneg %p311
        %s440 = sand.u32 %s31, 1
        %s441 = scalar_lea.sflag [#allocation13], %s440
        %s442 = sand.u32 %s301, 1
        %s443 = smul.addr %s442, 64
        %s444 = scalar_lea.vmem [#allocation12], %s443
        %p445 = pneg %p340
        %p446 = pneg %p337
        %s447 = sand.u32 %s31, 1
        %s448 = scalar_lea.sflag [#allocation13], %s447
        %s449 = sand.u32 %s327, 1
        %s450 = smul.addr %s449, 32
        %s451 = scalar_lea.vmem [#allocation14], %s450
        %p452 = scmp.lt.s32.totalorder %s31, 1
        %s453 = scalar_select %p452, %s31, 1
        %s454 = smul.addr %s453, 32
        %s455 = smul.addr %s454, 4
        %s456 = scalar_lea.vmem %s0, %s455
        %v458 = vld [vmem:[%s456] sm:$0xf]
        %v459 = vld [vmem:[%s456 + $0x4] sm:$0xf]
        %v460 = vld [vmem:[%s456 + $0x8] sm:$0xf]
        %v461 = vld [vmem:[%s456 + $0xc] sm:$0xf]
        %v462 = vld [vmem:[%s456 + $0x10] sm:$0xf]
        %v463 = vld [vmem:[%s456 + $0x14] sm:$0xf]
        %v464 = vld [vmem:[%s456 + $0x18] sm:$0xf]
        %v465 = vld [vmem:[%s456 + $0x1c] sm:$0xf]
        %v466 = vld [vmem:[%s456 + $0x20] sm:$0xf]
        %v467 = vld [vmem:[%s456 + $0x24] sm:$0xf]
        %v468 = vld [vmem:[%s456 + $0x28] sm:$0xf]
        %v469 = vld [vmem:[%s456 + $0x2c] sm:$0xf]
        %v470 = vld [vmem:[%s456 + $0x30] sm:$0xf]
        %v471 = vld [vmem:[%s456 + $0x34] sm:$0xf]
        %v472 = vld [vmem:[%s456 + $0x38] sm:$0xf]
        %v473 = vld [vmem:[%s456 + $0x3c] sm:$0xf]
        %v474 = vld [vmem:[%s456 + $0x40] sm:$0xf]
        %v475 = vld [vmem:[%s456 + $0x44] sm:$0xf]
        %v476 = vld [vmem:[%s456 + $0x48] sm:$0xf]
        %v477 = vld [vmem:[%s456 + $0x4c] sm:$0xf]
        %v478 = vld [vmem:[%s456 + $0x50] sm:$0xf]
        %v479 = vld [vmem:[%s456 + $0x54] sm:$0xf]
        %v480 = vld [vmem:[%s456 + $0x58] sm:$0xf]
        %v481 = vld [vmem:[%s456 + $0x5c] sm:$0xf]
        %v482 = vld [vmem:[%s456 + $0x60] sm:$0xf]
        %v483 = vld [vmem:[%s456 + $0x64] sm:$0xf]
        %v484 = vld [vmem:[%s456 + $0x68] sm:$0xf]
        %v485 = vld [vmem:[%s456 + $0x6c] sm:$0xf]
        %v486 = vld [vmem:[%s456 + $0x70] sm:$0xf]
        %v487 = vld [vmem:[%s456 + $0x74] sm:$0xf]
        %v488 = vld [vmem:[%s456 + $0x78] sm:$0xf]
        %v489 = vld [vmem:[%s456 + $0x7c] sm:$0xf]
        %v490 = vld [vmem:[%s1] sm:$0xf]
        %v491 = vld [vmem:[%s1 + $0x4] sm:$0xf]
        %v492 = vld [vmem:[%s1 + $0x8] sm:$0xf]
        %v493 = vld [vmem:[%s1 + $0xc] sm:$0xf]
        %v494 = vld [vmem:[%s2] sm:$0x1]
        %v496 = vlaneseq
        %v497 = vshrl.u32 %v496, 7
        %v498 = vsub.s32 0, %v497
        %v499 = vrot.slane %v494, %v498
        %v533 = vunpack.c.l.b16 %v458
        %v534 = vunpack.c.l.b16 %v459
        %v535 = vunpack.c.l.b16 %v460
        %v536 = vunpack.c.l.b16 %v461
        %v537 = vunpack.c.l.b16 %v462
        %v538 = vunpack.c.l.b16 %v463
        %v539 = vunpack.c.l.b16 %v464
        %v540 = vunpack.c.l.b16 %v465
        %v541 = vunpack.c.l.b16 %v466
        %v542 = vunpack.c.l.b16 %v467
        %v543 = vunpack.c.l.b16 %v468
        %v544 = vunpack.c.l.b16 %v469
        %v545 = vunpack.c.l.b16 %v470
        %v546 = vunpack.c.l.b16 %v471
        %v547 = vunpack.c.l.b16 %v472
        %v548 = vunpack.c.l.b16 %v473
        %v549 = vunpack.c.l.b16 %v474
        %v550 = vunpack.c.l.b16 %v475
        %v551 = vunpack.c.l.b16 %v476
        %v552 = vunpack.c.l.b16 %v477
        %v553 = vunpack.c.l.b16 %v478
        %v554 = vunpack.c.l.b16 %v479
        %v555 = vunpack.c.l.b16 %v480
        %v556 = vunpack.c.l.b16 %v481
        %v557 = vunpack.c.l.b16 %v482
        %v558 = vunpack.c.l.b16 %v483
        %v559 = vunpack.c.l.b16 %v484
        %v560 = vunpack.c.l.b16 %v485
        %v561 = vunpack.c.l.b16 %v486
        %v562 = vunpack.c.l.b16 %v487
        %v563 = vunpack.c.l.b16 %v488
        %v564 = vunpack.c.l.b16 %v489
        %v565 = vpack.c.b16 %v534, %v533
        %v566 = vpack.c.b16 %v536, %v535
        %v567 = vpack.c.b16 %v538, %v537
        %v568 = vpack.c.b16 %v540, %v539
        %v569 = vpack.c.b16 %v542, %v541
        %v570 = vpack.c.b16 %v544, %v543
        %v571 = vpack.c.b16 %v546, %v545
        %v572 = vpack.c.b16 %v548, %v547
        %v573 = vpack.c.b16 %v550, %v549
        %v574 = vpack.c.b16 %v552, %v551
        %v575 = vpack.c.b16 %v554, %v553
        %v576 = vpack.c.b16 %v556, %v555
        %v577 = vpack.c.b16 %v558, %v557
        %v578 = vpack.c.b16 %v560, %v559
        %v579 = vpack.c.b16 %v562, %v561
        %v580 = vpack.c.b16 %v564, %v563
        %v585 = vunpack.c.l.b16 %v490
        %v586 = vunpack.c.l.b16 %v491
        %v587 = vunpack.c.l.b16 %v492
        %v588 = vunpack.c.l.b16 %v493
        %v589 = vpack.c.b16 %v586, %v585
        %v590 = vpack.c.b16 %v588, %v587
        %vm593 = vcmask 261120
        %v595 = vsel %vm593, %v565, 0
        %v598 = vsel %vm593, %v566, 0
        %v601 = vsel %vm593, %v567, 0
        %v604 = vsel %vm593, %v568, 0
        %v607 = vsel %vm593, %v569, 0
        %v610 = vsel %vm593, %v570, 0
        %v613 = vsel %vm593, %v571, 0
        %v616 = vsel %vm593, %v572, 0
        %v619 = vsel %vm593, %v573, 0
        %v622 = vsel %vm593, %v574, 0
        %v625 = vsel %vm593, %v575, 0
        %v628 = vsel %vm593, %v576, 0
        %v631 = vsel %vm593, %v577, 0
        %v634 = vsel %vm593, %v578, 0
        %v637 = vsel %vm593, %v579, 0
        %v640 = vsel %vm593, %v580, 0
        %642 = vmatprep.subr.bf16.mxu0 0
        %643 = vmatpush1.bf16.msra.mxu0 0
        %644 = vmatprep.subr.bf16.mxu0 0
        %645 = vmatpush1.bf16.msra.mxu0 0
        %646 = vmatprep.subr.bf16.mxu0 0
        %647 = vmatpush1.bf16.msra.mxu0 0
        %648 = vmatprep.subr.bf16.mxu0 0
        %649 = vmatpush1.bf16.msra.mxu0 0
        %650 = vmatprep.subr.bf16.mxu0 0
        %651 = vmatpush1.bf16.msra.mxu0 0
        %652 = vmatprep.subr.bf16.mxu0 0
        %653 = vmatpush1.bf16.msra.mxu0 0
        %654 = vmatprep.subr.bf16.mxu0 0
        %655 = vmatpush1.bf16.msra.mxu0 %v590
        %656 = vmatprep.subr.bf16.mxu0 0
        %657 = vmatpush1.bf16.msra.mxu0 %v589
        %658 = vmatprep.subr.bf16.mxu0 0
        %659 = vmatpush2.bf16.msra.mxu0 0
        %660 = vmatprep.subr.bf16.mxu0 0
        %661 = vmatpush2.bf16.msra.mxu0 0
        %662 = vmatprep.subr.bf16.mxu0 0
        %663 = vmatpush2.bf16.msra.mxu0 0
        %664 = vmatprep.subr.bf16.mxu0 0
        %665 = vmatpush2.bf16.msra.mxu0 0
        %666 = vmatprep.subr.bf16.mxu0 0
        %667 = vmatpush2.bf16.msra.mxu0 0
        %668 = vmatprep.subr.bf16.mxu0 0
        %669 = vmatpush2.bf16.msra.mxu0 0
        %670 = vmatprep.subr.bf16.mxu0 0
        %671 = vmatpush2.bf16.msra.mxu0 0
        %672 = vmatprep.subr.bf16.mxu0 0
        %673 = vmatpush2.bf16.msra.mxu0 0
        %674 = vmatprep.mubr.bf16.mxu0 0
        %675 = vmatmul.mubr.bf16.gmra.mxu0 %v595
        %v676 = vpop.f32.mrf.mxu0
        %v677 = vadd.f32 %v499, %v676
        %v678 = vpop.f32.mrf.mxu0
        %v679 = vpop.f32.mrf.mxu0
        %v680 = vadd.f32 %v499, %v679
        %v681 = vpop.f32.mrf.mxu0
        %682 = vmatprep.mubr.bf16.mxu0 0
        %683 = vmatmul.mubr.bf16.gmra.mxu0 %v598
        %v684 = vpop.f32.mrf.mxu0
        %v685 = vadd.f32 %v499, %v684
        %v686 = vpop.f32.mrf.mxu0
        %v687 = vpop.f32.mrf.mxu0
        %v688 = vadd.f32 %v499, %v687
        %v689 = vpop.f32.mrf.mxu0
        %690 = vmatprep.mubr.bf16.mxu0 0
        %691 = vmatmul.mubr.bf16.gmra.mxu0 %v601
        %v692 = vpop.f32.mrf.mxu0
        %v693 = vadd.f32 %v499, %v692
        %v694 = vpop.f32.mrf.mxu0
        %v695 = vpop.f32.mrf.mxu0
        %v696 = vadd.f32 %v499, %v695
        %v697 = vpop.f32.mrf.mxu0
        %698 = vmatprep.mubr.bf16.mxu0 0
        %699 = vmatmul.mubr.bf16.gmra.mxu0 %v604
        %v700 = vpop.f32.mrf.mxu0
        %v701 = vadd.f32 %v499, %v700
        %v702 = vpop.f32.mrf.mxu0
        %v703 = vpop.f32.mrf.mxu0
        %v704 = vadd.f32 %v499, %v703
        %v705 = vpop.f32.mrf.mxu0
        %706 = vmatprep.mubr.bf16.mxu0 0
        %707 = vmatmul.mubr.bf16.gmra.mxu0 %v607
        %v708 = vpop.f32.mrf.mxu0
        %v709 = vadd.f32 %v499, %v708
        %v710 = vpop.f32.mrf.mxu0
        %v711 = vpop.f32.mrf.mxu0
        %v712 = vadd.f32 %v499, %v711
        %v713 = vpop.f32.mrf.mxu0
        %714 = vmatprep.mubr.bf16.mxu0 0
        %715 = vmatmul.mubr.bf16.gmra.mxu0 %v610
        %v716 = vpop.f32.mrf.mxu0
        %v717 = vadd.f32 %v499, %v716
        %v718 = vpop.f32.mrf.mxu0
        %v719 = vpop.f32.mrf.mxu0
        %v720 = vadd.f32 %v499, %v719
        %v721 = vpop.f32.mrf.mxu0
        %722 = vmatprep.mubr.bf16.mxu0 0
        %723 = vmatmul.mubr.bf16.gmra.mxu0 %v613
        %v724 = vpop.f32.mrf.mxu0
        %v725 = vadd.f32 %v499, %v724
        %v726 = vpop.f32.mrf.mxu0
        %v727 = vpop.f32.mrf.mxu0
        %v728 = vadd.f32 %v499, %v727
        %v729 = vpop.f32.mrf.mxu0
        %730 = vmatprep.mubr.bf16.mxu0 0
        %731 = vmatmul.mubr.bf16.gmra.mxu0 %v616
        %v732 = vpop.f32.mrf.mxu0
        %v733 = vadd.f32 %v499, %v732
        %v734 = vpop.f32.mrf.mxu0
        %v735 = vpop.f32.mrf.mxu0
        %v736 = vadd.f32 %v499, %v735
        %v737 = vpop.f32.mrf.mxu0
        %738 = vmatprep.mubr.bf16.mxu0 0
        %739 = vmatmul.mubr.bf16.gmra.mxu0 %v619
        %v740 = vpop.f32.mrf.mxu0
        %v741 = vadd.f32 %v499, %v740
        %v742 = vpop.f32.mrf.mxu0
        %v743 = vpop.f32.mrf.mxu0
        %v744 = vadd.f32 %v499, %v743
        %v745 = vpop.f32.mrf.mxu0
        %746 = vmatprep.mubr.bf16.mxu0 0
        %747 = vmatmul.mubr.bf16.gmra.mxu0 %v622
        %v748 = vpop.f32.mrf.mxu0
        %v749 = vadd.f32 %v499, %v748
        %v750 = vpop.f32.mrf.mxu0
        %v751 = vpop.f32.mrf.mxu0
        %v752 = vadd.f32 %v499, %v751
        %v753 = vpop.f32.mrf.mxu0
        %754 = vmatprep.mubr.bf16.mxu0 0
        %755 = vmatmul.mubr.bf16.gmra.mxu0 %v625
        %v756 = vpop.f32.mrf.mxu0
        %v757 = vadd.f32 %v499, %v756
        %v758 = vpop.f32.mrf.mxu0
        %v759 = vpop.f32.mrf.mxu0
        %v760 = vadd.f32 %v499, %v759
        %v761 = vpop.f32.mrf.mxu0
        %762 = vmatprep.mubr.bf16.mxu0 0
        %763 = vmatmul.mubr.bf16.gmra.mxu0 %v628
        %v764 = vpop.f32.mrf.mxu0
        %v765 = vadd.f32 %v499, %v764
        %v766 = vpop.f32.mrf.mxu0
        %v767 = vpop.f32.mrf.mxu0
        %v768 = vadd.f32 %v499, %v767
        %v769 = vpop.f32.mrf.mxu0
        %770 = vmatprep.mubr.bf16.mxu0 0
        %771 = vmatmul.mubr.bf16.gmra.mxu0 %v631
        %v772 = vpop.f32.mrf.mxu0
        %v773 = vadd.f32 %v499, %v772
        %v774 = vpop.f32.mrf.mxu0
        %v775 = vpop.f32.mrf.mxu0
        %v776 = vadd.f32 %v499, %v775
        %v777 = vpop.f32.mrf.mxu0
        %778 = vmatprep.mubr.bf16.mxu0 0
        %779 = vmatmul.mubr.bf16.gmra.mxu0 %v634
        %v780 = vpop.f32.mrf.mxu0
        %v781 = vadd.f32 %v499, %v780
        %v782 = vpop.f32.mrf.mxu0
        %v783 = vpop.f32.mrf.mxu0
        %v784 = vadd.f32 %v499, %v783
        %v785 = vpop.f32.mrf.mxu0
        %786 = vmatprep.mubr.bf16.mxu0 0
        %787 = vmatmul.mubr.bf16.gmra.mxu0 %v637
        %v788 = vpop.f32.mrf.mxu0
        %v789 = vadd.f32 %v499, %v788
        %v790 = vpop.f32.mrf.mxu0
        %v791 = vpop.f32.mrf.mxu0
        %v792 = vadd.f32 %v499, %v791
        %v793 = vpop.f32.mrf.mxu0
        %794 = vmatprep.mubr.bf16.mxu0 0
        %795 = vmatmul.mubr.bf16.gmra.mxu0 %v640
        %v796 = vpop.f32.mrf.mxu0
        %v797 = vadd.f32 %v499, %v796
        %v798 = vpop.f32.mrf.mxu0
        %v799 = vpop.f32.mrf.mxu0
        %v800 = vadd.f32 %v499, %v799
        %v801 = vpop.f32.mrf.mxu0
        %802 = vdwg.mxu0
        %vm803 = vcmask 523264
        %804 = vst.msk [vmem:[%s437] sm:$0xff] %vm803, %v677
        %805 = vst.msk [vmem:[%s437 + $0x8] sm:$0xff] %vm803, %v680
        %806 = vst.msk [vmem:[%s437 + $0x10] sm:$0xff] %vm803, %v685
        %807 = vst.msk [vmem:[%s437 + $0x18] sm:$0xff] %vm803, %v688
        %808 = vst.msk [vmem:[%s437 + $0x20] sm:$0xff] %vm803, %v693
        %809 = vst.msk [vmem:[%s437 + $0x28] sm:$0xff] %vm803, %v696
        %810 = vst.msk [vmem:[%s437 + $0x30] sm:$0xff] %vm803, %v701
        %811 = vst.msk [vmem:[%s437 + $0x38] sm:$0xff] %vm803, %v704
        %812 = vst.msk [vmem:[%s437 + $0x40] sm:$0xff] %vm803, %v709
        %813 = vst.msk [vmem:[%s437 + $0x48] sm:$0xff] %vm803, %v712
        %814 = vst.msk [vmem:[%s437 + $0x50] sm:$0xff] %vm803, %v717
        %815 = vst.msk [vmem:[%s437 + $0x58] sm:$0xff] %vm803, %v720
        %816 = vst.msk [vmem:[%s437 + $0x60] sm:$0xff] %vm803, %v725
        %817 = vst.msk [vmem:[%s437 + $0x68] sm:$0xff] %vm803, %v728
        %818 = vst.msk [vmem:[%s437 + $0x70] sm:$0xff] %vm803, %v733
        %819 = vst.msk [vmem:[%s437 + $0x78] sm:$0xff] %vm803, %v736
        %820 = vst.msk [vmem:[%s437 + $0x80] sm:$0xff] %vm803, %v741
        %821 = vst.msk [vmem:[%s437 + $0x88] sm:$0xff] %vm803, %v744
        %822 = vst.msk [vmem:[%s437 + $0x90] sm:$0xff] %vm803, %v749
        %823 = vst.msk [vmem:[%s437 + $0x98] sm:$0xff] %vm803, %v752
        %824 = vst.msk [vmem:[%s437 + $0xa0] sm:$0xff] %vm803, %v757
        %825 = vst.msk [vmem:[%s437 + $0xa8] sm:$0xff] %vm803, %v760
        %826 = vst.msk [vmem:[%s437 + $0xb0] sm:$0xff] %vm803, %v765
        %827 = vst.msk [vmem:[%s437 + $0xb8] sm:$0xff] %vm803, %v768
        %828 = vst.msk [vmem:[%s437 + $0xc0] sm:$0xff] %vm803, %v773
        %829 = vst.msk [vmem:[%s437 + $0xc8] sm:$0xff] %vm803, %v776
        %830 = vst.msk [vmem:[%s437 + $0xd0] sm:$0xff] %vm803, %v781
        %831 = vst.msk [vmem:[%s437 + $0xd8] sm:$0xff] %vm803, %v784
        %832 = vst.msk [vmem:[%s437 + $0xe0] sm:$0xff] %vm803, %v789
        %833 = vst.msk [vmem:[%s437 + $0xe8] sm:$0xff] %vm803, %v792
        %834 = vst.msk [vmem:[%s437 + $0xf0] sm:$0xff] %vm803, %v797
        %835 = vst.msk [vmem:[%s437 + $0xf8] sm:$0xff] %vm803, %v800
        %v836 = vmax.f32 %v677, 0.0
        %v837 = vmax.f32 %v680, 0.0
        %v838 = vmax.f32 %v685, 0.0
        %v839 = vmax.f32 %v688, 0.0
        %v840 = vmax.f32 %v693, 0.0
        %v841 = vmax.f32 %v696, 0.0
        %v842 = vmax.f32 %v701, 0.0
        %v843 = vmax.f32 %v704, 0.0
        %v844 = vmax.f32 %v709, 0.0
        %v845 = vmax.f32 %v712, 0.0
        %v846 = vmax.f32 %v717, 0.0
        %v847 = vmax.f32 %v720, 0.0
        %v848 = vmax.f32 %v725, 0.0
        %v849 = vmax.f32 %v728, 0.0
        %v850 = vmax.f32 %v733, 0.0
        %v851 = vmax.f32 %v736, 0.0
        %v852 = vmax.f32 %v741, 0.0
        %v853 = vmax.f32 %v744, 0.0
        %v854 = vmax.f32 %v749, 0.0
        %v855 = vmax.f32 %v752, 0.0
        %v856 = vmax.f32 %v757, 0.0
        %v857 = vmax.f32 %v760, 0.0
        %v858 = vmax.f32 %v765, 0.0
        %v859 = vmax.f32 %v768, 0.0
        %v860 = vmax.f32 %v773, 0.0
        %v861 = vmax.f32 %v776, 0.0
        %v862 = vmax.f32 %v781, 0.0
        %v863 = vmax.f32 %v784, 0.0
        %v864 = vmax.f32 %v789, 0.0
        %v865 = vmax.f32 %v792, 0.0
        %v866 = vmax.f32 %v797, 0.0
        %v867 = vmax.f32 %v800, 0.0
        %vm868 = vcmask 519168
        %869 = vst.msk [vmem:[#allocation2] sm:$0xf] %vm868, 0
        %870 = vst.msk [vmem:[#allocation2 + $0x4] sm:$0xf] %vm868, 0
        %vm871 = vcmask 516096
        %872 = vst.msk [vmem:[#allocation2 + $0x8] sm:$0x1] %vm871, 0
        %873 = vst.msk [vmem:[#allocation2 + $0xc] sm:$0xf] %vm868, 0
        %874 = vst.msk [vmem:[#allocation2 + $0x10] sm:$0xf] %vm868, 0
        %875 = vst.msk [vmem:[#allocation2 + $0x14] sm:$0x1] %vm871, 0
        %876 = vst.msk [vmem:[#allocation2 + $0x18] sm:$0xf] %vm868, 0
        %877 = vst.msk [vmem:[#allocation2 + $0x1c] sm:$0xf] %vm868, 0
        %878 = vst.msk [vmem:[#allocation2 + $0x20] sm:$0x1] %vm871, 0
        %879 = vst.msk [vmem:[#allocation2 + $0x24] sm:$0xf] %vm868, 0
        %880 = vst.msk [vmem:[#allocation2 + $0x28] sm:$0xf] %vm868, 0
        %881 = vst.msk [vmem:[#allocation2 + $0x2c] sm:$0x1] %vm871, 0
        %882 = vst.msk [vmem:[#allocation2 + $0x30] sm:$0xf] %vm868, 0
        %883 = vst.msk [vmem:[#allocation2 + $0x34] sm:$0xf] %vm868, 0
        %884 = vst.msk [vmem:[#allocation2 + $0x38] sm:$0x1] %vm871, 0
        %885 = vst.msk [vmem:[#allocation2 + $0x3c] sm:$0xf] %vm868, 0
        %886 = vst.msk [vmem:[#allocation2 + $0x40] sm:$0xf] %vm868, 0
        %887 = vst.msk [vmem:[#allocation2 + $0x44] sm:$0x1] %vm871, 0
        %888 = vst.msk [vmem:[#allocation2 + $0x48] sm:$0xf] %vm868, 0
        %889 = vst.msk [vmem:[#allocation2 + $0x4c] sm:$0xf] %vm868, 0
        %890 = vst.msk [vmem:[#allocation2 + $0x50] sm:$0x1] %vm871, 0
        %891 = vst.msk [vmem:[#allocation2 + $0x54] sm:$0xf] %vm868, 0
        %892 = vst.msk [vmem:[#allocation2 + $0x58] sm:$0xf] %vm868, 0
        %893 = vst.msk [vmem:[#allocation2 + $0x5c] sm:$0x1] %vm871, 0
        %894 = vst.msk [vmem:[#allocation2 + $0x60] sm:$0xf] %vm868, 0
        %895 = vst.msk [vmem:[#allocation2 + $0x64] sm:$0xf] %vm868, 0
        %896 = vst.msk [vmem:[#allocation2 + $0x68] sm:$0x1] %vm871, 0
        %897 = vst.msk [vmem:[#allocation2 + $0x6c] sm:$0xf] %vm868, 0
        %898 = vst.msk [vmem:[#allocation2 + $0x70] sm:$0xf] %vm868, 0
        %899 = vst.msk [vmem:[#allocation2 + $0x74] sm:$0x1] %vm871, 0
        %900 = vst.msk [vmem:[#allocation2 + $0x78] sm:$0xf] %vm868, 0
        %901 = vst.msk [vmem:[#allocation2 + $0x7c] sm:$0xf] %vm868, 0
        %902 = vst.msk [vmem:[#allocation2 + $0x80] sm:$0x1] %vm871, 0
        %903 = vst.msk [vmem:[#allocation2 + $0x84] sm:$0xf] %vm868, 0
        %904 = vst.msk [vmem:[#allocation2 + $0x88] sm:$0xf] %vm868, 0
        %905 = vst.msk [vmem:[#allocation2 + $0x8c] sm:$0x1] %vm871, 0
        %906 = vst.msk [vmem:[#allocation2 + $0x90] sm:$0xf] %vm868, 0
        %907 = vst.msk [vmem:[#allocation2 + $0x94] sm:$0xf] %vm868, 0
        %908 = vst.msk [vmem:[#allocation2 + $0x98] sm:$0x1] %vm871, 0
        %909 = vst.msk [vmem:[#allocation2 + $0x9c] sm:$0xf] %vm868, 0
        %910 = vst.msk [vmem:[#allocation2 + $0xa0] sm:$0xf] %vm868, 0
        %911 = vst.msk [vmem:[#allocation2 + $0xa4] sm:$0x1] %vm871, 0
        %912 = vst.msk [vmem:[#allocation2 + $0xa8] sm:$0xf] %vm868, 0
        %913 = vst.msk [vmem:[#allocation2 + $0xac] sm:$0xf] %vm868, 0
        %914 = vst.msk [vmem:[#allocation2 + $0xb0] sm:$0x1] %vm871, 0
        %915 = vst.msk [vmem:[#allocation2 + $0xb4] sm:$0xf] %vm868, 0
        %916 = vst.msk [vmem:[#allocation2 + $0xb8] sm:$0xf] %vm868, 0
        %917 = vst.msk [vmem:[#allocation2 + $0xbc] sm:$0x1] %vm871, 0
        %918 = vst.msk [vmem:[#allocation2 + $0xc0] sm:$0xf] %vm868, 0
        %919 = vst.msk [vmem:[#allocation2 + $0xc4] sm:$0xf] %vm868, 0
        %920 = vst.msk [vmem:[#allocation2 + $0xc8] sm:$0x1] %vm871, 0
        %921 = vst.msk [vmem:[#allocation2 + $0xcc] sm:$0xf] %vm868, 0
        %922 = vst.msk [vmem:[#allocation2 + $0xd0] sm:$0xf] %vm868, 0
        %923 = vst.msk [vmem:[#allocation2 + $0xd4] sm:$0x1] %vm871, 0
        %v924 = vpack.c.bf16 %v837, %v836
        %v925 = vpack.c.bf16 %v839, %v838
        %v926 = vpack.c.bf16 %v841, %v840
        %v927 = vpack.c.bf16 %v843, %v842
        %v928 = vpack.c.bf16 %v845, %v844
        %v929 = vpack.c.bf16 %v847, %v846
        %v930 = vpack.c.bf16 %v849, %v848
        %v931 = vpack.c.bf16 %v851, %v850
        %v932 = vpack.c.bf16 %v853, %v852
        %v933 = vpack.c.bf16 %v855, %v854
        %v934 = vpack.c.bf16 %v857, %v856
        %v935 = vpack.c.bf16 %v859, %v858
        %v936 = vpack.c.bf16 %v861, %v860
        %v937 = vpack.c.bf16 %v863, %v862
        %v938 = vpack.c.bf16 %v865, %v864
        %v939 = vpack.c.bf16 %v867, %v866
        %v956 = vunpack.c.l.b16 %v924
        %v957 = vunpack.c.h.b16 %v924
        %v958 = vunpack.c.l.b16 %v925
        %v959 = vunpack.c.h.b16 %v925
        %v960 = vunpack.c.l.b16 %v926
        %v961 = vunpack.c.h.b16 %v926
        %v962 = vunpack.c.l.b16 %v927
        %v963 = vunpack.c.h.b16 %v927
        %v964 = vunpack.c.l.b16 %v928
        %v965 = vunpack.c.h.b16 %v928
        %v966 = vunpack.c.l.b16 %v929
        %v967 = vunpack.c.h.b16 %v929
        %v968 = vunpack.c.l.b16 %v930
        %v969 = vunpack.c.h.b16 %v930
        %v970 = vunpack.c.l.b16 %v931
        %v971 = vunpack.c.h.b16 %v931
        %v972 = vunpack.c.l.b16 %v932
        %v973 = vunpack.c.h.b16 %v932
        %v974 = vunpack.c.l.b16 %v933
        %v975 = vunpack.c.h.b16 %v933
        %v976 = vunpack.c.l.b16 %v934
        %v977 = vunpack.c.h.b16 %v934
        %v978 = vunpack.c.l.b16 %v935
        %v979 = vunpack.c.h.b16 %v935
        %v980 = vunpack.c.l.b16 %v936
        %v981 = vunpack.c.h.b16 %v936
        %v982 = vunpack.c.l.b16 %v937
        %v983 = vunpack.c.h.b16 %v937
        %v984 = vunpack.c.l.b16 %v938
        %v985 = vunpack.c.h.b16 %v938
        %v986 = vunpack.c.l.b16 %v939
        %v987 = vunpack.c.h.b16 %v939
        %v988 = vpack.c.b16 %v956, %v956
        %v989 = vpack.c.b16 %v957, %v957
        %v990 = vpack.c.b16 %v958, %v958
        %v991 = vpack.c.b16 %v959, %v959
        %v992 = vpack.c.b16 %v960, %v960
        %v993 = vpack.c.b16 %v961, %v961
        %v994 = vpack.c.b16 %v962, %v962
        %v995 = vpack.c.b16 %v963, %v963
        %v996 = vpack.c.b16 %v964, %v964
        %v997 = vpack.c.b16 %v965, %v965
        %v998 = vpack.c.b16 %v966, %v966
        %v999 = vpack.c.b16 %v967, %v967
        %v1000 = vpack.c.b16 %v968, %v968
        %v1001 = vpack.c.b16 %v969, %v969
        %v1002 = vpack.c.b16 %v970, %v970
        %v1003 = vpack.c.b16 %v971, %v971
        %v1004 = vpack.c.b16 %v972, %v972
        %v1005 = vpack.c.b16 %v973, %v973
        %v1006 = vpack.c.b16 %v974, %v974
        %v1007 = vpack.c.b16 %v975, %v975
        %v1008 = vpack.c.b16 %v976, %v976
        %v1009 = vpack.c.b16 %v977, %v977
        %v1010 = vpack.c.b16 %v978, %v978
        %v1011 = vpack.c.b16 %v979, %v979
        %v1012 = vpack.c.b16 %v980, %v980
        %v1013 = vpack.c.b16 %v981, %v981
        %v1014 = vpack.c.b16 %v982, %v982
        %v1015 = vpack.c.b16 %v983, %v983
        %v1016 = vpack.c.b16 %v984, %v984
        %v1017 = vpack.c.b16 %v985, %v985
        %v1018 = vpack.c.b16 %v986, %v986
        %v1019 = vpack.c.b16 %v987, %v987
        %vm1020 = vsmask.f32 256
        %vm1021 = vsmask.f32 4368
        %vm1022 = vmor %vm1020, %vm1021
        %v1024 = vshrl.u32 %v988, 16
        %v1026 = vrot.slane %v1024, 7
        %v1027 = vshll.u32 %v988, 16
        %v1029 = vor.u32 %v1026, %v1027
        %v1030 = vrot.slane %v1026, 4
        %v1032 = vshrl.u32 %v989, 16
        %v1034 = vrot.slane %v1032, 7
        %v1035 = vshll.u32 %v989, 16
        %v1037 = vor.u32 %v1034, %v1035
        %v1038 = vsel %vm1022, %v1030, %v1037
        %v1039 = vrot.slane %v1034, 4
        %v1041 = vshrl.u32 %v990, 16
        %v1043 = vrot.slane %v1041, 7
        %v1044 = vshll.u32 %v990, 16
        %v1046 = vor.u32 %v1043, %v1044
        %v1047 = vrot.slane %v1043, 4
        %v1049 = vshrl.u32 %v991, 16
        %v1051 = vrot.slane %v1049, 7
        %v1052 = vshll.u32 %v991, 16
        %v1054 = vor.u32 %v1051, %v1052
        %v1055 = vsel %vm1022, %v1047, %v1054
        %v1056 = vrot.slane %v1051, 4
        %v1058 = vshrl.u32 %v992, 16
        %v1060 = vrot.slane %v1058, 7
        %v1061 = vshll.u32 %v992, 16
        %v1063 = vor.u32 %v1060, %v1061
        %v1064 = vrot.slane %v1060, 4
        %v1066 = vshrl.u32 %v993, 16
        %v1068 = vrot.slane %v1066, 7
        %v1069 = vshll.u32 %v993, 16
        %v1071 = vor.u32 %v1068, %v1069
        %v1072 = vsel %vm1022, %v1064, %v1071
        %v1073 = vrot.slane %v1068, 4
        %v1075 = vshrl.u32 %v994, 16
        %v1077 = vrot.slane %v1075, 7
        %v1078 = vshll.u32 %v994, 16
        %v1080 = vor.u32 %v1077, %v1078
        %v1081 = vrot.slane %v1077, 4
        %v1083 = vshrl.u32 %v995, 16
        %v1085 = vrot.slane %v1083, 7
        %v1086 = vshll.u32 %v995, 16
        %v1088 = vor.u32 %v1085, %v1086
        %v1089 = vsel %vm1022, %v1081, %v1088
        %v1090 = vrot.slane %v1085, 4
        %v1092 = vshrl.u32 %v996, 16
        %v1094 = vrot.slane %v1092, 7
        %v1095 = vshll.u32 %v996, 16
        %v1097 = vor.u32 %v1094, %v1095
        %v1098 = vrot.slane %v1094, 4
        %v1100 = vshrl.u32 %v997, 16
        %v1102 = vrot.slane %v1100, 7
        %v1103 = vshll.u32 %v997, 16
        %v1105 = vor.u32 %v1102, %v1103
        %v1106 = vsel %vm1022, %v1098, %v1105
        %v1107 = vrot.slane %v1102, 4
        %v1109 = vshrl.u32 %v998, 16
        %v1111 = vrot.slane %v1109, 7
        %v1112 = vshll.u32 %v998, 16
        %v1114 = vor.u32 %v1111, %v1112
        %v1115 = vrot.slane %v1111, 4
        %v1117 = vshrl.u32 %v999, 16
        %v1119 = vrot.slane %v1117, 7
        %v1120 = vshll.u32 %v999, 16
        %v1122 = vor.u32 %v1119, %v1120
        %v1123 = vsel %vm1022, %v1115, %v1122
        %v1124 = vrot.slane %v1119, 4
        %v1126 = vshrl.u32 %v1000, 16
        %v1128 = vrot.slane %v1126, 7
        %v1129 = vshll.u32 %v1000, 16
        %v1131 = vor.u32 %v1128, %v1129
        %v1132 = vrot.slane %v1128, 4
        %v1134 = vshrl.u32 %v1001, 16
        %v1136 = vrot.slane %v1134, 7
        %v1137 = vshll.u32 %v1001, 16
        %v1139 = vor.u32 %v1136, %v1137
        %v1140 = vsel %vm1022, %v1132, %v1139
        %v1141 = vrot.slane %v1136, 4
        %v1143 = vshrl.u32 %v1002, 16
        %v1145 = vrot.slane %v1143, 7
        %v1146 = vshll.u32 %v1002, 16
        %v1148 = vor.u32 %v1145, %v1146
        %v1149 = vrot.slane %v1145, 4
        %v1151 = vshrl.u32 %v1003, 16
        %v1153 = vrot.slane %v1151, 7
        %v1154 = vshll.u32 %v1003, 16
        %v1156 = vor.u32 %v1153, %v1154
        %v1157 = vsel %vm1022, %v1149, %v1156
        %v1158 = vrot.slane %v1153, 4
        %v1160 = vshrl.u32 %v1004, 16
        %v1162 = vrot.slane %v1160, 7
        %v1163 = vshll.u32 %v1004, 16
        %v1165 = vor.u32 %v1162, %v1163
        %v1166 = vrot.slane %v1162, 4
        %v1168 = vshrl.u32 %v1005, 16
        %v1170 = vrot.slane %v1168, 7
        %v1171 = vshll.u32 %v1005, 16
        %v1173 = vor.u32 %v1170, %v1171
        %v1174 = vsel %vm1022, %v1166, %v1173
        %v1175 = vrot.slane %v1170, 4
        %v1177 = vshrl.u32 %v1006, 16
        %v1179 = vrot.slane %v1177, 7
        %v1180 = vshll.u32 %v1006, 16
        %v1182 = vor.u32 %v1179, %v1180
        %v1183 = vrot.slane %v1179, 4
        %v1185 = vshrl.u32 %v1007, 16
        %v1187 = vrot.slane %v1185, 7
        %v1188 = vshll.u32 %v1007, 16
        %v1190 = vor.u32 %v1187, %v1188
        %v1191 = vsel %vm1022, %v1183, %v1190
        %v1192 = vrot.slane %v1187, 4
        %v1194 = vshrl.u32 %v1008, 16
        %v1196 = vrot.slane %v1194, 7
        %v1197 = vshll.u32 %v1008, 16
        %v1199 = vor.u32 %v1196, %v1197
        %v1200 = vrot.slane %v1196, 4
        %v1202 = vshrl.u32 %v1009, 16
        %v1204 = vrot.slane %v1202, 7
        %v1205 = vshll.u32 %v1009, 16
        %v1207 = vor.u32 %v1204, %v1205
        %v1208 = vsel %vm1022, %v1200, %v1207
        %v1209 = vrot.slane %v1204, 4
        %v1211 = vshrl.u32 %v1010, 16
        %v1213 = vrot.slane %v1211, 7
        %v1214 = vshll.u32 %v1010, 16
        %v1216 = vor.u32 %v1213, %v1214
        %v1217 = vrot.slane %v1213, 4
        %v1219 = vshrl.u32 %v1011, 16
        %v1221 = vrot.slane %v1219, 7
        %v1222 = vshll.u32 %v1011, 16
        %v1224 = vor.u32 %v1221, %v1222
        %v1225 = vsel %vm1022, %v1217, %v1224
        %v1226 = vrot.slane %v1221, 4
        %v1228 = vshrl.u32 %v1012, 16
        %v1230 = vrot.slane %v1228, 7
        %v1231 = vshll.u32 %v1012, 16
        %v1233 = vor.u32 %v1230, %v1231
        %v1234 = vrot.slane %v1230, 4
        %v1236 = vshrl.u32 %v1013, 16
        %v1238 = vrot.slane %v1236, 7
        %v1239 = vshll.u32 %v1013, 16
        %v1241 = vor.u32 %v1238, %v1239
        %v1242 = vsel %vm1022, %v1234, %v1241
        %v1243 = vrot.slane %v1238, 4
        %v1245 = vshrl.u32 %v1014, 16
        %v1247 = vrot.slane %v1245, 7
        %v1248 = vshll.u32 %v1014, 16
        %v1250 = vor.u32 %v1247, %v1248
        %v1251 = vrot.slane %v1247, 4
        %v1253 = vshrl.u32 %v1015, 16
        %v1255 = vrot.slane %v1253, 7
        %v1256 = vshll.u32 %v1015, 16
        %v1258 = vor.u32 %v1255, %v1256
        %v1259 = vsel %vm1022, %v1251, %v1258
        %v1260 = vrot.slane %v1255, 4
        %v1262 = vshrl.u32 %v1016, 16
        %v1264 = vrot.slane %v1262, 7
        %v1265 = vshll.u32 %v1016, 16
        %v1267 = vor.u32 %v1264, %v1265
        %v1268 = vrot.slane %v1264, 4
        %v1270 = vshrl.u32 %v1017, 16
        %v1272 = vrot.slane %v1270, 7
        %v1273 = vshll.u32 %v1017, 16
        %v1275 = vor.u32 %v1272, %v1273
        %v1276 = vsel %vm1022, %v1268, %v1275
        %v1277 = vrot.slane %v1272, 4
        %v1279 = vshrl.u32 %v1018, 16
        %v1281 = vrot.slane %v1279, 7
        %v1282 = vshll.u32 %v1018, 16
        %v1284 = vor.u32 %v1281, %v1282
        %v1285 = vrot.slane %v1281, 4
        %v1287 = vshrl.u32 %v1019, 16
        %v1289 = vrot.slane %v1287, 7
        %v1290 = vshll.u32 %v1019, 16
        %v1292 = vor.u32 %v1289, %v1290
        %v1293 = vsel %vm1022, %v1285, %v1292
        %v1294 = vrot.slane %v1289, 4
        %s1343 = scalar_lea.vmem [#allocation2], 12
        %vm1344 = vcmask 519168
        %vm1345 = vsmask.f32 7938
        %vm1346 = vmand %vm1344, %vm1345
        %v1347 = vld [vmem:[%s1343] sm:$0xf]
        %v1348 = vsel %vm1346, %v1029, %v1347
        %1349 = vst [vmem:[%s1343] sm:$0xf] %v1348
        %1350 = vst.msk [vmem:[%s1343 + $0x4] sm:$0xf] %vm868, %v1038
        %vm1351 = vcmask 516096
        %vm1352 = vmand %vm1351, %vm1020
        %v1353 = vld [vmem:[%s1343 + $0x8] sm:$0x1]
        %v1354 = vsel %vm1352, %v1039, %v1353
        %1355 = vst [vmem:[%s1343 + $0x8] sm:$0x1] %v1354
        %v1356 = vld [vmem:[%s1343 + $0xc] sm:$0xf]
        %v1357 = vsel %vm1346, %v1046, %v1356
        %1358 = vst [vmem:[%s1343 + $0xc] sm:$0xf] %v1357
        %1359 = vst.msk [vmem:[%s1343 + $0x10] sm:$0xf] %vm868, %v1055
        %v1360 = vld [vmem:[%s1343 + $0x14] sm:$0x1]
        %v1361 = vsel %vm1352, %v1056, %v1360
        %1362 = vst [vmem:[%s1343 + $0x14] sm:$0x1] %v1361
        %v1363 = vld [vmem:[%s1343 + $0x18] sm:$0xf]
        %v1364 = vsel %vm1346, %v1063, %v1363
        %1365 = vst [vmem:[%s1343 + $0x18] sm:$0xf] %v1364
        %1366 = vst.msk [vmem:[%s1343 + $0x1c] sm:$0xf] %vm868, %v1072
        %v1367 = vld [vmem:[%s1343 + $0x20] sm:$0x1]
        %v1368 = vsel %vm1352, %v1073, %v1367
        %1369 = vst [vmem:[%s1343 + $0x20] sm:$0x1] %v1368
        %v1370 = vld [vmem:[%s1343 + $0x24] sm:$0xf]
        %v1371 = vsel %vm1346, %v1080, %v1370
        %1372 = vst [vmem:[%s1343 + $0x24] sm:$0xf] %v1371
        %1373 = vst.msk [vmem:[%s1343 + $0x28] sm:$0xf] %vm868, %v1089
        %v1374 = vld [vmem:[%s1343 + $0x2c] sm:$0x1]
        %v1375 = vsel %vm1352, %v1090, %v1374
        %1376 = vst [vmem:[%s1343 + $0x2c] sm:$0x1] %v1375
        %v1377 = vld [vmem:[%s1343 + $0x30] sm:$0xf]
        %v1378 = vsel %vm1346, %v1097, %v1377
        %1379 = vst [vmem:[%s1343 + $0x30] sm:$0xf] %v1378
        %1380 = vst.msk [vmem:[%s1343 + $0x34] sm:$0xf] %vm868, %v1106
        %v1381 = vld [vmem:[%s1343 + $0x38] sm:$0x1]
        %v1382 = vsel %vm1352, %v1107, %v1381
        %1383 = vst [vmem:[%s1343 + $0x38] sm:$0x1] %v1382
        %v1384 = vld [vmem:[%s1343 + $0x3c] sm:$0xf]
        %v1385 = vsel %vm1346, %v1114, %v1384
        %1386 = vst [vmem:[%s1343 + $0x3c] sm:$0xf] %v1385
        %1387 = vst.msk [vmem:[%s1343 + $0x40] sm:$0xf] %vm868, %v1123
        %v1388 = vld [vmem:[%s1343 + $0x44] sm:$0x1]
        %v1389 = vsel %vm1352, %v1124, %v1388
        %1390 = vst [vmem:[%s1343 + $0x44] sm:$0x1] %v1389
        %v1391 = vld [vmem:[%s1343 + $0x48] sm:$0xf]
        %v1392 = vsel %vm1346, %v1131, %v1391
        %1393 = vst [vmem:[%s1343 + $0x48] sm:$0xf] %v1392
        %1394 = vst.msk [vmem:[%s1343 + $0x4c] sm:$0xf] %vm868, %v1140
        %v1395 = vld [vmem:[%s1343 + $0x50] sm:$0x1]
        %v1396 = vsel %vm1352, %v1141, %v1395
        %1397 = vst [vmem:[%s1343 + $0x50] sm:$0x1] %v1396
        %v1398 = vld [vmem:[%s1343 + $0x54] sm:$0xf]
        %v1399 = vsel %vm1346, %v1148, %v1398
        %1400 = vst [vmem:[%s1343 + $0x54] sm:$0xf] %v1399
        %1401 = vst.msk [vmem:[%s1343 + $0x58] sm:$0xf] %vm868, %v1157
        %v1402 = vld [vmem:[%s1343 + $0x5c] sm:$0x1]
        %v1403 = vsel %vm1352, %v1158, %v1402
        %1404 = vst [vmem:[%s1343 + $0x5c] sm:$0x1] %v1403
        %v1405 = vld [vmem:[%s1343 + $0x60] sm:$0xf]
        %v1406 = vsel %vm1346, %v1165, %v1405
        %1407 = vst [vmem:[%s1343 + $0x60] sm:$0xf] %v1406
        %1408 = vst.msk [vmem:[%s1343 + $0x64] sm:$0xf] %vm868, %v1174
        %v1409 = vld [vmem:[%s1343 + $0x68] sm:$0x1]
        %v1410 = vsel %vm1352, %v1175, %v1409
        %1411 = vst [vmem:[%s1343 + $0x68] sm:$0x1] %v1410
        %v1412 = vld [vmem:[%s1343 + $0x6c] sm:$0xf]
        %v1413 = vsel %vm1346, %v1182, %v1412
        %1414 = vst [vmem:[%s1343 + $0x6c] sm:$0xf] %v1413
        %1415 = vst.msk [vmem:[%s1343 + $0x70] sm:$0xf] %vm868, %v1191
        %v1416 = vld [vmem:[%s1343 + $0x74] sm:$0x1]
        %v1417 = vsel %vm1352, %v1192, %v1416
        %1418 = vst [vmem:[%s1343 + $0x74] sm:$0x1] %v1417
        %v1419 = vld [vmem:[%s1343 + $0x78] sm:$0xf]
        %v1420 = vsel %vm1346, %v1199, %v1419
        %1421 = vst [vmem:[%s1343 + $0x78] sm:$0xf] %v1420
        %1422 = vst.msk [vmem:[%s1343 + $0x7c] sm:$0xf] %vm868, %v1208
        %v1423 = vld [vmem:[%s1343 + $0x80] sm:$0x1]
        %v1424 = vsel %vm1352, %v1209, %v1423
        %1425 = vst [vmem:[%s1343 + $0x80] sm:$0x1] %v1424
        %v1426 = vld [vmem:[%s1343 + $0x84] sm:$0xf]
        %v1427 = vsel %vm1346, %v1216, %v1426
        %1428 = vst [vmem:[%s1343 + $0x84] sm:$0xf] %v1427
        %1429 = vst.msk [vmem:[%s1343 + $0x88] sm:$0xf] %vm868, %v1225
        %v1430 = vld [vmem:[%s1343 + $0x8c] sm:$0x1]
        %v1431 = vsel %vm1352, %v1226, %v1430
        %1432 = vst [vmem:[%s1343 + $0x8c] sm:$0x1] %v1431
        %v1433 = vld [vmem:[%s1343 + $0x90] sm:$0xf]
        %v1434 = vsel %vm1346, %v1233, %v1433
        %1435 = vst [vmem:[%s1343 + $0x90] sm:$0xf] %v1434
        %1436 = vst.msk [vmem:[%s1343 + $0x94] sm:$0xf] %vm868, %v1242
        %v1437 = vld [vmem:[%s1343 + $0x98] sm:$0x1]
        %v1438 = vsel %vm1352, %v1243, %v1437
        %1439 = vst [vmem:[%s1343 + $0x98] sm:$0x1] %v1438
        %v1440 = vld [vmem:[%s1343 + $0x9c] sm:$0xf]
        %v1441 = vsel %vm1346, %v1250, %v1440
        %1442 = vst [vmem:[%s1343 + $0x9c] sm:$0xf] %v1441
        %1443 = vst.msk [vmem:[%s1343 + $0xa0] sm:$0xf] %vm868, %v1259
        %v1444 = vld [vmem:[%s1343 + $0xa4] sm:$0x1]
        %v1445 = vsel %vm1352, %v1260, %v1444
        %1446 = vst [vmem:[%s1343 + $0xa4] sm:$0x1] %v1445
        %v1447 = vld [vmem:[%s1343 + $0xa8] sm:$0xf]
        %v1448 = vsel %vm1346, %v1267, %v1447
        %1449 = vst [vmem:[%s1343 + $0xa8] sm:$0xf] %v1448
        %1450 = vst.msk [vmem:[%s1343 + $0xac] sm:$0xf] %vm868, %v1276
        %v1451 = vld [vmem:[%s1343 + $0xb0] sm:$0x1]
        %v1452 = vsel %vm1352, %v1277, %v1451
        %1453 = vst [vmem:[%s1343 + $0xb0] sm:$0x1] %v1452
        %v1454 = vld [vmem:[%s1343 + $0xb4] sm:$0xf]
        %v1455 = vsel %vm1346, %v1284, %v1454
        %1456 = vst [vmem:[%s1343 + $0xb4] sm:$0xf] %v1455
        %1457 = vst.msk [vmem:[%s1343 + $0xb8] sm:$0xf] %vm868, %v1293
        %v1458 = vld [vmem:[%s1343 + $0xbc] sm:$0x1]
        %v1459 = vsel %vm1352, %v1294, %v1458
        %1460 = vst [vmem:[%s1343 + $0xbc] sm:$0x1] %v1459
        %v1461 = vld [vmem:[#allocation2] sm:$0xf]
        %v1462 = vld [vmem:[#allocation2 + $0x4] sm:$0xf]
        %v1463 = vld [vmem:[#allocation2 + $0xc] sm:$0xf]
        %v1464 = vld [vmem:[#allocation2 + $0x10] sm:$0xf]
        %v1465 = vld [vmem:[#allocation2 + $0x18] sm:$0xf]
        %v1466 = vld [vmem:[#allocation2 + $0x1c] sm:$0xf]
        %v1467 = vld [vmem:[#allocation2 + $0x24] sm:$0xf]
        %v1468 = vld [vmem:[#allocation2 + $0x28] sm:$0xf]
        %v1469 = vld [vmem:[#allocation2 + $0x30] sm:$0xf]
        %v1470 = vld [vmem:[#allocation2 + $0x34] sm:$0xf]
        %v1471 = vld [vmem:[#allocation2 + $0x3c] sm:$0xf]
        %v1472 = vld [vmem:[#allocation2 + $0x40] sm:$0xf]
        %v1473 = vld [vmem:[#allocation2 + $0x48] sm:$0xf]
        %v1474 = vld [vmem:[#allocation2 + $0x4c] sm:$0xf]
        %v1475 = vld [vmem:[#allocation2 + $0x54] sm:$0xf]
        %v1476 = vld [vmem:[#allocation2 + $0x58] sm:$0xf]
        %v1477 = vld [vmem:[#allocation2 + $0x60] sm:$0xf]
        %v1478 = vld [vmem:[#allocation2 + $0x64] sm:$0xf]
        %v1479 = vld [vmem:[#allocation2 + $0x6c] sm:$0xf]
        %v1480 = vld [vmem:[#allocation2 + $0x70] sm:$0xf]
        %v1481 = vld [vmem:[#allocation2 + $0x78] sm:$0xf]
        %v1482 = vld [vmem:[#allocation2 + $0x7c] sm:$0xf]
        %v1483 = vld [vmem:[#allocation2 + $0x84] sm:$0xf]
        %v1484 = vld [vmem:[#allocation2 + $0x88] sm:$0xf]
        %v1485 = vld [vmem:[#allocation2 + $0x90] sm:$0xf]
        %v1486 = vld [vmem:[#allocation2 + $0x94] sm:$0xf]
        %v1487 = vld [vmem:[#allocation2 + $0x9c] sm:$0xf]
        %v1488 = vld [vmem:[#allocation2 + $0xa0] sm:$0xf]
        %v1489 = vld [vmem:[#allocation2 + $0xa8] sm:$0xf]
        %v1490 = vld [vmem:[#allocation2 + $0xac] sm:$0xf]
        %v1491 = vld [vmem:[#allocation2 + $0xb4] sm:$0xf]
        %v1492 = vld [vmem:[#allocation2 + $0xb8] sm:$0xf]
        %1493 = vst.msk [vmem:[#allocation3] sm:$0xf] %vm868, %v1461
        %1494 = vst.msk [vmem:[#allocation3 + $0x14] sm:$0xf] %vm868, %v1462
        %1495 = vst.msk [vmem:[#allocation3 + $0x28] sm:$0xf] %vm868, %v1463
        %1496 = vst.msk [vmem:[#allocation3 + $0x3c] sm:$0xf] %vm868, %v1464
        %1497 = vst.msk [vmem:[#allocation3 + $0x50] sm:$0xf] %vm868, %v1465
        %1498 = vst.msk [vmem:[#allocation3 + $0x64] sm:$0xf] %vm868, %v1466
        %1499 = vst.msk [vmem:[#allocation3 + $0x78] sm:$0xf] %vm868, %v1467
        %1500 = vst.msk [vmem:[#allocation3 + $0x8c] sm:$0xf] %vm868, %v1468
        %1501 = vst.msk [vmem:[#allocation3 + $0xa0] sm:$0xf] %vm868, %v1469
        %1502 = vst.msk [vmem:[#allocation3 + $0xb4] sm:$0xf] %vm868, %v1470
        %1503 = vst.msk [vmem:[#allocation3 + $0xc8] sm:$0xf] %vm868, %v1471
        %1504 = vst.msk [vmem:[#allocation3 + $0xdc] sm:$0xf] %vm868, %v1472
        %1505 = vst.msk [vmem:[#allocation3 + $0xf0] sm:$0xf] %vm868, %v1473
        %1506 = vst.msk [vmem:[#allocation3 + $0x104] sm:$0xf] %vm868, %v1474
        %1507 = vst.msk [vmem:[#allocation3 + $0x118] sm:$0xf] %vm868, %v1475
        %1508 = vst.msk [vmem:[#allocation3 + $0x12c] sm:$0xf] %vm868, %v1476
        %1509 = vst.msk [vmem:[#allocation3 + $0x140] sm:$0xf] %vm868, %v1477
        %1510 = vst.msk [vmem:[#allocation3 + $0x154] sm:$0xf] %vm868, %v1478
        %1511 = vst.msk [vmem:[#allocation3 + $0x168] sm:$0xf] %vm868, %v1479
        %1512 = vst.msk [vmem:[#allocation3 + $0x17c] sm:$0xf] %vm868, %v1480
        %1513 = vst.msk [vmem:[#allocation3 + $0x190] sm:$0xf] %vm868, %v1481
        %1514 = vst.msk [vmem:[#allocation3 + $0x1a4] sm:$0xf] %vm868, %v1482
        %1515 = vst.msk [vmem:[#allocation3 + $0x1b8] sm:$0xf] %vm868, %v1483
        %1516 = vst.msk [vmem:[#allocation3 + $0x1cc] sm:$0xf] %vm868, %v1484
        %1517 = vst.msk [vmem:[#allocation3 + $0x1e0] sm:$0xf] %vm868, %v1485
        %1518 = vst.msk [vmem:[#allocation3 + $0x1f4] sm:$0xf] %vm868, %v1486
        %1519 = vst.msk [vmem:[#allocation3 + $0x208] sm:$0xf] %vm868, %v1487
        %1520 = vst.msk [vmem:[#allocation3 + $0x21c] sm:$0xf] %vm868, %v1488
        %1521 = vst.msk [vmem:[#allocation3 + $0x230] sm:$0xf] %vm868, %v1489
        %1522 = vst.msk [vmem:[#allocation3 + $0x244] sm:$0xf] %vm868, %v1490
        %1523 = vst.msk [vmem:[#allocation3 + $0x258] sm:$0xf] %vm868, %v1491
        %1524 = vst.msk [vmem:[#allocation3 + $0x26c] sm:$0xf] %vm868, %v1492
        %v1525 = vld [vmem:[#allocation2] sm:$0xf]
        %v1526 = vld [vmem:[#allocation2 + $0x4] sm:$0xf]
        %v1527 = vld [vmem:[#allocation2 + $0x8] sm:$0x1]
        %v1528 = vld [vmem:[#allocation2 + $0xc] sm:$0xf]
        %v1529 = vld [vmem:[#allocation2 + $0x10] sm:$0xf]
        %v1530 = vld [vmem:[#allocation2 + $0x14] sm:$0x1]
        %v1531 = vld [vmem:[#allocation2 + $0x18] sm:$0xf]
        %v1532 = vld [vmem:[#allocation2 + $0x1c] sm:$0xf]
        %v1533 = vld [vmem:[#allocation2 + $0x20] sm:$0x1]
        %v1534 = vld [vmem:[#allocation2 + $0x24] sm:$0xf]
        %v1535 = vld [vmem:[#allocation2 + $0x28] sm:$0xf]
        %v1536 = vld [vmem:[#allocation2 + $0x2c] sm:$0x1]
        %v1537 = vld [vmem:[#allocation2 + $0x30] sm:$0xf]
        %v1538 = vld [vmem:[#allocation2 + $0x34] sm:$0xf]
        %v1539 = vld [vmem:[#allocation2 + $0x38] sm:$0x1]
        %v1540 = vld [vmem:[#allocation2 + $0x3c] sm:$0xf]
        %v1541 = vld [vmem:[#allocation2 + $0x40] sm:$0xf]
        %v1542 = vld [vmem:[#allocation2 + $0x44] sm:$0x1]
        %v1543 = vld [vmem:[#allocation2 + $0x48] sm:$0xf]
        %v1544 = vld [vmem:[#allocation2 + $0x4c] sm:$0xf]
        %v1545 = vld [vmem:[#allocation2 + $0x50] sm:$0x1]
        %v1546 = vld [vmem:[#allocation2 + $0x54] sm:$0xf]
        %v1547 = vld [vmem:[#allocation2 + $0x58] sm:$0xf]
        %v1548 = vld [vmem:[#allocation2 + $0x5c] sm:$0x1]
        %v1549 = vld [vmem:[#allocation2 + $0x60] sm:$0xf]
        %v1550 = vld [vmem:[#allocation2 + $0x64] sm:$0xf]
        %v1551 = vld [vmem:[#allocation2 + $0x68] sm:$0x1]
        %v1552 = vld [vmem:[#allocation2 + $0x6c] sm:$0xf]
        %v1553 = vld [vmem:[#allocation2 + $0x70] sm:$0xf]
        %v1554 = vld [vmem:[#allocation2 + $0x74] sm:$0x1]
        %v1555 = vld [vmem:[#allocation2 + $0x78] sm:$0xf]
        %v1556 = vld [vmem:[#allocation2 + $0x7c] sm:$0xf]
        %v1557 = vld [vmem:[#allocation2 + $0x80] sm:$0x1]
        %v1558 = vld [vmem:[#allocation2 + $0x84] sm:$0xf]
        %v1559 = vld [vmem:[#allocation2 + $0x88] sm:$0xf]
        %v1560 = vld [vmem:[#allocation2 + $0x8c] sm:$0x1]
        %v1561 = vld [vmem:[#allocation2 + $0x90] sm:$0xf]
        %v1562 = vld [vmem:[#allocation2 + $0x94] sm:$0xf]
        %v1563 = vld [vmem:[#allocation2 + $0x98] sm:$0x1]
        %v1564 = vld [vmem:[#allocation2 + $0x9c] sm:$0xf]
        %v1565 = vld [vmem:[#allocation2 + $0xa0] sm:$0xf]
        %v1566 = vld [vmem:[#allocation2 + $0xa4] sm:$0x1]
        %v1567 = vld [vmem:[#allocation2 + $0xa8] sm:$0xf]
        %v1568 = vld [vmem:[#allocation2 + $0xac] sm:$0xf]
        %v1569 = vld [vmem:[#allocation2 + $0xb0] sm:$0x1]
        %v1570 = vld [vmem:[#allocation2 + $0xb4] sm:$0xf]
        %v1571 = vld [vmem:[#allocation2 + $0xb8] sm:$0xf]
        %v1572 = vld [vmem:[#allocation2 + $0xbc] sm:$0x1]
        %vm1573 = vsmask.f32 3328
        %vm1574 = vsmask.f32 7440
        %vm1575 = vmor %vm1573, %vm1574
        %v1577 = vshrl.u32 %v1525, 16
        %v1579 = vrot.slane %v1577, 4
        %v1580 = vshll.u32 %v1525, 16
        %v1582 = vrot.slane %v1580, 5
        %v1583 = vor.u32 %v1579, %v1582
        %v1584 = vrot.slane %v1583, 4
        %v1586 = vshll.u32 %v1526, 16
        %v1588 = vrot.slane %v1586, 5
        %v1589 = vsel %vm1575, %v1584, %v1588
        %v1590 = vshrl.u32 %v1526, 16
        %v1592 = vrot.slane %v1590, 4
        %v1593 = vor.u32 %v1592, %v1588
        %v1594 = vrot.slane %v1593, 4
        %v1596 = vshll.u32 %v1527, 16
        %v1598 = vrot.slane %v1596, 5
        %v1599 = vsel %vm1575, %v1594, %v1598
        %v1601 = vshrl.u32 %v1528, 16
        %v1603 = vrot.slane %v1601, 4
        %v1604 = vshll.u32 %v1528, 16
        %v1606 = vrot.slane %v1604, 5
        %v1607 = vor.u32 %v1603, %v1606
        %v1608 = vrot.slane %v1607, 4
        %v1610 = vshll.u32 %v1529, 16
        %v1612 = vrot.slane %v1610, 5
        %v1613 = vsel %vm1575, %v1608, %v1612
        %v1614 = vshrl.u32 %v1529, 16
        %v1616 = vrot.slane %v1614, 4
        %v1617 = vor.u32 %v1616, %v1612
        %v1618 = vrot.slane %v1617, 4
        %v1620 = vshll.u32 %v1530, 16
        %v1622 = vrot.slane %v1620, 5
        %v1623 = vsel %vm1575, %v1618, %v1622
        %v1625 = vshrl.u32 %v1531, 16
        %v1627 = vrot.slane %v1625, 4
        %v1628 = vshll.u32 %v1531, 16
        %v1630 = vrot.slane %v1628, 5
        %v1631 = vor.u32 %v1627, %v1630
        %v1632 = vrot.slane %v1631, 4
        %v1634 = vshll.u32 %v1532, 16
        %v1636 = vrot.slane %v1634, 5
        %v1637 = vsel %vm1575, %v1632, %v1636
        %v1638 = vshrl.u32 %v1532, 16
        %v1640 = vrot.slane %v1638, 4
        %v1641 = vor.u32 %v1640, %v1636
        %v1642 = vrot.slane %v1641, 4
        %v1644 = vshll.u32 %v1533, 16
        %v1646 = vrot.slane %v1644, 5
        %v1647 = vsel %vm1575, %v1642, %v1646
        %v1649 = vshrl.u32 %v1534, 16
        %v1651 = vrot.slane %v1649, 4
        %v1652 = vshll.u32 %v1534, 16
        %v1654 = vrot.slane %v1652, 5
        %v1655 = vor.u32 %v1651, %v1654
        %v1656 = vrot.slane %v1655, 4
        %v1658 = vshll.u32 %v1535, 16
        %v1660 = vrot.slane %v1658, 5
        %v1661 = vsel %vm1575, %v1656, %v1660
        %v1662 = vshrl.u32 %v1535, 16
        %v1664 = vrot.slane %v1662, 4
        %v1665 = vor.u32 %v1664, %v1660
        %v1666 = vrot.slane %v1665, 4
        %v1668 = vshll.u32 %v1536, 16
        %v1670 = vrot.slane %v1668, 5
        %v1671 = vsel %vm1575, %v1666, %v1670
        %v1673 = vshrl.u32 %v1537, 16
        %v1675 = vrot.slane %v1673, 4
        %v1676 = vshll.u32 %v1537, 16
        %v1678 = vrot.slane %v1676, 5
        %v1679 = vor.u32 %v1675, %v1678
        %v1680 = vrot.slane %v1679, 4
        %v1682 = vshll.u32 %v1538, 16
        %v1684 = vrot.slane %v1682, 5
        %v1685 = vsel %vm1575, %v1680, %v1684
        %v1686 = vshrl.u32 %v1538, 16
        %v1688 = vrot.slane %v1686, 4
        %v1689 = vor.u32 %v1688, %v1684
        %v1690 = vrot.slane %v1689, 4
        %v1692 = vshll.u32 %v1539, 16
        %v1694 = vrot.slane %v1692, 5
        %v1695 = vsel %vm1575, %v1690, %v1694
        %v1697 = vshrl.u32 %v1540, 16
        %v1699 = vrot.slane %v1697, 4
        %v1700 = vshll.u32 %v1540, 16
        %v1702 = vrot.slane %v1700, 5
        %v1703 = vor.u32 %v1699, %v1702
        %v1704 = vrot.slane %v1703, 4
        %v1706 = vshll.u32 %v1541, 16
        %v1708 = vrot.slane %v1706, 5
        %v1709 = vsel %vm1575, %v1704, %v1708
        %v1710 = vshrl.u32 %v1541, 16
        %v1712 = vrot.slane %v1710, 4
        %v1713 = vor.u32 %v1712, %v1708
        %v1714 = vrot.slane %v1713, 4
        %v1716 = vshll.u32 %v1542, 16
        %v1718 = vrot.slane %v1716, 5
        %v1719 = vsel %vm1575, %v1714, %v1718
        %v1721 = vshrl.u32 %v1543, 16
        %v1723 = vrot.slane %v1721, 4
        %v1724 = vshll.u32 %v1543, 16
        %v1726 = vrot.slane %v1724, 5
        %v1727 = vor.u32 %v1723, %v1726
        %v1728 = vrot.slane %v1727, 4
        %v1730 = vshll.u32 %v1544, 16
        %v1732 = vrot.slane %v1730, 5
        %v1733 = vsel %vm1575, %v1728, %v1732
        %v1734 = vshrl.u32 %v1544, 16
        %v1736 = vrot.slane %v1734, 4
        %v1737 = vor.u32 %v1736, %v1732
        %v1738 = vrot.slane %v1737, 4
        %v1740 = vshll.u32 %v1545, 16
        %v1742 = vrot.slane %v1740, 5
        %v1743 = vsel %vm1575, %v1738, %v1742
        %v1745 = vshrl.u32 %v1546, 16
        %v1747 = vrot.slane %v1745, 4
        %v1748 = vshll.u32 %v1546, 16
        %v1750 = vrot.slane %v1748, 5
        %v1751 = vor.u32 %v1747, %v1750
        %v1752 = vrot.slane %v1751, 4
        %v1754 = vshll.u32 %v1547, 16
        %v1756 = vrot.slane %v1754, 5
        %v1757 = vsel %vm1575, %v1752, %v1756
        %v1758 = vshrl.u32 %v1547, 16
        %v1760 = vrot.slane %v1758, 4
        %v1761 = vor.u32 %v1760, %v1756
        %v1762 = vrot.slane %v1761, 4
        %v1764 = vshll.u32 %v1548, 16
        %v1766 = vrot.slane %v1764, 5
        %v1767 = vsel %vm1575, %v1762, %v1766
        %v1769 = vshrl.u32 %v1549, 16
        %v1771 = vrot.slane %v1769, 4
        %v1772 = vshll.u32 %v1549, 16
        %v1774 = vrot.slane %v1772, 5
        %v1775 = vor.u32 %v1771, %v1774
        %v1776 = vrot.slane %v1775, 4
        %v1778 = vshll.u32 %v1550, 16
        %v1780 = vrot.slane %v1778, 5
        %v1781 = vsel %vm1575, %v1776, %v1780
        %v1782 = vshrl.u32 %v1550, 16
        %v1784 = vrot.slane %v1782, 4
        %v1785 = vor.u32 %v1784, %v1780
        %v1786 = vrot.slane %v1785, 4
        %v1788 = vshll.u32 %v1551, 16
        %v1790 = vrot.slane %v1788, 5
        %v1791 = vsel %vm1575, %v1786, %v1790
        %v1793 = vshrl.u32 %v1552, 16
        %v1795 = vrot.slane %v1793, 4
        %v1796 = vshll.u32 %v1552, 16
        %v1798 = vrot.slane %v1796, 5
        %v1799 = vor.u32 %v1795, %v1798
        %v1800 = vrot.slane %v1799, 4
        %v1802 = vshll.u32 %v1553, 16
        %v1804 = vrot.slane %v1802, 5
        %v1805 = vsel %vm1575, %v1800, %v1804
        %v1806 = vshrl.u32 %v1553, 16
        %v1808 = vrot.slane %v1806, 4
        %v1809 = vor.u32 %v1808, %v1804
        %v1810 = vrot.slane %v1809, 4
        %v1812 = vshll.u32 %v1554, 16
        %v1814 = vrot.slane %v1812, 5
        %v1815 = vsel %vm1575, %v1810, %v1814
        %v1817 = vshrl.u32 %v1555, 16
        %v1819 = vrot.slane %v1817, 4
        %v1820 = vshll.u32 %v1555, 16
        %v1822 = vrot.slane %v1820, 5
        %v1823 = vor.u32 %v1819, %v1822
        %v1824 = vrot.slane %v1823, 4
        %v1826 = vshll.u32 %v1556, 16
        %v1828 = vrot.slane %v1826, 5
        %v1829 = vsel %vm1575, %v1824, %v1828
        %v1830 = vshrl.u32 %v1556, 16
        %v1832 = vrot.slane %v1830, 4
        %v1833 = vor.u32 %v1832, %v1828
        %v1834 = vrot.slane %v1833, 4
        %v1836 = vshll.u32 %v1557, 16
        %v1838 = vrot.slane %v1836, 5
        %v1839 = vsel %vm1575, %v1834, %v1838
        %v1841 = vshrl.u32 %v1558, 16
        %v1843 = vrot.slane %v1841, 4
        %v1844 = vshll.u32 %v1558, 16
        %v1846 = vrot.slane %v1844, 5
        %v1847 = vor.u32 %v1843, %v1846
        %v1848 = vrot.slane %v1847, 4
        %v1850 = vshll.u32 %v1559, 16
        %v1852 = vrot.slane %v1850, 5
        %v1853 = vsel %vm1575, %v1848, %v1852
        %v1854 = vshrl.u32 %v1559, 16
        %v1856 = vrot.slane %v1854, 4
        %v1857 = vor.u32 %v1856, %v1852
        %v1858 = vrot.slane %v1857, 4
        %v1860 = vshll.u32 %v1560, 16
        %v1862 = vrot.slane %v1860, 5
        %v1863 = vsel %vm1575, %v1858, %v1862
        %v1865 = vshrl.u32 %v1561, 16
        %v1867 = vrot.slane %v1865, 4
        %v1868 = vshll.u32 %v1561, 16
        %v1870 = vrot.slane %v1868, 5
        %v1871 = vor.u32 %v1867, %v1870
        %v1872 = vrot.slane %v1871, 4
        %v1874 = vshll.u32 %v1562, 16
        %v1876 = vrot.slane %v1874, 5
        %v1877 = vsel %vm1575, %v1872, %v1876
        %v1878 = vshrl.u32 %v1562, 16
        %v1880 = vrot.slane %v1878, 4
        %v1881 = vor.u32 %v1880, %v1876
        %v1882 = vrot.slane %v1881, 4
        %v1884 = vshll.u32 %v1563, 16
        %v1886 = vrot.slane %v1884, 5
        %v1887 = vsel %vm1575, %v1882, %v1886
        %v1889 = vshrl.u32 %v1564, 16
        %v1891 = vrot.slane %v1889, 4
        %v1892 = vshll.u32 %v1564, 16
        %v1894 = vrot.slane %v1892, 5
        %v1895 = vor.u32 %v1891, %v1894
        %v1896 = vrot.slane %v1895, 4
        %v1898 = vshll.u32 %v1565, 16
        %v1900 = vrot.slane %v1898, 5
        %v1901 = vsel %vm1575, %v1896, %v1900
        %v1902 = vshrl.u32 %v1565, 16
        %v1904 = vrot.slane %v1902, 4
        %v1905 = vor.u32 %v1904, %v1900
        %v1906 = vrot.slane %v1905, 4
        %v1908 = vshll.u32 %v1566, 16
        %v1910 = vrot.slane %v1908, 5
        %v1911 = vsel %vm1575, %v1906, %v1910
        %v1913 = vshrl.u32 %v1567, 16
        %v1915 = vrot.slane %v1913, 4
        %v1916 = vshll.u32 %v1567, 16
        %v1918 = vrot.slane %v1916, 5
        %v1919 = vor.u32 %v1915, %v1918
        %v1920 = vrot.slane %v1919, 4
        %v1922 = vshll.u32 %v1568, 16
        %v1924 = vrot.slane %v1922, 5
        %v1925 = vsel %vm1575, %v1920, %v1924
        %v1926 = vshrl.u32 %v1568, 16
        %v1928 = vrot.slane %v1926, 4
        %v1929 = vor.u32 %v1928, %v1924
        %v1930 = vrot.slane %v1929, 4
        %v1932 = vshll.u32 %v1569, 16
        %v1934 = vrot.slane %v1932, 5
        %v1935 = vsel %vm1575, %v1930, %v1934
        %v1937 = vshrl.u32 %v1570, 16
        %v1939 = vrot.slane %v1937, 4
        %v1940 = vshll.u32 %v1570, 16
        %v1942 = vrot.slane %v1940, 5
        %v1943 = vor.u32 %v1939, %v1942
        %v1944 = vrot.slane %v1943, 4
        %v1946 = vshll.u32 %v1571, 16
        %v1948 = vrot.slane %v1946, 5
        %v1949 = vsel %vm1575, %v1944, %v1948
        %v1950 = vshrl.u32 %v1571, 16
        %v1952 = vrot.slane %v1950, 4
        %v1953 = vor.u32 %v1952, %v1948
        %v1954 = vrot.slane %v1953, 4
        %v1956 = vshll.u32 %v1572, 16
        %v1958 = vrot.slane %v1956, 5
        %v1959 = vsel %vm1575, %v1954, %v1958
        %1960 = vrot.lane.b32.xlu0 %v1589, 64
        %v1961 = vpop.permute.xlu0 %1960
        %1962 = vrot.lane.b32.xlu0 %v1599, 64
        %v1963 = vpop.permute.xlu0 %1962
        %1964 = vrot.lane.b32.xlu0 %v1613, 64
        %v1965 = vpop.permute.xlu0 %1964
        %1966 = vrot.lane.b32.xlu0 %v1623, 64
        %v1967 = vpop.permute.xlu0 %1966
        %1968 = vrot.lane.b32.xlu0 %v1637, 64
        %v1969 = vpop.permute.xlu0 %1968
        %1970 = vrot.lane.b32.xlu0 %v1647, 64
        %v1971 = vpop.permute.xlu0 %1970
        %1972 = vrot.lane.b32.xlu0 %v1661, 64
        %v1973 = vpop.permute.xlu0 %1972
        %1974 = vrot.lane.b32.xlu0 %v1671, 64
        %v1975 = vpop.permute.xlu0 %1974
        %1976 = vrot.lane.b32.xlu0 %v1685, 64
        %v1977 = vpop.permute.xlu0 %1976
        %1978 = vrot.lane.b32.xlu0 %v1695, 64
        %v1979 = vpop.permute.xlu0 %1978
        %1980 = vrot.lane.b32.xlu0 %v1709, 64
        %v1981 = vpop.permute.xlu0 %1980
        %1982 = vrot.lane.b32.xlu0 %v1719, 64
        %v1983 = vpop.permute.xlu0 %1982
        %1984 = vrot.lane.b32.xlu0 %v1733, 64
        %v1985 = vpop.permute.xlu0 %1984
        %1986 = vrot.lane.b32.xlu0 %v1743, 64
        %v1987 = vpop.permute.xlu0 %1986
        %1988 = vrot.lane.b32.xlu0 %v1757, 64
        %v1989 = vpop.permute.xlu0 %1988
        %1990 = vrot.lane.b32.xlu0 %v1767, 64
        %v1991 = vpop.permute.xlu0 %1990
        %1992 = vrot.lane.b32.xlu0 %v1781, 64
        %v1993 = vpop.permute.xlu0 %1992
        %1994 = vrot.lane.b32.xlu0 %v1791, 64
        %v1995 = vpop.permute.xlu0 %1994
        %1996 = vrot.lane.b32.xlu0 %v1805, 64
        %v1997 = vpop.permute.xlu0 %1996
        %1998 = vrot.lane.b32.xlu0 %v1815, 64
        %v1999 = vpop.permute.xlu0 %1998
        %2000 = vrot.lane.b32.xlu0 %v1829, 64
        %v2001 = vpop.permute.xlu0 %2000
        %2002 = vrot.lane.b32.xlu0 %v1839, 64
        %v2003 = vpop.permute.xlu0 %2002
        %2004 = vrot.lane.b32.xlu0 %v1853, 64
        %v2005 = vpop.permute.xlu0 %2004
        %2006 = vrot.lane.b32.xlu0 %v1863, 64
        %v2007 = vpop.permute.xlu0 %2006
        %2008 = vrot.lane.b32.xlu0 %v1877, 64
        %v2009 = vpop.permute.xlu0 %2008
        %2010 = vrot.lane.b32.xlu0 %v1887, 64
        %v2011 = vpop.permute.xlu0 %2010
        %2012 = vrot.lane.b32.xlu0 %v1901, 64
        %v2013 = vpop.permute.xlu0 %2012
        %2014 = vrot.lane.b32.xlu0 %v1911, 64
        %v2015 = vpop.permute.xlu0 %2014
        %2016 = vrot.lane.b32.xlu0 %v1925, 64
        %v2017 = vpop.permute.xlu0 %2016
        %2018 = vrot.lane.b32.xlu0 %v1935, 64
        %v2019 = vpop.permute.xlu0 %2018
        %2020 = vrot.lane.b32.xlu0 %v1949, 64
        %v2021 = vpop.permute.xlu0 %2020
        %2022 = vrot.lane.b32.xlu0 %v1959, 64
        %v2023 = vpop.permute.xlu0 %2022
        %vm2056 = vcmask 1043968
        %2057 = vst.msk [vmem:[#allocation3] sm:$0xf] %vm2056, %v1961
        %2058 = vst.msk [vmem:[#allocation3 + $0x14] sm:$0xf] %vm2056, %v1963
        %2059 = vst.msk [vmem:[#allocation3 + $0x28] sm:$0xf] %vm2056, %v1965
        %2060 = vst.msk [vmem:[#allocation3 + $0x3c] sm:$0xf] %vm2056, %v1967
        %2061 = vst.msk [vmem:[#allocation3 + $0x50] sm:$0xf] %vm2056, %v1969
        %2062 = vst.msk [vmem:[#allocation3 + $0x64] sm:$0xf] %vm2056, %v1971
        %2063 = vst.msk [vmem:[#allocation3 + $0x78] sm:$0xf] %vm2056, %v1973
        %2064 = vst.msk [vmem:[#allocation3 + $0x8c] sm:$0xf] %vm2056, %v1975
        %2065 = vst.msk [vmem:[#allocation3 + $0xa0] sm:$0xf] %vm2056, %v1977
        %2066 = vst.msk [vmem:[#allocation3 + $0xb4] sm:$0xf] %vm2056, %v1979
        %2067 = vst.msk [vmem:[#allocation3 + $0xc8] sm:$0xf] %vm2056, %v1981
        %2068 = vst.msk [vmem:[#allocation3 + $0xdc] sm:$0xf] %vm2056, %v1983
        %2069 = vst.msk [vmem:[#allocation3 + $0xf0] sm:$0xf] %vm2056, %v1985
        %2070 = vst.msk [vmem:[#allocation3 + $0x104] sm:$0xf] %vm2056, %v1987
        %2071 = vst.msk [vmem:[#allocation3 + $0x118] sm:$0xf] %vm2056, %v1989
        %2072 = vst.msk [vmem:[#allocation3 + $0x12c] sm:$0xf] %vm2056, %v1991
        %2073 = vst.msk [vmem:[#allocation3 + $0x140] sm:$0xf] %vm2056, %v1993
        %2074 = vst.msk [vmem:[#allocation3 + $0x154] sm:$0xf] %vm2056, %v1995
        %2075 = vst.msk [vmem:[#allocation3 + $0x168] sm:$0xf] %vm2056, %v1997
        %2076 = vst.msk [vmem:[#allocation3 + $0x17c] sm:$0xf] %vm2056, %v1999
        %2077 = vst.msk [vmem:[#allocation3 + $0x190] sm:$0xf] %vm2056, %v2001
        %2078 = vst.msk [vmem:[#allocation3 + $0x1a4] sm:$0xf] %vm2056, %v2003
        %2079 = vst.msk [vmem:[#allocation3 + $0x1b8] sm:$0xf] %vm2056, %v2005
        %2080 = vst.msk [vmem:[#allocation3 + $0x1cc] sm:$0xf] %vm2056, %v2007
        %2081 = vst.msk [vmem:[#allocation3 + $0x1e0] sm:$0xf] %vm2056, %v2009
        %2082 = vst.msk [vmem:[#allocation3 + $0x1f4] sm:$0xf] %vm2056, %v2011
        %2083 = vst.msk [vmem:[#allocation3 + $0x208] sm:$0xf] %vm2056, %v2013
        %2084 = vst.msk [vmem:[#allocation3 + $0x21c] sm:$0xf] %vm2056, %v2015
        %2085 = vst.msk [vmem:[#allocation3 + $0x230] sm:$0xf] %vm2056, %v2017
        %2086 = vst.msk [vmem:[#allocation3 + $0x244] sm:$0xf] %vm2056, %v2019
        %2087 = vst.msk [vmem:[#allocation3 + $0x258] sm:$0xf] %vm2056, %v2021
        %2088 = vst.msk [vmem:[#allocation3 + $0x26c] sm:$0xf] %vm2056, %v2023
        %v2089 = vld [vmem:[#allocation2] sm:$0xe]
        %v2090 = vld [vmem:[#allocation2 + $0x4] sm:$0xf]
        %v2091 = vld [vmem:[#allocation2 + $0x8] sm:$0x1]
        %v2092 = vld [vmem:[#allocation2 + $0xc] sm:$0xe]
        %v2093 = vld [vmem:[#allocation2 + $0x10] sm:$0xf]
        %v2094 = vld [vmem:[#allocation2 + $0x14] sm:$0x1]
        %v2095 = vld [vmem:[#allocation2 + $0x18] sm:$0xe]
        %v2096 = vld [vmem:[#allocation2 + $0x1c] sm:$0xf]
        %v2097 = vld [vmem:[#allocation2 + $0x20] sm:$0x1]
        %v2098 = vld [vmem:[#allocation2 + $0x24] sm:$0xe]
        %v2099 = vld [vmem:[#allocation2 + $0x28] sm:$0xf]
        %v2100 = vld [vmem:[#allocation2 + $0x2c] sm:$0x1]
        %v2101 = vld [vmem:[#allocation2 + $0x30] sm:$0xe]
        %v2102 = vld [vmem:[#allocation2 + $0x34] sm:$0xf]
        %v2103 = vld [vmem:[#allocation2 + $0x38] sm:$0x1]
        %v2104 = vld [vmem:[#allocation2 + $0x3c] sm:$0xe]
        %v2105 = vld [vmem:[#allocation2 + $0x40] sm:$0xf]
        %v2106 = vld [vmem:[#allocation2 + $0x44] sm:$0x1]
        %v2107 = vld [vmem:[#allocation2 + $0x48] sm:$0xe]
        %v2108 = vld [vmem:[#allocation2 + $0x4c] sm:$0xf]
        %v2109 = vld [vmem:[#allocation2 + $0x50] sm:$0x1]
        %v2110 = vld [vmem:[#allocation2 + $0x54] sm:$0xe]
        %v2111 = vld [vmem:[#allocation2 + $0x58] sm:$0xf]
        %v2112 = vld [vmem:[#allocation2 + $0x5c] sm:$0x1]
        %v2113 = vld [vmem:[#allocation2 + $0x60] sm:$0xe]
        %v2114 = vld [vmem:[#allocation2 + $0x64] sm:$0xf]
        %v2115 = vld [vmem:[#allocation2 + $0x68] sm:$0x1]
        %v2116 = vld [vmem:[#allocation2 + $0x6c] sm:$0xe]
        %v2117 = vld [vmem:[#allocation2 + $0x70] sm:$0xf]
        %v2118 = vld [vmem:[#allocation2 + $0x74] sm:$0x1]
        %v2119 = vld [vmem:[#allocation2 + $0x78] sm:$0xe]
        %v2120 = vld [vmem:[#allocation2 + $0x7c] sm:$0xf]
        %v2121 = vld [vmem:[#allocation2 + $0x80] sm:$0x1]
        %v2122 = vld [vmem:[#allocation2 + $0x84] sm:$0xe]
        %v2123 = vld [vmem:[#allocation2 + $0x88] sm:$0xf]
        %v2124 = vld [vmem:[#allocation2 + $0x8c] sm:$0x1]
        %v2125 = vld [vmem:[#allocation2 + $0x90] sm:$0xe]
        %v2126 = vld [vmem:[#allocation2 + $0x94] sm:$0xf]
        %v2127 = vld [vmem:[#allocation2 + $0x98] sm:$0x1]
        %v2128 = vld [vmem:[#allocation2 + $0x9c] sm:$0xe]
        %v2129 = vld [vmem:[#allocation2 + $0xa0] sm:$0xf]
        %v2130 = vld [vmem:[#allocation2 + $0xa4] sm:$0x1]
        %v2131 = vld [vmem:[#allocation2 + $0xa8] sm:$0xe]
        %v2132 = vld [vmem:[#allocation2 + $0xac] sm:$0xf]
        %v2133 = vld [vmem:[#allocation2 + $0xb0] sm:$0x1]
        %v2134 = vld [vmem:[#allocation2 + $0xb4] sm:$0xe]
        %v2135 = vld [vmem:[#allocation2 + $0xb8] sm:$0xf]
        %v2136 = vld [vmem:[#allocation2 + $0xbc] sm:$0x1]
        %vm2185 = vcmask 1042432
        %vm2186 = vcmask 1046532
        %vm2187 = vmor %vm2185, %vm2186
        %v2188 = vrot.slane %v2089, 5
        %v2189 = vrot.slane %v2188, 4
        %v2190 = vrot.slane %v2090, 5
        %v2191 = vsel %vm2187, %v2189, %v2190
        %v2192 = vrot.slane %v2190, 4
        %v2193 = vrot.slane %v2091, 5
        %v2194 = vsel %vm2187, %v2192, %v2193
        %v2195 = vrot.slane %v2092, 5
        %v2196 = vrot.slane %v2195, 4
        %v2197 = vrot.slane %v2093, 5
        %v2198 = vsel %vm2187, %v2196, %v2197
        %v2199 = vrot.slane %v2197, 4
        %v2200 = vrot.slane %v2094, 5
        %v2201 = vsel %vm2187, %v2199, %v2200
        %v2202 = vrot.slane %v2095, 5
        %v2203 = vrot.slane %v2202, 4
        %v2204 = vrot.slane %v2096, 5
        %v2205 = vsel %vm2187, %v2203, %v2204
        %v2206 = vrot.slane %v2204, 4
        %v2207 = vrot.slane %v2097, 5
        %v2208 = vsel %vm2187, %v2206, %v2207
        %v2209 = vrot.slane %v2098, 5
        %v2210 = vrot.slane %v2209, 4
        %v2211 = vrot.slane %v2099, 5
        %v2212 = vsel %vm2187, %v2210, %v2211
        %v2213 = vrot.slane %v2211, 4
        %v2214 = vrot.slane %v2100, 5
        %v2215 = vsel %vm2187, %v2213, %v2214
        %v2216 = vrot.slane %v2101, 5
        %v2217 = vrot.slane %v2216, 4
        %v2218 = vrot.slane %v2102, 5
        %v2219 = vsel %vm2187, %v2217, %v2218
        %v2220 = vrot.slane %v2218, 4
        %v2221 = vrot.slane %v2103, 5
        %v2222 = vsel %vm2187, %v2220, %v2221
        %v2223 = vrot.slane %v2104, 5
        %v2224 = vrot.slane %v2223, 4
        %v2225 = vrot.slane %v2105, 5
        %v2226 = vsel %vm2187, %v2224, %v2225
        %v2227 = vrot.slane %v2225, 4
        %v2228 = vrot.slane %v2106, 5
        %v2229 = vsel %vm2187, %v2227, %v2228
        %v2230 = vrot.slane %v2107, 5
        %v2231 = vrot.slane %v2230, 4
        %v2232 = vrot.slane %v2108, 5
        %v2233 = vsel %vm2187, %v2231, %v2232
        %v2234 = vrot.slane %v2232, 4
        %v2235 = vrot.slane %v2109, 5
        %v2236 = vsel %vm2187, %v2234, %v2235
        %v2237 = vrot.slane %v2110, 5
        %v2238 = vrot.slane %v2237, 4
        %v2239 = vrot.slane %v2111, 5
        %v2240 = vsel %vm2187, %v2238, %v2239
        %v2241 = vrot.slane %v2239, 4
        %v2242 = vrot.slane %v2112, 5
        %v2243 = vsel %vm2187, %v2241, %v2242
        %v2244 = vrot.slane %v2113, 5
        %v2245 = vrot.slane %v2244, 4
        %v2246 = vrot.slane %v2114, 5
        %v2247 = vsel %vm2187, %v2245, %v2246
        %v2248 = vrot.slane %v2246, 4
        %v2249 = vrot.slane %v2115, 5
        %v2250 = vsel %vm2187, %v2248, %v2249
        %v2251 = vrot.slane %v2116, 5
        %v2252 = vrot.slane %v2251, 4
        %v2253 = vrot.slane %v2117, 5
        %v2254 = vsel %vm2187, %v2252, %v2253
        %v2255 = vrot.slane %v2253, 4
        %v2256 = vrot.slane %v2118, 5
        %v2257 = vsel %vm2187, %v2255, %v2256
        %v2258 = vrot.slane %v2119, 5
        %v2259 = vrot.slane %v2258, 4
        %v2260 = vrot.slane %v2120, 5
        %v2261 = vsel %vm2187, %v2259, %v2260
        %v2262 = vrot.slane %v2260, 4
        %v2263 = vrot.slane %v2121, 5
        %v2264 = vsel %vm2187, %v2262, %v2263
        %v2265 = vrot.slane %v2122, 5
        %v2266 = vrot.slane %v2265, 4
        %v2267 = vrot.slane %v2123, 5
        %v2268 = vsel %vm2187, %v2266, %v2267
        %v2269 = vrot.slane %v2267, 4
        %v2270 = vrot.slane %v2124, 5
        %v2271 = vsel %vm2187, %v2269, %v2270
        %v2272 = vrot.slane %v2125, 5
        %v2273 = vrot.slane %v2272, 4
        %v2274 = vrot.slane %v2126, 5
        %v2275 = vsel %vm2187, %v2273, %v2274
        %v2276 = vrot.slane %v2274, 4
        %v2277 = vrot.slane %v2127, 5
        %v2278 = vsel %vm2187, %v2276, %v2277
        %v2279 = vrot.slane %v2128, 5
        %v2280 = vrot.slane %v2279, 4
        %v2281 = vrot.slane %v2129, 5
        %v2282 = vsel %vm2187, %v2280, %v2281
        %v2283 = vrot.slane %v2281, 4
        %v2284 = vrot.slane %v2130, 5
        %v2285 = vsel %vm2187, %v2283, %v2284
        %v2286 = vrot.slane %v2131, 5
        %v2287 = vrot.slane %v2286, 4
        %v2288 = vrot.slane %v2132, 5
        %v2289 = vsel %vm2187, %v2287, %v2288
        %v2290 = vrot.slane %v2288, 4
        %v2291 = vrot.slane %v2133, 5
        %v2292 = vsel %vm2187, %v2290, %v2291
        %v2293 = vrot.slane %v2134, 5
        %v2294 = vrot.slane %v2293, 4
        %v2295 = vrot.slane %v2135, 5
        %v2296 = vsel %vm2187, %v2294, %v2295
        %v2297 = vrot.slane %v2295, 4
        %v2298 = vrot.slane %v2136, 5
        %v2299 = vsel %vm2187, %v2297, %v2298
        %2332 = vst.msk [vmem:[#allocation3 + $0x4] sm:$0xf] %vm868, %v2191
        %2333 = vst.msk [vmem:[#allocation3 + $0x18] sm:$0xf] %vm868, %v2194
        %2334 = vst.msk [vmem:[#allocation3 + $0x2c] sm:$0xf] %vm868, %v2198
        %2335 = vst.msk [vmem:[#allocation3 + $0x40] sm:$0xf] %vm868, %v2201
        %2336 = vst.msk [vmem:[#allocation3 + $0x54] sm:$0xf] %vm868, %v2205
        %2337 = vst.msk [vmem:[#allocation3 + $0x68] sm:$0xf] %vm868, %v2208
        %2338 = vst.msk [vmem:[#allocation3 + $0x7c] sm:$0xf] %vm868, %v2212
        %2339 = vst.msk [vmem:[#allocation3 + $0x90] sm:$0xf] %vm868, %v2215
        %2340 = vst.msk [vmem:[#allocation3 + $0xa4] sm:$0xf] %vm868, %v2219
        %2341 = vst.msk [vmem:[#allocation3 + $0xb8] sm:$0xf] %vm868, %v2222
        %2342 = vst.msk [vmem:[#allocation3 + $0xcc] sm:$0xf] %vm868, %v2226
        %2343 = vst.msk [vmem:[#allocation3 + $0xe0] sm:$0xf] %vm868, %v2229
        %2344 = vst.msk [vmem:[#allocation3 + $0xf4] sm:$0xf] %vm868, %v2233
        %2345 = vst.msk [vmem:[#allocation3 + $0x108] sm:$0xf] %vm868, %v2236
        %2346 = vst.msk [vmem:[#allocation3 + $0x11c] sm:$0xf] %vm868, %v2240
        %2347 = vst.msk [vmem:[#allocation3 + $0x130] sm:$0xf] %vm868, %v2243
        %2348 = vst.msk [vmem:[#allocation3 + $0x144] sm:$0xf] %vm868, %v2247
        %2349 = vst.msk [vmem:[#allocation3 + $0x158] sm:$0xf] %vm868, %v2250
        %2350 = vst.msk [vmem:[#allocation3 + $0x16c] sm:$0xf] %vm868, %v2254
        %2351 = vst.msk [vmem:[#allocation3 + $0x180] sm:$0xf] %vm868, %v2257
        %2352 = vst.msk [vmem:[#allocation3 + $0x194] sm:$0xf] %vm868, %v2261
        %2353 = vst.msk [vmem:[#allocation3 + $0x1a8] sm:$0xf] %vm868, %v2264
        %2354 = vst.msk [vmem:[#allocation3 + $0x1bc] sm:$0xf] %vm868, %v2268
        %2355 = vst.msk [vmem:[#allocation3 + $0x1d0] sm:$0xf] %vm868, %v2271
        %2356 = vst.msk [vmem:[#allocation3 + $0x1e4] sm:$0xf] %vm868, %v2275
        %2357 = vst.msk [vmem:[#allocation3 + $0x1f8] sm:$0xf] %vm868, %v2278
        %2358 = vst.msk [vmem:[#allocation3 + $0x20c] sm:$0xf] %vm868, %v2282
        %2359 = vst.msk [vmem:[#allocation3 + $0x220] sm:$0xf] %vm868, %v2285
        %2360 = vst.msk [vmem:[#allocation3 + $0x234] sm:$0xf] %vm868, %v2289
        %2361 = vst.msk [vmem:[#allocation3 + $0x248] sm:$0xf] %vm868, %v2292
        %2362 = vst.msk [vmem:[#allocation3 + $0x25c] sm:$0xf] %vm868, %v2296
        %2363 = vst.msk [vmem:[#allocation3 + $0x270] sm:$0xf] %vm868, %v2299
        %v2364 = vld [vmem:[%s1343] sm:$0xf]
        %v2365 = vld [vmem:[%s1343 + $0x4] sm:$0xf]
        %v2366 = vld [vmem:[%s1343 + $0xc] sm:$0xf]
        %v2367 = vld [vmem:[%s1343 + $0x10] sm:$0xf]
        %v2368 = vld [vmem:[%s1343 + $0x18] sm:$0xf]
        %v2369 = vld [vmem:[%s1343 + $0x1c] sm:$0xf]
        %v2370 = vld [vmem:[%s1343 + $0x24] sm:$0xf]
        %v2371 = vld [vmem:[%s1343 + $0x28] sm:$0xf]
        %v2372 = vld [vmem:[%s1343 + $0x30] sm:$0xf]
        %v2373 = vld [vmem:[%s1343 + $0x34] sm:$0xf]
        %v2374 = vld [vmem:[%s1343 + $0x3c] sm:$0xf]
        %v2375 = vld [vmem:[%s1343 + $0x40] sm:$0xf]
        %v2376 = vld [vmem:[%s1343 + $0x48] sm:$0xf]
        %v2377 = vld [vmem:[%s1343 + $0x4c] sm:$0xf]
        %v2378 = vld [vmem:[%s1343 + $0x54] sm:$0xf]
        %v2379 = vld [vmem:[%s1343 + $0x58] sm:$0xf]
        %v2380 = vld [vmem:[%s1343 + $0x60] sm:$0xf]
        %v2381 = vld [vmem:[%s1343 + $0x64] sm:$0xf]
        %v2382 = vld [vmem:[%s1343 + $0x6c] sm:$0xf]
        %v2383 = vld [vmem:[%s1343 + $0x70] sm:$0xf]
        %v2384 = vld [vmem:[%s1343 + $0x78] sm:$0xf]
        %v2385 = vld [vmem:[%s1343 + $0x7c] sm:$0xf]
        %v2386 = vld [vmem:[%s1343 + $0x84] sm:$0xf]
        %v2387 = vld [vmem:[%s1343 + $0x88] sm:$0xf]
        %v2388 = vld [vmem:[%s1343 + $0x90] sm:$0xf]
        %v2389 = vld [vmem:[%s1343 + $0x94] sm:$0xf]
        %v2390 = vld [vmem:[%s1343 + $0x9c] sm:$0xf]
        %v2391 = vld [vmem:[%s1343 + $0xa0] sm:$0xf]
        %v2392 = vld [vmem:[%s1343 + $0xa8] sm:$0xf]
        %v2393 = vld [vmem:[%s1343 + $0xac] sm:$0xf]
        %v2394 = vld [vmem:[%s1343 + $0xb4] sm:$0xf]
        %v2395 = vld [vmem:[%s1343 + $0xb8] sm:$0xf]
        %2428 = vrot.lane.b32.xlu0 %v2364, 64
        %v2429 = vpop.permute.xlu0 %2428
        %2430 = vrot.lane.b32.xlu0 %v2365, 64
        %v2431 = vpop.permute.xlu0 %2430
        %2432 = vrot.lane.b32.xlu0 %v2366, 64
        %v2433 = vpop.permute.xlu0 %2432
        %2434 = vrot.lane.b32.xlu0 %v2367, 64
        %v2435 = vpop.permute.xlu0 %2434
        %2436 = vrot.lane.b32.xlu0 %v2368, 64
        %v2437 = vpop.permute.xlu0 %2436
        %2438 = vrot.lane.b32.xlu0 %v2369, 64
        %v2439 = vpop.permute.xlu0 %2438
        %2440 = vrot.lane.b32.xlu0 %v2370, 64
        %v2441 = vpop.permute.xlu0 %2440
        %2442 = vrot.lane.b32.xlu0 %v2371, 64
        %v2443 = vpop.permute.xlu0 %2442
        %2444 = vrot.lane.b32.xlu0 %v2372, 64
        %v2445 = vpop.permute.xlu0 %2444
        %2446 = vrot.lane.b32.xlu0 %v2373, 64
        %v2447 = vpop.permute.xlu0 %2446
        %2448 = vrot.lane.b32.xlu0 %v2374, 64
        %v2449 = vpop.permute.xlu0 %2448
        %2450 = vrot.lane.b32.xlu0 %v2375, 64
        %v2451 = vpop.permute.xlu0 %2450
        %2452 = vrot.lane.b32.xlu0 %v2376, 64
        %v2453 = vpop.permute.xlu0 %2452
        %2454 = vrot.lane.b32.xlu0 %v2377, 64
        %v2455 = vpop.permute.xlu0 %2454
        %2456 = vrot.lane.b32.xlu0 %v2378, 64
        %v2457 = vpop.permute.xlu0 %2456
        %2458 = vrot.lane.b32.xlu0 %v2379, 64
        %v2459 = vpop.permute.xlu0 %2458
        %2460 = vrot.lane.b32.xlu0 %v2380, 64
        %v2461 = vpop.permute.xlu0 %2460
        %2462 = vrot.lane.b32.xlu0 %v2381, 64
        %v2463 = vpop.permute.xlu0 %2462
        %2464 = vrot.lane.b32.xlu0 %v2382, 64
        %v2465 = vpop.permute.xlu0 %2464
        %2466 = vrot.lane.b32.xlu0 %v2383, 64
        %v2467 = vpop.permute.xlu0 %2466
        %2468 = vrot.lane.b32.xlu0 %v2384, 64
        %v2469 = vpop.permute.xlu0 %2468
        %2470 = vrot.lane.b32.xlu0 %v2385, 64
        %v2471 = vpop.permute.xlu0 %2470
        %2472 = vrot.lane.b32.xlu0 %v2386, 64
        %v2473 = vpop.permute.xlu0 %2472
        %2474 = vrot.lane.b32.xlu0 %v2387, 64
        %v2475 = vpop.permute.xlu0 %2474
        %2476 = vrot.lane.b32.xlu0 %v2388, 64
        %v2477 = vpop.permute.xlu0 %2476
        %2478 = vrot.lane.b32.xlu0 %v2389, 64
        %v2479 = vpop.permute.xlu0 %2478
        %2480 = vrot.lane.b32.xlu0 %v2390, 64
        %v2481 = vpop.permute.xlu0 %2480
        %2482 = vrot.lane.b32.xlu0 %v2391, 64
        %v2483 = vpop.permute.xlu0 %2482
        %2484 = vrot.lane.b32.xlu0 %v2392, 64
        %v2485 = vpop.permute.xlu0 %2484
        %2486 = vrot.lane.b32.xlu0 %v2393, 64
        %v2487 = vpop.permute.xlu0 %2486
        %2488 = vrot.lane.b32.xlu0 %v2394, 64
        %v2489 = vpop.permute.xlu0 %2488
        %2490 = vrot.lane.b32.xlu0 %v2395, 64
        %v2491 = vpop.permute.xlu0 %2490
        %2524 = vst.msk [vmem:[#allocation3 + $0x4] sm:$0xf] %vm2056, %v2429
        %2525 = vst.msk [vmem:[#allocation3 + $0x18] sm:$0xf] %vm2056, %v2431
        %2526 = vst.msk [vmem:[#allocation3 + $0x2c] sm:$0xf] %vm2056, %v2433
        %2527 = vst.msk [vmem:[#allocation3 + $0x40] sm:$0xf] %vm2056, %v2435
        %2528 = vst.msk [vmem:[#allocation3 + $0x54] sm:$0xf] %vm2056, %v2437
        %2529 = vst.msk [vmem:[#allocation3 + $0x68] sm:$0xf] %vm2056, %v2439
        %2530 = vst.msk [vmem:[#allocation3 + $0x7c] sm:$0xf] %vm2056, %v2441
        %2531 = vst.msk [vmem:[#allocation3 + $0x90] sm:$0xf] %vm2056, %v2443
        %2532 = vst.msk [vmem:[#allocation3 + $0xa4] sm:$0xf] %vm2056, %v2445
        %2533 = vst.msk [vmem:[#allocation3 + $0xb8] sm:$0xf] %vm2056, %v2447
        %2534 = vst.msk [vmem:[#allocation3 + $0xcc] sm:$0xf] %vm2056, %v2449
        %2535 = vst.msk [vmem:[#allocation3 + $0xe0] sm:$0xf] %vm2056, %v2451
        %2536 = vst.msk [vmem:[#allocation3 + $0xf4] sm:$0xf] %vm2056, %v2453
        %2537 = vst.msk [vmem:[#allocation3 + $0x108] sm:$0xf] %vm2056, %v2455
        %2538 = vst.msk [vmem:[#allocation3 + $0x11c] sm:$0xf] %vm2056, %v2457
        %2539 = vst.msk [vmem:[#allocation3 + $0x130] sm:$0xf] %vm2056, %v2459
        %2540 = vst.msk [vmem:[#allocation3 + $0x144] sm:$0xf] %vm2056, %v2461
        %2541 = vst.msk [vmem:[#allocation3 + $0x158] sm:$0xf] %vm2056, %v2463
        %2542 = vst.msk [vmem:[#allocation3 + $0x16c] sm:$0xf] %vm2056, %v2465
        %2543 = vst.msk [vmem:[#allocation3 + $0x180] sm:$0xf] %vm2056, %v2467
        %2544 = vst.msk [vmem:[#allocation3 + $0x194] sm:$0xf] %vm2056, %v2469
        %2545 = vst.msk [vmem:[#allocation3 + $0x1a8] sm:$0xf] %vm2056, %v2471
        %2546 = vst.msk [vmem:[#allocation3 + $0x1bc] sm:$0xf] %vm2056, %v2473
        %2547 = vst.msk [vmem:[#allocation3 + $0x1d0] sm:$0xf] %vm2056, %v2475
        %2548 = vst.msk [vmem:[#allocation3 + $0x1e4] sm:$0xf] %vm2056, %v2477
        %2549 = vst.msk [vmem:[#allocation3 + $0x1f8] sm:$0xf] %vm2056, %v2479
        %2550 = vst.msk [vmem:[#allocation3 + $0x20c] sm:$0xf] %vm2056, %v2481
        %2551 = vst.msk [vmem:[#allocation3 + $0x220] sm:$0xf] %vm2056, %v2483
        %2552 = vst.msk [vmem:[#allocation3 + $0x234] sm:$0xf] %vm2056, %v2485
        %2553 = vst.msk [vmem:[#allocation3 + $0x248] sm:$0xf] %vm2056, %v2487
        %2554 = vst.msk [vmem:[#allocation3 + $0x25c] sm:$0xf] %vm2056, %v2489
        %2555 = vst.msk [vmem:[#allocation3 + $0x270] sm:$0xf] %vm2056, %v2491
        %v2556 = vld [vmem:[%s1343] sm:$0xf]
        %v2557 = vld [vmem:[%s1343 + $0x4] sm:$0xf]
        %v2558 = vld [vmem:[%s1343 + $0x8] sm:$0x1]
        %v2559 = vld [vmem:[%s1343 + $0xc] sm:$0xf]
        %v2560 = vld [vmem:[%s1343 + $0x10] sm:$0xf]
        %v2561 = vld [vmem:[%s1343 + $0x14] sm:$0x1]
        %v2562 = vld [vmem:[%s1343 + $0x18] sm:$0xf]
        %v2563 = vld [vmem:[%s1343 + $0x1c] sm:$0xf]
        %v2564 = vld [vmem:[%s1343 + $0x20] sm:$0x1]
        %v2565 = vld [vmem:[%s1343 + $0x24] sm:$0xf]
        %v2566 = vld [vmem:[%s1343 + $0x28] sm:$0xf]
        %v2567 = vld [vmem:[%s1343 + $0x2c] sm:$0x1]
        %v2568 = vld [vmem:[%s1343 + $0x30] sm:$0xf]
        %v2569 = vld [vmem:[%s1343 + $0x34] sm:$0xf]
        %v2570 = vld [vmem:[%s1343 + $0x38] sm:$0x1]
        %v2571 = vld [vmem:[%s1343 + $0x3c] sm:$0xf]
        %v2572 = vld [vmem:[%s1343 + $0x40] sm:$0xf]
        %v2573 = vld [vmem:[%s1343 + $0x44] sm:$0x1]
        %v2574 = vld [vmem:[%s1343 + $0x48] sm:$0xf]
        %v2575 = vld [vmem:[%s1343 + $0x4c] sm:$0xf]
        %v2576 = vld [vmem:[%s1343 + $0x50] sm:$0x1]
        %v2577 = vld [vmem:[%s1343 + $0x54] sm:$0xf]
        %v2578 = vld [vmem:[%s1343 + $0x58] sm:$0xf]
        %v2579 = vld [vmem:[%s1343 + $0x5c] sm:$0x1]
        %v2580 = vld [vmem:[%s1343 + $0x60] sm:$0xf]
        %v2581 = vld [vmem:[%s1343 + $0x64] sm:$0xf]
        %v2582 = vld [vmem:[%s1343 + $0x68] sm:$0x1]
        %v2583 = vld [vmem:[%s1343 + $0x6c] sm:$0xf]
        %v2584 = vld [vmem:[%s1343 + $0x70] sm:$0xf]
        %v2585 = vld [vmem:[%s1343 + $0x74] sm:$0x1]
        %v2586 = vld [vmem:[%s1343 + $0x78] sm:$0xf]
        %v2587 = vld [vmem:[%s1343 + $0x7c] sm:$0xf]
        %v2588 = vld [vmem:[%s1343 + $0x80] sm:$0x1]
        %v2589 = vld [vmem:[%s1343 + $0x84] sm:$0xf]
        %v2590 = vld [vmem:[%s1343 + $0x88] sm:$0xf]
        %v2591 = vld [vmem:[%s1343 + $0x8c] sm:$0x1]
        %v2592 = vld [vmem:[%s1343 + $0x90] sm:$0xf]
        %v2593 = vld [vmem:[%s1343 + $0x94] sm:$0xf]
        %v2594 = vld [vmem:[%s1343 + $0x98] sm:$0x1]
        %v2595 = vld [vmem:[%s1343 + $0x9c] sm:$0xf]
        %v2596 = vld [vmem:[%s1343 + $0xa0] sm:$0xf]
        %v2597 = vld [vmem:[%s1343 + $0xa4] sm:$0x1]
        %v2598 = vld [vmem:[%s1343 + $0xa8] sm:$0xf]
        %v2599 = vld [vmem:[%s1343 + $0xac] sm:$0xf]
        %v2600 = vld [vmem:[%s1343 + $0xb0] sm:$0x1]
        %v2601 = vld [vmem:[%s1343 + $0xb4] sm:$0xf]
        %v2602 = vld [vmem:[%s1343 + $0xb8] sm:$0xf]
        %v2603 = vld [vmem:[%s1343 + $0xbc] sm:$0x1]
        %v2605 = vshrl.u32 %v2556, 16
        %v2607 = vrot.slane %v2605, 4
        %v2608 = vshll.u32 %v2556, 16
        %v2610 = vrot.slane %v2608, 5
        %v2611 = vor.u32 %v2607, %v2610
        %v2612 = vrot.slane %v2611, 4
        %v2614 = vshll.u32 %v2557, 16
        %v2616 = vrot.slane %v2614, 5
        %v2617 = vsel %vm1575, %v2612, %v2616
        %v2618 = vshrl.u32 %v2557, 16
        %v2620 = vrot.slane %v2618, 4
        %v2621 = vor.u32 %v2620, %v2616
        %v2622 = vrot.slane %v2621, 4
        %v2624 = vshll.u32 %v2558, 16
        %v2626 = vrot.slane %v2624, 5
        %v2627 = vsel %vm1575, %v2622, %v2626
        %v2629 = vshrl.u32 %v2559, 16
        %v2631 = vrot.slane %v2629, 4
        %v2632 = vshll.u32 %v2559, 16
        %v2634 = vrot.slane %v2632, 5
        %v2635 = vor.u32 %v2631, %v2634
        %v2636 = vrot.slane %v2635, 4
        %v2638 = vshll.u32 %v2560, 16
        %v2640 = vrot.slane %v2638, 5
        %v2641 = vsel %vm1575, %v2636, %v2640
        %v2642 = vshrl.u32 %v2560, 16
        %v2644 = vrot.slane %v2642, 4
        %v2645 = vor.u32 %v2644, %v2640
        %v2646 = vrot.slane %v2645, 4
        %v2648 = vshll.u32 %v2561, 16
        %v2650 = vrot.slane %v2648, 5
        %v2651 = vsel %vm1575, %v2646, %v2650
        %v2653 = vshrl.u32 %v2562, 16
        %v2655 = vrot.slane %v2653, 4
        %v2656 = vshll.u32 %v2562, 16
        %v2658 = vrot.slane %v2656, 5
        %v2659 = vor.u32 %v2655, %v2658
        %v2660 = vrot.slane %v2659, 4
        %v2662 = vshll.u32 %v2563, 16
        %v2664 = vrot.slane %v2662, 5
        %v2665 = vsel %vm1575, %v2660, %v2664
        %v2666 = vshrl.u32 %v2563, 16
        %v2668 = vrot.slane %v2666, 4
        %v2669 = vor.u32 %v2668, %v2664
        %v2670 = vrot.slane %v2669, 4
        %v2672 = vshll.u32 %v2564, 16
        %v2674 = vrot.slane %v2672, 5
        %v2675 = vsel %vm1575, %v2670, %v2674
        %v2677 = vshrl.u32 %v2565, 16
        %v2679 = vrot.slane %v2677, 4
        %v2680 = vshll.u32 %v2565, 16
        %v2682 = vrot.slane %v2680, 5
        %v2683 = vor.u32 %v2679, %v2682
        %v2684 = vrot.slane %v2683, 4
        %v2686 = vshll.u32 %v2566, 16
        %v2688 = vrot.slane %v2686, 5
        %v2689 = vsel %vm1575, %v2684, %v2688
        %v2690 = vshrl.u32 %v2566, 16
        %v2692 = vrot.slane %v2690, 4
        %v2693 = vor.u32 %v2692, %v2688
        %v2694 = vrot.slane %v2693, 4
        %v2696 = vshll.u32 %v2567, 16
        %v2698 = vrot.slane %v2696, 5
        %v2699 = vsel %vm1575, %v2694, %v2698
        %v2701 = vshrl.u32 %v2568, 16
        %v2703 = vrot.slane %v2701, 4
        %v2704 = vshll.u32 %v2568, 16
        %v2706 = vrot.slane %v2704, 5
        %v2707 = vor.u32 %v2703, %v2706
        %v2708 = vrot.slane %v2707, 4
        %v2710 = vshll.u32 %v2569, 16
        %v2712 = vrot.slane %v2710, 5
        %v2713 = vsel %vm1575, %v2708, %v2712
        %v2714 = vshrl.u32 %v2569, 16
        %v2716 = vrot.slane %v2714, 4
        %v2717 = vor.u32 %v2716, %v2712
        %v2718 = vrot.slane %v2717, 4
        %v2720 = vshll.u32 %v2570, 16
        %v2722 = vrot.slane %v2720, 5
        %v2723 = vsel %vm1575, %v2718, %v2722
        %v2725 = vshrl.u32 %v2571, 16
        %v2727 = vrot.slane %v2725, 4
        %v2728 = vshll.u32 %v2571, 16
        %v2730 = vrot.slane %v2728, 5
        %v2731 = vor.u32 %v2727, %v2730
        %v2732 = vrot.slane %v2731, 4
        %v2734 = vshll.u32 %v2572, 16
        %v2736 = vrot.slane %v2734, 5
        %v2737 = vsel %vm1575, %v2732, %v2736
        %v2738 = vshrl.u32 %v2572, 16
        %v2740 = vrot.slane %v2738, 4
        %v2741 = vor.u32 %v2740, %v2736
        %v2742 = vrot.slane %v2741, 4
        %v2744 = vshll.u32 %v2573, 16
        %v2746 = vrot.slane %v2744, 5
        %v2747 = vsel %vm1575, %v2742, %v2746
        %v2749 = vshrl.u32 %v2574, 16
        %v2751 = vrot.slane %v2749, 4
        %v2752 = vshll.u32 %v2574, 16
        %v2754 = vrot.slane %v2752, 5
        %v2755 = vor.u32 %v2751, %v2754
        %v2756 = vrot.slane %v2755, 4
        %v2758 = vshll.u32 %v2575, 16
        %v2760 = vrot.slane %v2758, 5
        %v2761 = vsel %vm1575, %v2756, %v2760
        %v2762 = vshrl.u32 %v2575, 16
        %v2764 = vrot.slane %v2762, 4
        %v2765 = vor.u32 %v2764, %v2760
        %v2766 = vrot.slane %v2765, 4
        %v2768 = vshll.u32 %v2576, 16
        %v2770 = vrot.slane %v2768, 5
        %v2771 = vsel %vm1575, %v2766, %v2770
        %v2773 = vshrl.u32 %v2577, 16
        %v2775 = vrot.slane %v2773, 4
        %v2776 = vshll.u32 %v2577, 16
        %v2778 = vrot.slane %v2776, 5
        %v2779 = vor.u32 %v2775, %v2778
        %v2780 = vrot.slane %v2779, 4
        %v2782 = vshll.u32 %v2578, 16
        %v2784 = vrot.slane %v2782, 5
        %v2785 = vsel %vm1575, %v2780, %v2784
        %v2786 = vshrl.u32 %v2578, 16
        %v2788 = vrot.slane %v2786, 4
        %v2789 = vor.u32 %v2788, %v2784
        %v2790 = vrot.slane %v2789, 4
        %v2792 = vshll.u32 %v2579, 16
        %v2794 = vrot.slane %v2792, 5
        %v2795 = vsel %vm1575, %v2790, %v2794
        %v2797 = vshrl.u32 %v2580, 16
        %v2799 = vrot.slane %v2797, 4
        %v2800 = vshll.u32 %v2580, 16
        %v2802 = vrot.slane %v2800, 5
        %v2803 = vor.u32 %v2799, %v2802
        %v2804 = vrot.slane %v2803, 4
        %v2806 = vshll.u32 %v2581, 16
        %v2808 = vrot.slane %v2806, 5
        %v2809 = vsel %vm1575, %v2804, %v2808
        %v2810 = vshrl.u32 %v2581, 16
        %v2812 = vrot.slane %v2810, 4
        %v2813 = vor.u32 %v2812, %v2808
        %v2814 = vrot.slane %v2813, 4
        %v2816 = vshll.u32 %v2582, 16
        %v2818 = vrot.slane %v2816, 5
        %v2819 = vsel %vm1575, %v2814, %v2818
        %v2821 = vshrl.u32 %v2583, 16
        %v2823 = vrot.slane %v2821, 4
        %v2824 = vshll.u32 %v2583, 16
        %v2826 = vrot.slane %v2824, 5
        %v2827 = vor.u32 %v2823, %v2826
        %v2828 = vrot.slane %v2827, 4
        %v2830 = vshll.u32 %v2584, 16
        %v2832 = vrot.slane %v2830, 5
        %v2833 = vsel %vm1575, %v2828, %v2832
        %v2834 = vshrl.u32 %v2584, 16
        %v2836 = vrot.slane %v2834, 4
        %v2837 = vor.u32 %v2836, %v2832
        %v2838 = vrot.slane %v2837, 4
        %v2840 = vshll.u32 %v2585, 16
        %v2842 = vrot.slane %v2840, 5
        %v2843 = vsel %vm1575, %v2838, %v2842
        %v2845 = vshrl.u32 %v2586, 16
        %v2847 = vrot.slane %v2845, 4
        %v2848 = vshll.u32 %v2586, 16
        %v2850 = vrot.slane %v2848, 5
        %v2851 = vor.u32 %v2847, %v2850
        %v2852 = vrot.slane %v2851, 4
        %v2854 = vshll.u32 %v2587, 16
        %v2856 = vrot.slane %v2854, 5
        %v2857 = vsel %vm1575, %v2852, %v2856
        %v2858 = vshrl.u32 %v2587, 16
        %v2860 = vrot.slane %v2858, 4
        %v2861 = vor.u32 %v2860, %v2856
        %v2862 = vrot.slane %v2861, 4
        %v2864 = vshll.u32 %v2588, 16
        %v2866 = vrot.slane %v2864, 5
        %v2867 = vsel %vm1575, %v2862, %v2866
        %v2869 = vshrl.u32 %v2589, 16
        %v2871 = vrot.slane %v2869, 4
        %v2872 = vshll.u32 %v2589, 16
        %v2874 = vrot.slane %v2872, 5
        %v2875 = vor.u32 %v2871, %v2874
        %v2876 = vrot.slane %v2875, 4
        %v2878 = vshll.u32 %v2590, 16
        %v2880 = vrot.slane %v2878, 5
        %v2881 = vsel %vm1575, %v2876, %v2880
        %v2882 = vshrl.u32 %v2590, 16
        %v2884 = vrot.slane %v2882, 4
        %v2885 = vor.u32 %v2884, %v2880
        %v2886 = vrot.slane %v2885, 4
        %v2888 = vshll.u32 %v2591, 16
        %v2890 = vrot.slane %v2888, 5
        %v2891 = vsel %vm1575, %v2886, %v2890
        %v2893 = vshrl.u32 %v2592, 16
        %v2895 = vrot.slane %v2893, 4
        %v2896 = vshll.u32 %v2592, 16
        %v2898 = vrot.slane %v2896, 5
        %v2899 = vor.u32 %v2895, %v2898
        %v2900 = vrot.slane %v2899, 4
        %v2902 = vshll.u32 %v2593, 16
        %v2904 = vrot.slane %v2902, 5
        %v2905 = vsel %vm1575, %v2900, %v2904
        %v2906 = vshrl.u32 %v2593, 16
        %v2908 = vrot.slane %v2906, 4
        %v2909 = vor.u32 %v2908, %v2904
        %v2910 = vrot.slane %v2909, 4
        %v2912 = vshll.u32 %v2594, 16
        %v2914 = vrot.slane %v2912, 5
        %v2915 = vsel %vm1575, %v2910, %v2914
        %v2917 = vshrl.u32 %v2595, 16
        %v2919 = vrot.slane %v2917, 4
        %v2920 = vshll.u32 %v2595, 16
        %v2922 = vrot.slane %v2920, 5
        %v2923 = vor.u32 %v2919, %v2922
        %v2924 = vrot.slane %v2923, 4
        %v2926 = vshll.u32 %v2596, 16
        %v2928 = vrot.slane %v2926, 5
        %v2929 = vsel %vm1575, %v2924, %v2928
        %v2930 = vshrl.u32 %v2596, 16
        %v2932 = vrot.slane %v2930, 4
        %v2933 = vor.u32 %v2932, %v2928
        %v2934 = vrot.slane %v2933, 4
        %v2936 = vshll.u32 %v2597, 16
        %v2938 = vrot.slane %v2936, 5
        %v2939 = vsel %vm1575, %v2934, %v2938
        %v2941 = vshrl.u32 %v2598, 16
        %v2943 = vrot.slane %v2941, 4
        %v2944 = vshll.u32 %v2598, 16
        %v2946 = vrot.slane %v2944, 5
        %v2947 = vor.u32 %v2943, %v2946
        %v2948 = vrot.slane %v2947, 4
        %v2950 = vshll.u32 %v2599, 16
        %v2952 = vrot.slane %v2950, 5
        %v2953 = vsel %vm1575, %v2948, %v2952
        %v2954 = vshrl.u32 %v2599, 16
        %v2956 = vrot.slane %v2954, 4
        %v2957 = vor.u32 %v2956, %v2952
        %v2958 = vrot.slane %v2957, 4
        %v2960 = vshll.u32 %v2600, 16
        %v2962 = vrot.slane %v2960, 5
        %v2963 = vsel %vm1575, %v2958, %v2962
        %v2965 = vshrl.u32 %v2601, 16
        %v2967 = vrot.slane %v2965, 4
        %v2968 = vshll.u32 %v2601, 16
        %v2970 = vrot.slane %v2968, 5
        %v2971 = vor.u32 %v2967, %v2970
        %v2972 = vrot.slane %v2971, 4
        %v2974 = vshll.u32 %v2602, 16
        %v2976 = vrot.slane %v2974, 5
        %v2977 = vsel %vm1575, %v2972, %v2976
        %v2978 = vshrl.u32 %v2602, 16
        %v2980 = vrot.slane %v2978, 4
        %v2981 = vor.u32 %v2980, %v2976
        %v2982 = vrot.slane %v2981, 4
        %v2984 = vshll.u32 %v2603, 16
        %v2986 = vrot.slane %v2984, 5
        %v2987 = vsel %vm1575, %v2982, %v2986
        %3020 = vst.msk [vmem:[#allocation3 + $0x8] sm:$0xf] %vm868, %v2617
        %3021 = vst.msk [vmem:[#allocation3 + $0x1c] sm:$0xf] %vm868, %v2627
        %3022 = vst.msk [vmem:[#allocation3 + $0x30] sm:$0xf] %vm868, %v2641
        %3023 = vst.msk [vmem:[#allocation3 + $0x44] sm:$0xf] %vm868, %v2651
        %3024 = vst.msk [vmem:[#allocation3 + $0x58] sm:$0xf] %vm868, %v2665
        %3025 = vst.msk [vmem:[#allocation3 + $0x6c] sm:$0xf] %vm868, %v2675
        %3026 = vst.msk [vmem:[#allocation3 + $0x80] sm:$0xf] %vm868, %v2689
        %3027 = vst.msk [vmem:[#allocation3 + $0x94] sm:$0xf] %vm868, %v2699
        %3028 = vst.msk [vmem:[#allocation3 + $0xa8] sm:$0xf] %vm868, %v2713
        %3029 = vst.msk [vmem:[#allocation3 + $0xbc] sm:$0xf] %vm868, %v2723
        %3030 = vst.msk [vmem:[#allocation3 + $0xd0] sm:$0xf] %vm868, %v2737
        %3031 = vst.msk [vmem:[#allocation3 + $0xe4] sm:$0xf] %vm868, %v2747
        %3032 = vst.msk [vmem:[#allocation3 + $0xf8] sm:$0xf] %vm868, %v2761
        %3033 = vst.msk [vmem:[#allocation3 + $0x10c] sm:$0xf] %vm868, %v2771
        %3034 = vst.msk [vmem:[#allocation3 + $0x120] sm:$0xf] %vm868, %v2785
        %3035 = vst.msk [vmem:[#allocation3 + $0x134] sm:$0xf] %vm868, %v2795
        %3036 = vst.msk [vmem:[#allocation3 + $0x148] sm:$0xf] %vm868, %v2809
        %3037 = vst.msk [vmem:[#allocation3 + $0x15c] sm:$0xf] %vm868, %v2819
        %3038 = vst.msk [vmem:[#allocation3 + $0x170] sm:$0xf] %vm868, %v2833
        %3039 = vst.msk [vmem:[#allocation3 + $0x184] sm:$0xf] %vm868, %v2843
        %3040 = vst.msk [vmem:[#allocation3 + $0x198] sm:$0xf] %vm868, %v2857
        %3041 = vst.msk [vmem:[#allocation3 + $0x1ac] sm:$0xf] %vm868, %v2867
        %3042 = vst.msk [vmem:[#allocation3 + $0x1c0] sm:$0xf] %vm868, %v2881
        %3043 = vst.msk [vmem:[#allocation3 + $0x1d4] sm:$0xf] %vm868, %v2891
        %3044 = vst.msk [vmem:[#allocation3 + $0x1e8] sm:$0xf] %vm868, %v2905
        %3045 = vst.msk [vmem:[#allocation3 + $0x1fc] sm:$0xf] %vm868, %v2915
        %3046 = vst.msk [vmem:[#allocation3 + $0x210] sm:$0xf] %vm868, %v2929
        %3047 = vst.msk [vmem:[#allocation3 + $0x224] sm:$0xf] %vm868, %v2939
        %3048 = vst.msk [vmem:[#allocation3 + $0x238] sm:$0xf] %vm868, %v2953
        %3049 = vst.msk [vmem:[#allocation3 + $0x24c] sm:$0xf] %vm868, %v2963
        %3050 = vst.msk [vmem:[#allocation3 + $0x260] sm:$0xf] %vm868, %v2977
        %3051 = vst.msk [vmem:[#allocation3 + $0x274] sm:$0xf] %vm868, %v2987
        %v3052 = vld [vmem:[%s1343] sm:$0xe]
        %v3053 = vld [vmem:[%s1343 + $0x4] sm:$0xf]
        %v3054 = vld [vmem:[%s1343 + $0x8] sm:$0x1]
        %v3055 = vld [vmem:[%s1343 + $0xc] sm:$0xe]
        %v3056 = vld [vmem:[%s1343 + $0x10] sm:$0xf]
        %v3057 = vld [vmem:[%s1343 + $0x14] sm:$0x1]
        %v3058 = vld [vmem:[%s1343 + $0x18] sm:$0xe]
        %v3059 = vld [vmem:[%s1343 + $0x1c] sm:$0xf]
        %v3060 = vld [vmem:[%s1343 + $0x20] sm:$0x1]
        %v3061 = vld [vmem:[%s1343 + $0x24] sm:$0xe]
        %v3062 = vld [vmem:[%s1343 + $0x28] sm:$0xf]
        %v3063 = vld [vmem:[%s1343 + $0x2c] sm:$0x1]
        %v3064 = vld [vmem:[%s1343 + $0x30] sm:$0xe]
        %v3065 = vld [vmem:[%s1343 + $0x34] sm:$0xf]
        %v3066 = vld [vmem:[%s1343 + $0x38] sm:$0x1]
        %v3067 = vld [vmem:[%s1343 + $0x3c] sm:$0xe]
        %v3068 = vld [vmem:[%s1343 + $0x40] sm:$0xf]
        %v3069 = vld [vmem:[%s1343 + $0x44] sm:$0x1]
        %v3070 = vld [vmem:[%s1343 + $0x48] sm:$0xe]
        %v3071 = vld [vmem:[%s1343 + $0x4c] sm:$0xf]
        %v3072 = vld [vmem:[%s1343 + $0x50] sm:$0x1]
        %v3073 = vld [vmem:[%s1343 + $0x54] sm:$0xe]
        %v3074 = vld [vmem:[%s1343 + $0x58] sm:$0xf]
        %v3075 = vld [vmem:[%s1343 + $0x5c] sm:$0x1]
        %v3076 = vld [vmem:[%s1343 + $0x60] sm:$0xe]
        %v3077 = vld [vmem:[%s1343 + $0x64] sm:$0xf]
        %v3078 = vld [vmem:[%s1343 + $0x68] sm:$0x1]
        %v3079 = vld [vmem:[%s1343 + $0x6c] sm:$0xe]
        %v3080 = vld [vmem:[%s1343 + $0x70] sm:$0xf]
        %v3081 = vld [vmem:[%s1343 + $0x74] sm:$0x1]
        %v3082 = vld [vmem:[%s1343 + $0x78] sm:$0xe]
        %v3083 = vld [vmem:[%s1343 + $0x7c] sm:$0xf]
        %v3084 = vld [vmem:[%s1343 + $0x80] sm:$0x1]
        %v3085 = vld [vmem:[%s1343 + $0x84] sm:$0xe]
        %v3086 = vld [vmem:[%s1343 + $0x88] sm:$0xf]
        %v3087 = vld [vmem:[%s1343 + $0x8c] sm:$0x1]
        %v3088 = vld [vmem:[%s1343 + $0x90] sm:$0xe]
        %v3089 = vld [vmem:[%s1343 + $0x94] sm:$0xf]
        %v3090 = vld [vmem:[%s1343 + $0x98] sm:$0x1]
        %v3091 = vld [vmem:[%s1343 + $0x9c] sm:$0xe]
        %v3092 = vld [vmem:[%s1343 + $0xa0] sm:$0xf]
        %v3093 = vld [vmem:[%s1343 + $0xa4] sm:$0x1]
        %v3094 = vld [vmem:[%s1343 + $0xa8] sm:$0xe]
        %v3095 = vld [vmem:[%s1343 + $0xac] sm:$0xf]
        %v3096 = vld [vmem:[%s1343 + $0xb0] sm:$0x1]
        %v3097 = vld [vmem:[%s1343 + $0xb4] sm:$0xe]
        %v3098 = vld [vmem:[%s1343 + $0xb8] sm:$0xf]
        %v3099 = vld [vmem:[%s1343 + $0xbc] sm:$0x1]
        %v3148 = vrot.slane %v3052, 5
        %v3149 = vrot.slane %v3148, 4
        %v3150 = vrot.slane %v3053, 5
        %v3151 = vsel %vm2187, %v3149, %v3150
        %v3152 = vrot.slane %v3150, 4
        %v3153 = vrot.slane %v3054, 5
        %v3154 = vsel %vm2187, %v3152, %v3153
        %v3155 = vrot.slane %v3055, 5
        %v3156 = vrot.slane %v3155, 4
        %v3157 = vrot.slane %v3056, 5
        %v3158 = vsel %vm2187, %v3156, %v3157
        %v3159 = vrot.slane %v3157, 4
        %v3160 = vrot.slane %v3057, 5
        %v3161 = vsel %vm2187, %v3159, %v3160
        %v3162 = vrot.slane %v3058, 5
        %v3163 = vrot.slane %v3162, 4
        %v3164 = vrot.slane %v3059, 5
        %v3165 = vsel %vm2187, %v3163, %v3164
        %v3166 = vrot.slane %v3164, 4
        %v3167 = vrot.slane %v3060, 5
        %v3168 = vsel %vm2187, %v3166, %v3167
        %v3169 = vrot.slane %v3061, 5
        %v3170 = vrot.slane %v3169, 4
        %v3171 = vrot.slane %v3062, 5
        %v3172 = vsel %vm2187, %v3170, %v3171
        %v3173 = vrot.slane %v3171, 4
        %v3174 = vrot.slane %v3063, 5
        %v3175 = vsel %vm2187, %v3173, %v3174
        %v3176 = vrot.slane %v3064, 5
        %v3177 = vrot.slane %v3176, 4
        %v3178 = vrot.slane %v3065, 5
        %v3179 = vsel %vm2187, %v3177, %v3178
        %v3180 = vrot.slane %v3178, 4
        %v3181 = vrot.slane %v3066, 5
        %v3182 = vsel %vm2187, %v3180, %v3181
        %v3183 = vrot.slane %v3067, 5
        %v3184 = vrot.slane %v3183, 4
        %v3185 = vrot.slane %v3068, 5
        %v3186 = vsel %vm2187, %v3184, %v3185
        %v3187 = vrot.slane %v3185, 4
        %v3188 = vrot.slane %v3069, 5
        %v3189 = vsel %vm2187, %v3187, %v3188
        %v3190 = vrot.slane %v3070, 5
        %v3191 = vrot.slane %v3190, 4
        %v3192 = vrot.slane %v3071, 5
        %v3193 = vsel %vm2187, %v3191, %v3192
        %v3194 = vrot.slane %v3192, 4
        %v3195 = vrot.slane %v3072, 5
        %v3196 = vsel %vm2187, %v3194, %v3195
        %v3197 = vrot.slane %v3073, 5
        %v3198 = vrot.slane %v3197, 4
        %v3199 = vrot.slane %v3074, 5
        %v3200 = vsel %vm2187, %v3198, %v3199
        %v3201 = vrot.slane %v3199, 4
        %v3202 = vrot.slane %v3075, 5
        %v3203 = vsel %vm2187, %v3201, %v3202
        %v3204 = vrot.slane %v3076, 5
        %v3205 = vrot.slane %v3204, 4
        %v3206 = vrot.slane %v3077, 5
        %v3207 = vsel %vm2187, %v3205, %v3206
        %v3208 = vrot.slane %v3206, 4
        %v3209 = vrot.slane %v3078, 5
        %v3210 = vsel %vm2187, %v3208, %v3209
        %v3211 = vrot.slane %v3079, 5
        %v3212 = vrot.slane %v3211, 4
        %v3213 = vrot.slane %v3080, 5
        %v3214 = vsel %vm2187, %v3212, %v3213
        %v3215 = vrot.slane %v3213, 4
        %v3216 = vrot.slane %v3081, 5
        %v3217 = vsel %vm2187, %v3215, %v3216
        %v3218 = vrot.slane %v3082, 5
        %v3219 = vrot.slane %v3218, 4
        %v3220 = vrot.slane %v3083, 5
        %v3221 = vsel %vm2187, %v3219, %v3220
        %v3222 = vrot.slane %v3220, 4
        %v3223 = vrot.slane %v3084, 5
        %v3224 = vsel %vm2187, %v3222, %v3223
        %v3225 = vrot.slane %v3085, 5
        %v3226 = vrot.slane %v3225, 4
        %v3227 = vrot.slane %v3086, 5
        %v3228 = vsel %vm2187, %v3226, %v3227
        %v3229 = vrot.slane %v3227, 4
        %v3230 = vrot.slane %v3087, 5
        %v3231 = vsel %vm2187, %v3229, %v3230
        %v3232 = vrot.slane %v3088, 5
        %v3233 = vrot.slane %v3232, 4
        %v3234 = vrot.slane %v3089, 5
        %v3235 = vsel %vm2187, %v3233, %v3234
        %v3236 = vrot.slane %v3234, 4
        %v3237 = vrot.slane %v3090, 5
        %v3238 = vsel %vm2187, %v3236, %v3237
        %v3239 = vrot.slane %v3091, 5
        %v3240 = vrot.slane %v3239, 4
        %v3241 = vrot.slane %v3092, 5
        %v3242 = vsel %vm2187, %v3240, %v3241
        %v3243 = vrot.slane %v3241, 4
        %v3244 = vrot.slane %v3093, 5
        %v3245 = vsel %vm2187, %v3243, %v3244
        %v3246 = vrot.slane %v3094, 5
        %v3247 = vrot.slane %v3246, 4
        %v3248 = vrot.slane %v3095, 5
        %v3249 = vsel %vm2187, %v3247, %v3248
        %v3250 = vrot.slane %v3248, 4
        %v3251 = vrot.slane %v3096, 5
        %v3252 = vsel %vm2187, %v3250, %v3251
        %v3253 = vrot.slane %v3097, 5
        %v3254 = vrot.slane %v3253, 4
        %v3255 = vrot.slane %v3098, 5
        %v3256 = vsel %vm2187, %v3254, %v3255
        %v3257 = vrot.slane %v3255, 4
        %v3258 = vrot.slane %v3099, 5
        %v3259 = vsel %vm2187, %v3257, %v3258
        %3260 = vrot.lane.b32.xlu0 %v3151, 64
        %v3261 = vpop.permute.xlu0 %3260
        %3262 = vrot.lane.b32.xlu0 %v3154, 64
        %v3263 = vpop.permute.xlu0 %3262
        %3264 = vrot.lane.b32.xlu0 %v3158, 64
        %v3265 = vpop.permute.xlu0 %3264
        %3266 = vrot.lane.b32.xlu0 %v3161, 64
        %v3267 = vpop.permute.xlu0 %3266
        %3268 = vrot.lane.b32.xlu0 %v3165, 64
        %v3269 = vpop.permute.xlu0 %3268
        %3270 = vrot.lane.b32.xlu0 %v3168, 64
        %v3271 = vpop.permute.xlu0 %3270
        %3272 = vrot.lane.b32.xlu0 %v3172, 64
        %v3273 = vpop.permute.xlu0 %3272
        %3274 = vrot.lane.b32.xlu0 %v3175, 64
        %v3275 = vpop.permute.xlu0 %3274
        %3276 = vrot.lane.b32.xlu0 %v3179, 64
        %v3277 = vpop.permute.xlu0 %3276
        %3278 = vrot.lane.b32.xlu0 %v3182, 64
        %v3279 = vpop.permute.xlu0 %3278
        %3280 = vrot.lane.b32.xlu0 %v3186, 64
        %v3281 = vpop.permute.xlu0 %3280
        %3282 = vrot.lane.b32.xlu0 %v3189, 64
        %v3283 = vpop.permute.xlu0 %3282
        %3284 = vrot.lane.b32.xlu0 %v3193, 64
        %v3285 = vpop.permute.xlu0 %3284
        %3286 = vrot.lane.b32.xlu0 %v3196, 64
        %v3287 = vpop.permute.xlu0 %3286
        %3288 = vrot.lane.b32.xlu0 %v3200, 64
        %v3289 = vpop.permute.xlu0 %3288
        %3290 = vrot.lane.b32.xlu0 %v3203, 64
        %v3291 = vpop.permute.xlu0 %3290
        %3292 = vrot.lane.b32.xlu0 %v3207, 64
        %v3293 = vpop.permute.xlu0 %3292
        %3294 = vrot.lane.b32.xlu0 %v3210, 64
        %v3295 = vpop.permute.xlu0 %3294
        %3296 = vrot.lane.b32.xlu0 %v3214, 64
        %v3297 = vpop.permute.xlu0 %3296
        %3298 = vrot.lane.b32.xlu0 %v3217, 64
        %v3299 = vpop.permute.xlu0 %3298
        %3300 = vrot.lane.b32.xlu0 %v3221, 64
        %v3301 = vpop.permute.xlu0 %3300
        %3302 = vrot.lane.b32.xlu0 %v3224, 64
        %v3303 = vpop.permute.xlu0 %3302
        %3304 = vrot.lane.b32.xlu0 %v3228, 64
        %v3305 = vpop.permute.xlu0 %3304
        %3306 = vrot.lane.b32.xlu0 %v3231, 64
        %v3307 = vpop.permute.xlu0 %3306
        %3308 = vrot.lane.b32.xlu0 %v3235, 64
        %v3309 = vpop.permute.xlu0 %3308
        %3310 = vrot.lane.b32.xlu0 %v3238, 64
        %v3311 = vpop.permute.xlu0 %3310
        %3312 = vrot.lane.b32.xlu0 %v3242, 64
        %v3313 = vpop.permute.xlu0 %3312
        %3314 = vrot.lane.b32.xlu0 %v3245, 64
        %v3315 = vpop.permute.xlu0 %3314
        %3316 = vrot.lane.b32.xlu0 %v3249, 64
        %v3317 = vpop.permute.xlu0 %3316
        %3318 = vrot.lane.b32.xlu0 %v3252, 64
        %v3319 = vpop.permute.xlu0 %3318
        %3320 = vrot.lane.b32.xlu0 %v3256, 64
        %v3321 = vpop.permute.xlu0 %3320
        %3322 = vrot.lane.b32.xlu0 %v3259, 64
        %v3323 = vpop.permute.xlu0 %3322
        %3356 = vst.msk [vmem:[#allocation3 + $0x8] sm:$0xf] %vm2056, %v3261
        %3357 = vst.msk [vmem:[#allocation3 + $0x1c] sm:$0xf] %vm2056, %v3263
        %3358 = vst.msk [vmem:[#allocation3 + $0x30] sm:$0xf] %vm2056, %v3265
        %3359 = vst.msk [vmem:[#allocation3 + $0x44] sm:$0xf] %vm2056, %v3267
        %3360 = vst.msk [vmem:[#allocation3 + $0x58] sm:$0xf] %vm2056, %v3269
        %3361 = vst.msk [vmem:[#allocation3 + $0x6c] sm:$0xf] %vm2056, %v3271
        %3362 = vst.msk [vmem:[#allocation3 + $0x80] sm:$0xf] %vm2056, %v3273
        %3363 = vst.msk [vmem:[#allocation3 + $0x94] sm:$0xf] %vm2056, %v3275
        %3364 = vst.msk [vmem:[#allocation3 + $0xa8] sm:$0xf] %vm2056, %v3277
        %3365 = vst.msk [vmem:[#allocation3 + $0xbc] sm:$0xf] %vm2056, %v3279
        %3366 = vst.msk [vmem:[#allocation3 + $0xd0] sm:$0xf] %vm2056, %v3281
        %3367 = vst.msk [vmem:[#allocation3 + $0xe4] sm:$0xf] %vm2056, %v3283
        %3368 = vst.msk [vmem:[#allocation3 + $0xf8] sm:$0xf] %vm2056, %v3285
        %3369 = vst.msk [vmem:[#allocation3 + $0x10c] sm:$0xf] %vm2056, %v3287
        %3370 = vst.msk [vmem:[#allocation3 + $0x120] sm:$0xf] %vm2056, %v3289
        %3371 = vst.msk [vmem:[#allocation3 + $0x134] sm:$0xf] %vm2056, %v3291
        %3372 = vst.msk [vmem:[#allocation3 + $0x148] sm:$0xf] %vm2056, %v3293
        %3373 = vst.msk [vmem:[#allocation3 + $0x15c] sm:$0xf] %vm2056, %v3295
        %3374 = vst.msk [vmem:[#allocation3 + $0x170] sm:$0xf] %vm2056, %v3297
        %3375 = vst.msk [vmem:[#allocation3 + $0x184] sm:$0xf] %vm2056, %v3299
        %3376 = vst.msk [vmem:[#allocation3 + $0x198] sm:$0xf] %vm2056, %v3301
        %3377 = vst.msk [vmem:[#allocation3 + $0x1ac] sm:$0xf] %vm2056, %v3303
        %3378 = vst.msk [vmem:[#allocation3 + $0x1c0] sm:$0xf] %vm2056, %v3305
        %3379 = vst.msk [vmem:[#allocation3 + $0x1d4] sm:$0xf] %vm2056, %v3307
        %3380 = vst.msk [vmem:[#allocation3 + $0x1e8] sm:$0xf] %vm2056, %v3309
        %3381 = vst.msk [vmem:[#allocation3 + $0x1fc] sm:$0xf] %vm2056, %v3311
        %3382 = vst.msk [vmem:[#allocation3 + $0x210] sm:$0xf] %vm2056, %v3313
        %3383 = vst.msk [vmem:[#allocation3 + $0x224] sm:$0xf] %vm2056, %v3315
        %3384 = vst.msk [vmem:[#allocation3 + $0x238] sm:$0xf] %vm2056, %v3317
        %3385 = vst.msk [vmem:[#allocation3 + $0x24c] sm:$0xf] %vm2056, %v3319
        %3386 = vst.msk [vmem:[#allocation3 + $0x260] sm:$0xf] %vm2056, %v3321
        %3387 = vst.msk [vmem:[#allocation3 + $0x274] sm:$0xf] %vm2056, %v3323
        %s3388 = scalar_lea.vmem [#allocation2], 24
        %v3389 = vld [vmem:[%s3388] sm:$0xf]
        %v3390 = vld [vmem:[%s3388 + $0x4] sm:$0xf]
        %v3391 = vld [vmem:[%s3388 + $0xc] sm:$0xf]
        %v3392 = vld [vmem:[%s3388 + $0x10] sm:$0xf]
        %v3393 = vld [vmem:[%s3388 + $0x18] sm:$0xf]
        %v3394 = vld [vmem:[%s3388 + $0x1c] sm:$0xf]
        %v3395 = vld [vmem:[%s3388 + $0x24] sm:$0xf]
        %v3396 = vld [vmem:[%s3388 + $0x28] sm:$0xf]
        %v3397 = vld [vmem:[%s3388 + $0x30] sm:$0xf]
        %v3398 = vld [vmem:[%s3388 + $0x34] sm:$0xf]
        %v3399 = vld [vmem:[%s3388 + $0x3c] sm:$0xf]
        %v3400 = vld [vmem:[%s3388 + $0x40] sm:$0xf]
        %v3401 = vld [vmem:[%s3388 + $0x48] sm:$0xf]
        %v3402 = vld [vmem:[%s3388 + $0x4c] sm:$0xf]
        %v3403 = vld [vmem:[%s3388 + $0x54] sm:$0xf]
        %v3404 = vld [vmem:[%s3388 + $0x58] sm:$0xf]
        %v3405 = vld [vmem:[%s3388 + $0x60] sm:$0xf]
        %v3406 = vld [vmem:[%s3388 + $0x64] sm:$0xf]
        %v3407 = vld [vmem:[%s3388 + $0x6c] sm:$0xf]
        %v3408 = vld [vmem:[%s3388 + $0x70] sm:$0xf]
        %v3409 = vld [vmem:[%s3388 + $0x78] sm:$0xf]
        %v3410 = vld [vmem:[%s3388 + $0x7c] sm:$0xf]
        %v3411 = vld [vmem:[%s3388 + $0x84] sm:$0xf]
        %v3412 = vld [vmem:[%s3388 + $0x88] sm:$0xf]
        %v3413 = vld [vmem:[%s3388 + $0x90] sm:$0xf]
        %v3414 = vld [vmem:[%s3388 + $0x94] sm:$0xf]
        %v3415 = vld [vmem:[%s3388 + $0x9c] sm:$0xf]
        %v3416 = vld [vmem:[%s3388 + $0xa0] sm:$0xf]
        %v3417 = vld [vmem:[%s3388 + $0xa8] sm:$0xf]
        %v3418 = vld [vmem:[%s3388 + $0xac] sm:$0xf]
        %v3419 = vld [vmem:[%s3388 + $0xb4] sm:$0xf]
        %v3420 = vld [vmem:[%s3388 + $0xb8] sm:$0xf]
        %3421 = vst.msk [vmem:[#allocation3 + $0xc] sm:$0xf] %vm868, %v3389
        %3422 = vst.msk [vmem:[#allocation3 + $0x20] sm:$0xf] %vm868, %v3390
        %3423 = vst.msk [vmem:[#allocation3 + $0x34] sm:$0xf] %vm868, %v3391
        %3424 = vst.msk [vmem:[#allocation3 + $0x48] sm:$0xf] %vm868, %v3392
        %3425 = vst.msk [vmem:[#allocation3 + $0x5c] sm:$0xf] %vm868, %v3393
        %3426 = vst.msk [vmem:[#allocation3 + $0x70] sm:$0xf] %vm868, %v3394
        %3427 = vst.msk [vmem:[#allocation3 + $0x84] sm:$0xf] %vm868, %v3395
        %3428 = vst.msk [vmem:[#allocation3 + $0x98] sm:$0xf] %vm868, %v3396
        %3429 = vst.msk [vmem:[#allocation3 + $0xac] sm:$0xf] %vm868, %v3397
        %3430 = vst.msk [vmem:[#allocation3 + $0xc0] sm:$0xf] %vm868, %v3398
        %3431 = vst.msk [vmem:[#allocation3 + $0xd4] sm:$0xf] %vm868, %v3399
        %3432 = vst.msk [vmem:[#allocation3 + $0xe8] sm:$0xf] %vm868, %v3400
        %3433 = vst.msk [vmem:[#allocation3 + $0xfc] sm:$0xf] %vm868, %v3401
        %3434 = vst.msk [vmem:[#allocation3 + $0x110] sm:$0xf] %vm868, %v3402
        %3435 = vst.msk [vmem:[#allocation3 + $0x124] sm:$0xf] %vm868, %v3403
        %3436 = vst.msk [vmem:[#allocation3 + $0x138] sm:$0xf] %vm868, %v3404
        %3437 = vst.msk [vmem:[#allocation3 + $0x14c] sm:$0xf] %vm868, %v3405
        %3438 = vst.msk [vmem:[#allocation3 + $0x160] sm:$0xf] %vm868, %v3406
        %3439 = vst.msk [vmem:[#allocation3 + $0x174] sm:$0xf] %vm868, %v3407
        %3440 = vst.msk [vmem:[#allocation3 + $0x188] sm:$0xf] %vm868, %v3408
        %3441 = vst.msk [vmem:[#allocation3 + $0x19c] sm:$0xf] %vm868, %v3409
        %3442 = vst.msk [vmem:[#allocation3 + $0x1b0] sm:$0xf] %vm868, %v3410
        %3443 = vst.msk [vmem:[#allocation3 + $0x1c4] sm:$0xf] %vm868, %v3411
        %3444 = vst.msk [vmem:[#allocation3 + $0x1d8] sm:$0xf] %vm868, %v3412
        %3445 = vst.msk [vmem:[#allocation3 + $0x1ec] sm:$0xf] %vm868, %v3413
        %3446 = vst.msk [vmem:[#allocation3 + $0x200] sm:$0xf] %vm868, %v3414
        %3447 = vst.msk [vmem:[#allocation3 + $0x214] sm:$0xf] %vm868, %v3415
        %3448 = vst.msk [vmem:[#allocation3 + $0x228] sm:$0xf] %vm868, %v3416
        %3449 = vst.msk [vmem:[#allocation3 + $0x23c] sm:$0xf] %vm868, %v3417
        %3450 = vst.msk [vmem:[#allocation3 + $0x250] sm:$0xf] %vm868, %v3418
        %3451 = vst.msk [vmem:[#allocation3 + $0x264] sm:$0xf] %vm868, %v3419
        %3452 = vst.msk [vmem:[#allocation3 + $0x278] sm:$0xf] %vm868, %v3420
        %v3453 = vld [vmem:[%s3388] sm:$0xf]
        %v3454 = vld [vmem:[%s3388 + $0x4] sm:$0xf]
        %v3455 = vld [vmem:[%s3388 + $0x8] sm:$0x1]
        %v3456 = vld [vmem:[%s3388 + $0xc] sm:$0xf]
        %v3457 = vld [vmem:[%s3388 + $0x10] sm:$0xf]
        %v3458 = vld [vmem:[%s3388 + $0x14] sm:$0x1]
        %v3459 = vld [vmem:[%s3388 + $0x18] sm:$0xf]
        %v3460 = vld [vmem:[%s3388 + $0x1c] sm:$0xf]
        %v3461 = vld [vmem:[%s3388 + $0x20] sm:$0x1]
        %v3462 = vld [vmem:[%s3388 + $0x24] sm:$0xf]
        %v3463 = vld [vmem:[%s3388 + $0x28] sm:$0xf]
        %v3464 = vld [vmem:[%s3388 + $0x2c] sm:$0x1]
        %v3465 = vld [vmem:[%s3388 + $0x30] sm:$0xf]
        %v3466 = vld [vmem:[%s3388 + $0x34] sm:$0xf]
        %v3467 = vld [vmem:[%s3388 + $0x38] sm:$0x1]
        %v3468 = vld [vmem:[%s3388 + $0x3c] sm:$0xf]
        %v3469 = vld [vmem:[%s3388 + $0x40] sm:$0xf]
        %v3470 = vld [vmem:[%s3388 + $0x44] sm:$0x1]
        %v3471 = vld [vmem:[%s3388 + $0x48] sm:$0xf]
        %v3472 = vld [vmem:[%s3388 + $0x4c] sm:$0xf]
        %v3473 = vld [vmem:[%s3388 + $0x50] sm:$0x1]
        %v3474 = vld [vmem:[%s3388 + $0x54] sm:$0xf]
        %v3475 = vld [vmem:[%s3388 + $0x58] sm:$0xf]
        %v3476 = vld [vmem:[%s3388 + $0x5c] sm:$0x1]
        %v3477 = vld [vmem:[%s3388 + $0x60] sm:$0xf]
        %v3478 = vld [vmem:[%s3388 + $0x64] sm:$0xf]
        %v3479 = vld [vmem:[%s3388 + $0x68] sm:$0x1]
        %v3480 = vld [vmem:[%s3388 + $0x6c] sm:$0xf]
        %v3481 = vld [vmem:[%s3388 + $0x70] sm:$0xf]
        %v3482 = vld [vmem:[%s3388 + $0x74] sm:$0x1]
        %v3483 = vld [vmem:[%s3388 + $0x78] sm:$0xf]
        %v3484 = vld [vmem:[%s3388 + $0x7c] sm:$0xf]
        %v3485 = vld [vmem:[%s3388 + $0x80] sm:$0x1]
        %v3486 = vld [vmem:[%s3388 + $0x84] sm:$0xf]
        %v3487 = vld [vmem:[%s3388 + $0x88] sm:$0xf]
        %v3488 = vld [vmem:[%s3388 + $0x8c] sm:$0x1]
        %v3489 = vld [vmem:[%s3388 + $0x90] sm:$0xf]
        %v3490 = vld [vmem:[%s3388 + $0x94] sm:$0xf]
        %v3491 = vld [vmem:[%s3388 + $0x98] sm:$0x1]
        %v3492 = vld [vmem:[%s3388 + $0x9c] sm:$0xf]
        %v3493 = vld [vmem:[%s3388 + $0xa0] sm:$0xf]
        %v3494 = vld [vmem:[%s3388 + $0xa4] sm:$0x1]
        %v3495 = vld [vmem:[%s3388 + $0xa8] sm:$0xf]
        %v3496 = vld [vmem:[%s3388 + $0xac] sm:$0xf]
        %v3497 = vld [vmem:[%s3388 + $0xb0] sm:$0x1]
        %v3498 = vld [vmem:[%s3388 + $0xb4] sm:$0xf]
        %v3499 = vld [vmem:[%s3388 + $0xb8] sm:$0xf]
        %v3500 = vld [vmem:[%s3388 + $0xbc] sm:$0x1]
        %v3502 = vshrl.u32 %v3453, 16
        %v3504 = vrot.slane %v3502, 4
        %v3505 = vshll.u32 %v3453, 16
        %v3507 = vrot.slane %v3505, 5
        %v3508 = vor.u32 %v3504, %v3507
        %v3509 = vrot.slane %v3508, 4
        %v3511 = vshll.u32 %v3454, 16
        %v3513 = vrot.slane %v3511, 5
        %v3514 = vsel %vm1575, %v3509, %v3513
        %v3515 = vshrl.u32 %v3454, 16
        %v3517 = vrot.slane %v3515, 4
        %v3518 = vor.u32 %v3517, %v3513
        %v3519 = vrot.slane %v3518, 4
        %v3521 = vshll.u32 %v3455, 16
        %v3523 = vrot.slane %v3521, 5
        %v3524 = vsel %vm1575, %v3519, %v3523
        %v3526 = vshrl.u32 %v3456, 16
        %v3528 = vrot.slane %v3526, 4
        %v3529 = vshll.u32 %v3456, 16
        %v3531 = vrot.slane %v3529, 5
        %v3532 = vor.u32 %v3528, %v3531
        %v3533 = vrot.slane %v3532, 4
        %v3535 = vshll.u32 %v3457, 16
        %v3537 = vrot.slane %v3535, 5
        %v3538 = vsel %vm1575, %v3533, %v3537
        %v3539 = vshrl.u32 %v3457, 16
        %v3541 = vrot.slane %v3539, 4
        %v3542 = vor.u32 %v3541, %v3537
        %v3543 = vrot.slane %v3542, 4
        %v3545 = vshll.u32 %v3458, 16
        %v3547 = vrot.slane %v3545, 5
        %v3548 = vsel %vm1575, %v3543, %v3547
        %v3550 = vshrl.u32 %v3459, 16
        %v3552 = vrot.slane %v3550, 4
        %v3553 = vshll.u32 %v3459, 16
        %v3555 = vrot.slane %v3553, 5
        %v3556 = vor.u32 %v3552, %v3555
        %v3557 = vrot.slane %v3556, 4
        %v3559 = vshll.u32 %v3460, 16
        %v3561 = vrot.slane %v3559, 5
        %v3562 = vsel %vm1575, %v3557, %v3561
        %v3563 = vshrl.u32 %v3460, 16
        %v3565 = vrot.slane %v3563, 4
        %v3566 = vor.u32 %v3565, %v3561
        %v3567 = vrot.slane %v3566, 4
        %v3569 = vshll.u32 %v3461, 16
        %v3571 = vrot.slane %v3569, 5
        %v3572 = vsel %vm1575, %v3567, %v3571
        %v3574 = vshrl.u32 %v3462, 16
        %v3576 = vrot.slane %v3574, 4
        %v3577 = vshll.u32 %v3462, 16
        %v3579 = vrot.slane %v3577, 5
        %v3580 = vor.u32 %v3576, %v3579
        %v3581 = vrot.slane %v3580, 4
        %v3583 = vshll.u32 %v3463, 16
        %v3585 = vrot.slane %v3583, 5
        %v3586 = vsel %vm1575, %v3581, %v3585
        %v3587 = vshrl.u32 %v3463, 16
        %v3589 = vrot.slane %v3587, 4
        %v3590 = vor.u32 %v3589, %v3585
        %v3591 = vrot.slane %v3590, 4
        %v3593 = vshll.u32 %v3464, 16
        %v3595 = vrot.slane %v3593, 5
        %v3596 = vsel %vm1575, %v3591, %v3595
        %v3598 = vshrl.u32 %v3465, 16
        %v3600 = vrot.slane %v3598, 4
        %v3601 = vshll.u32 %v3465, 16
        %v3603 = vrot.slane %v3601, 5
        %v3604 = vor.u32 %v3600, %v3603
        %v3605 = vrot.slane %v3604, 4
        %v3607 = vshll.u32 %v3466, 16
        %v3609 = vrot.slane %v3607, 5
        %v3610 = vsel %vm1575, %v3605, %v3609
        %v3611 = vshrl.u32 %v3466, 16
        %v3613 = vrot.slane %v3611, 4
        %v3614 = vor.u32 %v3613, %v3609
        %v3615 = vrot.slane %v3614, 4
        %v3617 = vshll.u32 %v3467, 16
        %v3619 = vrot.slane %v3617, 5
        %v3620 = vsel %vm1575, %v3615, %v3619
        %v3622 = vshrl.u32 %v3468, 16
        %v3624 = vrot.slane %v3622, 4
        %v3625 = vshll.u32 %v3468, 16
        %v3627 = vrot.slane %v3625, 5
        %v3628 = vor.u32 %v3624, %v3627
        %v3629 = vrot.slane %v3628, 4
        %v3631 = vshll.u32 %v3469, 16
        %v3633 = vrot.slane %v3631, 5
        %v3634 = vsel %vm1575, %v3629, %v3633
        %v3635 = vshrl.u32 %v3469, 16
        %v3637 = vrot.slane %v3635, 4
        %v3638 = vor.u32 %v3637, %v3633
        %v3639 = vrot.slane %v3638, 4
        %v3641 = vshll.u32 %v3470, 16
        %v3643 = vrot.slane %v3641, 5
        %v3644 = vsel %vm1575, %v3639, %v3643
        %v3646 = vshrl.u32 %v3471, 16
        %v3648 = vrot.slane %v3646, 4
        %v3649 = vshll.u32 %v3471, 16
        %v3651 = vrot.slane %v3649, 5
        %v3652 = vor.u32 %v3648, %v3651
        %v3653 = vrot.slane %v3652, 4
        %v3655 = vshll.u32 %v3472, 16
        %v3657 = vrot.slane %v3655, 5
        %v3658 = vsel %vm1575, %v3653, %v3657
        %v3659 = vshrl.u32 %v3472, 16
        %v3661 = vrot.slane %v3659, 4
        %v3662 = vor.u32 %v3661, %v3657
        %v3663 = vrot.slane %v3662, 4
        %v3665 = vshll.u32 %v3473, 16
        %v3667 = vrot.slane %v3665, 5
        %v3668 = vsel %vm1575, %v3663, %v3667
        %v3670 = vshrl.u32 %v3474, 16
        %v3672 = vrot.slane %v3670, 4
        %v3673 = vshll.u32 %v3474, 16
        %v3675 = vrot.slane %v3673, 5
        %v3676 = vor.u32 %v3672, %v3675
        %v3677 = vrot.slane %v3676, 4
        %v3679 = vshll.u32 %v3475, 16
        %v3681 = vrot.slane %v3679, 5
        %v3682 = vsel %vm1575, %v3677, %v3681
        %v3683 = vshrl.u32 %v3475, 16
        %v3685 = vrot.slane %v3683, 4
        %v3686 = vor.u32 %v3685, %v3681
        %v3687 = vrot.slane %v3686, 4
        %v3689 = vshll.u32 %v3476, 16
        %v3691 = vrot.slane %v3689, 5
        %v3692 = vsel %vm1575, %v3687, %v3691
        %v3694 = vshrl.u32 %v3477, 16
        %v3696 = vrot.slane %v3694, 4
        %v3697 = vshll.u32 %v3477, 16
        %v3699 = vrot.slane %v3697, 5
        %v3700 = vor.u32 %v3696, %v3699
        %v3701 = vrot.slane %v3700, 4
        %v3703 = vshll.u32 %v3478, 16
        %v3705 = vrot.slane %v3703, 5
        %v3706 = vsel %vm1575, %v3701, %v3705
        %v3707 = vshrl.u32 %v3478, 16
        %v3709 = vrot.slane %v3707, 4
        %v3710 = vor.u32 %v3709, %v3705
        %v3711 = vrot.slane %v3710, 4
        %v3713 = vshll.u32 %v3479, 16
        %v3715 = vrot.slane %v3713, 5
        %v3716 = vsel %vm1575, %v3711, %v3715
        %v3718 = vshrl.u32 %v3480, 16
        %v3720 = vrot.slane %v3718, 4
        %v3721 = vshll.u32 %v3480, 16
        %v3723 = vrot.slane %v3721, 5
        %v3724 = vor.u32 %v3720, %v3723
        %v3725 = vrot.slane %v3724, 4
        %v3727 = vshll.u32 %v3481, 16
        %v3729 = vrot.slane %v3727, 5
        %v3730 = vsel %vm1575, %v3725, %v3729
        %v3731 = vshrl.u32 %v3481, 16
        %v3733 = vrot.slane %v3731, 4
        %v3734 = vor.u32 %v3733, %v3729
        %v3735 = vrot.slane %v3734, 4
        %v3737 = vshll.u32 %v3482, 16
        %v3739 = vrot.slane %v3737, 5
        %v3740 = vsel %vm1575, %v3735, %v3739
        %v3742 = vshrl.u32 %v3483, 16
        %v3744 = vrot.slane %v3742, 4
        %v3745 = vshll.u32 %v3483, 16
        %v3747 = vrot.slane %v3745, 5
        %v3748 = vor.u32 %v3744, %v3747
        %v3749 = vrot.slane %v3748, 4
        %v3751 = vshll.u32 %v3484, 16
        %v3753 = vrot.slane %v3751, 5
        %v3754 = vsel %vm1575, %v3749, %v3753
        %v3755 = vshrl.u32 %v3484, 16
        %v3757 = vrot.slane %v3755, 4
        %v3758 = vor.u32 %v3757, %v3753
        %v3759 = vrot.slane %v3758, 4
        %v3761 = vshll.u32 %v3485, 16
        %v3763 = vrot.slane %v3761, 5
        %v3764 = vsel %vm1575, %v3759, %v3763
        %v3766 = vshrl.u32 %v3486, 16
        %v3768 = vrot.slane %v3766, 4
        %v3769 = vshll.u32 %v3486, 16
        %v3771 = vrot.slane %v3769, 5
        %v3772 = vor.u32 %v3768, %v3771
        %v3773 = vrot.slane %v3772, 4
        %v3775 = vshll.u32 %v3487, 16
        %v3777 = vrot.slane %v3775, 5
        %v3778 = vsel %vm1575, %v3773, %v3777
        %v3779 = vshrl.u32 %v3487, 16
        %v3781 = vrot.slane %v3779, 4
        %v3782 = vor.u32 %v3781, %v3777
        %v3783 = vrot.slane %v3782, 4
        %v3785 = vshll.u32 %v3488, 16
        %v3787 = vrot.slane %v3785, 5
        %v3788 = vsel %vm1575, %v3783, %v3787
        %v3790 = vshrl.u32 %v3489, 16
        %v3792 = vrot.slane %v3790, 4
        %v3793 = vshll.u32 %v3489, 16
        %v3795 = vrot.slane %v3793, 5
        %v3796 = vor.u32 %v3792, %v3795
        %v3797 = vrot.slane %v3796, 4
        %v3799 = vshll.u32 %v3490, 16
        %v3801 = vrot.slane %v3799, 5
        %v3802 = vsel %vm1575, %v3797, %v3801
        %v3803 = vshrl.u32 %v3490, 16
        %v3805 = vrot.slane %v3803, 4
        %v3806 = vor.u32 %v3805, %v3801
        %v3807 = vrot.slane %v3806, 4
        %v3809 = vshll.u32 %v3491, 16
        %v3811 = vrot.slane %v3809, 5
        %v3812 = vsel %vm1575, %v3807, %v3811
        %v3814 = vshrl.u32 %v3492, 16
        %v3816 = vrot.slane %v3814, 4
        %v3817 = vshll.u32 %v3492, 16
        %v3819 = vrot.slane %v3817, 5
        %v3820 = vor.u32 %v3816, %v3819
        %v3821 = vrot.slane %v3820, 4
        %v3823 = vshll.u32 %v3493, 16
        %v3825 = vrot.slane %v3823, 5
        %v3826 = vsel %vm1575, %v3821, %v3825
        %v3827 = vshrl.u32 %v3493, 16
        %v3829 = vrot.slane %v3827, 4
        %v3830 = vor.u32 %v3829, %v3825
        %v3831 = vrot.slane %v3830, 4
        %v3833 = vshll.u32 %v3494, 16
        %v3835 = vrot.slane %v3833, 5
        %v3836 = vsel %vm1575, %v3831, %v3835
        %v3838 = vshrl.u32 %v3495, 16
        %v3840 = vrot.slane %v3838, 4
        %v3841 = vshll.u32 %v3495, 16
        %v3843 = vrot.slane %v3841, 5
        %v3844 = vor.u32 %v3840, %v3843
        %v3845 = vrot.slane %v3844, 4
        %v3847 = vshll.u32 %v3496, 16
        %v3849 = vrot.slane %v3847, 5
        %v3850 = vsel %vm1575, %v3845, %v3849
        %v3851 = vshrl.u32 %v3496, 16
        %v3853 = vrot.slane %v3851, 4
        %v3854 = vor.u32 %v3853, %v3849
        %v3855 = vrot.slane %v3854, 4
        %v3857 = vshll.u32 %v3497, 16
        %v3859 = vrot.slane %v3857, 5
        %v3860 = vsel %vm1575, %v3855, %v3859
        %v3862 = vshrl.u32 %v3498, 16
        %v3864 = vrot.slane %v3862, 4
        %v3865 = vshll.u32 %v3498, 16
        %v3867 = vrot.slane %v3865, 5
        %v3868 = vor.u32 %v3864, %v3867
        %v3869 = vrot.slane %v3868, 4
        %v3871 = vshll.u32 %v3499, 16
        %v3873 = vrot.slane %v3871, 5
        %v3874 = vsel %vm1575, %v3869, %v3873
        %v3875 = vshrl.u32 %v3499, 16
        %v3877 = vrot.slane %v3875, 4
        %v3878 = vor.u32 %v3877, %v3873
        %v3879 = vrot.slane %v3878, 4
        %v3881 = vshll.u32 %v3500, 16
        %v3883 = vrot.slane %v3881, 5
        %v3884 = vsel %vm1575, %v3879, %v3883
        %3885 = vrot.lane.b32.xlu0 %v3514, 64
        %v3886 = vpop.permute.xlu0 %3885
        %3887 = vrot.lane.b32.xlu0 %v3524, 64
        %v3888 = vpop.permute.xlu0 %3887
        %3889 = vrot.lane.b32.xlu0 %v3538, 64
        %v3890 = vpop.permute.xlu0 %3889
        %3891 = vrot.lane.b32.xlu0 %v3548, 64
        %v3892 = vpop.permute.xlu0 %3891
        %3893 = vrot.lane.b32.xlu0 %v3562, 64
        %v3894 = vpop.permute.xlu0 %3893
        %3895 = vrot.lane.b32.xlu0 %v3572, 64
        %v3896 = vpop.permute.xlu0 %3895
        %3897 = vrot.lane.b32.xlu0 %v3586, 64
        %v3898 = vpop.permute.xlu0 %3897
        %3899 = vrot.lane.b32.xlu0 %v3596, 64
        %v3900 = vpop.permute.xlu0 %3899
        %3901 = vrot.lane.b32.xlu0 %v3610, 64
        %v3902 = vpop.permute.xlu0 %3901
        %3903 = vrot.lane.b32.xlu0 %v3620, 64
        %v3904 = vpop.permute.xlu0 %3903
        %3905 = vrot.lane.b32.xlu0 %v3634, 64
        %v3906 = vpop.permute.xlu0 %3905
        %3907 = vrot.lane.b32.xlu0 %v3644, 64
        %v3908 = vpop.permute.xlu0 %3907
        %3909 = vrot.lane.b32.xlu0 %v3658, 64
        %v3910 = vpop.permute.xlu0 %3909
        %3911 = vrot.lane.b32.xlu0 %v3668, 64
        %v3912 = vpop.permute.xlu0 %3911
        %3913 = vrot.lane.b32.xlu0 %v3682, 64
        %v3914 = vpop.permute.xlu0 %3913
        %3915 = vrot.lane.b32.xlu0 %v3692, 64
        %v3916 = vpop.permute.xlu0 %3915
        %3917 = vrot.lane.b32.xlu0 %v3706, 64
        %v3918 = vpop.permute.xlu0 %3917
        %3919 = vrot.lane.b32.xlu0 %v3716, 64
        %v3920 = vpop.permute.xlu0 %3919
        %3921 = vrot.lane.b32.xlu0 %v3730, 64
        %v3922 = vpop.permute.xlu0 %3921
        %3923 = vrot.lane.b32.xlu0 %v3740, 64
        %v3924 = vpop.permute.xlu0 %3923
        %3925 = vrot.lane.b32.xlu0 %v3754, 64
        %v3926 = vpop.permute.xlu0 %3925
        %3927 = vrot.lane.b32.xlu0 %v3764, 64
        %v3928 = vpop.permute.xlu0 %3927
        %3929 = vrot.lane.b32.xlu0 %v3778, 64
        %v3930 = vpop.permute.xlu0 %3929
        %3931 = vrot.lane.b32.xlu0 %v3788, 64
        %v3932 = vpop.permute.xlu0 %3931
        %3933 = vrot.lane.b32.xlu0 %v3802, 64
        %v3934 = vpop.permute.xlu0 %3933
        %3935 = vrot.lane.b32.xlu0 %v3812, 64
        %v3936 = vpop.permute.xlu0 %3935
        %3937 = vrot.lane.b32.xlu0 %v3826, 64
        %v3938 = vpop.permute.xlu0 %3937
        %3939 = vrot.lane.b32.xlu0 %v3836, 64
        %v3940 = vpop.permute.xlu0 %3939
        %3941 = vrot.lane.b32.xlu0 %v3850, 64
        %v3942 = vpop.permute.xlu0 %3941
        %3943 = vrot.lane.b32.xlu0 %v3860, 64
        %v3944 = vpop.permute.xlu0 %3943
        %3945 = vrot.lane.b32.xlu0 %v3874, 64
        %v3946 = vpop.permute.xlu0 %3945
        %3947 = vrot.lane.b32.xlu0 %v3884, 64
        %v3948 = vpop.permute.xlu0 %3947
        %3981 = vst.msk [vmem:[#allocation3 + $0xc] sm:$0xf] %vm2056, %v3886
        %3982 = vst.msk [vmem:[#allocation3 + $0x20] sm:$0xf] %vm2056, %v3888
        %3983 = vst.msk [vmem:[#allocation3 + $0x34] sm:$0xf] %vm2056, %v3890
        %3984 = vst.msk [vmem:[#allocation3 + $0x48] sm:$0xf] %vm2056, %v3892
        %3985 = vst.msk [vmem:[#allocation3 + $0x5c] sm:$0xf] %vm2056, %v3894
        %3986 = vst.msk [vmem:[#allocation3 + $0x70] sm:$0xf] %vm2056, %v3896
        %3987 = vst.msk [vmem:[#allocation3 + $0x84] sm:$0xf] %vm2056, %v3898
        %3988 = vst.msk [vmem:[#allocation3 + $0x98] sm:$0xf] %vm2056, %v3900
        %3989 = vst.msk [vmem:[#allocation3 + $0xac] sm:$0xf] %vm2056, %v3902
        %3990 = vst.msk [vmem:[#allocation3 + $0xc0] sm:$0xf] %vm2056, %v3904
        %3991 = vst.msk [vmem:[#allocation3 + $0xd4] sm:$0xf] %vm2056, %v3906
        %3992 = vst.msk [vmem:[#allocation3 + $0xe8] sm:$0xf] %vm2056, %v3908
        %3993 = vst.msk [vmem:[#allocation3 + $0xfc] sm:$0xf] %vm2056, %v3910
        %3994 = vst.msk [vmem:[#allocation3 + $0x110] sm:$0xf] %vm2056, %v3912
        %3995 = vst.msk [vmem:[#allocation3 + $0x124] sm:$0xf] %vm2056, %v3914
        %3996 = vst.msk [vmem:[#allocation3 + $0x138] sm:$0xf] %vm2056, %v3916
        %3997 = vst.msk [vmem:[#allocation3 + $0x14c] sm:$0xf] %vm2056, %v3918
        %3998 = vst.msk [vmem:[#allocation3 + $0x160] sm:$0xf] %vm2056, %v3920
        %3999 = vst.msk [vmem:[#allocation3 + $0x174] sm:$0xf] %vm2056, %v3922
        %4000 = vst.msk [vmem:[#allocation3 + $0x188] sm:$0xf] %vm2056, %v3924
        %4001 = vst.msk [vmem:[#allocation3 + $0x19c] sm:$0xf] %vm2056, %v3926
        %4002 = vst.msk [vmem:[#allocation3 + $0x1b0] sm:$0xf] %vm2056, %v3928
        %4003 = vst.msk [vmem:[#allocation3 + $0x1c4] sm:$0xf] %vm2056, %v3930
        %4004 = vst.msk [vmem:[#allocation3 + $0x1d8] sm:$0xf] %vm2056, %v3932
        %4005 = vst.msk [vmem:[#allocation3 + $0x1ec] sm:$0xf] %vm2056, %v3934
        %4006 = vst.msk [vmem:[#allocation3 + $0x200] sm:$0xf] %vm2056, %v3936
        %4007 = vst.msk [vmem:[#allocation3 + $0x214] sm:$0xf] %vm2056, %v3938
        %4008 = vst.msk [vmem:[#allocation3 + $0x228] sm:$0xf] %vm2056, %v3940
        %4009 = vst.msk [vmem:[#allocation3 + $0x23c] sm:$0xf] %vm2056, %v3942
        %4010 = vst.msk [vmem:[#allocation3 + $0x250] sm:$0xf] %vm2056, %v3944
        %4011 = vst.msk [vmem:[#allocation3 + $0x264] sm:$0xf] %vm2056, %v3946
        %4012 = vst.msk [vmem:[#allocation3 + $0x278] sm:$0xf] %vm2056, %v3948
        %v4013 = vld [vmem:[%s3388] sm:$0xe]
        %v4014 = vld [vmem:[%s3388 + $0x4] sm:$0xf]
        %v4015 = vld [vmem:[%s3388 + $0x8] sm:$0x1]
        %v4016 = vld [vmem:[%s3388 + $0xc] sm:$0xe]
        %v4017 = vld [vmem:[%s3388 + $0x10] sm:$0xf]
        %v4018 = vld [vmem:[%s3388 + $0x14] sm:$0x1]
        %v4019 = vld [vmem:[%s3388 + $0x18] sm:$0xe]
        %v4020 = vld [vmem:[%s3388 + $0x1c] sm:$0xf]
        %v4021 = vld [vmem:[%s3388 + $0x20] sm:$0x1]
        %v4022 = vld [vmem:[%s3388 + $0x24] sm:$0xe]
        %v4023 = vld [vmem:[%s3388 + $0x28] sm:$0xf]
        %v4024 = vld [vmem:[%s3388 + $0x2c] sm:$0x1]
        %v4025 = vld [vmem:[%s3388 + $0x30] sm:$0xe]
        %v4026 = vld [vmem:[%s3388 + $0x34] sm:$0xf]
        %v4027 = vld [vmem:[%s3388 + $0x38] sm:$0x1]
        %v4028 = vld [vmem:[%s3388 + $0x3c] sm:$0xe]
        %v4029 = vld [vmem:[%s3388 + $0x40] sm:$0xf]
        %v4030 = vld [vmem:[%s3388 + $0x44] sm:$0x1]
        %v4031 = vld [vmem:[%s3388 + $0x48] sm:$0xe]
        %v4032 = vld [vmem:[%s3388 + $0x4c] sm:$0xf]
        %v4033 = vld [vmem:[%s3388 + $0x50] sm:$0x1]
        %v4034 = vld [vmem:[%s3388 + $0x54] sm:$0xe]
        %v4035 = vld [vmem:[%s3388 + $0x58] sm:$0xf]
        %v4036 = vld [vmem:[%s3388 + $0x5c] sm:$0x1]
        %v4037 = vld [vmem:[%s3388 + $0x60] sm:$0xe]
        %v4038 = vld [vmem:[%s3388 + $0x64] sm:$0xf]
        %v4039 = vld [vmem:[%s3388 + $0x68] sm:$0x1]
        %v4040 = vld [vmem:[%s3388 + $0x6c] sm:$0xe]
        %v4041 = vld [vmem:[%s3388 + $0x70] sm:$0xf]
        %v4042 = vld [vmem:[%s3388 + $0x74] sm:$0x1]
        %v4043 = vld [vmem:[%s3388 + $0x78] sm:$0xe]
        %v4044 = vld [vmem:[%s3388 + $0x7c] sm:$0xf]
        %v4045 = vld [vmem:[%s3388 + $0x80] sm:$0x1]
        %v4046 = vld [vmem:[%s3388 + $0x84] sm:$0xe]
        %v4047 = vld [vmem:[%s3388 + $0x88] sm:$0xf]
        %v4048 = vld [vmem:[%s3388 + $0x8c] sm:$0x1]
        %v4049 = vld [vmem:[%s3388 + $0x90] sm:$0xe]
        %v4050 = vld [vmem:[%s3388 + $0x94] sm:$0xf]
        %v4051 = vld [vmem:[%s3388 + $0x98] sm:$0x1]
        %v4052 = vld [vmem:[%s3388 + $0x9c] sm:$0xe]
        %v4053 = vld [vmem:[%s3388 + $0xa0] sm:$0xf]
        %v4054 = vld [vmem:[%s3388 + $0xa4] sm:$0x1]
        %v4055 = vld [vmem:[%s3388 + $0xa8] sm:$0xe]
        %v4056 = vld [vmem:[%s3388 + $0xac] sm:$0xf]
        %v4057 = vld [vmem:[%s3388 + $0xb0] sm:$0x1]
        %v4058 = vld [vmem:[%s3388 + $0xb4] sm:$0xe]
        %v4059 = vld [vmem:[%s3388 + $0xb8] sm:$0xf]
        %v4060 = vld [vmem:[%s3388 + $0xbc] sm:$0x1]
        %v4109 = vrot.slane %v4013, 5
        %v4110 = vrot.slane %v4109, 4
        %v4111 = vrot.slane %v4014, 5
        %v4112 = vsel %vm2187, %v4110, %v4111
        %v4113 = vrot.slane %v4111, 4
        %v4114 = vrot.slane %v4015, 5
        %v4115 = vsel %vm2187, %v4113, %v4114
        %v4116 = vrot.slane %v4016, 5
        %v4117 = vrot.slane %v4116, 4
        %v4118 = vrot.slane %v4017, 5
        %v4119 = vsel %vm2187, %v4117, %v4118
        %v4120 = vrot.slane %v4118, 4
        %v4121 = vrot.slane %v4018, 5
        %v4122 = vsel %vm2187, %v4120, %v4121
        %v4123 = vrot.slane %v4019, 5
        %v4124 = vrot.slane %v4123, 4
        %v4125 = vrot.slane %v4020, 5
        %v4126 = vsel %vm2187, %v4124, %v4125
        %v4127 = vrot.slane %v4125, 4
        %v4128 = vrot.slane %v4021, 5
        %v4129 = vsel %vm2187, %v4127, %v4128
        %v4130 = vrot.slane %v4022, 5
        %v4131 = vrot.slane %v4130, 4
        %v4132 = vrot.slane %v4023, 5
        %v4133 = vsel %vm2187, %v4131, %v4132
        %v4134 = vrot.slane %v4132, 4
        %v4135 = vrot.slane %v4024, 5
        %v4136 = vsel %vm2187, %v4134, %v4135
        %v4137 = vrot.slane %v4025, 5
        %v4138 = vrot.slane %v4137, 4
        %v4139 = vrot.slane %v4026, 5
        %v4140 = vsel %vm2187, %v4138, %v4139
        %v4141 = vrot.slane %v4139, 4
        %v4142 = vrot.slane %v4027, 5
        %v4143 = vsel %vm2187, %v4141, %v4142
        %v4144 = vrot.slane %v4028, 5
        %v4145 = vrot.slane %v4144, 4
        %v4146 = vrot.slane %v4029, 5
        %v4147 = vsel %vm2187, %v4145, %v4146
        %v4148 = vrot.slane %v4146, 4
        %v4149 = vrot.slane %v4030, 5
        %v4150 = vsel %vm2187, %v4148, %v4149
        %v4151 = vrot.slane %v4031, 5
        %v4152 = vrot.slane %v4151, 4
        %v4153 = vrot.slane %v4032, 5
        %v4154 = vsel %vm2187, %v4152, %v4153
        %v4155 = vrot.slane %v4153, 4
        %v4156 = vrot.slane %v4033, 5
        %v4157 = vsel %vm2187, %v4155, %v4156
        %v4158 = vrot.slane %v4034, 5
        %v4159 = vrot.slane %v4158, 4
        %v4160 = vrot.slane %v4035, 5
        %v4161 = vsel %vm2187, %v4159, %v4160
        %v4162 = vrot.slane %v4160, 4
        %v4163 = vrot.slane %v4036, 5
        %v4164 = vsel %vm2187, %v4162, %v4163
        %v4165 = vrot.slane %v4037, 5
        %v4166 = vrot.slane %v4165, 4
        %v4167 = vrot.slane %v4038, 5
        %v4168 = vsel %vm2187, %v4166, %v4167
        %v4169 = vrot.slane %v4167, 4
        %v4170 = vrot.slane %v4039, 5
        %v4171 = vsel %vm2187, %v4169, %v4170
        %v4172 = vrot.slane %v4040, 5
        %v4173 = vrot.slane %v4172, 4
        %v4174 = vrot.slane %v4041, 5
        %v4175 = vsel %vm2187, %v4173, %v4174
        %v4176 = vrot.slane %v4174, 4
        %v4177 = vrot.slane %v4042, 5
        %v4178 = vsel %vm2187, %v4176, %v4177
        %v4179 = vrot.slane %v4043, 5
        %v4180 = vrot.slane %v4179, 4
        %v4181 = vrot.slane %v4044, 5
        %v4182 = vsel %vm2187, %v4180, %v4181
        %v4183 = vrot.slane %v4181, 4
        %v4184 = vrot.slane %v4045, 5
        %v4185 = vsel %vm2187, %v4183, %v4184
        %v4186 = vrot.slane %v4046, 5
        %v4187 = vrot.slane %v4186, 4
        %v4188 = vrot.slane %v4047, 5
        %v4189 = vsel %vm2187, %v4187, %v4188
        %v4190 = vrot.slane %v4188, 4
        %v4191 = vrot.slane %v4048, 5
        %v4192 = vsel %vm2187, %v4190, %v4191
        %v4193 = vrot.slane %v4049, 5
        %v4194 = vrot.slane %v4193, 4
        %v4195 = vrot.slane %v4050, 5
        %v4196 = vsel %vm2187, %v4194, %v4195
        %v4197 = vrot.slane %v4195, 4
        %v4198 = vrot.slane %v4051, 5
        %v4199 = vsel %vm2187, %v4197, %v4198
        %v4200 = vrot.slane %v4052, 5
        %v4201 = vrot.slane %v4200, 4
        %v4202 = vrot.slane %v4053, 5
        %v4203 = vsel %vm2187, %v4201, %v4202
        %v4204 = vrot.slane %v4202, 4
        %v4205 = vrot.slane %v4054, 5
        %v4206 = vsel %vm2187, %v4204, %v4205
        %v4207 = vrot.slane %v4055, 5
        %v4208 = vrot.slane %v4207, 4
        %v4209 = vrot.slane %v4056, 5
        %v4210 = vsel %vm2187, %v4208, %v4209
        %v4211 = vrot.slane %v4209, 4
        %v4212 = vrot.slane %v4057, 5
        %v4213 = vsel %vm2187, %v4211, %v4212
        %v4214 = vrot.slane %v4058, 5
        %v4215 = vrot.slane %v4214, 4
        %v4216 = vrot.slane %v4059, 5
        %v4217 = vsel %vm2187, %v4215, %v4216
        %v4218 = vrot.slane %v4216, 4
        %v4219 = vrot.slane %v4060, 5
        %v4220 = vsel %vm2187, %v4218, %v4219
        %4253 = vst.msk [vmem:[#allocation3 + $0x10] sm:$0xf] %vm868, %v4112
        %4254 = vst.msk [vmem:[#allocation3 + $0x24] sm:$0xf] %vm868, %v4115
        %4255 = vst.msk [vmem:[#allocation3 + $0x38] sm:$0xf] %vm868, %v4119
        %4256 = vst.msk [vmem:[#allocation3 + $0x4c] sm:$0xf] %vm868, %v4122
        %4257 = vst.msk [vmem:[#allocation3 + $0x60] sm:$0xf] %vm868, %v4126
        %4258 = vst.msk [vmem:[#allocation3 + $0x74] sm:$0xf] %vm868, %v4129
        %4259 = vst.msk [vmem:[#allocation3 + $0x88] sm:$0xf] %vm868, %v4133
        %4260 = vst.msk [vmem:[#allocation3 + $0x9c] sm:$0xf] %vm868, %v4136
        %4261 = vst.msk [vmem:[#allocation3 + $0xb0] sm:$0xf] %vm868, %v4140
        %4262 = vst.msk [vmem:[#allocation3 + $0xc4] sm:$0xf] %vm868, %v4143
        %4263 = vst.msk [vmem:[#allocation3 + $0xd8] sm:$0xf] %vm868, %v4147
        %4264 = vst.msk [vmem:[#allocation3 + $0xec] sm:$0xf] %vm868, %v4150
        %4265 = vst.msk [vmem:[#allocation3 + $0x100] sm:$0xf] %vm868, %v4154
        %4266 = vst.msk [vmem:[#allocation3 + $0x114] sm:$0xf] %vm868, %v4157
        %4267 = vst.msk [vmem:[#allocation3 + $0x128] sm:$0xf] %vm868, %v4161
        %4268 = vst.msk [vmem:[#allocation3 + $0x13c] sm:$0xf] %vm868, %v4164
        %4269 = vst.msk [vmem:[#allocation3 + $0x150] sm:$0xf] %vm868, %v4168
        %4270 = vst.msk [vmem:[#allocation3 + $0x164] sm:$0xf] %vm868, %v4171
        %4271 = vst.msk [vmem:[#allocation3 + $0x178] sm:$0xf] %vm868, %v4175
        %4272 = vst.msk [vmem:[#allocation3 + $0x18c] sm:$0xf] %vm868, %v4178
        %4273 = vst.msk [vmem:[#allocation3 + $0x1a0] sm:$0xf] %vm868, %v4182
        %4274 = vst.msk [vmem:[#allocation3 + $0x1b4] sm:$0xf] %vm868, %v4185
        %4275 = vst.msk [vmem:[#allocation3 + $0x1c8] sm:$0xf] %vm868, %v4189
        %4276 = vst.msk [vmem:[#allocation3 + $0x1dc] sm:$0xf] %vm868, %v4192
        %4277 = vst.msk [vmem:[#allocation3 + $0x1f0] sm:$0xf] %vm868, %v4196
        %4278 = vst.msk [vmem:[#allocation3 + $0x204] sm:$0xf] %vm868, %v4199
        %4279 = vst.msk [vmem:[#allocation3 + $0x218] sm:$0xf] %vm868, %v4203
        %4280 = vst.msk [vmem:[#allocation3 + $0x22c] sm:$0xf] %vm868, %v4206
        %4281 = vst.msk [vmem:[#allocation3 + $0x240] sm:$0xf] %vm868, %v4210
        %4282 = vst.msk [vmem:[#allocation3 + $0x254] sm:$0xf] %vm868, %v4213
        %4283 = vst.msk [vmem:[#allocation3 + $0x268] sm:$0xf] %vm868, %v4217
        %4284 = vst.msk [vmem:[#allocation3 + $0x27c] sm:$0xf] %vm868, %v4220
        %v4285 = vld [vmem:[#allocation3] sm:$0xff]
        %v4286 = vld [vmem:[#allocation3 + $0x8] sm:$0xff]
        %v4287 = vld [vmem:[#allocation3 + $0x10] sm:$0xf]
        %v4288 = vld [vmem:[#allocation3 + $0x14] sm:$0xff]
        %v4289 = vld [vmem:[#allocation3 + $0x1c] sm:$0xff]
        %v4290 = vld [vmem:[#allocation3 + $0x24] sm:$0xf]
        %v4291 = vld [vmem:[#allocation3 + $0x28] sm:$0xff]
        %v4292 = vld [vmem:[#allocation3 + $0x30] sm:$0xff]
        %v4293 = vld [vmem:[#allocation3 + $0x38] sm:$0xf]
        %v4294 = vld [vmem:[#allocation3 + $0x3c] sm:$0xff]
        %v4295 = vld [vmem:[#allocation3 + $0x44] sm:$0xff]
        %v4296 = vld [vmem:[#allocation3 + $0x4c] sm:$0xf]
        %v4297 = vld [vmem:[#allocation3 + $0x50] sm:$0xff]
        %v4298 = vld [vmem:[#allocation3 + $0x58] sm:$0xff]
        %v4299 = vld [vmem:[#allocation3 + $0x60] sm:$0xf]
        %v4300 = vld [vmem:[#allocation3 + $0x64] sm:$0xff]
        %v4301 = vld [vmem:[#allocation3 + $0x6c] sm:$0xff]
        %v4302 = vld [vmem:[#allocation3 + $0x74] sm:$0xf]
        %v4303 = vld [vmem:[#allocation3 + $0x78] sm:$0xff]
        %v4304 = vld [vmem:[#allocation3 + $0x80] sm:$0xff]
        %v4305 = vld [vmem:[#allocation3 + $0x88] sm:$0xf]
        %v4306 = vld [vmem:[#allocation3 + $0x8c] sm:$0xff]
        %v4307 = vld [vmem:[#allocation3 + $0x94] sm:$0xff]
        %v4308 = vld [vmem:[#allocation3 + $0x9c] sm:$0xf]
        %v4309 = vld [vmem:[#allocation3 + $0xa0] sm:$0xff]
        %v4310 = vld [vmem:[#allocation3 + $0xa8] sm:$0xff]
        %v4311 = vld [vmem:[#allocation3 + $0xb0] sm:$0xf]
        %v4312 = vld [vmem:[#allocation3 + $0xb4] sm:$0xff]
        %v4313 = vld [vmem:[#allocation3 + $0xbc] sm:$0xff]
        %v4314 = vld [vmem:[#allocation3 + $0xc4] sm:$0xf]
        %v4315 = vld [vmem:[#allocation3 + $0xc8] sm:$0xff]
        %v4316 = vld [vmem:[#allocation3 + $0xd0] sm:$0xff]
        %v4317 = vld [vmem:[#allocation3 + $0xd8] sm:$0xf]
        %v4318 = vld [vmem:[#allocation3 + $0xdc] sm:$0xff]
        %v4319 = vld [vmem:[#allocation3 + $0xe4] sm:$0xff]
        %v4320 = vld [vmem:[#allocation3 + $0xec] sm:$0xf]
        %v4321 = vld [vmem:[#allocation3 + $0xf0] sm:$0xff]
        %v4322 = vld [vmem:[#allocation3 + $0xf8] sm:$0xff]
        %v4323 = vld [vmem:[#allocation3 + $0x100] sm:$0xf]
        %v4324 = vld [vmem:[#allocation3 + $0x104] sm:$0xff]
        %v4325 = vld [vmem:[#allocation3 + $0x10c] sm:$0xff]
        %v4326 = vld [vmem:[#allocation3 + $0x114] sm:$0xf]
        %v4327 = vld [vmem:[#allocation3 + $0x118] sm:$0xff]
        %v4328 = vld [vmem:[#allocation3 + $0x120] sm:$0xff]
        %v4329 = vld [vmem:[#allocation3 + $0x128] sm:$0xf]
        %v4330 = vld [vmem:[#allocation3 + $0x12c] sm:$0xff]
        %v4331 = vld [vmem:[#allocation3 + $0x134] sm:$0xff]
        %v4332 = vld [vmem:[#allocation3 + $0x13c] sm:$0xf]
        %v4333 = vld [vmem:[#allocation3 + $0x140] sm:$0xff]
        %v4334 = vld [vmem:[#allocation3 + $0x148] sm:$0xff]
        %v4335 = vld [vmem:[#allocation3 + $0x150] sm:$0xf]
        %v4336 = vld [vmem:[#allocation3 + $0x154] sm:$0xff]
        %v4337 = vld [vmem:[#allocation3 + $0x15c] sm:$0xff]
        %v4338 = vld [vmem:[#allocation3 + $0x164] sm:$0xf]
        %v4339 = vld [vmem:[#allocation3 + $0x168] sm:$0xff]
        %v4340 = vld [vmem:[#allocation3 + $0x170] sm:$0xff]
        %v4341 = vld [vmem:[#allocation3 + $0x178] sm:$0xf]
        %v4342 = vld [vmem:[#allocation3 + $0x17c] sm:$0xff]
        %v4343 = vld [vmem:[#allocation3 + $0x184] sm:$0xff]
        %v4344 = vld [vmem:[#allocation3 + $0x18c] sm:$0xf]
        %v4345 = vld [vmem:[#allocation3 + $0x190] sm:$0xff]
        %v4346 = vld [vmem:[#allocation3 + $0x198] sm:$0xff]
        %v4347 = vld [vmem:[#allocation3 + $0x1a0] sm:$0xf]
        %v4348 = vld [vmem:[#allocation3 + $0x1a4] sm:$0xff]
        %v4349 = vld [vmem:[#allocation3 + $0x1ac] sm:$0xff]
        %v4350 = vld [vmem:[#allocation3 + $0x1b4] sm:$0xf]
        %v4351 = vld [vmem:[#allocation3 + $0x1b8] sm:$0xff]
        %v4352 = vld [vmem:[#allocation3 + $0x1c0] sm:$0xff]
        %v4353 = vld [vmem:[#allocation3 + $0x1c8] sm:$0xf]
        %v4354 = vld [vmem:[#allocation3 + $0x1cc] sm:$0xff]
        %v4355 = vld [vmem:[#allocation3 + $0x1d4] sm:$0xff]
        %v4356 = vld [vmem:[#allocation3 + $0x1dc] sm:$0xf]
        %v4357 = vld [vmem:[#allocation3 + $0x1e0] sm:$0xff]
        %v4358 = vld [vmem:[#allocation3 + $0x1e8] sm:$0xff]
        %v4359 = vld [vmem:[#allocation3 + $0x1f0] sm:$0xf]
        %v4360 = vld [vmem:[#allocation3 + $0x1f4] sm:$0xff]
        %v4361 = vld [vmem:[#allocation3 + $0x1fc] sm:$0xff]
        %v4362 = vld [vmem:[#allocation3 + $0x204] sm:$0xf]
        %v4363 = vld [vmem:[#allocation3 + $0x208] sm:$0xff]
        %v4364 = vld [vmem:[#allocation3 + $0x210] sm:$0xff]
        %v4365 = vld [vmem:[#allocation3 + $0x218] sm:$0xf]
        %v4366 = vld [vmem:[#allocation3 + $0x21c] sm:$0xff]
        %v4367 = vld [vmem:[#allocation3 + $0x224] sm:$0xff]
        %v4368 = vld [vmem:[#allocation3 + $0x22c] sm:$0xf]
        %v4369 = vld [vmem:[#allocation3 + $0x230] sm:$0xff]
        %v4370 = vld [vmem:[#allocation3 + $0x238] sm:$0xff]
        %v4371 = vld [vmem:[#allocation3 + $0x240] sm:$0xf]
        %v4372 = vld [vmem:[#allocation3 + $0x244] sm:$0xff]
        %v4373 = vld [vmem:[#allocation3 + $0x24c] sm:$0xff]
        %v4374 = vld [vmem:[#allocation3 + $0x254] sm:$0xf]
        %v4375 = vld [vmem:[#allocation3 + $0x258] sm:$0xff]
        %v4376 = vld [vmem:[#allocation3 + $0x260] sm:$0xff]
        %v4377 = vld [vmem:[#allocation3 + $0x268] sm:$0xf]
        %v4378 = vld [vmem:[#allocation3 + $0x26c] sm:$0xff]
        %v4379 = vld [vmem:[#allocation3 + $0x274] sm:$0xff]
        %v4380 = vld [vmem:[#allocation3 + $0x27c] sm:$0xf]
        %v4381 = vld [vmem:[%s3] sm:$0xf]
        %v4382 = vld [vmem:[%s3 + $0x4] sm:$0xf]
        %v4383 = vld [vmem:[%s3 + $0x8] sm:$0xf]
        %v4384 = vld [vmem:[%s3 + $0xc] sm:$0xf]
        %v4385 = vld [vmem:[%s3 + $0x10] sm:$0xf]
        %v4386 = vld [vmem:[%s3 + $0x14] sm:$0xf]
        %v4387 = vld [vmem:[%s3 + $0x18] sm:$0xf]
        %v4388 = vld [vmem:[%s3 + $0x1c] sm:$0xf]
        %v4389 = vld [vmem:[%s3 + $0x20] sm:$0xf]
        %v4390 = vld [vmem:[%s3 + $0x24] sm:$0xf]
        %v4391 = vld [vmem:[%s3 + $0x28] sm:$0xf]
        %v4392 = vld [vmem:[%s3 + $0x2c] sm:$0xf]
        %v4393 = vld [vmem:[%s3 + $0x30] sm:$0xf]
        %v4394 = vld [vmem:[%s3 + $0x34] sm:$0xf]
        %v4395 = vld [vmem:[%s3 + $0x38] sm:$0xf]
        %v4396 = vld [vmem:[%s3 + $0x3c] sm:$0xf]
        %v4397 = vld [vmem:[%s3 + $0x40] sm:$0xf]
        %v4398 = vld [vmem:[%s3 + $0x44] sm:$0xf]
        %v4399 = vld [vmem:[%s3 + $0x48] sm:$0xf]
        %v4400 = vld [vmem:[%s3 + $0x4c] sm:$0xf]
        %v4401 = vld [vmem:[%s3 + $0x50] sm:$0xf]
        %v4402 = vld [vmem:[%s3 + $0x54] sm:$0xf]
        %v4403 = vld [vmem:[%s3 + $0x58] sm:$0xf]
        %v4404 = vld [vmem:[%s3 + $0x5c] sm:$0xf]
        %v4405 = vld [vmem:[%s3 + $0x60] sm:$0xf]
        %v4406 = vld [vmem:[%s3 + $0x64] sm:$0xf]
        %v4407 = vld [vmem:[%s3 + $0x68] sm:$0xf]
        %v4408 = vld [vmem:[%s3 + $0x6c] sm:$0xf]
        %v4409 = vld [vmem:[%s3 + $0x70] sm:$0xf]
        %v4410 = vld [vmem:[%s3 + $0x74] sm:$0xf]
        %v4411 = vld [vmem:[%s3 + $0x78] sm:$0xf]
        %v4412 = vld [vmem:[%s3 + $0x7c] sm:$0xf]
        %v4413 = vld [vmem:[%s3 + $0x80] sm:$0xf]
        %v4414 = vld [vmem:[%s3 + $0x84] sm:$0xf]
        %v4415 = vld [vmem:[%s3 + $0x88] sm:$0xf]
        %v4416 = vld [vmem:[%s3 + $0x8c] sm:$0xf]
        %v4417 = vld [vmem:[%s3 + $0x90] sm:$0xf]
        %v4418 = vld [vmem:[%s3 + $0x94] sm:$0xf]
        %v4419 = vld [vmem:[%s3 + $0x98] sm:$0xf]
        %v4420 = vld [vmem:[%s3 + $0x9c] sm:$0xf]
        %v4421 = vld [vmem:[%s3 + $0xa0] sm:$0xf]
        %v4422 = vld [vmem:[%s3 + $0xa4] sm:$0xf]
        %v4423 = vld [vmem:[%s3 + $0xa8] sm:$0xf]
        %v4424 = vld [vmem:[%s3 + $0xac] sm:$0xf]
        %v4425 = vld [vmem:[%s3 + $0xb0] sm:$0xf]
        %v4426 = vld [vmem:[%s3 + $0xb4] sm:$0xf]
        %v4427 = vld [vmem:[%s3 + $0xb8] sm:$0xf]
        %v4428 = vld [vmem:[%s3 + $0xbc] sm:$0xf]
        %v4429 = vld [vmem:[%s3 + $0xc0] sm:$0xf]
        %v4430 = vld [vmem:[%s3 + $0xc4] sm:$0xf]
        %v4431 = vld [vmem:[%s3 + $0xc8] sm:$0xf]
        %v4432 = vld [vmem:[%s3 + $0xcc] sm:$0xf]
        %v4433 = vld [vmem:[%s3 + $0xd0] sm:$0xf]
        %v4434 = vld [vmem:[%s3 + $0xd4] sm:$0xf]
        %v4435 = vld [vmem:[%s3 + $0xd8] sm:$0xf]
        %v4436 = vld [vmem:[%s3 + $0xdc] sm:$0xf]
        %v4437 = vld [vmem:[%s3 + $0xe0] sm:$0xf]
        %v4438 = vld [vmem:[%s3 + $0xe4] sm:$0xf]
        %v4439 = vld [vmem:[%s3 + $0xe8] sm:$0xf]
        %v4440 = vld [vmem:[%s3 + $0xec] sm:$0xf]
        %v4441 = vld [vmem:[%s3 + $0xf0] sm:$0xf]
        %v4442 = vld [vmem:[%s3 + $0xf4] sm:$0xf]
        %v4443 = vld [vmem:[%s3 + $0xf8] sm:$0xf]
        %v4444 = vld [vmem:[%s3 + $0xfc] sm:$0xf]
        %v4445 = vld [vmem:[%s3 + $0x100] sm:$0xf]
        %v4446 = vld [vmem:[%s3 + $0x104] sm:$0xf]
        %v4447 = vld [vmem:[%s3 + $0x108] sm:$0xf]
        %v4448 = vld [vmem:[%s3 + $0x10c] sm:$0xf]
        %v4449 = vld [vmem:[%s3 + $0x110] sm:$0xf]
        %v4450 = vld [vmem:[%s3 + $0x114] sm:$0xf]
        %v4451 = vld [vmem:[%s3 + $0x118] sm:$0xf]
        %v4452 = vld [vmem:[%s3 + $0x11c] sm:$0xf]
        %v4453 = vld [vmem:[%s4] sm:$0x1]
        %v4455 = vlaneseq
        %v4456 = vshrl.u32 %v4455, 7
        %v4457 = vsub.s32 0, %v4456
        %v4458 = vrot.slane %v4453, %v4457
        %v4556 = vunpack.c.l.b16 %v4285
        %v4557 = vunpack.c.h.b16 %v4285
        %v4558 = vunpack.c.l.b16 %v4286
        %v4559 = vunpack.c.h.b16 %v4286
        %v4560 = vunpack.c.l.b16 %v4287
        %v4561 = vunpack.c.l.b16 %v4288
        %v4562 = vunpack.c.h.b16 %v4288
        %v4563 = vunpack.c.l.b16 %v4289
        %v4564 = vunpack.c.h.b16 %v4289
        %v4565 = vunpack.c.l.b16 %v4290
        %v4566 = vunpack.c.l.b16 %v4291
        %v4567 = vunpack.c.h.b16 %v4291
        %v4568 = vunpack.c.l.b16 %v4292
        %v4569 = vunpack.c.h.b16 %v4292
        %v4570 = vunpack.c.l.b16 %v4293
        %v4571 = vunpack.c.l.b16 %v4294
        %v4572 = vunpack.c.h.b16 %v4294
        %v4573 = vunpack.c.l.b16 %v4295
        %v4574 = vunpack.c.h.b16 %v4295
        %v4575 = vunpack.c.l.b16 %v4296
        %v4576 = vunpack.c.l.b16 %v4297
        %v4577 = vunpack.c.h.b16 %v4297
        %v4578 = vunpack.c.l.b16 %v4298
        %v4579 = vunpack.c.h.b16 %v4298
        %v4580 = vunpack.c.l.b16 %v4299
        %v4581 = vunpack.c.l.b16 %v4300
        %v4582 = vunpack.c.h.b16 %v4300
        %v4583 = vunpack.c.l.b16 %v4301
        %v4584 = vunpack.c.h.b16 %v4301
        %v4585 = vunpack.c.l.b16 %v4302
        %v4586 = vunpack.c.l.b16 %v4303
        %v4587 = vunpack.c.h.b16 %v4303
        %v4588 = vunpack.c.l.b16 %v4304
        %v4589 = vunpack.c.h.b16 %v4304
        %v4590 = vunpack.c.l.b16 %v4305
        %v4591 = vunpack.c.l.b16 %v4306
        %v4592 = vunpack.c.h.b16 %v4306
        %v4593 = vunpack.c.l.b16 %v4307
        %v4594 = vunpack.c.h.b16 %v4307
        %v4595 = vunpack.c.l.b16 %v4308
        %v4596 = vunpack.c.l.b16 %v4309
        %v4597 = vunpack.c.h.b16 %v4309
        %v4598 = vunpack.c.l.b16 %v4310
        %v4599 = vunpack.c.h.b16 %v4310
        %v4600 = vunpack.c.l.b16 %v4311
        %v4601 = vunpack.c.l.b16 %v4312
        %v4602 = vunpack.c.h.b16 %v4312
        %v4603 = vunpack.c.l.b16 %v4313
        %v4604 = vunpack.c.h.b16 %v4313
        %v4605 = vunpack.c.l.b16 %v4314
        %v4606 = vunpack.c.l.b16 %v4315
        %v4607 = vunpack.c.h.b16 %v4315
        %v4608 = vunpack.c.l.b16 %v4316
        %v4609 = vunpack.c.h.b16 %v4316
        %v4610 = vunpack.c.l.b16 %v4317
        %v4611 = vunpack.c.l.b16 %v4318
        %v4612 = vunpack.c.h.b16 %v4318
        %v4613 = vunpack.c.l.b16 %v4319
        %v4614 = vunpack.c.h.b16 %v4319
        %v4615 = vunpack.c.l.b16 %v4320
        %v4616 = vunpack.c.l.b16 %v4321
        %v4617 = vunpack.c.h.b16 %v4321
        %v4618 = vunpack.c.l.b16 %v4322
        %v4619 = vunpack.c.h.b16 %v4322
        %v4620 = vunpack.c.l.b16 %v4323
        %v4621 = vunpack.c.l.b16 %v4324
        %v4622 = vunpack.c.h.b16 %v4324
        %v4623 = vunpack.c.l.b16 %v4325
        %v4624 = vunpack.c.h.b16 %v4325
        %v4625 = vunpack.c.l.b16 %v4326
        %v4626 = vunpack.c.l.b16 %v4327
        %v4627 = vunpack.c.h.b16 %v4327
        %v4628 = vunpack.c.l.b16 %v4328
        %v4629 = vunpack.c.h.b16 %v4328
        %v4630 = vunpack.c.l.b16 %v4329
        %v4631 = vunpack.c.l.b16 %v4330
        %v4632 = vunpack.c.h.b16 %v4330
        %v4633 = vunpack.c.l.b16 %v4331
        %v4634 = vunpack.c.h.b16 %v4331
        %v4635 = vunpack.c.l.b16 %v4332
        %v4636 = vunpack.c.l.b16 %v4333
        %v4637 = vunpack.c.h.b16 %v4333
        %v4638 = vunpack.c.l.b16 %v4334
        %v4639 = vunpack.c.h.b16 %v4334
        %v4640 = vunpack.c.l.b16 %v4335
        %v4641 = vunpack.c.l.b16 %v4336
        %v4642 = vunpack.c.h.b16 %v4336
        %v4643 = vunpack.c.l.b16 %v4337
        %v4644 = vunpack.c.h.b16 %v4337
        %v4645 = vunpack.c.l.b16 %v4338
        %v4646 = vunpack.c.l.b16 %v4339
        %v4647 = vunpack.c.h.b16 %v4339
        %v4648 = vunpack.c.l.b16 %v4340
        %v4649 = vunpack.c.h.b16 %v4340
        %v4650 = vunpack.c.l.b16 %v4341
        %v4651 = vunpack.c.l.b16 %v4342
        %v4652 = vunpack.c.h.b16 %v4342
        %v4653 = vunpack.c.l.b16 %v4343
        %v4654 = vunpack.c.h.b16 %v4343
        %v4655 = vunpack.c.l.b16 %v4344
        %v4656 = vunpack.c.l.b16 %v4345
        %v4657 = vunpack.c.h.b16 %v4345
        %v4658 = vunpack.c.l.b16 %v4346
        %v4659 = vunpack.c.h.b16 %v4346
        %v4660 = vunpack.c.l.b16 %v4347
        %v4661 = vunpack.c.l.b16 %v4348
        %v4662 = vunpack.c.h.b16 %v4348
        %v4663 = vunpack.c.l.b16 %v4349
        %v4664 = vunpack.c.h.b16 %v4349
        %v4665 = vunpack.c.l.b16 %v4350
        %v4666 = vunpack.c.l.b16 %v4351
        %v4667 = vunpack.c.h.b16 %v4351
        %v4668 = vunpack.c.l.b16 %v4352
        %v4669 = vunpack.c.h.b16 %v4352
        %v4670 = vunpack.c.l.b16 %v4353
        %v4671 = vunpack.c.l.b16 %v4354
        %v4672 = vunpack.c.h.b16 %v4354
        %v4673 = vunpack.c.l.b16 %v4355
        %v4674 = vunpack.c.h.b16 %v4355
        %v4675 = vunpack.c.l.b16 %v4356
        %v4676 = vunpack.c.l.b16 %v4357
        %v4677 = vunpack.c.h.b16 %v4357
        %v4678 = vunpack.c.l.b16 %v4358
        %v4679 = vunpack.c.h.b16 %v4358
        %v4680 = vunpack.c.l.b16 %v4359
        %v4681 = vunpack.c.l.b16 %v4360
        %v4682 = vunpack.c.h.b16 %v4360
        %v4683 = vunpack.c.l.b16 %v4361
        %v4684 = vunpack.c.h.b16 %v4361
        %v4685 = vunpack.c.l.b16 %v4362
        %v4686 = vunpack.c.l.b16 %v4363
        %v4687 = vunpack.c.h.b16 %v4363
        %v4688 = vunpack.c.l.b16 %v4364
        %v4689 = vunpack.c.h.b16 %v4364
        %v4690 = vunpack.c.l.b16 %v4365
        %v4691 = vunpack.c.l.b16 %v4366
        %v4692 = vunpack.c.h.b16 %v4366
        %v4693 = vunpack.c.l.b16 %v4367
        %v4694 = vunpack.c.h.b16 %v4367
        %v4695 = vunpack.c.l.b16 %v4368
        %v4696 = vunpack.c.l.b16 %v4369
        %v4697 = vunpack.c.h.b16 %v4369
        %v4698 = vunpack.c.l.b16 %v4370
        %v4699 = vunpack.c.h.b16 %v4370
        %v4700 = vunpack.c.l.b16 %v4371
        %v4701 = vunpack.c.l.b16 %v4372
        %v4702 = vunpack.c.h.b16 %v4372
        %v4703 = vunpack.c.l.b16 %v4373
        %v4704 = vunpack.c.h.b16 %v4373
        %v4705 = vunpack.c.l.b16 %v4374
        %v4706 = vunpack.c.l.b16 %v4375
        %v4707 = vunpack.c.h.b16 %v4375
        %v4708 = vunpack.c.l.b16 %v4376
        %v4709 = vunpack.c.h.b16 %v4376
        %v4710 = vunpack.c.l.b16 %v4377
        %v4711 = vunpack.c.l.b16 %v4378
        %v4712 = vunpack.c.h.b16 %v4378
        %v4713 = vunpack.c.l.b16 %v4379
        %v4714 = vunpack.c.h.b16 %v4379
        %v4715 = vunpack.c.l.b16 %v4380
        %v4716 = vpack.c.b16 %v4561, %v4556
        %v4717 = vpack.c.b16 %v4562, %v4557
        %v4718 = vpack.c.b16 %v4563, %v4558
        %v4719 = vpack.c.b16 %v4564, %v4559
        %v4720 = vpack.c.b16 %v4565, %v4560
        %v4721 = vpack.c.b16 %v4571, %v4566
        %v4722 = vpack.c.b16 %v4572, %v4567
        %v4723 = vpack.c.b16 %v4573, %v4568
        %v4724 = vpack.c.b16 %v4574, %v4569
        %v4725 = vpack.c.b16 %v4575, %v4570
        %v4726 = vpack.c.b16 %v4581, %v4576
        %v4727 = vpack.c.b16 %v4582, %v4577
        %v4728 = vpack.c.b16 %v4583, %v4578
        %v4729 = vpack.c.b16 %v4584, %v4579
        %v4730 = vpack.c.b16 %v4585, %v4580
        %v4731 = vpack.c.b16 %v4591, %v4586
        %v4732 = vpack.c.b16 %v4592, %v4587
        %v4733 = vpack.c.b16 %v4593, %v4588
        %v4734 = vpack.c.b16 %v4594, %v4589
        %v4735 = vpack.c.b16 %v4595, %v4590
        %v4736 = vpack.c.b16 %v4601, %v4596
        %v4737 = vpack.c.b16 %v4602, %v4597
        %v4738 = vpack.c.b16 %v4603, %v4598
        %v4739 = vpack.c.b16 %v4604, %v4599
        %v4740 = vpack.c.b16 %v4605, %v4600
        %v4741 = vpack.c.b16 %v4611, %v4606
        %v4742 = vpack.c.b16 %v4612, %v4607
        %v4743 = vpack.c.b16 %v4613, %v4608
        %v4744 = vpack.c.b16 %v4614, %v4609
        %v4745 = vpack.c.b16 %v4615, %v4610
        %v4746 = vpack.c.b16 %v4621, %v4616
        %v4747 = vpack.c.b16 %v4622, %v4617
        %v4748 = vpack.c.b16 %v4623, %v4618
        %v4749 = vpack.c.b16 %v4624, %v4619
        %v4750 = vpack.c.b16 %v4625, %v4620
        %v4751 = vpack.c.b16 %v4631, %v4626
        %v4752 = vpack.c.b16 %v4632, %v4627
        %v4753 = vpack.c.b16 %v4633, %v4628
        %v4754 = vpack.c.b16 %v4634, %v4629
        %v4755 = vpack.c.b16 %v4635, %v4630
        %v4756 = vpack.c.b16 %v4641, %v4636
        %v4757 = vpack.c.b16 %v4642, %v4637
        %v4758 = vpack.c.b16 %v4643, %v4638
        %v4759 = vpack.c.b16 %v4644, %v4639
        %v4760 = vpack.c.b16 %v4645, %v4640
        %v4761 = vpack.c.b16 %v4651, %v4646
        %v4762 = vpack.c.b16 %v4652, %v4647
        %v4763 = vpack.c.b16 %v4653, %v4648
        %v4764 = vpack.c.b16 %v4654, %v4649
        %v4765 = vpack.c.b16 %v4655, %v4650
        %v4766 = vpack.c.b16 %v4661, %v4656
        %v4767 = vpack.c.b16 %v4662, %v4657
        %v4768 = vpack.c.b16 %v4663, %v4658
        %v4769 = vpack.c.b16 %v4664, %v4659
        %v4770 = vpack.c.b16 %v4665, %v4660
        %v4771 = vpack.c.b16 %v4671, %v4666
        %v4772 = vpack.c.b16 %v4672, %v4667
        %v4773 = vpack.c.b16 %v4673, %v4668
        %v4774 = vpack.c.b16 %v4674, %v4669
        %v4775 = vpack.c.b16 %v4675, %v4670
        %v4776 = vpack.c.b16 %v4681, %v4676
        %v4777 = vpack.c.b16 %v4682, %v4677
        %v4778 = vpack.c.b16 %v4683, %v4678
        %v4779 = vpack.c.b16 %v4684, %v4679
        %v4780 = vpack.c.b16 %v4685, %v4680
        %v4781 = vpack.c.b16 %v4691, %v4686
        %v4782 = vpack.c.b16 %v4692, %v4687
        %v4783 = vpack.c.b16 %v4693, %v4688
        %v4784 = vpack.c.b16 %v4694, %v4689
        %v4785 = vpack.c.b16 %v4695, %v4690
        %v4786 = vpack.c.b16 %v4701, %v4696
        %v4787 = vpack.c.b16 %v4702, %v4697
        %v4788 = vpack.c.b16 %v4703, %v4698
        %v4789 = vpack.c.b16 %v4704, %v4699
        %v4790 = vpack.c.b16 %v4705, %v4700
        %v4791 = vpack.c.b16 %v4711, %v4706
        %v4792 = vpack.c.b16 %v4712, %v4707
        %v4793 = vpack.c.b16 %v4713, %v4708
        %v4794 = vpack.c.b16 %v4714, %v4709
        %v4795 = vpack.c.b16 %v4715, %v4710
        %v4932 = vunpack.c.l.b16 %v4381
        %v4933 = vunpack.c.l.b16 %v4382
        %v4934 = vunpack.c.l.b16 %v4383
        %v4935 = vunpack.c.l.b16 %v4384
        %v4936 = vunpack.c.l.b16 %v4385
        %v4937 = vunpack.c.l.b16 %v4386
        %v4938 = vunpack.c.l.b16 %v4387
        %v4939 = vunpack.c.l.b16 %v4388
        %v4940 = vunpack.c.l.b16 %v4389
        %v4941 = vunpack.c.l.b16 %v4390
        %v4942 = vunpack.c.l.b16 %v4391
        %v4943 = vunpack.c.l.b16 %v4392
        %v4944 = vunpack.c.l.b16 %v4393
        %v4945 = vunpack.c.l.b16 %v4394
        %v4946 = vunpack.c.l.b16 %v4395
        %v4947 = vunpack.c.l.b16 %v4396
        %v4948 = vunpack.c.l.b16 %v4397
        %v4949 = vunpack.c.l.b16 %v4398
        %v4950 = vunpack.c.l.b16 %v4399
        %v4951 = vunpack.c.l.b16 %v4400
        %v4952 = vunpack.c.l.b16 %v4401
        %v4953 = vunpack.c.l.b16 %v4402
        %v4954 = vunpack.c.l.b16 %v4403
        %v4955 = vunpack.c.l.b16 %v4404
        %v4956 = vunpack.c.l.b16 %v4405
        %v4957 = vunpack.c.l.b16 %v4406
        %v4958 = vunpack.c.l.b16 %v4407
        %v4959 = vunpack.c.l.b16 %v4408
        %v4960 = vunpack.c.l.b16 %v4409
        %v4961 = vunpack.c.l.b16 %v4410
        %v4962 = vunpack.c.l.b16 %v4411
        %v4963 = vunpack.c.l.b16 %v4412
        %v4964 = vunpack.c.l.b16 %v4413
        %v4965 = vunpack.c.l.b16 %v4414
        %v4966 = vunpack.c.l.b16 %v4415
        %v4967 = vunpack.c.l.b16 %v4416
        %v4968 = vunpack.c.l.b16 %v4417
        %v4969 = vunpack.c.l.b16 %v4418
        %v4970 = vunpack.c.l.b16 %v4419
        %v4971 = vunpack.c.l.b16 %v4420
        %v4972 = vunpack.c.l.b16 %v4421
        %v4973 = vunpack.c.l.b16 %v4422
        %v4974 = vunpack.c.l.b16 %v4423
        %v4975 = vunpack.c.l.b16 %v4424
        %v4976 = vunpack.c.l.b16 %v4425
        %v4977 = vunpack.c.l.b16 %v4426
        %v4978 = vunpack.c.l.b16 %v4427
        %v4979 = vunpack.c.l.b16 %v4428
        %v4980 = vunpack.c.l.b16 %v4429
        %v4981 = vunpack.c.l.b16 %v4430
        %v4982 = vunpack.c.l.b16 %v4431
        %v4983 = vunpack.c.l.b16 %v4432
        %v4984 = vunpack.c.l.b16 %v4433
        %v4985 = vunpack.c.l.b16 %v4434
        %v4986 = vunpack.c.l.b16 %v4435
        %v4987 = vunpack.c.l.b16 %v4436
        %v4988 = vunpack.c.l.b16 %v4437
        %v4989 = vunpack.c.l.b16 %v4438
        %v4990 = vunpack.c.l.b16 %v4439
        %v4991 = vunpack.c.l.b16 %v4440
        %v4992 = vunpack.c.l.b16 %v4441
        %v4993 = vunpack.c.l.b16 %v4442
        %v4994 = vunpack.c.l.b16 %v4443
        %v4995 = vunpack.c.l.b16 %v4444
        %v4996 = vunpack.c.l.b16 %v4445
        %v4997 = vunpack.c.l.b16 %v4446
        %v4998 = vunpack.c.l.b16 %v4447
        %v4999 = vunpack.c.l.b16 %v4448
        %v5000 = vunpack.c.l.b16 %v4449
        %v5001 = vunpack.c.l.b16 %v4450
        %v5002 = vunpack.c.l.b16 %v4451
        %v5003 = vunpack.c.l.b16 %v4452
        %v5004 = vpack.c.b16 %v4933, %v4932
        %v5005 = vpack.c.b16 %v4935, %v4934
        %v5006 = vpack.c.b16 %v4937, %v4936
        %v5007 = vpack.c.b16 %v4939, %v4938
        %v5008 = vpack.c.b16 %v4941, %v4940
        %v5009 = vpack.c.b16 %v4943, %v4942
        %v5010 = vpack.c.b16 %v4945, %v4944
        %v5011 = vpack.c.b16 %v4947, %v4946
        %v5012 = vpack.c.b16 %v4949, %v4948
        %v5013 = vpack.c.b16 %v4951, %v4950
        %v5014 = vpack.c.b16 %v4953, %v4952
        %v5015 = vpack.c.b16 %v4955, %v4954
        %v5016 = vpack.c.b16 %v4957, %v4956
        %v5017 = vpack.c.b16 %v4959, %v4958
        %v5018 = vpack.c.b16 %v4961, %v4960
        %v5019 = vpack.c.b16 %v4963, %v4962
        %v5020 = vpack.c.b16 %v4965, %v4964
        %v5021 = vpack.c.b16 %v4967, %v4966
        %v5022 = vpack.c.b16 %v4969, %v4968
        %v5023 = vpack.c.b16 %v4971, %v4970
        %v5024 = vpack.c.b16 %v4973, %v4972
        %v5025 = vpack.c.b16 %v4975, %v4974
        %v5026 = vpack.c.b16 %v4977, %v4976
        %v5027 = vpack.c.b16 %v4979, %v4978
        %v5028 = vpack.c.b16 %v4981, %v4980
        %v5029 = vpack.c.b16 %v4983, %v4982
        %v5030 = vpack.c.b16 %v4985, %v4984
        %v5031 = vpack.c.b16 %v4987, %v4986
        %v5032 = vpack.c.b16 %v4989, %v4988
        %v5033 = vpack.c.b16 %v4991, %v4990
        %v5034 = vpack.c.b16 %v4993, %v4992
        %v5035 = vpack.c.b16 %v4995, %v4994
        %v5036 = vpack.c.b16 %v4997, %v4996
        %v5037 = vpack.c.b16 %v4999, %v4998
        %v5038 = vpack.c.b16 %v5001, %v5000
        %v5039 = vpack.c.b16 %v5003, %v5002
        %v5077 = vsel %vm803, %v4720, 0
        %v5080 = vsel %vm803, %v4725, 0
        %v5083 = vsel %vm803, %v4730, 0
        %v5086 = vsel %vm803, %v4735, 0
        %v5089 = vsel %vm803, %v4740, 0
        %v5092 = vsel %vm803, %v4745, 0
        %v5095 = vsel %vm803, %v4750, 0
        %v5098 = vsel %vm803, %v4755, 0
        %v5101 = vsel %vm803, %v4760, 0
        %v5104 = vsel %vm803, %v4765, 0
        %v5107 = vsel %vm803, %v4770, 0
        %v5110 = vsel %vm803, %v4775, 0
        %v5113 = vsel %vm803, %v4780, 0
        %v5116 = vsel %vm803, %v4785, 0
        %v5119 = vsel %vm803, %v4790, 0
        %v5122 = vsel %vm803, %v4795, 0
        %5124 = vmatprep.subr.bf16.mxu0 0
        %5125 = vmatpush1.bf16.msra.mxu0 %v5011
        %5126 = vmatprep.subr.bf16.mxu0 0
        %5127 = vmatpush1.bf16.msra.mxu0 %v5010
        %5128 = vmatprep.subr.bf16.mxu0 0
        %5129 = vmatpush1.bf16.msra.mxu0 %v5009
        %5130 = vmatprep.subr.bf16.mxu0 0
        %5131 = vmatpush1.bf16.msra.mxu0 %v5008
        %5132 = vmatprep.subr.bf16.mxu0 0
        %5133 = vmatpush1.bf16.msra.mxu0 %v5007
        %5134 = vmatprep.subr.bf16.mxu0 0
        %5135 = vmatpush1.bf16.msra.mxu0 %v5006
        %5136 = vmatprep.subr.bf16.mxu0 0
        %5137 = vmatpush1.bf16.msra.mxu0 %v5005
        %5138 = vmatprep.subr.bf16.mxu0 0
        %5139 = vmatpush1.bf16.msra.mxu0 %v5004
        %5140 = vmatprep.subr.bf16.mxu0 0
        %5141 = vmatpush2.bf16.msra.mxu0 %v5019
        %5142 = vmatprep.subr.bf16.mxu0 0
        %5143 = vmatpush2.bf16.msra.mxu0 %v5018
        %5144 = vmatprep.subr.bf16.mxu0 0
        %5145 = vmatpush2.bf16.msra.mxu0 %v5017
        %5146 = vmatprep.subr.bf16.mxu0 0
        %5147 = vmatpush2.bf16.msra.mxu0 %v5016
        %5148 = vmatprep.subr.bf16.mxu0 0
        %5149 = vmatpush2.bf16.msra.mxu0 %v5015
        %5150 = vmatprep.subr.bf16.mxu0 0
        %5151 = vmatpush2.bf16.msra.mxu0 %v5014
        %5152 = vmatprep.subr.bf16.mxu0 0
        %5153 = vmatpush2.bf16.msra.mxu0 %v5013
        %5154 = vmatprep.subr.bf16.mxu0 0
        %5155 = vmatpush2.bf16.msra.mxu0 %v5012
        %5156 = vmatprep.mubr.bf16.mxu0 %v4717
        %5157 = vmatmul.mubr.bf16.gmra.mxu0 %v4716
        %v5158 = vpop.f32.mrf.mxu0
        %v5159 = vadd.f32 %v4458, %v5158
        %v5160 = vpop.f32.mrf.mxu0
        %v5161 = vpop.f32.mrf.mxu0
        %v5162 = vadd.f32 %v4458, %v5161
        %v5163 = vpop.f32.mrf.mxu0
        %5164 = vmatprep.mubr.bf16.mxu0 %v4722
        %5165 = vmatmul.mubr.bf16.gmra.mxu0 %v4721
        %v5166 = vpop.f32.mrf.mxu0
        %v5167 = vadd.f32 %v4458, %v5166
        %v5168 = vpop.f32.mrf.mxu0
        %v5169 = vpop.f32.mrf.mxu0
        %v5170 = vadd.f32 %v4458, %v5169
        %v5171 = vpop.f32.mrf.mxu0
        %5172 = vmatprep.mubr.bf16.mxu0 %v4727
        %5173 = vmatmul.mubr.bf16.gmra.mxu0 %v4726
        %v5174 = vpop.f32.mrf.mxu0
        %v5175 = vadd.f32 %v4458, %v5174
        %v5176 = vpop.f32.mrf.mxu0
        %v5177 = vpop.f32.mrf.mxu0
        %v5178 = vadd.f32 %v4458, %v5177
        %v5179 = vpop.f32.mrf.mxu0
        %5180 = vmatprep.mubr.bf16.mxu0 %v4732
        %5181 = vmatmul.mubr.bf16.gmra.mxu0 %v4731
        %v5182 = vpop.f32.mrf.mxu0
        %v5183 = vadd.f32 %v4458, %v5182
        %v5184 = vpop.f32.mrf.mxu0
        %v5185 = vpop.f32.mrf.mxu0
        %v5186 = vadd.f32 %v4458, %v5185
        %v5187 = vpop.f32.mrf.mxu0
        %5188 = vmatprep.mubr.bf16.mxu0 %v4737
        %5189 = vmatmul.mubr.bf16.gmra.mxu0 %v4736
        %v5190 = vpop.f32.mrf.mxu0
        %v5191 = vadd.f32 %v4458, %v5190
        %v5192 = vpop.f32.mrf.mxu0
        %v5193 = vpop.f32.mrf.mxu0
        %v5194 = vadd.f32 %v4458, %v5193
        %v5195 = vpop.f32.mrf.mxu0
        %5196 = vmatprep.mubr.bf16.mxu0 %v4742
        %5197 = vmatmul.mubr.bf16.gmra.mxu0 %v4741
        %v5198 = vpop.f32.mrf.mxu0
        %v5199 = vadd.f32 %v4458, %v5198
        %v5200 = vpop.f32.mrf.mxu0
        %v5201 = vpop.f32.mrf.mxu0
        %v5202 = vadd.f32 %v4458, %v5201
        %v5203 = vpop.f32.mrf.mxu0
        %5204 = vmatprep.mubr.bf16.mxu0 %v4747
        %5205 = vmatmul.mubr.bf16.gmra.mxu0 %v4746
        %v5206 = vpop.f32.mrf.mxu0
        %v5207 = vadd.f32 %v4458, %v5206
        %v5208 = vpop.f32.mrf.mxu0
        %v5209 = vpop.f32.mrf.mxu0
        %v5210 = vadd.f32 %v4458, %v5209
        %v5211 = vpop.f32.mrf.mxu0
        %5212 = vmatprep.mubr.bf16.mxu0 %v4752
        %5213 = vmatmul.mubr.bf16.gmra.mxu0 %v4751
        %v5214 = vpop.f32.mrf.mxu0
        %v5215 = vadd.f32 %v4458, %v5214
        %v5216 = vpop.f32.mrf.mxu0
        %v5217 = vpop.f32.mrf.mxu0
        %v5218 = vadd.f32 %v4458, %v5217
        %v5219 = vpop.f32.mrf.mxu0
        %5220 = vmatprep.mubr.bf16.mxu0 %v4757
        %5221 = vmatmul.mubr.bf16.gmra.mxu0 %v4756
        %v5222 = vpop.f32.mrf.mxu0
        %v5223 = vadd.f32 %v4458, %v5222
        %v5224 = vpop.f32.mrf.mxu0
        %v5225 = vpop.f32.mrf.mxu0
        %v5226 = vadd.f32 %v4458, %v5225
        %v5227 = vpop.f32.mrf.mxu0
        %5228 = vmatprep.mubr.bf16.mxu0 %v4762
        %5229 = vmatmul.mubr.bf16.gmra.mxu0 %v4761
        %v5230 = vpop.f32.mrf.mxu0
        %v5231 = vadd.f32 %v4458, %v5230
        %v5232 = vpop.f32.mrf.mxu0
        %v5233 = vpop.f32.mrf.mxu0
        %v5234 = vadd.f32 %v4458, %v5233
        %v5235 = vpop.f32.mrf.mxu0
        %5236 = vmatprep.mubr.bf16.mxu0 %v4767
        %5237 = vmatmul.mubr.bf16.gmra.mxu0 %v4766
        %v5238 = vpop.f32.mrf.mxu0
        %v5239 = vadd.f32 %v4458, %v5238
        %v5240 = vpop.f32.mrf.mxu0
        %v5241 = vpop.f32.mrf.mxu0
        %v5242 = vadd.f32 %v4458, %v5241
        %v5243 = vpop.f32.mrf.mxu0
        %5244 = vmatprep.mubr.bf16.mxu0 %v4772
        %5245 = vmatmul.mubr.bf16.gmra.mxu0 %v4771
        %v5246 = vpop.f32.mrf.mxu0
        %v5247 = vadd.f32 %v4458, %v5246
        %v5248 = vpop.f32.mrf.mxu0
        %v5249 = vpop.f32.mrf.mxu0
        %v5250 = vadd.f32 %v4458, %v5249
        %v5251 = vpop.f32.mrf.mxu0
        %5252 = vmatprep.mubr.bf16.mxu0 %v4777
        %5253 = vmatmul.mubr.bf16.gmra.mxu0 %v4776
        %v5254 = vpop.f32.mrf.mxu0
        %v5255 = vadd.f32 %v4458, %v5254
        %v5256 = vpop.f32.mrf.mxu0
        %v5257 = vpop.f32.mrf.mxu0
        %v5258 = vadd.f32 %v4458, %v5257
        %v5259 = vpop.f32.mrf.mxu0
        %5260 = vmatprep.mubr.bf16.mxu0 %v4782
        %5261 = vmatmul.mubr.bf16.gmra.mxu0 %v4781
        %v5262 = vpop.f32.mrf.mxu0
        %v5263 = vadd.f32 %v4458, %v5262
        %v5264 = vpop.f32.mrf.mxu0
        %v5265 = vpop.f32.mrf.mxu0
        %v5266 = vadd.f32 %v4458, %v5265
        %v5267 = vpop.f32.mrf.mxu0
        %5268 = vmatprep.mubr.bf16.mxu0 %v4787
        %5269 = vmatmul.mubr.bf16.gmra.mxu0 %v4786
        %v5270 = vpop.f32.mrf.mxu0
        %v5271 = vadd.f32 %v4458, %v5270
        %v5272 = vpop.f32.mrf.mxu0
        %v5273 = vpop.f32.mrf.mxu0
        %v5274 = vadd.f32 %v4458, %v5273
        %v5275 = vpop.f32.mrf.mxu0
        %5276 = vmatprep.mubr.bf16.mxu0 %v4792
        %5277 = vmatmul.mubr.bf16.gmra.mxu0 %v4791
        %v5278 = vpop.f32.mrf.mxu0
        %v5279 = vadd.f32 %v4458, %v5278
        %v5280 = vpop.f32.mrf.mxu0
        %v5281 = vpop.f32.mrf.mxu0
        %v5282 = vadd.f32 %v4458, %v5281
        %v5283 = vpop.f32.mrf.mxu0
        %5284 = vdwg.mxu0
        %5285 = vmatprep.subr.bf16.mxu0 0
        %5286 = vmatpush1.bf16.msra.mxu0 %v5027
        %5287 = vmatprep.subr.bf16.mxu0 0
        %5288 = vmatpush1.bf16.msra.mxu0 %v5026
        %5289 = vmatprep.subr.bf16.mxu0 0
        %5290 = vmatpush1.bf16.msra.mxu0 %v5025
        %5291 = vmatprep.subr.bf16.mxu0 0
        %5292 = vmatpush1.bf16.msra.mxu0 %v5024
        %5293 = vmatprep.subr.bf16.mxu0 0
        %5294 = vmatpush1.bf16.msra.mxu0 %v5023
        %5295 = vmatprep.subr.bf16.mxu0 0
        %5296 = vmatpush1.bf16.msra.mxu0 %v5022
        %5297 = vmatprep.subr.bf16.mxu0 0
        %5298 = vmatpush1.bf16.msra.mxu0 %v5021
        %5299 = vmatprep.subr.bf16.mxu0 0
        %5300 = vmatpush1.bf16.msra.mxu0 %v5020
        %5301 = vmatprep.subr.bf16.mxu0 0
        %5302 = vmatpush2.bf16.msra.mxu0 %v5035
        %5303 = vmatprep.subr.bf16.mxu0 0
        %5304 = vmatpush2.bf16.msra.mxu0 %v5034
        %5305 = vmatprep.subr.bf16.mxu0 0
        %5306 = vmatpush2.bf16.msra.mxu0 %v5033
        %5307 = vmatprep.subr.bf16.mxu0 0
        %5308 = vmatpush2.bf16.msra.mxu0 %v5032
        %5309 = vmatprep.subr.bf16.mxu0 0
        %5310 = vmatpush2.bf16.msra.mxu0 %v5031
        %5311 = vmatprep.subr.bf16.mxu0 0
        %5312 = vmatpush2.bf16.msra.mxu0 %v5030
        %5313 = vmatprep.subr.bf16.mxu0 0
        %5314 = vmatpush2.bf16.msra.mxu0 %v5029
        %5315 = vmatprep.subr.bf16.mxu0 0
        %5316 = vmatpush2.bf16.msra.mxu0 %v5028
        %5317 = vmatprep.mubr.bf16.mxu0 %v4719
        %5318 = vmatmul.mubr.bf16.gmra.mxu0 %v4718
        %v5319 = vpop.f32.mrf.mxu0
        %v5320 = vadd.f32 %v5159, %v5319
        %v5321 = vpop.f32.mrf.mxu0
        %v5322 = vpop.f32.mrf.mxu0
        %v5323 = vadd.f32 %v5162, %v5322
        %v5324 = vpop.f32.mrf.mxu0
        %5325 = vmatprep.mubr.bf16.mxu0 %v4724
        %5326 = vmatmul.mubr.bf16.gmra.mxu0 %v4723
        %v5327 = vpop.f32.mrf.mxu0
        %v5328 = vadd.f32 %v5167, %v5327
        %v5329 = vpop.f32.mrf.mxu0
        %v5330 = vpop.f32.mrf.mxu0
        %v5331 = vadd.f32 %v5170, %v5330
        %v5332 = vpop.f32.mrf.mxu0
        %5333 = vmatprep.mubr.bf16.mxu0 %v4729
        %5334 = vmatmul.mubr.bf16.gmra.mxu0 %v4728
        %v5335 = vpop.f32.mrf.mxu0
        %v5336 = vadd.f32 %v5175, %v5335
        %v5337 = vpop.f32.mrf.mxu0
        %v5338 = vpop.f32.mrf.mxu0
        %v5339 = vadd.f32 %v5178, %v5338
        %v5340 = vpop.f32.mrf.mxu0
        %5341 = vmatprep.mubr.bf16.mxu0 %v4734
        %5342 = vmatmul.mubr.bf16.gmra.mxu0 %v4733
        %v5343 = vpop.f32.mrf.mxu0
        %v5344 = vadd.f32 %v5183, %v5343
        %v5345 = vpop.f32.mrf.mxu0
        %v5346 = vpop.f32.mrf.mxu0
        %v5347 = vadd.f32 %v5186, %v5346
        %v5348 = vpop.f32.mrf.mxu0
        %5349 = vmatprep.mubr.bf16.mxu0 %v4739
        %5350 = vmatmul.mubr.bf16.gmra.mxu0 %v4738
        %v5351 = vpop.f32.mrf.mxu0
        %v5352 = vadd.f32 %v5191, %v5351
        %v5353 = vpop.f32.mrf.mxu0
        %v5354 = vpop.f32.mrf.mxu0
        %v5355 = vadd.f32 %v5194, %v5354
        %v5356 = vpop.f32.mrf.mxu0
        %5357 = vmatprep.mubr.bf16.mxu0 %v4744
        %5358 = vmatmul.mubr.bf16.gmra.mxu0 %v4743
        %v5359 = vpop.f32.mrf.mxu0
        %v5360 = vadd.f32 %v5199, %v5359
        %v5361 = vpop.f32.mrf.mxu0
        %v5362 = vpop.f32.mrf.mxu0
        %v5363 = vadd.f32 %v5202, %v5362
        %v5364 = vpop.f32.mrf.mxu0
        %5365 = vmatprep.mubr.bf16.mxu0 %v4749
        %5366 = vmatmul.mubr.bf16.gmra.mxu0 %v4748
        %v5367 = vpop.f32.mrf.mxu0
        %v5368 = vadd.f32 %v5207, %v5367
        %v5369 = vpop.f32.mrf.mxu0
        %v5370 = vpop.f32.mrf.mxu0
        %v5371 = vadd.f32 %v5210, %v5370
        %v5372 = vpop.f32.mrf.mxu0
        %5373 = vmatprep.mubr.bf16.mxu0 %v4754
        %5374 = vmatmul.mubr.bf16.gmra.mxu0 %v4753
        %v5375 = vpop.f32.mrf.mxu0
        %v5376 = vadd.f32 %v5215, %v5375
        %v5377 = vpop.f32.mrf.mxu0
        %v5378 = vpop.f32.mrf.mxu0
        %v5379 = vadd.f32 %v5218, %v5378
        %v5380 = vpop.f32.mrf.mxu0
        %5381 = vmatprep.mubr.bf16.mxu0 %v4759
        %5382 = vmatmul.mubr.bf16.gmra.mxu0 %v4758
        %v5383 = vpop.f32.mrf.mxu0
        %v5384 = vadd.f32 %v5223, %v5383
        %v5385 = vpop.f32.mrf.mxu0
        %v5386 = vpop.f32.mrf.mxu0
        %v5387 = vadd.f32 %v5226, %v5386
        %v5388 = vpop.f32.mrf.mxu0
        %5389 = vmatprep.mubr.bf16.mxu0 %v4764
        %5390 = vmatmul.mubr.bf16.gmra.mxu0 %v4763
        %v5391 = vpop.f32.mrf.mxu0
        %v5392 = vadd.f32 %v5231, %v5391
        %v5393 = vpop.f32.mrf.mxu0
        %v5394 = vpop.f32.mrf.mxu0
        %v5395 = vadd.f32 %v5234, %v5394
        %v5396 = vpop.f32.mrf.mxu0
        %5397 = vmatprep.mubr.bf16.mxu0 %v4769
        %5398 = vmatmul.mubr.bf16.gmra.mxu0 %v4768
        %v5399 = vpop.f32.mrf.mxu0
        %v5400 = vadd.f32 %v5239, %v5399
        %v5401 = vpop.f32.mrf.mxu0
        %v5402 = vpop.f32.mrf.mxu0
        %v5403 = vadd.f32 %v5242, %v5402
        %v5404 = vpop.f32.mrf.mxu0
        %5405 = vmatprep.mubr.bf16.mxu0 %v4774
        %5406 = vmatmul.mubr.bf16.gmra.mxu0 %v4773
        %v5407 = vpop.f32.mrf.mxu0
        %v5408 = vadd.f32 %v5247, %v5407
        %v5409 = vpop.f32.mrf.mxu0
        %v5410 = vpop.f32.mrf.mxu0
        %v5411 = vadd.f32 %v5250, %v5410
        %v5412 = vpop.f32.mrf.mxu0
        %5413 = vmatprep.mubr.bf16.mxu0 %v4779
        %5414 = vmatmul.mubr.bf16.gmra.mxu0 %v4778
        %v5415 = vpop.f32.mrf.mxu0
        %v5416 = vadd.f32 %v5255, %v5415
        %v5417 = vpop.f32.mrf.mxu0
        %v5418 = vpop.f32.mrf.mxu0
        %v5419 = vadd.f32 %v5258, %v5418
        %v5420 = vpop.f32.mrf.mxu0
        %5421 = vmatprep.mubr.bf16.mxu0 %v4784
        %5422 = vmatmul.mubr.bf16.gmra.mxu0 %v4783
        %v5423 = vpop.f32.mrf.mxu0
        %v5424 = vadd.f32 %v5263, %v5423
        %v5425 = vpop.f32.mrf.mxu0
        %v5426 = vpop.f32.mrf.mxu0
        %v5427 = vadd.f32 %v5266, %v5426
        %v5428 = vpop.f32.mrf.mxu0
        %5429 = vmatprep.mubr.bf16.mxu0 %v4789
        %5430 = vmatmul.mubr.bf16.gmra.mxu0 %v4788
        %v5431 = vpop.f32.mrf.mxu0
        %v5432 = vadd.f32 %v5271, %v5431
        %v5433 = vpop.f32.mrf.mxu0
        %v5434 = vpop.f32.mrf.mxu0
        %v5435 = vadd.f32 %v5274, %v5434
        %v5436 = vpop.f32.mrf.mxu0
        %5437 = vmatprep.mubr.bf16.mxu0 %v4794
        %5438 = vmatmul.mubr.bf16.gmra.mxu0 %v4793
        %v5439 = vpop.f32.mrf.mxu0
        %v5440 = vadd.f32 %v5279, %v5439
        %v5441 = vpop.f32.mrf.mxu0
        %v5442 = vpop.f32.mrf.mxu0
        %v5443 = vadd.f32 %v5282, %v5442
        %v5444 = vpop.f32.mrf.mxu0
        %5445 = vdwg.mxu0
        %5446 = vmatprep.subr.bf16.mxu0 0
        %5447 = vmatpush1.bf16.msra.mxu0 0
        %5448 = vmatprep.subr.bf16.mxu0 0
        %5449 = vmatpush1.bf16.msra.mxu0 0
        %5450 = vmatprep.subr.bf16.mxu0 0
        %5451 = vmatpush1.bf16.msra.mxu0 0
        %5452 = vmatprep.subr.bf16.mxu0 0
        %5453 = vmatpush1.bf16.msra.mxu0 0
        %5454 = vmatprep.subr.bf16.mxu0 0
        %5455 = vmatpush1.bf16.msra.mxu0 %v5039
        %5456 = vmatprep.subr.bf16.mxu0 0
        %5457 = vmatpush1.bf16.msra.mxu0 %v5038
        %5458 = vmatprep.subr.bf16.mxu0 0
        %5459 = vmatpush1.bf16.msra.mxu0 %v5037
        %5460 = vmatprep.subr.bf16.mxu0 0
        %5461 = vmatpush1.bf16.msra.mxu0 %v5036
        %5462 = vmatprep.subr.bf16.mxu0 0
        %5463 = vmatpush2.bf16.msra.mxu0 0
        %5464 = vmatprep.subr.bf16.mxu0 0
        %5465 = vmatpush2.bf16.msra.mxu0 0
        %5466 = vmatprep.subr.bf16.mxu0 0
        %5467 = vmatpush2.bf16.msra.mxu0 0
        %5468 = vmatprep.subr.bf16.mxu0 0
        %5469 = vmatpush2.bf16.msra.mxu0 0
        %5470 = vmatprep.subr.bf16.mxu0 0
        %5471 = vmatpush2.bf16.msra.mxu0 0
        %5472 = vmatprep.subr.bf16.mxu0 0
        %5473 = vmatpush2.bf16.msra.mxu0 0
        %5474 = vmatprep.subr.bf16.mxu0 0
        %5475 = vmatpush2.bf16.msra.mxu0 0
        %5476 = vmatprep.subr.bf16.mxu0 0
        %5477 = vmatpush2.bf16.msra.mxu0 0
        %5478 = vmatprep.mubr.bf16.mxu0 0
        %5479 = vmatmul.mubr.bf16.gmra.mxu0 %v5077
        %v5480 = vpop.f32.mrf.mxu0
        %v5481 = vadd.f32 %v5320, %v5480
        %v5482 = vpop.f32.mrf.mxu0
        %v5483 = vpop.f32.mrf.mxu0
        %v5484 = vadd.f32 %v5323, %v5483
        %v5485 = vpop.f32.mrf.mxu0
        %5486 = vmatprep.mubr.bf16.mxu0 0
        %5487 = vmatmul.mubr.bf16.gmra.mxu0 %v5080
        %v5488 = vpop.f32.mrf.mxu0
        %v5489 = vadd.f32 %v5328, %v5488
        %v5490 = vpop.f32.mrf.mxu0
        %v5491 = vpop.f32.mrf.mxu0
        %v5492 = vadd.f32 %v5331, %v5491
        %v5493 = vpop.f32.mrf.mxu0
        %5494 = vmatprep.mubr.bf16.mxu0 0
        %5495 = vmatmul.mubr.bf16.gmra.mxu0 %v5083
        %v5496 = vpop.f32.mrf.mxu0
        %v5497 = vadd.f32 %v5336, %v5496
        %v5498 = vpop.f32.mrf.mxu0
        %v5499 = vpop.f32.mrf.mxu0
        %v5500 = vadd.f32 %v5339, %v5499
        %v5501 = vpop.f32.mrf.mxu0
        %5502 = vmatprep.mubr.bf16.mxu0 0
        %5503 = vmatmul.mubr.bf16.gmra.mxu0 %v5086
        %v5504 = vpop.f32.mrf.mxu0
        %v5505 = vadd.f32 %v5344, %v5504
        %v5506 = vpop.f32.mrf.mxu0
        %v5507 = vpop.f32.mrf.mxu0
        %v5508 = vadd.f32 %v5347, %v5507
        %v5509 = vpop.f32.mrf.mxu0
        %5510 = vmatprep.mubr.bf16.mxu0 0
        %5511 = vmatmul.mubr.bf16.gmra.mxu0 %v5089
        %v5512 = vpop.f32.mrf.mxu0
        %v5513 = vadd.f32 %v5352, %v5512
        %v5514 = vpop.f32.mrf.mxu0
        %v5515 = vpop.f32.mrf.mxu0
        %v5516 = vadd.f32 %v5355, %v5515
        %v5517 = vpop.f32.mrf.mxu0
        %5518 = vmatprep.mubr.bf16.mxu0 0
        %5519 = vmatmul.mubr.bf16.gmra.mxu0 %v5092
        %v5520 = vpop.f32.mrf.mxu0
        %v5521 = vadd.f32 %v5360, %v5520
        %v5522 = vpop.f32.mrf.mxu0
        %v5523 = vpop.f32.mrf.mxu0
        %v5524 = vadd.f32 %v5363, %v5523
        %v5525 = vpop.f32.mrf.mxu0
        %5526 = vmatprep.mubr.bf16.mxu0 0
        %5527 = vmatmul.mubr.bf16.gmra.mxu0 %v5095
        %v5528 = vpop.f32.mrf.mxu0
        %v5529 = vadd.f32 %v5368, %v5528
        %v5530 = vpop.f32.mrf.mxu0
        %v5531 = vpop.f32.mrf.mxu0
        %v5532 = vadd.f32 %v5371, %v5531
        %v5533 = vpop.f32.mrf.mxu0
        %5534 = vmatprep.mubr.bf16.mxu0 0
        %5535 = vmatmul.mubr.bf16.gmra.mxu0 %v5098
        %v5536 = vpop.f32.mrf.mxu0
        %v5537 = vadd.f32 %v5376, %v5536
        %v5538 = vpop.f32.mrf.mxu0
        %v5539 = vpop.f32.mrf.mxu0
        %v5540 = vadd.f32 %v5379, %v5539
        %v5541 = vpop.f32.mrf.mxu0
        %5542 = vmatprep.mubr.bf16.mxu0 0
        %5543 = vmatmul.mubr.bf16.gmra.mxu0 %v5101
        %v5544 = vpop.f32.mrf.mxu0
        %v5545 = vadd.f32 %v5384, %v5544
        %v5546 = vpop.f32.mrf.mxu0
        %v5547 = vpop.f32.mrf.mxu0
        %v5548 = vadd.f32 %v5387, %v5547
        %v5549 = vpop.f32.mrf.mxu0
        %5550 = vmatprep.mubr.bf16.mxu0 0
        %5551 = vmatmul.mubr.bf16.gmra.mxu0 %v5104
        %v5552 = vpop.f32.mrf.mxu0
        %v5553 = vadd.f32 %v5392, %v5552
        %v5554 = vpop.f32.mrf.mxu0
        %v5555 = vpop.f32.mrf.mxu0
        %v5556 = vadd.f32 %v5395, %v5555
        %v5557 = vpop.f32.mrf.mxu0
        %5558 = vmatprep.mubr.bf16.mxu0 0
        %5559 = vmatmul.mubr.bf16.gmra.mxu0 %v5107
        %v5560 = vpop.f32.mrf.mxu0
        %v5561 = vadd.f32 %v5400, %v5560
        %v5562 = vpop.f32.mrf.mxu0
        %v5563 = vpop.f32.mrf.mxu0
        %v5564 = vadd.f32 %v5403, %v5563
        %v5565 = vpop.f32.mrf.mxu0
        %5566 = vmatprep.mubr.bf16.mxu0 0
        %5567 = vmatmul.mubr.bf16.gmra.mxu0 %v5110
        %v5568 = vpop.f32.mrf.mxu0
        %v5569 = vadd.f32 %v5408, %v5568
        %v5570 = vpop.f32.mrf.mxu0
        %v5571 = vpop.f32.mrf.mxu0
        %v5572 = vadd.f32 %v5411, %v5571
        %v5573 = vpop.f32.mrf.mxu0
        %5574 = vmatprep.mubr.bf16.mxu0 0
        %5575 = vmatmul.mubr.bf16.gmra.mxu0 %v5113
        %v5576 = vpop.f32.mrf.mxu0
        %v5577 = vadd.f32 %v5416, %v5576
        %v5578 = vpop.f32.mrf.mxu0
        %v5579 = vpop.f32.mrf.mxu0
        %v5580 = vadd.f32 %v5419, %v5579
        %v5581 = vpop.f32.mrf.mxu0
        %5582 = vmatprep.mubr.bf16.mxu0 0
        %5583 = vmatmul.mubr.bf16.gmra.mxu0 %v5116
        %v5584 = vpop.f32.mrf.mxu0
        %v5585 = vadd.f32 %v5424, %v5584
        %v5586 = vpop.f32.mrf.mxu0
        %v5587 = vpop.f32.mrf.mxu0
        %v5588 = vadd.f32 %v5427, %v5587
        %v5589 = vpop.f32.mrf.mxu0
        %5590 = vmatprep.mubr.bf16.mxu0 0
        %5591 = vmatmul.mubr.bf16.gmra.mxu0 %v5119
        %v5592 = vpop.f32.mrf.mxu0
        %v5593 = vadd.f32 %v5432, %v5592
        %v5594 = vpop.f32.mrf.mxu0
        %v5595 = vpop.f32.mrf.mxu0
        %v5596 = vadd.f32 %v5435, %v5595
        %v5597 = vpop.f32.mrf.mxu0
        %5598 = vmatprep.mubr.bf16.mxu0 0
        %5599 = vmatmul.mubr.bf16.gmra.mxu0 %v5122
        %v5600 = vpop.f32.mrf.mxu0
        %v5601 = vadd.f32 %v5440, %v5600
        %v5602 = vpop.f32.mrf.mxu0
        %v5603 = vpop.f32.mrf.mxu0
        %v5604 = vadd.f32 %v5443, %v5603
        %v5605 = vpop.f32.mrf.mxu0
        %5606 = vdwg.mxu0
        %v5607 = vmax.f32 %v5481, 0.0
        %v5608 = vmax.f32 %v5484, 0.0
        %v5609 = vmax.f32 %v5489, 0.0
        %v5610 = vmax.f32 %v5492, 0.0
        %v5611 = vmax.f32 %v5497, 0.0
        %v5612 = vmax.f32 %v5500, 0.0
        %v5613 = vmax.f32 %v5505, 0.0
        %v5614 = vmax.f32 %v5508, 0.0
        %v5615 = vmax.f32 %v5513, 0.0
        %v5616 = vmax.f32 %v5516, 0.0
        %v5617 = vmax.f32 %v5521, 0.0
        %v5618 = vmax.f32 %v5524, 0.0
        %v5619 = vmax.f32 %v5529, 0.0
        %v5620 = vmax.f32 %v5532, 0.0
        %v5621 = vmax.f32 %v5537, 0.0
        %v5622 = vmax.f32 %v5540, 0.0
        %v5623 = vmax.f32 %v5545, 0.0
        %v5624 = vmax.f32 %v5548, 0.0
        %v5625 = vmax.f32 %v5553, 0.0
        %v5626 = vmax.f32 %v5556, 0.0
        %v5627 = vmax.f32 %v5561, 0.0
        %v5628 = vmax.f32 %v5564, 0.0
        %v5629 = vmax.f32 %v5569, 0.0
        %v5630 = vmax.f32 %v5572, 0.0
        %v5631 = vmax.f32 %v5577, 0.0
        %v5632 = vmax.f32 %v5580, 0.0
        %v5633 = vmax.f32 %v5585, 0.0
        %v5634 = vmax.f32 %v5588, 0.0
        %v5635 = vmax.f32 %v5593, 0.0
        %v5636 = vmax.f32 %v5596, 0.0
        %v5637 = vmax.f32 %v5601, 0.0
        %v5638 = vmax.f32 %v5604, 0.0
        %v5639 = vmax.f32 %v5607, %v5609
        %v5640 = vmax.f32 %v5608, %v5610
        %v5641 = vmax.f32 %v5611, %v5613
        %v5642 = vmax.f32 %v5612, %v5614
        %v5643 = vmax.f32 %v5615, %v5617
        %v5644 = vmax.f32 %v5616, %v5618
        %v5645 = vmax.f32 %v5619, %v5621
        %v5646 = vmax.f32 %v5620, %v5622
        %v5647 = vmax.f32 %v5623, %v5625
        %v5648 = vmax.f32 %v5624, %v5626
        %v5649 = vmax.f32 %v5627, %v5629
        %v5650 = vmax.f32 %v5628, %v5630
        %v5651 = vmax.f32 %v5631, %v5633
        %v5652 = vmax.f32 %v5632, %v5634
        %v5653 = vmax.f32 %v5635, %v5637
        %v5654 = vmax.f32 %v5636, %v5638
        %v5671 = vcombine.high %v5639, %v5639
        %v5673 = vunpack.c.l.s4 1983009808
        %v5674 = vunpack.c.0.s8 %v5673
        %v5675 = vlaneseq
        %v5676 = vshrl.u32 %v5675, 7
        %v5677 = vsub.s32 %v5674, %v5676
        %v5678 = vrot.slane %v5639, %v5677
        %v5680 = vunpack.c.l.s4 1983009808
        %v5681 = vunpack.c.0.s8 %v5680
        %v5682 = vlaneseq
        %v5683 = vshrl.u32 %v5682, 7
        %v5684 = vsub.s32 %v5681, %v5683
        %v5685 = vrot.slane %v5671, %v5684
        %v5686 = vcombine.high %v5678, %v5678
        %v5687 = vcombine.high %v5685, %v5685
        %v5688 = vcombine.high %v5640, %v5640
        %v5690 = vunpack.c.l.s4 1983009808
        %v5691 = vunpack.c.0.s8 %v5690
        %v5692 = vlaneseq
        %v5693 = vshrl.u32 %v5692, 7
        %v5694 = vsub.s32 %v5691, %v5693
        %v5695 = vrot.slane %v5640, %v5694
        %v5697 = vunpack.c.l.s4 1983009808
        %v5698 = vunpack.c.0.s8 %v5697
        %v5699 = vlaneseq
        %v5700 = vshrl.u32 %v5699, 7
        %v5701 = vsub.s32 %v5698, %v5700
        %v5702 = vrot.slane %v5688, %v5701
        %v5703 = vcombine.high %v5695, %v5695
        %v5704 = vcombine.high %v5702, %v5702
        %v5705 = vcombine.high %v5641, %v5641
        %v5707 = vunpack.c.l.s4 1983009808
        %v5708 = vunpack.c.0.s8 %v5707
        %v5709 = vlaneseq
        %v5710 = vshrl.u32 %v5709, 7
        %v5711 = vsub.s32 %v5708, %v5710
        %v5712 = vrot.slane %v5641, %v5711
        %v5714 = vunpack.c.l.s4 1983009808
        %v5715 = vunpack.c.0.s8 %v5714
        %v5716 = vlaneseq
        %v5717 = vshrl.u32 %v5716, 7
        %v5718 = vsub.s32 %v5715, %v5717
        %v5719 = vrot.slane %v5705, %v5718
        %v5720 = vcombine.high %v5712, %v5712
        %v5721 = vcombine.high %v5719, %v5719
        %v5722 = vcombine.high %v5642, %v5642
        %v5724 = vunpack.c.l.s4 1983009808
        %v5725 = vunpack.c.0.s8 %v5724
        %v5726 = vlaneseq
        %v5727 = vshrl.u32 %v5726, 7
        %v5728 = vsub.s32 %v5725, %v5727
        %v5729 = vrot.slane %v5642, %v5728
        %v5731 = vunpack.c.l.s4 1983009808
        %v5732 = vunpack.c.0.s8 %v5731
        %v5733 = vlaneseq
        %v5734 = vshrl.u32 %v5733, 7
        %v5735 = vsub.s32 %v5732, %v5734
        %v5736 = vrot.slane %v5722, %v5735
        %v5737 = vcombine.high %v5729, %v5729
        %v5738 = vcombine.high %v5736, %v5736
        %v5739 = vcombine.high %v5643, %v5643
        %v5741 = vunpack.c.l.s4 1983009808
        %v5742 = vunpack.c.0.s8 %v5741
        %v5743 = vlaneseq
        %v5744 = vshrl.u32 %v5743, 7
        %v5745 = vsub.s32 %v5742, %v5744
        %v5746 = vrot.slane %v5643, %v5745
        %v5748 = vunpack.c.l.s4 1983009808
        %v5749 = vunpack.c.0.s8 %v5748
        %v5750 = vlaneseq
        %v5751 = vshrl.u32 %v5750, 7
        %v5752 = vsub.s32 %v5749, %v5751
        %v5753 = vrot.slane %v5739, %v5752
        %v5754 = vcombine.high %v5746, %v5746
        %v5755 = vcombine.high %v5753, %v5753
        %v5756 = vcombine.high %v5644, %v5644
        %v5758 = vunpack.c.l.s4 1983009808
        %v5759 = vunpack.c.0.s8 %v5758
        %v5760 = vlaneseq
        %v5761 = vshrl.u32 %v5760, 7
        %v5762 = vsub.s32 %v5759, %v5761
        %v5763 = vrot.slane %v5644, %v5762
        %v5765 = vunpack.c.l.s4 1983009808
        %v5766 = vunpack.c.0.s8 %v5765
        %v5767 = vlaneseq
        %v5768 = vshrl.u32 %v5767, 7
        %v5769 = vsub.s32 %v5766, %v5768
        %v5770 = vrot.slane %v5756, %v5769
        %v5771 = vcombine.high %v5763, %v5763
        %v5772 = vcombine.high %v5770, %v5770
        %v5773 = vcombine.high %v5645, %v5645
        %v5775 = vunpack.c.l.s4 1983009808
        %v5776 = vunpack.c.0.s8 %v5775
        %v5777 = vlaneseq
        %v5778 = vshrl.u32 %v5777, 7
        %v5779 = vsub.s32 %v5776, %v5778
        %v5780 = vrot.slane %v5645, %v5779
        %v5782 = vunpack.c.l.s4 1983009808
        %v5783 = vunpack.c.0.s8 %v5782
        %v5784 = vlaneseq
        %v5785 = vshrl.u32 %v5784, 7
        %v5786 = vsub.s32 %v5783, %v5785
        %v5787 = vrot.slane %v5773, %v5786
        %v5788 = vcombine.high %v5780, %v5780
        %v5789 = vcombine.high %v5787, %v5787
        %v5790 = vcombine.high %v5646, %v5646
        %v5792 = vunpack.c.l.s4 1983009808
        %v5793 = vunpack.c.0.s8 %v5792
        %v5794 = vlaneseq
        %v5795 = vshrl.u32 %v5794, 7
        %v5796 = vsub.s32 %v5793, %v5795
        %v5797 = vrot.slane %v5646, %v5796
        %v5799 = vunpack.c.l.s4 1983009808
        %v5800 = vunpack.c.0.s8 %v5799
        %v5801 = vlaneseq
        %v5802 = vshrl.u32 %v5801, 7
        %v5803 = vsub.s32 %v5800, %v5802
        %v5804 = vrot.slane %v5790, %v5803
        %v5805 = vcombine.high %v5797, %v5797
        %v5806 = vcombine.high %v5804, %v5804
        %v5807 = vcombine.high %v5647, %v5647
        %v5809 = vunpack.c.l.s4 1983009808
        %v5810 = vunpack.c.0.s8 %v5809
        %v5811 = vlaneseq
        %v5812 = vshrl.u32 %v5811, 7
        %v5813 = vsub.s32 %v5810, %v5812
        %v5814 = vrot.slane %v5647, %v5813
        %v5816 = vunpack.c.l.s4 1983009808
        %v5817 = vunpack.c.0.s8 %v5816
        %v5818 = vlaneseq
        %v5819 = vshrl.u32 %v5818, 7
        %v5820 = vsub.s32 %v5817, %v5819
        %v5821 = vrot.slane %v5807, %v5820
        %v5822 = vcombine.high %v5814, %v5814
        %v5823 = vcombine.high %v5821, %v5821
        %v5824 = vcombine.high %v5648, %v5648
        %v5826 = vunpack.c.l.s4 1983009808
        %v5827 = vunpack.c.0.s8 %v5826
        %v5828 = vlaneseq
        %v5829 = vshrl.u32 %v5828, 7
        %v5830 = vsub.s32 %v5827, %v5829
        %v5831 = vrot.slane %v5648, %v5830
        %v5833 = vunpack.c.l.s4 1983009808
        %v5834 = vunpack.c.0.s8 %v5833
        %v5835 = vlaneseq
        %v5836 = vshrl.u32 %v5835, 7
        %v5837 = vsub.s32 %v5834, %v5836
        %v5838 = vrot.slane %v5824, %v5837
        %v5839 = vcombine.high %v5831, %v5831
        %v5840 = vcombine.high %v5838, %v5838
        %v5841 = vcombine.high %v5649, %v5649
        %v5843 = vunpack.c.l.s4 1983009808
        %v5844 = vunpack.c.0.s8 %v5843
        %v5845 = vlaneseq
        %v5846 = vshrl.u32 %v5845, 7
        %v5847 = vsub.s32 %v5844, %v5846
        %v5848 = vrot.slane %v5649, %v5847
        %v5850 = vunpack.c.l.s4 1983009808
        %v5851 = vunpack.c.0.s8 %v5850
        %v5852 = vlaneseq
        %v5853 = vshrl.u32 %v5852, 7
        %v5854 = vsub.s32 %v5851, %v5853
        %v5855 = vrot.slane %v5841, %v5854
        %v5856 = vcombine.high %v5848, %v5848
        %v5857 = vcombine.high %v5855, %v5855
        %v5858 = vcombine.high %v5650, %v5650
        %v5860 = vunpack.c.l.s4 1983009808
        %v5861 = vunpack.c.0.s8 %v5860
        %v5862 = vlaneseq
        %v5863 = vshrl.u32 %v5862, 7
        %v5864 = vsub.s32 %v5861, %v5863
        %v5865 = vrot.slane %v5650, %v5864
        %v5867 = vunpack.c.l.s4 1983009808
        %v5868 = vunpack.c.0.s8 %v5867
        %v5869 = vlaneseq
        %v5870 = vshrl.u32 %v5869, 7
        %v5871 = vsub.s32 %v5868, %v5870
        %v5872 = vrot.slane %v5858, %v5871
        %v5873 = vcombine.high %v5865, %v5865
        %v5874 = vcombine.high %v5872, %v5872
        %v5875 = vcombine.high %v5651, %v5651
        %v5877 = vunpack.c.l.s4 1983009808
        %v5878 = vunpack.c.0.s8 %v5877
        %v5879 = vlaneseq
        %v5880 = vshrl.u32 %v5879, 7
        %v5881 = vsub.s32 %v5878, %v5880
        %v5882 = vrot.slane %v5651, %v5881
        %v5884 = vunpack.c.l.s4 1983009808
        %v5885 = vunpack.c.0.s8 %v5884
        %v5886 = vlaneseq
        %v5887 = vshrl.u32 %v5886, 7
        %v5888 = vsub.s32 %v5885, %v5887
        %v5889 = vrot.slane %v5875, %v5888
        %v5890 = vcombine.high %v5882, %v5882
        %v5891 = vcombine.high %v5889, %v5889
        %v5892 = vcombine.high %v5652, %v5652
        %v5894 = vunpack.c.l.s4 1983009808
        %v5895 = vunpack.c.0.s8 %v5894
        %v5896 = vlaneseq
        %v5897 = vshrl.u32 %v5896, 7
        %v5898 = vsub.s32 %v5895, %v5897
        %v5899 = vrot.slane %v5652, %v5898
        %v5901 = vunpack.c.l.s4 1983009808
        %v5902 = vunpack.c.0.s8 %v5901
        %v5903 = vlaneseq
        %v5904 = vshrl.u32 %v5903, 7
        %v5905 = vsub.s32 %v5902, %v5904
        %v5906 = vrot.slane %v5892, %v5905
        %v5907 = vcombine.high %v5899, %v5899
        %v5908 = vcombine.high %v5906, %v5906
        %v5909 = vcombine.high %v5653, %v5653
        %v5911 = vunpack.c.l.s4 1983009808
        %v5912 = vunpack.c.0.s8 %v5911
        %v5913 = vlaneseq
        %v5914 = vshrl.u32 %v5913, 7
        %v5915 = vsub.s32 %v5912, %v5914
        %v5916 = vrot.slane %v5653, %v5915
        %v5918 = vunpack.c.l.s4 1983009808
        %v5919 = vunpack.c.0.s8 %v5918
        %v5920 = vlaneseq
        %v5921 = vshrl.u32 %v5920, 7
        %v5922 = vsub.s32 %v5919, %v5921
        %v5923 = vrot.slane %v5909, %v5922
        %v5924 = vcombine.high %v5916, %v5916
        %v5925 = vcombine.high %v5923, %v5923
        %v5926 = vcombine.high %v5654, %v5654
        %v5928 = vunpack.c.l.s4 1983009808
        %v5929 = vunpack.c.0.s8 %v5928
        %v5930 = vlaneseq
        %v5931 = vshrl.u32 %v5930, 7
        %v5932 = vsub.s32 %v5929, %v5931
        %v5933 = vrot.slane %v5654, %v5932
        %v5935 = vunpack.c.l.s4 1983009808
        %v5936 = vunpack.c.0.s8 %v5935
        %v5937 = vlaneseq
        %v5938 = vshrl.u32 %v5937, 7
        %v5939 = vsub.s32 %v5936, %v5938
        %v5940 = vrot.slane %v5926, %v5939
        %v5941 = vcombine.high %v5933, %v5933
        %v5942 = vcombine.high %v5940, %v5940
        %v6007 = vrot.slane %v5678, 7
        %v6008 = vrot.slane %v6007, 2
        %v6009 = vrot.slane %v5686, 7
        %v6010 = vrot.slane %v6009, 2
        %v6011 = vrot.slane %v5685, 7
        %v6012 = vrot.slane %v6011, 2
        %v6013 = vrot.slane %v5687, 7
        %v6014 = vrot.slane %v6013, 2
        %v6015 = vrot.slane %v5695, 7
        %v6016 = vrot.slane %v6015, 2
        %v6017 = vrot.slane %v5703, 7
        %v6018 = vrot.slane %v6017, 2
        %v6019 = vrot.slane %v5702, 7
        %v6020 = vrot.slane %v6019, 2
        %v6021 = vrot.slane %v5704, 7
        %v6022 = vrot.slane %v6021, 2
        %v6023 = vrot.slane %v5712, 7
        %v6024 = vrot.slane %v6023, 2
        %v6025 = vrot.slane %v5720, 7
        %v6026 = vrot.slane %v6025, 2
        %v6027 = vrot.slane %v5719, 7
        %v6028 = vrot.slane %v6027, 2
        %v6029 = vrot.slane %v5721, 7
        %v6030 = vrot.slane %v6029, 2
        %v6031 = vrot.slane %v5729, 7
        %v6032 = vrot.slane %v6031, 2
        %v6033 = vrot.slane %v5737, 7
        %v6034 = vrot.slane %v6033, 2
        %v6035 = vrot.slane %v5736, 7
        %v6036 = vrot.slane %v6035, 2
        %v6037 = vrot.slane %v5738, 7
        %v6038 = vrot.slane %v6037, 2
        %v6039 = vrot.slane %v5746, 7
        %v6040 = vrot.slane %v6039, 2
        %v6041 = vrot.slane %v5754, 7
        %v6042 = vrot.slane %v6041, 2
        %v6043 = vrot.slane %v5753, 7
        %v6044 = vrot.slane %v6043, 2
        %v6045 = vrot.slane %v5755, 7
        %v6046 = vrot.slane %v6045, 2
        %v6047 = vrot.slane %v5763, 7
        %v6048 = vrot.slane %v6047, 2
        %v6049 = vrot.slane %v5771, 7
        %v6050 = vrot.slane %v6049, 2
        %v6051 = vrot.slane %v5770, 7
        %v6052 = vrot.slane %v6051, 2
        %v6053 = vrot.slane %v5772, 7
        %v6054 = vrot.slane %v6053, 2
        %v6055 = vrot.slane %v5780, 7
        %v6056 = vrot.slane %v6055, 2
        %v6057 = vrot.slane %v5788, 7
        %v6058 = vrot.slane %v6057, 2
        %v6059 = vrot.slane %v5787, 7
        %v6060 = vrot.slane %v6059, 2
        %v6061 = vrot.slane %v5789, 7
        %v6062 = vrot.slane %v6061, 2
        %v6063 = vrot.slane %v5797, 7
        %v6064 = vrot.slane %v6063, 2
        %v6065 = vrot.slane %v5805, 7
        %v6066 = vrot.slane %v6065, 2
        %v6067 = vrot.slane %v5804, 7
        %v6068 = vrot.slane %v6067, 2
        %v6069 = vrot.slane %v5806, 7
        %v6070 = vrot.slane %v6069, 2
        %v6071 = vrot.slane %v5814, 7
        %v6072 = vrot.slane %v6071, 2
        %v6073 = vrot.slane %v5822, 7
        %v6074 = vrot.slane %v6073, 2
        %v6075 = vrot.slane %v5821, 7
        %v6076 = vrot.slane %v6075, 2
        %v6077 = vrot.slane %v5823, 7
        %v6078 = vrot.slane %v6077, 2
        %v6079 = vrot.slane %v5831, 7
        %v6080 = vrot.slane %v6079, 2
        %v6081 = vrot.slane %v5839, 7
        %v6082 = vrot.slane %v6081, 2
        %v6083 = vrot.slane %v5838, 7
        %v6084 = vrot.slane %v6083, 2
        %v6085 = vrot.slane %v5840, 7
        %v6086 = vrot.slane %v6085, 2
        %v6087 = vrot.slane %v5848, 7
        %v6088 = vrot.slane %v6087, 2
        %v6089 = vrot.slane %v5856, 7
        %v6090 = vrot.slane %v6089, 2
        %v6091 = vrot.slane %v5855, 7
        %v6092 = vrot.slane %v6091, 2
        %v6093 = vrot.slane %v5857, 7
        %v6094 = vrot.slane %v6093, 2
        %v6095 = vrot.slane %v5865, 7
        %v6096 = vrot.slane %v6095, 2
        %v6097 = vrot.slane %v5873, 7
        %v6098 = vrot.slane %v6097, 2
        %v6099 = vrot.slane %v5872, 7
        %v6100 = vrot.slane %v6099, 2
        %v6101 = vrot.slane %v5874, 7
        %v6102 = vrot.slane %v6101, 2
        %v6103 = vrot.slane %v5882, 7
        %v6104 = vrot.slane %v6103, 2
        %v6105 = vrot.slane %v5890, 7
        %v6106 = vrot.slane %v6105, 2
        %v6107 = vrot.slane %v5889, 7
        %v6108 = vrot.slane %v6107, 2
        %v6109 = vrot.slane %v5891, 7
        %v6110 = vrot.slane %v6109, 2
        %v6111 = vrot.slane %v5899, 7
        %v6112 = vrot.slane %v6111, 2
        %v6113 = vrot.slane %v5907, 7
        %v6114 = vrot.slane %v6113, 2
        %v6115 = vrot.slane %v5906, 7
        %v6116 = vrot.slane %v6115, 2
        %v6117 = vrot.slane %v5908, 7
        %v6118 = vrot.slane %v6117, 2
        %v6119 = vrot.slane %v5916, 7
        %v6120 = vrot.slane %v6119, 2
        %v6121 = vrot.slane %v5924, 7
        %v6122 = vrot.slane %v6121, 2
        %v6123 = vrot.slane %v5923, 7
        %v6124 = vrot.slane %v6123, 2
        %v6125 = vrot.slane %v5925, 7
        %v6126 = vrot.slane %v6125, 2
        %v6127 = vrot.slane %v5933, 7
        %v6128 = vrot.slane %v6127, 2
        %v6129 = vrot.slane %v5941, 7
        %v6130 = vrot.slane %v6129, 2
        %v6131 = vrot.slane %v5940, 7
        %v6132 = vrot.slane %v6131, 2
        %v6133 = vrot.slane %v5942, 7
        %v6134 = vrot.slane %v6133, 2
        %v6199 = vmax.f32 %v5678, %v6008
        %v6200 = vmax.f32 %v5686, %v6010
        %v6201 = vmax.f32 %v5685, %v6012
        %v6202 = vmax.f32 %v5687, %v6014
        %v6203 = vmax.f32 %v5695, %v6016
        %v6204 = vmax.f32 %v5703, %v6018
        %v6205 = vmax.f32 %v5702, %v6020
        %v6206 = vmax.f32 %v5704, %v6022
        %v6207 = vmax.f32 %v5712, %v6024
        %v6208 = vmax.f32 %v5720, %v6026
        %v6209 = vmax.f32 %v5719, %v6028
        %v6210 = vmax.f32 %v5721, %v6030
        %v6211 = vmax.f32 %v5729, %v6032
        %v6212 = vmax.f32 %v5737, %v6034
        %v6213 = vmax.f32 %v5736, %v6036
        %v6214 = vmax.f32 %v5738, %v6038
        %v6215 = vmax.f32 %v5746, %v6040
        %v6216 = vmax.f32 %v5754, %v6042
        %v6217 = vmax.f32 %v5753, %v6044
        %v6218 = vmax.f32 %v5755, %v6046
        %v6219 = vmax.f32 %v5763, %v6048
        %v6220 = vmax.f32 %v5771, %v6050
        %v6221 = vmax.f32 %v5770, %v6052
        %v6222 = vmax.f32 %v5772, %v6054
        %v6223 = vmax.f32 %v5780, %v6056
        %v6224 = vmax.f32 %v5788, %v6058
        %v6225 = vmax.f32 %v5787, %v6060
        %v6226 = vmax.f32 %v5789, %v6062
        %v6227 = vmax.f32 %v5797, %v6064
        %v6228 = vmax.f32 %v5805, %v6066
        %v6229 = vmax.f32 %v5804, %v6068
        %v6230 = vmax.f32 %v5806, %v6070
        %v6231 = vmax.f32 %v5814, %v6072
        %v6232 = vmax.f32 %v5822, %v6074
        %v6233 = vmax.f32 %v5821, %v6076
        %v6234 = vmax.f32 %v5823, %v6078
        %v6235 = vmax.f32 %v5831, %v6080
        %v6236 = vmax.f32 %v5839, %v6082
        %v6237 = vmax.f32 %v5838, %v6084
        %v6238 = vmax.f32 %v5840, %v6086
        %v6239 = vmax.f32 %v5848, %v6088
        %v6240 = vmax.f32 %v5856, %v6090
        %v6241 = vmax.f32 %v5855, %v6092
        %v6242 = vmax.f32 %v5857, %v6094
        %v6243 = vmax.f32 %v5865, %v6096
        %v6244 = vmax.f32 %v5873, %v6098
        %v6245 = vmax.f32 %v5872, %v6100
        %v6246 = vmax.f32 %v5874, %v6102
        %v6247 = vmax.f32 %v5882, %v6104
        %v6248 = vmax.f32 %v5890, %v6106
        %v6249 = vmax.f32 %v5889, %v6108
        %v6250 = vmax.f32 %v5891, %v6110
        %v6251 = vmax.f32 %v5899, %v6112
        %v6252 = vmax.f32 %v5907, %v6114
        %v6253 = vmax.f32 %v5906, %v6116
        %v6254 = vmax.f32 %v5908, %v6118
        %v6255 = vmax.f32 %v5916, %v6120
        %v6256 = vmax.f32 %v5924, %v6122
        %v6257 = vmax.f32 %v5923, %v6124
        %v6258 = vmax.f32 %v5925, %v6126
        %v6259 = vmax.f32 %v5933, %v6128
        %v6260 = vmax.f32 %v5941, %v6130
        %v6261 = vmax.f32 %v5940, %v6132
        %v6262 = vmax.f32 %v5942, %v6134
        %6263 = vst.msk [vmem:[#allocation4] sm:$0xf] %vm868, 0
        %6264 = vst.msk [vmem:[#allocation4 + $0x4] sm:$0x1] %vm871, 0
        %6265 = vst.msk [vmem:[#allocation4 + $0x8] sm:$0xf] %vm868, 0
        %6266 = vst.msk [vmem:[#allocation4 + $0xc] sm:$0x1] %vm871, 0
        %6267 = vst.msk [vmem:[#allocation4 + $0x10] sm:$0xf] %vm868, 0
        %6268 = vst.msk [vmem:[#allocation4 + $0x14] sm:$0x1] %vm871, 0
        %6269 = vst.msk [vmem:[#allocation4 + $0x18] sm:$0xf] %vm868, 0
        %6270 = vst.msk [vmem:[#allocation4 + $0x1c] sm:$0x1] %vm871, 0
        %6271 = vst.msk [vmem:[#allocation4 + $0x20] sm:$0xf] %vm868, 0
        %6272 = vst.msk [vmem:[#allocation4 + $0x24] sm:$0x1] %vm871, 0
        %6273 = vst.msk [vmem:[#allocation4 + $0x28] sm:$0xf] %vm868, 0
        %6274 = vst.msk [vmem:[#allocation4 + $0x2c] sm:$0x1] %vm871, 0
        %6275 = vst.msk [vmem:[#allocation4 + $0x30] sm:$0xf] %vm868, 0
        %6276 = vst.msk [vmem:[#allocation4 + $0x34] sm:$0x1] %vm871, 0
        %6277 = vst.msk [vmem:[#allocation4 + $0x38] sm:$0xf] %vm868, 0
        %6278 = vst.msk [vmem:[#allocation4 + $0x3c] sm:$0x1] %vm871, 0
        %6279 = vst.msk [vmem:[#allocation4 + $0x40] sm:$0xf] %vm868, 0
        %6280 = vst.msk [vmem:[#allocation4 + $0x44] sm:$0x1] %vm871, 0
        %6281 = vst.msk [vmem:[#allocation4 + $0x48] sm:$0xf] %vm868, 0
        %6282 = vst.msk [vmem:[#allocation4 + $0x4c] sm:$0x1] %vm871, 0
        %v6283 = vpack.c.bf16 %v6199, %v6199
        %v6284 = vpack.c.bf16 %v6200, %v6200
        %v6285 = vpack.c.bf16 %v6201, %v6201
        %v6286 = vpack.c.bf16 %v6202, %v6202
        %v6287 = vpack.c.bf16 %v6203, %v6203
        %v6288 = vpack.c.bf16 %v6204, %v6204
        %v6289 = vpack.c.bf16 %v6205, %v6205
        %v6290 = vpack.c.bf16 %v6206, %v6206
        %v6291 = vpack.c.bf16 %v6207, %v6207
        %v6292 = vpack.c.bf16 %v6208, %v6208
        %v6293 = vpack.c.bf16 %v6209, %v6209
        %v6294 = vpack.c.bf16 %v6210, %v6210
        %v6295 = vpack.c.bf16 %v6211, %v6211
        %v6296 = vpack.c.bf16 %v6212, %v6212
        %v6297 = vpack.c.bf16 %v6213, %v6213
        %v6298 = vpack.c.bf16 %v6214, %v6214
        %v6299 = vpack.c.bf16 %v6215, %v6215
        %v6300 = vpack.c.bf16 %v6216, %v6216
        %v6301 = vpack.c.bf16 %v6217, %v6217
        %v6302 = vpack.c.bf16 %v6218, %v6218
        %v6303 = vpack.c.bf16 %v6219, %v6219
        %v6304 = vpack.c.bf16 %v6220, %v6220
        %v6305 = vpack.c.bf16 %v6221, %v6221
        %v6306 = vpack.c.bf16 %v6222, %v6222
        %v6307 = vpack.c.bf16 %v6223, %v6223
        %v6308 = vpack.c.bf16 %v6224, %v6224
        %v6309 = vpack.c.bf16 %v6225, %v6225
        %v6310 = vpack.c.bf16 %v6226, %v6226
        %v6311 = vpack.c.bf16 %v6227, %v6227
        %v6312 = vpack.c.bf16 %v6228, %v6228
        %v6313 = vpack.c.bf16 %v6229, %v6229
        %v6314 = vpack.c.bf16 %v6230, %v6230
        %v6315 = vpack.c.bf16 %v6231, %v6231
        %v6316 = vpack.c.bf16 %v6232, %v6232
        %v6317 = vpack.c.bf16 %v6233, %v6233
        %v6318 = vpack.c.bf16 %v6234, %v6234
        %v6319 = vpack.c.bf16 %v6235, %v6235
        %v6320 = vpack.c.bf16 %v6236, %v6236
        %v6321 = vpack.c.bf16 %v6237, %v6237
        %v6322 = vpack.c.bf16 %v6238, %v6238
        %v6323 = vpack.c.bf16 %v6239, %v6239
        %v6324 = vpack.c.bf16 %v6240, %v6240
        %v6325 = vpack.c.bf16 %v6241, %v6241
        %v6326 = vpack.c.bf16 %v6242, %v6242
        %v6327 = vpack.c.bf16 %v6243, %v6243
        %v6328 = vpack.c.bf16 %v6244, %v6244
        %v6329 = vpack.c.bf16 %v6245, %v6245
        %v6330 = vpack.c.bf16 %v6246, %v6246
        %v6331 = vpack.c.bf16 %v6247, %v6247
        %v6332 = vpack.c.bf16 %v6248, %v6248
        %v6333 = vpack.c.bf16 %v6249, %v6249
        %v6334 = vpack.c.bf16 %v6250, %v6250
        %v6335 = vpack.c.bf16 %v6251, %v6251
        %v6336 = vpack.c.bf16 %v6252, %v6252
        %v6337 = vpack.c.bf16 %v6253, %v6253
        %v6338 = vpack.c.bf16 %v6254, %v6254
        %v6339 = vpack.c.bf16 %v6255, %v6255
        %v6340 = vpack.c.bf16 %v6256, %v6256
        %v6341 = vpack.c.bf16 %v6257, %v6257
        %v6342 = vpack.c.bf16 %v6258, %v6258
        %v6343 = vpack.c.bf16 %v6259, %v6259
        %v6344 = vpack.c.bf16 %v6260, %v6260
        %v6345 = vpack.c.bf16 %v6261, %v6261
        %v6346 = vpack.c.bf16 %v6262, %v6262
        %v6411 = vunpack.c.l.b16 %v6283
        %v6412 = vunpack.c.l.b16 %v6284
        %v6413 = vunpack.c.l.b16 %v6285
        %v6414 = vunpack.c.l.b16 %v6286
        %v6415 = vunpack.c.l.b16 %v6287
        %v6416 = vunpack.c.l.b16 %v6288
        %v6417 = vunpack.c.l.b16 %v6289
        %v6418 = vunpack.c.l.b16 %v6290
        %v6419 = vunpack.c.l.b16 %v6291
        %v6420 = vunpack.c.l.b16 %v6292
        %v6421 = vunpack.c.l.b16 %v6293
        %v6422 = vunpack.c.l.b16 %v6294
        %v6423 = vunpack.c.l.b16 %v6295
        %v6424 = vunpack.c.l.b16 %v6296
        %v6425 = vunpack.c.l.b16 %v6297
        %v6426 = vunpack.c.l.b16 %v6298
        %v6427 = vunpack.c.l.b16 %v6299
        %v6428 = vunpack.c.l.b16 %v6300
        %v6429 = vunpack.c.l.b16 %v6301
        %v6430 = vunpack.c.l.b16 %v6302
        %v6431 = vunpack.c.l.b16 %v6303
        %v6432 = vunpack.c.l.b16 %v6304
        %v6433 = vunpack.c.l.b16 %v6305
        %v6434 = vunpack.c.l.b16 %v6306
        %v6435 = vunpack.c.l.b16 %v6307
        %v6436 = vunpack.c.l.b16 %v6308
        %v6437 = vunpack.c.l.b16 %v6309
        %v6438 = vunpack.c.l.b16 %v6310
        %v6439 = vunpack.c.l.b16 %v6311
        %v6440 = vunpack.c.l.b16 %v6312
        %v6441 = vunpack.c.l.b16 %v6313
        %v6442 = vunpack.c.l.b16 %v6314
        %v6443 = vunpack.c.l.b16 %v6315
        %v6444 = vunpack.c.l.b16 %v6316
        %v6445 = vunpack.c.l.b16 %v6317
        %v6446 = vunpack.c.l.b16 %v6318
        %v6447 = vunpack.c.l.b16 %v6319
        %v6448 = vunpack.c.l.b16 %v6320
        %v6449 = vunpack.c.l.b16 %v6321
        %v6450 = vunpack.c.l.b16 %v6322
        %v6451 = vunpack.c.l.b16 %v6323
        %v6452 = vunpack.c.l.b16 %v6324
        %v6453 = vunpack.c.l.b16 %v6325
        %v6454 = vunpack.c.l.b16 %v6326
        %v6455 = vunpack.c.l.b16 %v6327
        %v6456 = vunpack.c.l.b16 %v6328
        %v6457 = vunpack.c.l.b16 %v6329
        %v6458 = vunpack.c.l.b16 %v6330
        %v6459 = vunpack.c.l.b16 %v6331
        %v6460 = vunpack.c.l.b16 %v6332
        %v6461 = vunpack.c.l.b16 %v6333
        %v6462 = vunpack.c.l.b16 %v6334
        %v6463 = vunpack.c.l.b16 %v6335
        %v6464 = vunpack.c.l.b16 %v6336
        %v6465 = vunpack.c.l.b16 %v6337
        %v6466 = vunpack.c.l.b16 %v6338
        %v6467 = vunpack.c.l.b16 %v6339
        %v6468 = vunpack.c.l.b16 %v6340
        %v6469 = vunpack.c.l.b16 %v6341
        %v6470 = vunpack.c.l.b16 %v6342
        %v6471 = vunpack.c.l.b16 %v6343
        %v6472 = vunpack.c.l.b16 %v6344
        %v6473 = vunpack.c.l.b16 %v6345
        %v6474 = vunpack.c.l.b16 %v6346
        %v6475 = vpack.c.b16 %v6411, %v6411
        %v6476 = vpack.c.b16 %v6412, %v6412
        %v6477 = vpack.c.b16 %v6413, %v6413
        %v6478 = vpack.c.b16 %v6414, %v6414
        %v6479 = vpack.c.b16 %v6415, %v6415
        %v6480 = vpack.c.b16 %v6416, %v6416
        %v6481 = vpack.c.b16 %v6417, %v6417
        %v6482 = vpack.c.b16 %v6418, %v6418
        %v6483 = vpack.c.b16 %v6419, %v6419
        %v6484 = vpack.c.b16 %v6420, %v6420
        %v6485 = vpack.c.b16 %v6421, %v6421
        %v6486 = vpack.c.b16 %v6422, %v6422
        %v6487 = vpack.c.b16 %v6423, %v6423
        %v6488 = vpack.c.b16 %v6424, %v6424
        %v6489 = vpack.c.b16 %v6425, %v6425
        %v6490 = vpack.c.b16 %v6426, %v6426
        %v6491 = vpack.c.b16 %v6427, %v6427
        %v6492 = vpack.c.b16 %v6428, %v6428
        %v6493 = vpack.c.b16 %v6429, %v6429
        %v6494 = vpack.c.b16 %v6430, %v6430
        %v6495 = vpack.c.b16 %v6431, %v6431
        %v6496 = vpack.c.b16 %v6432, %v6432
        %v6497 = vpack.c.b16 %v6433, %v6433
        %v6498 = vpack.c.b16 %v6434, %v6434
        %v6499 = vpack.c.b16 %v6435, %v6435
        %v6500 = vpack.c.b16 %v6436, %v6436
        %v6501 = vpack.c.b16 %v6437, %v6437
        %v6502 = vpack.c.b16 %v6438, %v6438
        %v6503 = vpack.c.b16 %v6439, %v6439
        %v6504 = vpack.c.b16 %v6440, %v6440
        %v6505 = vpack.c.b16 %v6441, %v6441
        %v6506 = vpack.c.b16 %v6442, %v6442
        %v6507 = vpack.c.b16 %v6443, %v6443
        %v6508 = vpack.c.b16 %v6444, %v6444
        %v6509 = vpack.c.b16 %v6445, %v6445
        %v6510 = vpack.c.b16 %v6446, %v6446
        %v6511 = vpack.c.b16 %v6447, %v6447
        %v6512 = vpack.c.b16 %v6448, %v6448
        %v6513 = vpack.c.b16 %v6449, %v6449
        %v6514 = vpack.c.b16 %v6450, %v6450
        %v6515 = vpack.c.b16 %v6451, %v6451
        %v6516 = vpack.c.b16 %v6452, %v6452
        %v6517 = vpack.c.b16 %v6453, %v6453
        %v6518 = vpack.c.b16 %v6454, %v6454
        %v6519 = vpack.c.b16 %v6455, %v6455
        %v6520 = vpack.c.b16 %v6456, %v6456
        %v6521 = vpack.c.b16 %v6457, %v6457
        %v6522 = vpack.c.b16 %v6458, %v6458
        %v6523 = vpack.c.b16 %v6459, %v6459
        %v6524 = vpack.c.b16 %v6460, %v6460
        %v6525 = vpack.c.b16 %v6461, %v6461
        %v6526 = vpack.c.b16 %v6462, %v6462
        %v6527 = vpack.c.b16 %v6463, %v6463
        %v6528 = vpack.c.b16 %v6464, %v6464
        %v6529 = vpack.c.b16 %v6465, %v6465
        %v6530 = vpack.c.b16 %v6466, %v6466
        %v6531 = vpack.c.b16 %v6467, %v6467
        %v6532 = vpack.c.b16 %v6468, %v6468
        %v6533 = vpack.c.b16 %v6469, %v6469
        %v6534 = vpack.c.b16 %v6470, %v6470
        %v6535 = vpack.c.b16 %v6471, %v6471
        %v6536 = vpack.c.b16 %v6472, %v6472
        %v6537 = vpack.c.b16 %v6473, %v6473
        %v6538 = vpack.c.b16 %v6474, %v6474
        %v6539 = vunpack.c.l.b16 %v6475
        %v6540 = vunpack.c.l.b16 %v6476
        %v6541 = vunpack.c.l.b16 %v6477
        %v6542 = vunpack.c.l.b16 %v6478
        %v6543 = vunpack.c.l.b16 %v6479
        %v6544 = vunpack.c.l.b16 %v6480
        %v6545 = vunpack.c.l.b16 %v6481
        %v6546 = vunpack.c.l.b16 %v6482
        %v6547 = vunpack.c.l.b16 %v6483
        %v6548 = vunpack.c.l.b16 %v6484
        %v6549 = vunpack.c.l.b16 %v6485
        %v6550 = vunpack.c.l.b16 %v6486
        %v6551 = vunpack.c.l.b16 %v6487
        %v6552 = vunpack.c.l.b16 %v6488
        %v6553 = vunpack.c.l.b16 %v6489
        %v6554 = vunpack.c.l.b16 %v6490
        %v6555 = vunpack.c.l.b16 %v6491
        %v6556 = vunpack.c.l.b16 %v6492
        %v6557 = vunpack.c.l.b16 %v6493
        %v6558 = vunpack.c.l.b16 %v6494
        %v6559 = vunpack.c.l.b16 %v6495
        %v6560 = vunpack.c.l.b16 %v6496
        %v6561 = vunpack.c.l.b16 %v6497
        %v6562 = vunpack.c.l.b16 %v6498
        %v6563 = vunpack.c.l.b16 %v6499
        %v6564 = vunpack.c.l.b16 %v6500
        %v6565 = vunpack.c.l.b16 %v6501
        %v6566 = vunpack.c.l.b16 %v6502
        %v6567 = vunpack.c.l.b16 %v6503
        %v6568 = vunpack.c.l.b16 %v6504
        %v6569 = vunpack.c.l.b16 %v6505
        %v6570 = vunpack.c.l.b16 %v6506
        %v6571 = vunpack.c.l.b16 %v6507
        %v6572 = vunpack.c.l.b16 %v6508
        %v6573 = vunpack.c.l.b16 %v6509
        %v6574 = vunpack.c.l.b16 %v6510
        %v6575 = vunpack.c.l.b16 %v6511
        %v6576 = vunpack.c.l.b16 %v6512
        %v6577 = vunpack.c.l.b16 %v6513
        %v6578 = vunpack.c.l.b16 %v6514
        %v6579 = vunpack.c.l.b16 %v6515
        %v6580 = vunpack.c.l.b16 %v6516
        %v6581 = vunpack.c.l.b16 %v6517
        %v6582 = vunpack.c.l.b16 %v6518
        %v6583 = vunpack.c.l.b16 %v6519
        %v6584 = vunpack.c.l.b16 %v6520
        %v6585 = vunpack.c.l.b16 %v6521
        %v6586 = vunpack.c.l.b16 %v6522
        %v6587 = vunpack.c.l.b16 %v6523
        %v6588 = vunpack.c.l.b16 %v6524
        %v6589 = vunpack.c.l.b16 %v6525
        %v6590 = vunpack.c.l.b16 %v6526
        %v6591 = vunpack.c.l.b16 %v6527
        %v6592 = vunpack.c.l.b16 %v6528
        %v6593 = vunpack.c.l.b16 %v6529
        %v6594 = vunpack.c.l.b16 %v6530
        %v6595 = vunpack.c.l.b16 %v6531
        %v6596 = vunpack.c.l.b16 %v6532
        %v6597 = vunpack.c.l.b16 %v6533
        %v6598 = vunpack.c.l.b16 %v6534
        %v6599 = vunpack.c.l.b16 %v6535
        %v6600 = vunpack.c.l.b16 %v6536
        %v6601 = vunpack.c.l.b16 %v6537
        %v6602 = vunpack.c.l.b16 %v6538
        %v6603 = vrot.slane %v6539, 7
        %v6604 = vrot.slane %v6540, 6
        %vm6605 = vcmask 1042434
        %v6606 = vsel %vm6605, %v6604, %v6603
        %v6607 = vrot.slane %v6541, 5
        %vm6608 = vcmask 1043459
        %v6609 = vsel %vm6608, %v6607, %v6606
        %v6610 = vrot.slane %v6542, 4
        %vm6611 = vcmask 1044484
        %v6612 = vsel %vm6611, %v6610, %v6609
        %v6613 = vrot.slane %v6543, 3
        %vm6614 = vcmask 1045509
        %v6615 = vsel %vm6614, %v6613, %v6612
        %v6616 = vrot.slane %v6544, 2
        %vm6617 = vcmask 1046534
        %v6618 = vsel %vm6617, %v6616, %v6615
        %v6619 = vrot.slane %v6545, 1
        %vm6620 = vcmask 1047559
        %v6621 = vsel %vm6620, %v6619, %v6618
        %v6622 = vrot.slane %v6547, 7
        %v6623 = vrot.slane %v6548, 6
        %v6624 = vsel %vm6605, %v6623, %v6622
        %v6625 = vrot.slane %v6549, 5
        %v6626 = vsel %vm6608, %v6625, %v6624
        %v6627 = vrot.slane %v6550, 4
        %v6628 = vsel %vm6611, %v6627, %v6626
        %v6629 = vrot.slane %v6551, 3
        %v6630 = vsel %vm6614, %v6629, %v6628
        %v6631 = vrot.slane %v6552, 2
        %v6632 = vsel %vm6617, %v6631, %v6630
        %v6633 = vrot.slane %v6553, 1
        %v6634 = vsel %vm6620, %v6633, %v6632
        %v6635 = vrot.slane %v6555, 7
        %v6636 = vrot.slane %v6556, 6
        %v6637 = vsel %vm6605, %v6636, %v6635
        %v6638 = vrot.slane %v6557, 5
        %v6639 = vsel %vm6608, %v6638, %v6637
        %v6640 = vrot.slane %v6558, 4
        %v6641 = vsel %vm6611, %v6640, %v6639
        %v6642 = vrot.slane %v6559, 3
        %v6643 = vsel %vm6614, %v6642, %v6641
        %v6644 = vrot.slane %v6560, 2
        %v6645 = vsel %vm6617, %v6644, %v6643
        %v6646 = vrot.slane %v6561, 1
        %v6647 = vsel %vm6620, %v6646, %v6645
        %v6648 = vrot.slane %v6563, 7
        %v6649 = vrot.slane %v6564, 6
        %v6650 = vsel %vm6605, %v6649, %v6648
        %v6651 = vrot.slane %v6565, 5
        %v6652 = vsel %vm6608, %v6651, %v6650
        %v6653 = vrot.slane %v6566, 4
        %v6654 = vsel %vm6611, %v6653, %v6652
        %v6655 = vrot.slane %v6567, 3
        %v6656 = vsel %vm6614, %v6655, %v6654
        %v6657 = vrot.slane %v6568, 2
        %v6658 = vsel %vm6617, %v6657, %v6656
        %v6659 = vrot.slane %v6569, 1
        %v6660 = vsel %vm6620, %v6659, %v6658
        %v6661 = vrot.slane %v6571, 7
        %v6662 = vrot.slane %v6572, 6
        %v6663 = vsel %vm6605, %v6662, %v6661
        %v6664 = vrot.slane %v6573, 5
        %v6665 = vsel %vm6608, %v6664, %v6663
        %v6666 = vrot.slane %v6574, 4
        %v6667 = vsel %vm6611, %v6666, %v6665
        %v6668 = vrot.slane %v6575, 3
        %v6669 = vsel %vm6614, %v6668, %v6667
        %v6670 = vrot.slane %v6576, 2
        %v6671 = vsel %vm6617, %v6670, %v6669
        %v6672 = vrot.slane %v6577, 1
        %v6673 = vsel %vm6620, %v6672, %v6671
        %v6674 = vrot.slane %v6579, 7
        %v6675 = vrot.slane %v6580, 6
        %v6676 = vsel %vm6605, %v6675, %v6674
        %v6677 = vrot.slane %v6581, 5
        %v6678 = vsel %vm6608, %v6677, %v6676
        %v6679 = vrot.slane %v6582, 4
        %v6680 = vsel %vm6611, %v6679, %v6678
        %v6681 = vrot.slane %v6583, 3
        %v6682 = vsel %vm6614, %v6681, %v6680
        %v6683 = vrot.slane %v6584, 2
        %v6684 = vsel %vm6617, %v6683, %v6682
        %v6685 = vrot.slane %v6585, 1
        %v6686 = vsel %vm6620, %v6685, %v6684
        %v6687 = vrot.slane %v6587, 7
        %v6688 = vrot.slane %v6588, 6
        %v6689 = vsel %vm6605, %v6688, %v6687
        %v6690 = vrot.slane %v6589, 5
        %v6691 = vsel %vm6608, %v6690, %v6689
        %v6692 = vrot.slane %v6590, 4
        %v6693 = vsel %vm6611, %v6692, %v6691
        %v6694 = vrot.slane %v6591, 3
        %v6695 = vsel %vm6614, %v6694, %v6693
        %v6696 = vrot.slane %v6592, 2
        %v6697 = vsel %vm6617, %v6696, %v6695
        %v6698 = vrot.slane %v6593, 1
        %v6699 = vsel %vm6620, %v6698, %v6697
        %v6700 = vrot.slane %v6595, 7
        %v6701 = vrot.slane %v6596, 6
        %v6702 = vsel %vm6605, %v6701, %v6700
        %v6703 = vrot.slane %v6597, 5
        %v6704 = vsel %vm6608, %v6703, %v6702
        %v6705 = vrot.slane %v6598, 4
        %v6706 = vsel %vm6611, %v6705, %v6704
        %v6707 = vrot.slane %v6599, 3
        %v6708 = vsel %vm6614, %v6707, %v6706
        %v6709 = vrot.slane %v6600, 2
        %v6710 = vsel %vm6617, %v6709, %v6708
        %v6711 = vrot.slane %v6601, 1
        %v6712 = vsel %vm6620, %v6711, %v6710
        %v6713 = vpack.c.b16 %v6621, %v6621
        %v6714 = vpack.c.b16 %v6546, %v6546
        %v6715 = vpack.c.b16 %v6634, %v6634
        %v6716 = vpack.c.b16 %v6554, %v6554
        %v6717 = vpack.c.b16 %v6647, %v6647
        %v6718 = vpack.c.b16 %v6562, %v6562
        %v6719 = vpack.c.b16 %v6660, %v6660
        %v6720 = vpack.c.b16 %v6570, %v6570
        %v6721 = vpack.c.b16 %v6673, %v6673
        %v6722 = vpack.c.b16 %v6578, %v6578
        %v6723 = vpack.c.b16 %v6686, %v6686
        %v6724 = vpack.c.b16 %v6586, %v6586
        %v6725 = vpack.c.b16 %v6699, %v6699
        %v6726 = vpack.c.b16 %v6594, %v6594
        %v6727 = vpack.c.b16 %v6712, %v6712
        %v6728 = vpack.c.b16 %v6602, %v6602
        %s6745 = scalar_lea.vmem [#allocation4], 8
        %v6746 = vld [vmem:[%s6745] sm:$0xf]
        %v6747 = vsel %vm1346, %v6713, %v6746
        %6748 = vst [vmem:[%s6745] sm:$0xf] %v6747
        %v6749 = vld [vmem:[%s6745 + $0x4] sm:$0x1]
        %v6750 = vsel %vm1352, %v6714, %v6749
        %6751 = vst [vmem:[%s6745 + $0x4] sm:$0x1] %v6750
        %v6752 = vld [vmem:[%s6745 + $0x8] sm:$0xf]
        %v6753 = vsel %vm1346, %v6715, %v6752
        %6754 = vst [vmem:[%s6745 + $0x8] sm:$0xf] %v6753
        %v6755 = vld [vmem:[%s6745 + $0xc] sm:$0x1]
        %v6756 = vsel %vm1352, %v6716, %v6755
        %6757 = vst [vmem:[%s6745 + $0xc] sm:$0x1] %v6756
        %v6758 = vld [vmem:[%s6745 + $0x10] sm:$0xf]
        %v6759 = vsel %vm1346, %v6717, %v6758
        %6760 = vst [vmem:[%s6745 + $0x10] sm:$0xf] %v6759
        %v6761 = vld [vmem:[%s6745 + $0x14] sm:$0x1]
        %v6762 = vsel %vm1352, %v6718, %v6761
        %6763 = vst [vmem:[%s6745 + $0x14] sm:$0x1] %v6762
        %v6764 = vld [vmem:[%s6745 + $0x18] sm:$0xf]
        %v6765 = vsel %vm1346, %v6719, %v6764
        %6766 = vst [vmem:[%s6745 + $0x18] sm:$0xf] %v6765
        %v6767 = vld [vmem:[%s6745 + $0x1c] sm:$0x1]
        %v6768 = vsel %vm1352, %v6720, %v6767
        %6769 = vst [vmem:[%s6745 + $0x1c] sm:$0x1] %v6768
        %v6770 = vld [vmem:[%s6745 + $0x20] sm:$0xf]
        %v6771 = vsel %vm1346, %v6721, %v6770
        %6772 = vst [vmem:[%s6745 + $0x20] sm:$0xf] %v6771
        %v6773 = vld [vmem:[%s6745 + $0x24] sm:$0x1]
        %v6774 = vsel %vm1352, %v6722, %v6773
        %6775 = vst [vmem:[%s6745 + $0x24] sm:$0x1] %v6774
        %v6776 = vld [vmem:[%s6745 + $0x28] sm:$0xf]
        %v6777 = vsel %vm1346, %v6723, %v6776
        %6778 = vst [vmem:[%s6745 + $0x28] sm:$0xf] %v6777
        %v6779 = vld [vmem:[%s6745 + $0x2c] sm:$0x1]
        %v6780 = vsel %vm1352, %v6724, %v6779
        %6781 = vst [vmem:[%s6745 + $0x2c] sm:$0x1] %v6780
        %v6782 = vld [vmem:[%s6745 + $0x30] sm:$0xf]
        %v6783 = vsel %vm1346, %v6725, %v6782
        %6784 = vst [vmem:[%s6745 + $0x30] sm:$0xf] %v6783
        %v6785 = vld [vmem:[%s6745 + $0x34] sm:$0x1]
        %v6786 = vsel %vm1352, %v6726, %v6785
        %6787 = vst [vmem:[%s6745 + $0x34] sm:$0x1] %v6786
        %v6788 = vld [vmem:[%s6745 + $0x38] sm:$0xf]
        %v6789 = vsel %vm1346, %v6727, %v6788
        %6790 = vst [vmem:[%s6745 + $0x38] sm:$0xf] %v6789
        %v6791 = vld [vmem:[%s6745 + $0x3c] sm:$0x1]
        %v6792 = vsel %vm1352, %v6728, %v6791
        %6793 = vst [vmem:[%s6745 + $0x3c] sm:$0x1] %v6792
        %v6794 = vld [vmem:[#allocation4] sm:$0xf]
        %v6795 = vld [vmem:[#allocation4 + $0x8] sm:$0xf]
        %v6796 = vld [vmem:[#allocation4 + $0x10] sm:$0xf]
        %v6797 = vld [vmem:[#allocation4 + $0x18] sm:$0xf]
        %v6798 = vld [vmem:[#allocation4 + $0x20] sm:$0xf]
        %v6799 = vld [vmem:[#allocation4 + $0x28] sm:$0xf]
        %v6800 = vld [vmem:[#allocation4 + $0x30] sm:$0xf]
        %v6801 = vld [vmem:[#allocation4 + $0x38] sm:$0xf]
        %6802 = vst.msk [vmem:[#allocation5] sm:$0xf] %vm868, %v6794
        %6803 = vst.msk [vmem:[#allocation5 + $0x14] sm:$0xf] %vm868, %v6795
        %6804 = vst.msk [vmem:[#allocation5 + $0x28] sm:$0xf] %vm868, %v6796
        %6805 = vst.msk [vmem:[#allocation5 + $0x3c] sm:$0xf] %vm868, %v6797
        %6806 = vst.msk [vmem:[#allocation5 + $0x50] sm:$0xf] %vm868, %v6798
        %6807 = vst.msk [vmem:[#allocation5 + $0x64] sm:$0xf] %vm868, %v6799
        %6808 = vst.msk [vmem:[#allocation5 + $0x78] sm:$0xf] %vm868, %v6800
        %6809 = vst.msk [vmem:[#allocation5 + $0x8c] sm:$0xf] %vm868, %v6801
        %v6810 = vld [vmem:[#allocation4] sm:$0xf]
        %v6811 = vld [vmem:[#allocation4 + $0x4] sm:$0x1]
        %v6812 = vld [vmem:[#allocation4 + $0x8] sm:$0xf]
        %v6813 = vld [vmem:[#allocation4 + $0xc] sm:$0x1]
        %v6814 = vld [vmem:[#allocation4 + $0x10] sm:$0xf]
        %v6815 = vld [vmem:[#allocation4 + $0x14] sm:$0x1]
        %v6816 = vld [vmem:[#allocation4 + $0x18] sm:$0xf]
        %v6817 = vld [vmem:[#allocation4 + $0x1c] sm:$0x1]
        %v6818 = vld [vmem:[#allocation4 + $0x20] sm:$0xf]
        %v6819 = vld [vmem:[#allocation4 + $0x24] sm:$0x1]
        %v6820 = vld [vmem:[#allocation4 + $0x28] sm:$0xf]
        %v6821 = vld [vmem:[#allocation4 + $0x2c] sm:$0x1]
        %v6822 = vld [vmem:[#allocation4 + $0x30] sm:$0xf]
        %v6823 = vld [vmem:[#allocation4 + $0x34] sm:$0x1]
        %v6824 = vld [vmem:[#allocation4 + $0x38] sm:$0xf]
        %v6825 = vld [vmem:[#allocation4 + $0x3c] sm:$0x1]
        %v6827 = vshrl.u32 %v6810, 16
        %v6829 = vrot.slane %v6827, 4
        %v6830 = vshll.u32 %v6810, 16
        %v6832 = vrot.slane %v6830, 5
        %v6833 = vor.u32 %v6829, %v6832
        %v6834 = vrot.slane %v6833, 4
        %v6836 = vshll.u32 %v6811, 16
        %v6838 = vrot.slane %v6836, 5
        %v6839 = vsel %vm1575, %v6834, %v6838
        %v6841 = vshrl.u32 %v6812, 16
        %v6843 = vrot.slane %v6841, 4
        %v6844 = vshll.u32 %v6812, 16
        %v6846 = vrot.slane %v6844, 5
        %v6847 = vor.u32 %v6843, %v6846
        %v6848 = vrot.slane %v6847, 4
        %v6850 = vshll.u32 %v6813, 16
        %v6852 = vrot.slane %v6850, 5
        %v6853 = vsel %vm1575, %v6848, %v6852
        %v6855 = vshrl.u32 %v6814, 16
        %v6857 = vrot.slane %v6855, 4
        %v6858 = vshll.u32 %v6814, 16
        %v6860 = vrot.slane %v6858, 5
        %v6861 = vor.u32 %v6857, %v6860
        %v6862 = vrot.slane %v6861, 4
        %v6864 = vshll.u32 %v6815, 16
        %v6866 = vrot.slane %v6864, 5
        %v6867 = vsel %vm1575, %v6862, %v6866
        %v6869 = vshrl.u32 %v6816, 16
        %v6871 = vrot.slane %v6869, 4
        %v6872 = vshll.u32 %v6816, 16
        %v6874 = vrot.slane %v6872, 5
        %v6875 = vor.u32 %v6871, %v6874
        %v6876 = vrot.slane %v6875, 4
        %v6878 = vshll.u32 %v6817, 16
        %v6880 = vrot.slane %v6878, 5
        %v6881 = vsel %vm1575, %v6876, %v6880
        %v6883 = vshrl.u32 %v6818, 16
        %v6885 = vrot.slane %v6883, 4
        %v6886 = vshll.u32 %v6818, 16
        %v6888 = vrot.slane %v6886, 5
        %v6889 = vor.u32 %v6885, %v6888
        %v6890 = vrot.slane %v6889, 4
        %v6892 = vshll.u32 %v6819, 16
        %v6894 = vrot.slane %v6892, 5
        %v6895 = vsel %vm1575, %v6890, %v6894
        %v6897 = vshrl.u32 %v6820, 16
        %v6899 = vrot.slane %v6897, 4
        %v6900 = vshll.u32 %v6820, 16
        %v6902 = vrot.slane %v6900, 5
        %v6903 = vor.u32 %v6899, %v6902
        %v6904 = vrot.slane %v6903, 4
        %v6906 = vshll.u32 %v6821, 16
        %v6908 = vrot.slane %v6906, 5
        %v6909 = vsel %vm1575, %v6904, %v6908
        %v6911 = vshrl.u32 %v6822, 16
        %v6913 = vrot.slane %v6911, 4
        %v6914 = vshll.u32 %v6822, 16
        %v6916 = vrot.slane %v6914, 5
        %v6917 = vor.u32 %v6913, %v6916
        %v6918 = vrot.slane %v6917, 4
        %v6920 = vshll.u32 %v6823, 16
        %v6922 = vrot.slane %v6920, 5
        %v6923 = vsel %vm1575, %v6918, %v6922
        %v6925 = vshrl.u32 %v6824, 16
        %v6927 = vrot.slane %v6925, 4
        %v6928 = vshll.u32 %v6824, 16
        %v6930 = vrot.slane %v6928, 5
        %v6931 = vor.u32 %v6927, %v6930
        %v6932 = vrot.slane %v6931, 4
        %v6934 = vshll.u32 %v6825, 16
        %v6936 = vrot.slane %v6934, 5
        %v6937 = vsel %vm1575, %v6932, %v6936
        %6938 = vrot.lane.b32.xlu0 %v6839, 64
        %v6939 = vpop.permute.xlu0 %6938
        %6940 = vrot.lane.b32.xlu0 %v6853, 64
        %v6941 = vpop.permute.xlu0 %6940
        %6942 = vrot.lane.b32.xlu0 %v6867, 64
        %v6943 = vpop.permute.xlu0 %6942
        %6944 = vrot.lane.b32.xlu0 %v6881, 64
        %v6945 = vpop.permute.xlu0 %6944
        %6946 = vrot.lane.b32.xlu0 %v6895, 64
        %v6947 = vpop.permute.xlu0 %6946
        %6948 = vrot.lane.b32.xlu0 %v6909, 64
        %v6949 = vpop.permute.xlu0 %6948
        %6950 = vrot.lane.b32.xlu0 %v6923, 64
        %v6951 = vpop.permute.xlu0 %6950
        %6952 = vrot.lane.b32.xlu0 %v6937, 64
        %v6953 = vpop.permute.xlu0 %6952
        %6962 = vst.msk [vmem:[#allocation5] sm:$0xf] %vm2056, %v6939
        %6963 = vst.msk [vmem:[#allocation5 + $0x14] sm:$0xf] %vm2056, %v6941
        %6964 = vst.msk [vmem:[#allocation5 + $0x28] sm:$0xf] %vm2056, %v6943
        %6965 = vst.msk [vmem:[#allocation5 + $0x3c] sm:$0xf] %vm2056, %v6945
        %6966 = vst.msk [vmem:[#allocation5 + $0x50] sm:$0xf] %vm2056, %v6947
        %6967 = vst.msk [vmem:[#allocation5 + $0x64] sm:$0xf] %vm2056, %v6949
        %6968 = vst.msk [vmem:[#allocation5 + $0x78] sm:$0xf] %vm2056, %v6951
        %6969 = vst.msk [vmem:[#allocation5 + $0x8c] sm:$0xf] %vm2056, %v6953
        %v6970 = vld [vmem:[#allocation4] sm:$0xe]
        %v6971 = vld [vmem:[#allocation4 + $0x4] sm:$0x1]
        %v6972 = vld [vmem:[#allocation4 + $0x8] sm:$0xe]
        %v6973 = vld [vmem:[#allocation4 + $0xc] sm:$0x1]
        %v6974 = vld [vmem:[#allocation4 + $0x10] sm:$0xe]
        %v6975 = vld [vmem:[#allocation4 + $0x14] sm:$0x1]
        %v6976 = vld [vmem:[#allocation4 + $0x18] sm:$0xe]
        %v6977 = vld [vmem:[#allocation4 + $0x1c] sm:$0x1]
        %v6978 = vld [vmem:[#allocation4 + $0x20] sm:$0xe]
        %v6979 = vld [vmem:[#allocation4 + $0x24] sm:$0x1]
        %v6980 = vld [vmem:[#allocation4 + $0x28] sm:$0xe]
        %v6981 = vld [vmem:[#allocation4 + $0x2c] sm:$0x1]
        %v6982 = vld [vmem:[#allocation4 + $0x30] sm:$0xe]
        %v6983 = vld [vmem:[#allocation4 + $0x34] sm:$0x1]
        %v6984 = vld [vmem:[#allocation4 + $0x38] sm:$0xe]
        %v6985 = vld [vmem:[#allocation4 + $0x3c] sm:$0x1]
        %v7002 = vrot.slane %v6970, 5
        %v7003 = vrot.slane %v7002, 4
        %v7004 = vrot.slane %v6971, 5
        %v7005 = vsel %vm2187, %v7003, %v7004
        %v7006 = vrot.slane %v6972, 5
        %v7007 = vrot.slane %v7006, 4
        %v7008 = vrot.slane %v6973, 5
        %v7009 = vsel %vm2187, %v7007, %v7008
        %v7010 = vrot.slane %v6974, 5
        %v7011 = vrot.slane %v7010, 4
        %v7012 = vrot.slane %v6975, 5
        %v7013 = vsel %vm2187, %v7011, %v7012
        %v7014 = vrot.slane %v6976, 5
        %v7015 = vrot.slane %v7014, 4
        %v7016 = vrot.slane %v6977, 5
        %v7017 = vsel %vm2187, %v7015, %v7016
        %v7018 = vrot.slane %v6978, 5
        %v7019 = vrot.slane %v7018, 4
        %v7020 = vrot.slane %v6979, 5
        %v7021 = vsel %vm2187, %v7019, %v7020
        %v7022 = vrot.slane %v6980, 5
        %v7023 = vrot.slane %v7022, 4
        %v7024 = vrot.slane %v6981, 5
        %v7025 = vsel %vm2187, %v7023, %v7024
        %v7026 = vrot.slane %v6982, 5
        %v7027 = vrot.slane %v7026, 4
        %v7028 = vrot.slane %v6983, 5
        %v7029 = vsel %vm2187, %v7027, %v7028
        %v7030 = vrot.slane %v6984, 5
        %v7031 = vrot.slane %v7030, 4
        %v7032 = vrot.slane %v6985, 5
        %v7033 = vsel %vm2187, %v7031, %v7032
        %7042 = vst.msk [vmem:[#allocation5 + $0x4] sm:$0xf] %vm868, %v7005
        %7043 = vst.msk [vmem:[#allocation5 + $0x18] sm:$0xf] %vm868, %v7009
        %7044 = vst.msk [vmem:[#allocation5 + $0x2c] sm:$0xf] %vm868, %v7013
        %7045 = vst.msk [vmem:[#allocation5 + $0x40] sm:$0xf] %vm868, %v7017
        %7046 = vst.msk [vmem:[#allocation5 + $0x54] sm:$0xf] %vm868, %v7021
        %7047 = vst.msk [vmem:[#allocation5 + $0x68] sm:$0xf] %vm868, %v7025
        %7048 = vst.msk [vmem:[#allocation5 + $0x7c] sm:$0xf] %vm868, %v7029
        %7049 = vst.msk [vmem:[#allocation5 + $0x90] sm:$0xf] %vm868, %v7033
        %v7050 = vld [vmem:[%s6745] sm:$0xf]
        %v7051 = vld [vmem:[%s6745 + $0x8] sm:$0xf]
        %v7052 = vld [vmem:[%s6745 + $0x10] sm:$0xf]
        %v7053 = vld [vmem:[%s6745 + $0x18] sm:$0xf]
        %v7054 = vld [vmem:[%s6745 + $0x20] sm:$0xf]
        %v7055 = vld [vmem:[%s6745 + $0x28] sm:$0xf]
        %v7056 = vld [vmem:[%s6745 + $0x30] sm:$0xf]
        %v7057 = vld [vmem:[%s6745 + $0x38] sm:$0xf]
        %7066 = vrot.lane.b32.xlu0 %v7050, 64
        %v7067 = vpop.permute.xlu0 %7066
        %7068 = vrot.lane.b32.xlu0 %v7051, 64
        %v7069 = vpop.permute.xlu0 %7068
        %7070 = vrot.lane.b32.xlu0 %v7052, 64
        %v7071 = vpop.permute.xlu0 %7070
        %7072 = vrot.lane.b32.xlu0 %v7053, 64
        %v7073 = vpop.permute.xlu0 %7072
        %7074 = vrot.lane.b32.xlu0 %v7054, 64
        %v7075 = vpop.permute.xlu0 %7074
        %7076 = vrot.lane.b32.xlu0 %v7055, 64
        %v7077 = vpop.permute.xlu0 %7076
        %7078 = vrot.lane.b32.xlu0 %v7056, 64
        %v7079 = vpop.permute.xlu0 %7078
        %7080 = vrot.lane.b32.xlu0 %v7057, 64
        %v7081 = vpop.permute.xlu0 %7080
        %7090 = vst.msk [vmem:[#allocation5 + $0x4] sm:$0xf] %vm2056, %v7067
        %7091 = vst.msk [vmem:[#allocation5 + $0x18] sm:$0xf] %vm2056, %v7069
        %7092 = vst.msk [vmem:[#allocation5 + $0x2c] sm:$0xf] %vm2056, %v7071
        %7093 = vst.msk [vmem:[#allocation5 + $0x40] sm:$0xf] %vm2056, %v7073
        %7094 = vst.msk [vmem:[#allocation5 + $0x54] sm:$0xf] %vm2056, %v7075
        %7095 = vst.msk [vmem:[#allocation5 + $0x68] sm:$0xf] %vm2056, %v7077
        %7096 = vst.msk [vmem:[#allocation5 + $0x7c] sm:$0xf] %vm2056, %v7079
        %7097 = vst.msk [vmem:[#allocation5 + $0x90] sm:$0xf] %vm2056, %v7081
        %v7098 = vld [vmem:[%s6745] sm:$0xf]
        %v7099 = vld [vmem:[%s6745 + $0x4] sm:$0x1]
        %v7100 = vld [vmem:[%s6745 + $0x8] sm:$0xf]
        %v7101 = vld [vmem:[%s6745 + $0xc] sm:$0x1]
        %v7102 = vld [vmem:[%s6745 + $0x10] sm:$0xf]
        %v7103 = vld [vmem:[%s6745 + $0x14] sm:$0x1]
        %v7104 = vld [vmem:[%s6745 + $0x18] sm:$0xf]
        %v7105 = vld [vmem:[%s6745 + $0x1c] sm:$0x1]
        %v7106 = vld [vmem:[%s6745 + $0x20] sm:$0xf]
        %v7107 = vld [vmem:[%s6745 + $0x24] sm:$0x1]
        %v7108 = vld [vmem:[%s6745 + $0x28] sm:$0xf]
        %v7109 = vld [vmem:[%s6745 + $0x2c] sm:$0x1]
        %v7110 = vld [vmem:[%s6745 + $0x30] sm:$0xf]
        %v7111 = vld [vmem:[%s6745 + $0x34] sm:$0x1]
        %v7112 = vld [vmem:[%s6745 + $0x38] sm:$0xf]
        %v7113 = vld [vmem:[%s6745 + $0x3c] sm:$0x1]
        %v7115 = vshrl.u32 %v7098, 16
        %v7117 = vrot.slane %v7115, 4
        %v7118 = vshll.u32 %v7098, 16
        %v7120 = vrot.slane %v7118, 5
        %v7121 = vor.u32 %v7117, %v7120
        %v7122 = vrot.slane %v7121, 4
        %v7124 = vshll.u32 %v7099, 16
        %v7126 = vrot.slane %v7124, 5
        %v7127 = vsel %vm1575, %v7122, %v7126
        %v7129 = vshrl.u32 %v7100, 16
        %v7131 = vrot.slane %v7129, 4
        %v7132 = vshll.u32 %v7100, 16
        %v7134 = vrot.slane %v7132, 5
        %v7135 = vor.u32 %v7131, %v7134
        %v7136 = vrot.slane %v7135, 4
        %v7138 = vshll.u32 %v7101, 16
        %v7140 = vrot.slane %v7138, 5
        %v7141 = vsel %vm1575, %v7136, %v7140
        %v7143 = vshrl.u32 %v7102, 16
        %v7145 = vrot.slane %v7143, 4
        %v7146 = vshll.u32 %v7102, 16
        %v7148 = vrot.slane %v7146, 5
        %v7149 = vor.u32 %v7145, %v7148
        %v7150 = vrot.slane %v7149, 4
        %v7152 = vshll.u32 %v7103, 16
        %v7154 = vrot.slane %v7152, 5
        %v7155 = vsel %vm1575, %v7150, %v7154
        %v7157 = vshrl.u32 %v7104, 16
        %v7159 = vrot.slane %v7157, 4
        %v7160 = vshll.u32 %v7104, 16
        %v7162 = vrot.slane %v7160, 5
        %v7163 = vor.u32 %v7159, %v7162
        %v7164 = vrot.slane %v7163, 4
        %v7166 = vshll.u32 %v7105, 16
        %v7168 = vrot.slane %v7166, 5
        %v7169 = vsel %vm1575, %v7164, %v7168
        %v7171 = vshrl.u32 %v7106, 16
        %v7173 = vrot.slane %v7171, 4
        %v7174 = vshll.u32 %v7106, 16
        %v7176 = vrot.slane %v7174, 5
        %v7177 = vor.u32 %v7173, %v7176
        %v7178 = vrot.slane %v7177, 4
        %v7180 = vshll.u32 %v7107, 16
        %v7182 = vrot.slane %v7180, 5
        %v7183 = vsel %vm1575, %v7178, %v7182
        %v7185 = vshrl.u32 %v7108, 16
        %v7187 = vrot.slane %v7185, 4
        %v7188 = vshll.u32 %v7108, 16
        %v7190 = vrot.slane %v7188, 5
        %v7191 = vor.u32 %v7187, %v7190
        %v7192 = vrot.slane %v7191, 4
        %v7194 = vshll.u32 %v7109, 16
        %v7196 = vrot.slane %v7194, 5
        %v7197 = vsel %vm1575, %v7192, %v7196
        %v7199 = vshrl.u32 %v7110, 16
        %v7201 = vrot.slane %v7199, 4
        %v7202 = vshll.u32 %v7110, 16
        %v7204 = vrot.slane %v7202, 5
        %v7205 = vor.u32 %v7201, %v7204
        %v7206 = vrot.slane %v7205, 4
        %v7208 = vshll.u32 %v7111, 16
        %v7210 = vrot.slane %v7208, 5
        %v7211 = vsel %vm1575, %v7206, %v7210
        %v7213 = vshrl.u32 %v7112, 16
        %v7215 = vrot.slane %v7213, 4
        %v7216 = vshll.u32 %v7112, 16
        %v7218 = vrot.slane %v7216, 5
        %v7219 = vor.u32 %v7215, %v7218
        %v7220 = vrot.slane %v7219, 4
        %v7222 = vshll.u32 %v7113, 16
        %v7224 = vrot.slane %v7222, 5
        %v7225 = vsel %vm1575, %v7220, %v7224
        %7234 = vst.msk [vmem:[#allocation5 + $0x8] sm:$0xf] %vm868, %v7127
        %7235 = vst.msk [vmem:[#allocation5 + $0x1c] sm:$0xf] %vm868, %v7141
        %7236 = vst.msk [vmem:[#allocation5 + $0x30] sm:$0xf] %vm868, %v7155
        %7237 = vst.msk [vmem:[#allocation5 + $0x44] sm:$0xf] %vm868, %v7169
        %7238 = vst.msk [vmem:[#allocation5 + $0x58] sm:$0xf] %vm868, %v7183
        %7239 = vst.msk [vmem:[#allocation5 + $0x6c] sm:$0xf] %vm868, %v7197
        %7240 = vst.msk [vmem:[#allocation5 + $0x80] sm:$0xf] %vm868, %v7211
        %7241 = vst.msk [vmem:[#allocation5 + $0x94] sm:$0xf] %vm868, %v7225
        %v7242 = vld [vmem:[%s6745] sm:$0xe]
        %v7243 = vld [vmem:[%s6745 + $0x4] sm:$0x1]
        %v7244 = vld [vmem:[%s6745 + $0x8] sm:$0xe]
        %v7245 = vld [vmem:[%s6745 + $0xc] sm:$0x1]
        %v7246 = vld [vmem:[%s6745 + $0x10] sm:$0xe]
        %v7247 = vld [vmem:[%s6745 + $0x14] sm:$0x1]
        %v7248 = vld [vmem:[%s6745 + $0x18] sm:$0xe]
        %v7249 = vld [vmem:[%s6745 + $0x1c] sm:$0x1]
        %v7250 = vld [vmem:[%s6745 + $0x20] sm:$0xe]
        %v7251 = vld [vmem:[%s6745 + $0x24] sm:$0x1]
        %v7252 = vld [vmem:[%s6745 + $0x28] sm:$0xe]
        %v7253 = vld [vmem:[%s6745 + $0x2c] sm:$0x1]
        %v7254 = vld [vmem:[%s6745 + $0x30] sm:$0xe]
        %v7255 = vld [vmem:[%s6745 + $0x34] sm:$0x1]
        %v7256 = vld [vmem:[%s6745 + $0x38] sm:$0xe]
        %v7257 = vld [vmem:[%s6745 + $0x3c] sm:$0x1]
        %v7274 = vrot.slane %v7242, 5
        %v7275 = vrot.slane %v7274, 4
        %v7276 = vrot.slane %v7243, 5
        %v7277 = vsel %vm2187, %v7275, %v7276
        %v7278 = vrot.slane %v7244, 5
        %v7279 = vrot.slane %v7278, 4
        %v7280 = vrot.slane %v7245, 5
        %v7281 = vsel %vm2187, %v7279, %v7280
        %v7282 = vrot.slane %v7246, 5
        %v7283 = vrot.slane %v7282, 4
        %v7284 = vrot.slane %v7247, 5
        %v7285 = vsel %vm2187, %v7283, %v7284
        %v7286 = vrot.slane %v7248, 5
        %v7287 = vrot.slane %v7286, 4
        %v7288 = vrot.slane %v7249, 5
        %v7289 = vsel %vm2187, %v7287, %v7288
        %v7290 = vrot.slane %v7250, 5
        %v7291 = vrot.slane %v7290, 4
        %v7292 = vrot.slane %v7251, 5
        %v7293 = vsel %vm2187, %v7291, %v7292
        %v7294 = vrot.slane %v7252, 5
        %v7295 = vrot.slane %v7294, 4
        %v7296 = vrot.slane %v7253, 5
        %v7297 = vsel %vm2187, %v7295, %v7296
        %v7298 = vrot.slane %v7254, 5
        %v7299 = vrot.slane %v7298, 4
        %v7300 = vrot.slane %v7255, 5
        %v7301 = vsel %vm2187, %v7299, %v7300
        %v7302 = vrot.slane %v7256, 5
        %v7303 = vrot.slane %v7302, 4
        %v7304 = vrot.slane %v7257, 5
        %v7305 = vsel %vm2187, %v7303, %v7304
        %7306 = vrot.lane.b32.xlu0 %v7277, 64
        %v7307 = vpop.permute.xlu0 %7306
        %7308 = vrot.lane.b32.xlu0 %v7281, 64
        %v7309 = vpop.permute.xlu0 %7308
        %7310 = vrot.lane.b32.xlu0 %v7285, 64
        %v7311 = vpop.permute.xlu0 %7310
        %7312 = vrot.lane.b32.xlu0 %v7289, 64
        %v7313 = vpop.permute.xlu0 %7312
        %7314 = vrot.lane.b32.xlu0 %v7293, 64
        %v7315 = vpop.permute.xlu0 %7314
        %7316 = vrot.lane.b32.xlu0 %v7297, 64
        %v7317 = vpop.permute.xlu0 %7316
        %7318 = vrot.lane.b32.xlu0 %v7301, 64
        %v7319 = vpop.permute.xlu0 %7318
        %7320 = vrot.lane.b32.xlu0 %v7305, 64
        %v7321 = vpop.permute.xlu0 %7320
        %7330 = vst.msk [vmem:[#allocation5 + $0x8] sm:$0xf] %vm2056, %v7307
        %7331 = vst.msk [vmem:[#allocation5 + $0x1c] sm:$0xf] %vm2056, %v7309
        %7332 = vst.msk [vmem:[#allocation5 + $0x30] sm:$0xf] %vm2056, %v7311
        %7333 = vst.msk [vmem:[#allocation5 + $0x44] sm:$0xf] %vm2056, %v7313
        %7334 = vst.msk [vmem:[#allocation5 + $0x58] sm:$0xf] %vm2056, %v7315
        %7335 = vst.msk [vmem:[#allocation5 + $0x6c] sm:$0xf] %vm2056, %v7317
        %7336 = vst.msk [vmem:[#allocation5 + $0x80] sm:$0xf] %vm2056, %v7319
        %7337 = vst.msk [vmem:[#allocation5 + $0x94] sm:$0xf] %vm2056, %v7321
        %s7338 = scalar_lea.vmem [#allocation4], 16
        %v7339 = vld [vmem:[%s7338] sm:$0xf]
        %v7340 = vld [vmem:[%s7338 + $0x8] sm:$0xf]
        %v7341 = vld [vmem:[%s7338 + $0x10] sm:$0xf]
        %v7342 = vld [vmem:[%s7338 + $0x18] sm:$0xf]
        %v7343 = vld [vmem:[%s7338 + $0x20] sm:$0xf]
        %v7344 = vld [vmem:[%s7338 + $0x28] sm:$0xf]
        %v7345 = vld [vmem:[%s7338 + $0x30] sm:$0xf]
        %v7346 = vld [vmem:[%s7338 + $0x38] sm:$0xf]
        %7347 = vst.msk [vmem:[#allocation5 + $0xc] sm:$0xf] %vm868, %v7339
        %7348 = vst.msk [vmem:[#allocation5 + $0x20] sm:$0xf] %vm868, %v7340
        %7349 = vst.msk [vmem:[#allocation5 + $0x34] sm:$0xf] %vm868, %v7341
        %7350 = vst.msk [vmem:[#allocation5 + $0x48] sm:$0xf] %vm868, %v7342
        %7351 = vst.msk [vmem:[#allocation5 + $0x5c] sm:$0xf] %vm868, %v7343
        %7352 = vst.msk [vmem:[#allocation5 + $0x70] sm:$0xf] %vm868, %v7344
        %7353 = vst.msk [vmem:[#allocation5 + $0x84] sm:$0xf] %vm868, %v7345
        %7354 = vst.msk [vmem:[#allocation5 + $0x98] sm:$0xf] %vm868, %v7346
        %v7355 = vld [vmem:[%s7338] sm:$0xf]
        %v7356 = vld [vmem:[%s7338 + $0x4] sm:$0x1]
        %v7357 = vld [vmem:[%s7338 + $0x8] sm:$0xf]
        %v7358 = vld [vmem:[%s7338 + $0xc] sm:$0x1]
        %v7359 = vld [vmem:[%s7338 + $0x10] sm:$0xf]
        %v7360 = vld [vmem:[%s7338 + $0x14] sm:$0x1]
        %v7361 = vld [vmem:[%s7338 + $0x18] sm:$0xf]
        %v7362 = vld [vmem:[%s7338 + $0x1c] sm:$0x1]
        %v7363 = vld [vmem:[%s7338 + $0x20] sm:$0xf]
        %v7364 = vld [vmem:[%s7338 + $0x24] sm:$0x1]
        %v7365 = vld [vmem:[%s7338 + $0x28] sm:$0xf]
        %v7366 = vld [vmem:[%s7338 + $0x2c] sm:$0x1]
        %v7367 = vld [vmem:[%s7338 + $0x30] sm:$0xf]
        %v7368 = vld [vmem:[%s7338 + $0x34] sm:$0x1]
        %v7369 = vld [vmem:[%s7338 + $0x38] sm:$0xf]
        %v7370 = vld [vmem:[%s7338 + $0x3c] sm:$0x1]
        %v7372 = vshrl.u32 %v7355, 16
        %v7374 = vrot.slane %v7372, 4
        %v7375 = vshll.u32 %v7355, 16
        %v7377 = vrot.slane %v7375, 5
        %v7378 = vor.u32 %v7374, %v7377
        %v7379 = vrot.slane %v7378, 4
        %v7381 = vshll.u32 %v7356, 16
        %v7383 = vrot.slane %v7381, 5
        %v7384 = vsel %vm1575, %v7379, %v7383
        %v7386 = vshrl.u32 %v7357, 16
        %v7388 = vrot.slane %v7386, 4
        %v7389 = vshll.u32 %v7357, 16
        %v7391 = vrot.slane %v7389, 5
        %v7392 = vor.u32 %v7388, %v7391
        %v7393 = vrot.slane %v7392, 4
        %v7395 = vshll.u32 %v7358, 16
        %v7397 = vrot.slane %v7395, 5
        %v7398 = vsel %vm1575, %v7393, %v7397
        %v7400 = vshrl.u32 %v7359, 16
        %v7402 = vrot.slane %v7400, 4
        %v7403 = vshll.u32 %v7359, 16
        %v7405 = vrot.slane %v7403, 5
        %v7406 = vor.u32 %v7402, %v7405
        %v7407 = vrot.slane %v7406, 4
        %v7409 = vshll.u32 %v7360, 16
        %v7411 = vrot.slane %v7409, 5
        %v7412 = vsel %vm1575, %v7407, %v7411
        %v7414 = vshrl.u32 %v7361, 16
        %v7416 = vrot.slane %v7414, 4
        %v7417 = vshll.u32 %v7361, 16
        %v7419 = vrot.slane %v7417, 5
        %v7420 = vor.u32 %v7416, %v7419
        %v7421 = vrot.slane %v7420, 4
        %v7423 = vshll.u32 %v7362, 16
        %v7425 = vrot.slane %v7423, 5
        %v7426 = vsel %vm1575, %v7421, %v7425
        %v7428 = vshrl.u32 %v7363, 16
        %v7430 = vrot.slane %v7428, 4
        %v7431 = vshll.u32 %v7363, 16
        %v7433 = vrot.slane %v7431, 5
        %v7434 = vor.u32 %v7430, %v7433
        %v7435 = vrot.slane %v7434, 4
        %v7437 = vshll.u32 %v7364, 16
        %v7439 = vrot.slane %v7437, 5
        %v7440 = vsel %vm1575, %v7435, %v7439
        %v7442 = vshrl.u32 %v7365, 16
        %v7444 = vrot.slane %v7442, 4
        %v7445 = vshll.u32 %v7365, 16
        %v7447 = vrot.slane %v7445, 5
        %v7448 = vor.u32 %v7444, %v7447
        %v7449 = vrot.slane %v7448, 4
        %v7451 = vshll.u32 %v7366, 16
        %v7453 = vrot.slane %v7451, 5
        %v7454 = vsel %vm1575, %v7449, %v7453
        %v7456 = vshrl.u32 %v7367, 16
        %v7458 = vrot.slane %v7456, 4
        %v7459 = vshll.u32 %v7367, 16
        %v7461 = vrot.slane %v7459, 5
        %v7462 = vor.u32 %v7458, %v7461
        %v7463 = vrot.slane %v7462, 4
        %v7465 = vshll.u32 %v7368, 16
        %v7467 = vrot.slane %v7465, 5
        %v7468 = vsel %vm1575, %v7463, %v7467
        %v7470 = vshrl.u32 %v7369, 16
        %v7472 = vrot.slane %v7470, 4
        %v7473 = vshll.u32 %v7369, 16
        %v7475 = vrot.slane %v7473, 5
        %v7476 = vor.u32 %v7472, %v7475
        %v7477 = vrot.slane %v7476, 4
        %v7479 = vshll.u32 %v7370, 16
        %v7481 = vrot.slane %v7479, 5
        %v7482 = vsel %vm1575, %v7477, %v7481
        %7483 = vrot.lane.b32.xlu0 %v7384, 64
        %v7484 = vpop.permute.xlu0 %7483
        %7485 = vrot.lane.b32.xlu0 %v7398, 64
        %v7486 = vpop.permute.xlu0 %7485
        %7487 = vrot.lane.b32.xlu0 %v7412, 64
        %v7488 = vpop.permute.xlu0 %7487
        %7489 = vrot.lane.b32.xlu0 %v7426, 64
        %v7490 = vpop.permute.xlu0 %7489
        %7491 = vrot.lane.b32.xlu0 %v7440, 64
        %v7492 = vpop.permute.xlu0 %7491
        %7493 = vrot.lane.b32.xlu0 %v7454, 64
        %v7494 = vpop.permute.xlu0 %7493
        %7495 = vrot.lane.b32.xlu0 %v7468, 64
        %v7496 = vpop.permute.xlu0 %7495
        %7497 = vrot.lane.b32.xlu0 %v7482, 64
        %v7498 = vpop.permute.xlu0 %7497
        %7507 = vst.msk [vmem:[#allocation5 + $0xc] sm:$0xf] %vm2056, %v7484
        %7508 = vst.msk [vmem:[#allocation5 + $0x20] sm:$0xf] %vm2056, %v7486
        %7509 = vst.msk [vmem:[#allocation5 + $0x34] sm:$0xf] %vm2056, %v7488
        %7510 = vst.msk [vmem:[#allocation5 + $0x48] sm:$0xf] %vm2056, %v7490
        %7511 = vst.msk [vmem:[#allocation5 + $0x5c] sm:$0xf] %vm2056, %v7492
        %7512 = vst.msk [vmem:[#allocation5 + $0x70] sm:$0xf] %vm2056, %v7494
        %7513 = vst.msk [vmem:[#allocation5 + $0x84] sm:$0xf] %vm2056, %v7496
        %7514 = vst.msk [vmem:[#allocation5 + $0x98] sm:$0xf] %vm2056, %v7498
        %v7515 = vld [vmem:[%s7338] sm:$0xe]
        %v7516 = vld [vmem:[%s7338 + $0x4] sm:$0x1]
        %v7517 = vld [vmem:[%s7338 + $0x8] sm:$0xe]
        %v7518 = vld [vmem:[%s7338 + $0xc] sm:$0x1]
        %v7519 = vld [vmem:[%s7338 + $0x10] sm:$0xe]
        %v7520 = vld [vmem:[%s7338 + $0x14] sm:$0x1]
        %v7521 = vld [vmem:[%s7338 + $0x18] sm:$0xe]
        %v7522 = vld [vmem:[%s7338 + $0x1c] sm:$0x1]
        %v7523 = vld [vmem:[%s7338 + $0x20] sm:$0xe]
        %v7524 = vld [vmem:[%s7338 + $0x24] sm:$0x1]
        %v7525 = vld [vmem:[%s7338 + $0x28] sm:$0xe]
        %v7526 = vld [vmem:[%s7338 + $0x2c] sm:$0x1]
        %v7527 = vld [vmem:[%s7338 + $0x30] sm:$0xe]
        %v7528 = vld [vmem:[%s7338 + $0x34] sm:$0x1]
        %v7529 = vld [vmem:[%s7338 + $0x38] sm:$0xe]
        %v7530 = vld [vmem:[%s7338 + $0x3c] sm:$0x1]
        %v7547 = vrot.slane %v7515, 5
        %v7548 = vrot.slane %v7547, 4
        %v7549 = vrot.slane %v7516, 5
        %v7550 = vsel %vm2187, %v7548, %v7549
        %v7551 = vrot.slane %v7517, 5
        %v7552 = vrot.slane %v7551, 4
        %v7553 = vrot.slane %v7518, 5
        %v7554 = vsel %vm2187, %v7552, %v7553
        %v7555 = vrot.slane %v7519, 5
        %v7556 = vrot.slane %v7555, 4
        %v7557 = vrot.slane %v7520, 5
        %v7558 = vsel %vm2187, %v7556, %v7557
        %v7559 = vrot.slane %v7521, 5
        %v7560 = vrot.slane %v7559, 4
        %v7561 = vrot.slane %v7522, 5
        %v7562 = vsel %vm2187, %v7560, %v7561
        %v7563 = vrot.slane %v7523, 5
        %v7564 = vrot.slane %v7563, 4
        %v7565 = vrot.slane %v7524, 5
        %v7566 = vsel %vm2187, %v7564, %v7565
        %v7567 = vrot.slane %v7525, 5
        %v7568 = vrot.slane %v7567, 4
        %v7569 = vrot.slane %v7526, 5
        %v7570 = vsel %vm2187, %v7568, %v7569
        %v7571 = vrot.slane %v7527, 5
        %v7572 = vrot.slane %v7571, 4
        %v7573 = vrot.slane %v7528, 5
        %v7574 = vsel %vm2187, %v7572, %v7573
        %v7575 = vrot.slane %v7529, 5
        %v7576 = vrot.slane %v7575, 4
        %v7577 = vrot.slane %v7530, 5
        %v7578 = vsel %vm2187, %v7576, %v7577
        %7587 = vst.msk [vmem:[#allocation5 + $0x10] sm:$0xf] %vm868, %v7550
        %7588 = vst.msk [vmem:[#allocation5 + $0x24] sm:$0xf] %vm868, %v7554
        %7589 = vst.msk [vmem:[#allocation5 + $0x38] sm:$0xf] %vm868, %v7558
        %7590 = vst.msk [vmem:[#allocation5 + $0x4c] sm:$0xf] %vm868, %v7562
        %7591 = vst.msk [vmem:[#allocation5 + $0x60] sm:$0xf] %vm868, %v7566
        %7592 = vst.msk [vmem:[#allocation5 + $0x74] sm:$0xf] %vm868, %v7570
        %7593 = vst.msk [vmem:[#allocation5 + $0x88] sm:$0xf] %vm868, %v7574
        %7594 = vst.msk [vmem:[#allocation5 + $0x9c] sm:$0xf] %vm868, %v7578
        %v7595 = vld [vmem:[#allocation5] sm:$0xff]
        %v7596 = vld [vmem:[#allocation5 + $0x8] sm:$0xff]
        %v7597 = vld [vmem:[#allocation5 + $0x10] sm:$0xf]
        %v7598 = vld [vmem:[#allocation5 + $0x14] sm:$0xff]
        %v7599 = vld [vmem:[#allocation5 + $0x1c] sm:$0xff]
        %v7600 = vld [vmem:[#allocation5 + $0x24] sm:$0xf]
        %v7601 = vld [vmem:[#allocation5 + $0x28] sm:$0xff]
        %v7602 = vld [vmem:[#allocation5 + $0x30] sm:$0xff]
        %v7603 = vld [vmem:[#allocation5 + $0x38] sm:$0xf]
        %v7604 = vld [vmem:[#allocation5 + $0x3c] sm:$0xff]
        %v7605 = vld [vmem:[#allocation5 + $0x44] sm:$0xff]
        %v7606 = vld [vmem:[#allocation5 + $0x4c] sm:$0xf]
        %v7607 = vld [vmem:[#allocation5 + $0x50] sm:$0xff]
        %v7608 = vld [vmem:[#allocation5 + $0x58] sm:$0xff]
        %v7609 = vld [vmem:[#allocation5 + $0x60] sm:$0xf]
        %v7610 = vld [vmem:[#allocation5 + $0x64] sm:$0xff]
        %v7611 = vld [vmem:[#allocation5 + $0x6c] sm:$0xff]
        %v7612 = vld [vmem:[#allocation5 + $0x74] sm:$0xf]
        %v7613 = vld [vmem:[#allocation5 + $0x78] sm:$0xff]
        %v7614 = vld [vmem:[#allocation5 + $0x80] sm:$0xff]
        %v7615 = vld [vmem:[#allocation5 + $0x88] sm:$0xf]
        %v7616 = vld [vmem:[#allocation5 + $0x8c] sm:$0xff]
        %v7617 = vld [vmem:[#allocation5 + $0x94] sm:$0xff]
        %v7618 = vld [vmem:[#allocation5 + $0x9c] sm:$0xf]
        %v7619 = vld [vmem:[%s5] sm:$0xf]
        %v7620 = vld [vmem:[%s5 + $0x4] sm:$0xf]
        %v7621 = vld [vmem:[%s5 + $0x8] sm:$0xf]
        %v7622 = vld [vmem:[%s5 + $0xc] sm:$0xf]
        %v7623 = vld [vmem:[%s5 + $0x10] sm:$0xf]
        %v7624 = vld [vmem:[%s5 + $0x14] sm:$0xf]
        %v7625 = vld [vmem:[%s5 + $0x18] sm:$0xf]
        %v7626 = vld [vmem:[%s5 + $0x1c] sm:$0xf]
        %v7627 = vld [vmem:[%s5 + $0x20] sm:$0xf]
        %v7628 = vld [vmem:[%s5 + $0x24] sm:$0xf]
        %v7629 = vld [vmem:[%s5 + $0x28] sm:$0xf]
        %v7630 = vld [vmem:[%s5 + $0x2c] sm:$0xf]
        %v7631 = vld [vmem:[%s5 + $0x30] sm:$0xf]
        %v7632 = vld [vmem:[%s5 + $0x34] sm:$0xf]
        %v7633 = vld [vmem:[%s5 + $0x38] sm:$0xf]
        %v7634 = vld [vmem:[%s5 + $0x3c] sm:$0xf]
        %v7635 = vld [vmem:[%s5 + $0x40] sm:$0xf]
        %v7636 = vld [vmem:[%s5 + $0x44] sm:$0xf]
        %v7637 = vld [vmem:[%s5 + $0x48] sm:$0xf]
        %v7638 = vld [vmem:[%s5 + $0x4c] sm:$0xf]
        %v7639 = vld [vmem:[%s5 + $0x50] sm:$0xf]
        %v7640 = vld [vmem:[%s5 + $0x54] sm:$0xf]
        %v7641 = vld [vmem:[%s5 + $0x58] sm:$0xf]
        %v7642 = vld [vmem:[%s5 + $0x5c] sm:$0xf]
        %v7643 = vld [vmem:[%s5 + $0x60] sm:$0xf]
        %v7644 = vld [vmem:[%s5 + $0x64] sm:$0xf]
        %v7645 = vld [vmem:[%s5 + $0x68] sm:$0xf]
        %v7646 = vld [vmem:[%s5 + $0x6c] sm:$0xf]
        %v7647 = vld [vmem:[%s5 + $0x70] sm:$0xf]
        %v7648 = vld [vmem:[%s5 + $0x74] sm:$0xf]
        %v7649 = vld [vmem:[%s5 + $0x78] sm:$0xf]
        %v7650 = vld [vmem:[%s5 + $0x7c] sm:$0xf]
        %v7651 = vld [vmem:[%s5 + $0x80] sm:$0xf]
        %v7652 = vld [vmem:[%s5 + $0x84] sm:$0xf]
        %v7653 = vld [vmem:[%s5 + $0x88] sm:$0xf]
        %v7654 = vld [vmem:[%s5 + $0x8c] sm:$0xf]
        %v7655 = vld [vmem:[%s5 + $0x90] sm:$0xf]
        %v7656 = vld [vmem:[%s5 + $0x94] sm:$0xf]
        %v7657 = vld [vmem:[%s5 + $0x98] sm:$0xf]
        %v7658 = vld [vmem:[%s5 + $0x9c] sm:$0xf]
        %v7659 = vld [vmem:[%s5 + $0xa0] sm:$0xf]
        %v7660 = vld [vmem:[%s5 + $0xa4] sm:$0xf]
        %v7661 = vld [vmem:[%s5 + $0xa8] sm:$0xf]
        %v7662 = vld [vmem:[%s5 + $0xac] sm:$0xf]
        %v7663 = vld [vmem:[%s5 + $0xb0] sm:$0xf]
        %v7664 = vld [vmem:[%s5 + $0xb4] sm:$0xf]
        %v7665 = vld [vmem:[%s5 + $0xb8] sm:$0xf]
        %v7666 = vld [vmem:[%s5 + $0xbc] sm:$0xf]
        %v7667 = vld [vmem:[%s5 + $0xc0] sm:$0xf]
        %v7668 = vld [vmem:[%s5 + $0xc4] sm:$0xf]
        %v7669 = vld [vmem:[%s5 + $0xc8] sm:$0xf]
        %v7670 = vld [vmem:[%s5 + $0xcc] sm:$0xf]
        %v7671 = vld [vmem:[%s5 + $0xd0] sm:$0xf]
        %v7672 = vld [vmem:[%s5 + $0xd4] sm:$0xf]
        %v7673 = vld [vmem:[%s5 + $0xd8] sm:$0xf]
        %v7674 = vld [vmem:[%s5 + $0xdc] sm:$0xf]
        %v7675 = vld [vmem:[%s5 + $0xe0] sm:$0xf]
        %v7676 = vld [vmem:[%s5 + $0xe4] sm:$0xf]
        %v7677 = vld [vmem:[%s5 + $0xe8] sm:$0xf]
        %v7678 = vld [vmem:[%s5 + $0xec] sm:$0xf]
        %v7679 = vld [vmem:[%s5 + $0xf0] sm:$0xf]
        %v7680 = vld [vmem:[%s5 + $0xf4] sm:$0xf]
        %v7681 = vld [vmem:[%s5 + $0xf8] sm:$0xf]
        %v7682 = vld [vmem:[%s5 + $0xfc] sm:$0xf]
        %v7683 = vld [vmem:[%s5 + $0x100] sm:$0xf]
        %v7684 = vld [vmem:[%s5 + $0x104] sm:$0xf]
        %v7685 = vld [vmem:[%s5 + $0x108] sm:$0xf]
        %v7686 = vld [vmem:[%s5 + $0x10c] sm:$0xf]
        %v7687 = vld [vmem:[%s5 + $0x110] sm:$0xf]
        %v7688 = vld [vmem:[%s5 + $0x114] sm:$0xf]
        %v7689 = vld [vmem:[%s5 + $0x118] sm:$0xf]
        %v7690 = vld [vmem:[%s5 + $0x11c] sm:$0xf]
        %v7691 = vld [vmem:[%s6] sm:$0x1]
        %v7693 = vlaneseq
        %v7694 = vshrl.u32 %v7693, 7
        %v7695 = vsub.s32 0, %v7694
        %v7696 = vrot.slane %v7691, %v7695
        %v7722 = vunpack.c.l.b16 %v7595
        %v7723 = vunpack.c.h.b16 %v7595
        %v7724 = vunpack.c.l.b16 %v7596
        %v7725 = vunpack.c.h.b16 %v7596
        %v7726 = vunpack.c.l.b16 %v7597
        %v7727 = vunpack.c.l.b16 %v7598
        %v7728 = vunpack.c.h.b16 %v7598
        %v7729 = vunpack.c.l.b16 %v7599
        %v7730 = vunpack.c.h.b16 %v7599
        %v7731 = vunpack.c.l.b16 %v7600
        %v7732 = vunpack.c.l.b16 %v7601
        %v7733 = vunpack.c.h.b16 %v7601
        %v7734 = vunpack.c.l.b16 %v7602
        %v7735 = vunpack.c.h.b16 %v7602
        %v7736 = vunpack.c.l.b16 %v7603
        %v7737 = vunpack.c.l.b16 %v7604
        %v7738 = vunpack.c.h.b16 %v7604
        %v7739 = vunpack.c.l.b16 %v7605
        %v7740 = vunpack.c.h.b16 %v7605
        %v7741 = vunpack.c.l.b16 %v7606
        %v7742 = vunpack.c.l.b16 %v7607
        %v7743 = vunpack.c.h.b16 %v7607
        %v7744 = vunpack.c.l.b16 %v7608
        %v7745 = vunpack.c.h.b16 %v7608
        %v7746 = vunpack.c.l.b16 %v7609
        %v7747 = vunpack.c.l.b16 %v7610
        %v7748 = vunpack.c.h.b16 %v7610
        %v7749 = vunpack.c.l.b16 %v7611
        %v7750 = vunpack.c.h.b16 %v7611
        %v7751 = vunpack.c.l.b16 %v7612
        %v7752 = vunpack.c.l.b16 %v7613
        %v7753 = vunpack.c.h.b16 %v7613
        %v7754 = vunpack.c.l.b16 %v7614
        %v7755 = vunpack.c.h.b16 %v7614
        %v7756 = vunpack.c.l.b16 %v7615
        %v7757 = vunpack.c.l.b16 %v7616
        %v7758 = vunpack.c.h.b16 %v7616
        %v7759 = vunpack.c.l.b16 %v7617
        %v7760 = vunpack.c.h.b16 %v7617
        %v7761 = vunpack.c.l.b16 %v7618
        %v7762 = vpack.c.b16 %v7727, %v7722
        %v7763 = vpack.c.b16 %v7728, %v7723
        %v7764 = vpack.c.b16 %v7729, %v7724
        %v7765 = vpack.c.b16 %v7730, %v7725
        %v7766 = vpack.c.b16 %v7731, %v7726
        %v7767 = vpack.c.b16 %v7737, %v7732
        %v7768 = vpack.c.b16 %v7738, %v7733
        %v7769 = vpack.c.b16 %v7739, %v7734
        %v7770 = vpack.c.b16 %v7740, %v7735
        %v7771 = vpack.c.b16 %v7741, %v7736
        %v7772 = vpack.c.b16 %v7747, %v7742
        %v7773 = vpack.c.b16 %v7748, %v7743
        %v7774 = vpack.c.b16 %v7749, %v7744
        %v7775 = vpack.c.b16 %v7750, %v7745
        %v7776 = vpack.c.b16 %v7751, %v7746
        %v7777 = vpack.c.b16 %v7757, %v7752
        %v7778 = vpack.c.b16 %v7758, %v7753
        %v7779 = vpack.c.b16 %v7759, %v7754
        %v7780 = vpack.c.b16 %v7760, %v7755
        %v7781 = vpack.c.b16 %v7761, %v7756
        %v7870 = vunpack.c.l.b16 %v7619
        %v7871 = vunpack.c.l.b16 %v7620
        %v7872 = vunpack.c.l.b16 %v7621
        %v7873 = vunpack.c.l.b16 %v7622
        %v7874 = vunpack.c.l.b16 %v7623
        %v7875 = vunpack.c.l.b16 %v7624
        %v7876 = vunpack.c.l.b16 %v7625
        %v7877 = vunpack.c.l.b16 %v7626
        %v7878 = vunpack.c.l.b16 %v7627
        %v7879 = vunpack.c.l.b16 %v7628
        %v7880 = vunpack.c.l.b16 %v7629
        %v7881 = vunpack.c.l.b16 %v7630
        %v7882 = vunpack.c.l.b16 %v7631
        %v7883 = vunpack.c.l.b16 %v7632
        %v7884 = vunpack.c.l.b16 %v7633
        %v7885 = vunpack.c.l.b16 %v7634
        %v7886 = vunpack.c.l.b16 %v7635
        %v7887 = vunpack.c.l.b16 %v7636
        %v7888 = vunpack.c.l.b16 %v7637
        %v7889 = vunpack.c.l.b16 %v7638
        %v7890 = vunpack.c.l.b16 %v7639
        %v7891 = vunpack.c.l.b16 %v7640
        %v7892 = vunpack.c.l.b16 %v7641
        %v7893 = vunpack.c.l.b16 %v7642
        %v7894 = vunpack.c.l.b16 %v7643
        %v7895 = vunpack.c.l.b16 %v7644
        %v7896 = vunpack.c.l.b16 %v7645
        %v7897 = vunpack.c.l.b16 %v7646
        %v7898 = vunpack.c.l.b16 %v7647
        %v7899 = vunpack.c.l.b16 %v7648
        %v7900 = vunpack.c.l.b16 %v7649
        %v7901 = vunpack.c.l.b16 %v7650
        %v7902 = vunpack.c.l.b16 %v7651
        %v7903 = vunpack.c.l.b16 %v7652
        %v7904 = vunpack.c.l.b16 %v7653
        %v7905 = vunpack.c.l.b16 %v7654
        %v7906 = vunpack.c.l.b16 %v7655
        %v7907 = vunpack.c.l.b16 %v7656
        %v7908 = vunpack.c.l.b16 %v7657
        %v7909 = vunpack.c.l.b16 %v7658
        %v7910 = vunpack.c.l.b16 %v7659
        %v7911 = vunpack.c.l.b16 %v7660
        %v7912 = vunpack.c.l.b16 %v7661
        %v7913 = vunpack.c.l.b16 %v7662
        %v7914 = vunpack.c.l.b16 %v7663
        %v7915 = vunpack.c.l.b16 %v7664
        %v7916 = vunpack.c.l.b16 %v7665
        %v7917 = vunpack.c.l.b16 %v7666
        %v7918 = vunpack.c.l.b16 %v7667
        %v7919 = vunpack.c.l.b16 %v7668
        %v7920 = vunpack.c.l.b16 %v7669
        %v7921 = vunpack.c.l.b16 %v7670
        %v7922 = vunpack.c.l.b16 %v7671
        %v7923 = vunpack.c.l.b16 %v7672
        %v7924 = vunpack.c.l.b16 %v7673
        %v7925 = vunpack.c.l.b16 %v7674
        %v7926 = vunpack.c.l.b16 %v7675
        %v7927 = vunpack.c.l.b16 %v7676
        %v7928 = vunpack.c.l.b16 %v7677
        %v7929 = vunpack.c.l.b16 %v7678
        %v7930 = vunpack.c.l.b16 %v7679
        %v7931 = vunpack.c.l.b16 %v7680
        %v7932 = vunpack.c.l.b16 %v7681
        %v7933 = vunpack.c.l.b16 %v7682
        %v7934 = vunpack.c.l.b16 %v7683
        %v7935 = vunpack.c.l.b16 %v7684
        %v7936 = vunpack.c.l.b16 %v7685
        %v7937 = vunpack.c.l.b16 %v7686
        %v7938 = vunpack.c.l.b16 %v7687
        %v7939 = vunpack.c.l.b16 %v7688
        %v7940 = vunpack.c.l.b16 %v7689
        %v7941 = vunpack.c.l.b16 %v7690
        %v7942 = vpack.c.b16 %v7871, %v7870
        %v7943 = vpack.c.b16 %v7873, %v7872
        %v7944 = vpack.c.b16 %v7875, %v7874
        %v7945 = vpack.c.b16 %v7877, %v7876
        %v7946 = vpack.c.b16 %v7879, %v7878
        %v7947 = vpack.c.b16 %v7881, %v7880
        %v7948 = vpack.c.b16 %v7883, %v7882
        %v7949 = vpack.c.b16 %v7885, %v7884
        %v7950 = vpack.c.b16 %v7887, %v7886
        %v7951 = vpack.c.b16 %v7889, %v7888
        %v7952 = vpack.c.b16 %v7891, %v7890
        %v7953 = vpack.c.b16 %v7893, %v7892
        %v7954 = vpack.c.b16 %v7895, %v7894
        %v7955 = vpack.c.b16 %v7897, %v7896
        %v7956 = vpack.c.b16 %v7899, %v7898
        %v7957 = vpack.c.b16 %v7901, %v7900
        %v7958 = vpack.c.b16 %v7903, %v7902
        %v7959 = vpack.c.b16 %v7905, %v7904
        %v7960 = vpack.c.b16 %v7907, %v7906
        %v7961 = vpack.c.b16 %v7909, %v7908
        %v7962 = vpack.c.b16 %v7911, %v7910
        %v7963 = vpack.c.b16 %v7913, %v7912
        %v7964 = vpack.c.b16 %v7915, %v7914
        %v7965 = vpack.c.b16 %v7917, %v7916
        %v7966 = vpack.c.b16 %v7919, %v7918
        %v7967 = vpack.c.b16 %v7921, %v7920
        %v7968 = vpack.c.b16 %v7923, %v7922
        %v7969 = vpack.c.b16 %v7925, %v7924
        %v7970 = vpack.c.b16 %v7927, %v7926
        %v7971 = vpack.c.b16 %v7929, %v7928
        %v7972 = vpack.c.b16 %v7931, %v7930
        %v7973 = vpack.c.b16 %v7933, %v7932
        %v7974 = vpack.c.b16 %v7935, %v7934
        %v7975 = vpack.c.b16 %v7937, %v7936
        %v7976 = vpack.c.b16 %v7939, %v7938
        %v7977 = vpack.c.b16 %v7941, %v7940
        %v8015 = vsel %vm803, %v7766, 0
        %v8018 = vsel %vm803, %v7771, 0
        %v8021 = vsel %vm803, %v7776, 0
        %v8024 = vsel %vm803, %v7781, 0
        %8026 = vmatprep.subr.bf16.mxu0 0
        %8027 = vmatpush1.bf16.msra.mxu0 %v7949
        %8028 = vmatprep.subr.bf16.mxu0 0
        %8029 = vmatpush1.bf16.msra.mxu0 %v7948
        %8030 = vmatprep.subr.bf16.mxu0 0
        %8031 = vmatpush1.bf16.msra.mxu0 %v7947
        %8032 = vmatprep.subr.bf16.mxu0 0
        %8033 = vmatpush1.bf16.msra.mxu0 %v7946
        %8034 = vmatprep.subr.bf16.mxu0 0
        %8035 = vmatpush1.bf16.msra.mxu0 %v7945
        %8036 = vmatprep.subr.bf16.mxu0 0
        %8037 = vmatpush1.bf16.msra.mxu0 %v7944
        %8038 = vmatprep.subr.bf16.mxu0 0
        %8039 = vmatpush1.bf16.msra.mxu0 %v7943
        %8040 = vmatprep.subr.bf16.mxu0 0
        %8041 = vmatpush1.bf16.msra.mxu0 %v7942
        %8042 = vmatprep.subr.bf16.mxu0 0
        %8043 = vmatpush2.bf16.msra.mxu0 %v7957
        %8044 = vmatprep.subr.bf16.mxu0 0
        %8045 = vmatpush2.bf16.msra.mxu0 %v7956
        %8046 = vmatprep.subr.bf16.mxu0 0
        %8047 = vmatpush2.bf16.msra.mxu0 %v7955
        %8048 = vmatprep.subr.bf16.mxu0 0
        %8049 = vmatpush2.bf16.msra.mxu0 %v7954
        %8050 = vmatprep.subr.bf16.mxu0 0
        %8051 = vmatpush2.bf16.msra.mxu0 %v7953
        %8052 = vmatprep.subr.bf16.mxu0 0
        %8053 = vmatpush2.bf16.msra.mxu0 %v7952
        %8054 = vmatprep.subr.bf16.mxu0 0
        %8055 = vmatpush2.bf16.msra.mxu0 %v7951
        %8056 = vmatprep.subr.bf16.mxu0 0
        %8057 = vmatpush2.bf16.msra.mxu0 %v7950
        %8058 = vmatprep.mubr.bf16.mxu0 %v7763
        %8059 = vmatmul.mubr.bf16.gmra.mxu0 %v7762
        %v8060 = vpop.f32.mrf.mxu0
        %v8061 = vadd.f32 %v7696, %v8060
        %v8062 = vpop.f32.mrf.mxu0
        %v8063 = vpop.f32.mrf.mxu0
        %v8064 = vadd.f32 %v7696, %v8063
        %v8065 = vpop.f32.mrf.mxu0
        %8066 = vmatprep.mubr.bf16.mxu0 %v7768
        %8067 = vmatmul.mubr.bf16.gmra.mxu0 %v7767
        %v8068 = vpop.f32.mrf.mxu0
        %v8069 = vadd.f32 %v7696, %v8068
        %v8070 = vpop.f32.mrf.mxu0
        %v8071 = vpop.f32.mrf.mxu0
        %v8072 = vadd.f32 %v7696, %v8071
        %v8073 = vpop.f32.mrf.mxu0
        %8074 = vmatprep.mubr.bf16.mxu0 %v7773
        %8075 = vmatmul.mubr.bf16.gmra.mxu0 %v7772
        %v8076 = vpop.f32.mrf.mxu0
        %v8077 = vadd.f32 %v7696, %v8076
        %v8078 = vpop.f32.mrf.mxu0
        %v8079 = vpop.f32.mrf.mxu0
        %v8080 = vadd.f32 %v7696, %v8079
        %v8081 = vpop.f32.mrf.mxu0
        %8082 = vmatprep.mubr.bf16.mxu0 %v7778
        %8083 = vmatmul.mubr.bf16.gmra.mxu0 %v7777
        %v8084 = vpop.f32.mrf.mxu0
        %v8085 = vadd.f32 %v7696, %v8084
        %v8086 = vpop.f32.mrf.mxu0
        %v8087 = vpop.f32.mrf.mxu0
        %v8088 = vadd.f32 %v7696, %v8087
        %v8089 = vpop.f32.mrf.mxu0
        %8090 = vdwg.mxu0
        %8091 = vmatprep.subr.bf16.mxu0 0
        %8092 = vmatpush1.bf16.msra.mxu0 %v7965
        %8093 = vmatprep.subr.bf16.mxu0 0
        %8094 = vmatpush1.bf16.msra.mxu0 %v7964
        %8095 = vmatprep.subr.bf16.mxu0 0
        %8096 = vmatpush1.bf16.msra.mxu0 %v7963
        %8097 = vmatprep.subr.bf16.mxu0 0
        %8098 = vmatpush1.bf16.msra.mxu0 %v7962
        %8099 = vmatprep.subr.bf16.mxu0 0
        %8100 = vmatpush1.bf16.msra.mxu0 %v7961
        %8101 = vmatprep.subr.bf16.mxu0 0
        %8102 = vmatpush1.bf16.msra.mxu0 %v7960
        %8103 = vmatprep.subr.bf16.mxu0 0
        %8104 = vmatpush1.bf16.msra.mxu0 %v7959
        %8105 = vmatprep.subr.bf16.mxu0 0
        %8106 = vmatpush1.bf16.msra.mxu0 %v7958
        %8107 = vmatprep.subr.bf16.mxu0 0
        %8108 = vmatpush2.bf16.msra.mxu0 %v7973
        %8109 = vmatprep.subr.bf16.mxu0 0
        %8110 = vmatpush2.bf16.msra.mxu0 %v7972
        %8111 = vmatprep.subr.bf16.mxu0 0
        %8112 = vmatpush2.bf16.msra.mxu0 %v7971
        %8113 = vmatprep.subr.bf16.mxu0 0
        %8114 = vmatpush2.bf16.msra.mxu0 %v7970
        %8115 = vmatprep.subr.bf16.mxu0 0
        %8116 = vmatpush2.bf16.msra.mxu0 %v7969
        %8117 = vmatprep.subr.bf16.mxu0 0
        %8118 = vmatpush2.bf16.msra.mxu0 %v7968
        %8119 = vmatprep.subr.bf16.mxu0 0
        %8120 = vmatpush2.bf16.msra.mxu0 %v7967
        %8121 = vmatprep.subr.bf16.mxu0 0
        %8122 = vmatpush2.bf16.msra.mxu0 %v7966
        %8123 = vmatprep.mubr.bf16.mxu0 %v7765
        %8124 = vmatmul.mubr.bf16.gmra.mxu0 %v7764
        %v8125 = vpop.f32.mrf.mxu0
        %v8126 = vadd.f32 %v8061, %v8125
        %v8127 = vpop.f32.mrf.mxu0
        %v8128 = vpop.f32.mrf.mxu0
        %v8129 = vadd.f32 %v8064, %v8128
        %v8130 = vpop.f32.mrf.mxu0
        %8131 = vmatprep.mubr.bf16.mxu0 %v7770
        %8132 = vmatmul.mubr.bf16.gmra.mxu0 %v7769
        %v8133 = vpop.f32.mrf.mxu0
        %v8134 = vadd.f32 %v8069, %v8133
        %v8135 = vpop.f32.mrf.mxu0
        %v8136 = vpop.f32.mrf.mxu0
        %v8137 = vadd.f32 %v8072, %v8136
        %v8138 = vpop.f32.mrf.mxu0
        %8139 = vmatprep.mubr.bf16.mxu0 %v7775
        %8140 = vmatmul.mubr.bf16.gmra.mxu0 %v7774
        %v8141 = vpop.f32.mrf.mxu0
        %v8142 = vadd.f32 %v8077, %v8141
        %v8143 = vpop.f32.mrf.mxu0
        %v8144 = vpop.f32.mrf.mxu0
        %v8145 = vadd.f32 %v8080, %v8144
        %v8146 = vpop.f32.mrf.mxu0
        %8147 = vmatprep.mubr.bf16.mxu0 %v7780
        %8148 = vmatmul.mubr.bf16.gmra.mxu0 %v7779
        %v8149 = vpop.f32.mrf.mxu0
        %v8150 = vadd.f32 %v8085, %v8149
        %v8151 = vpop.f32.mrf.mxu0
        %v8152 = vpop.f32.mrf.mxu0
        %v8153 = vadd.f32 %v8088, %v8152
        %v8154 = vpop.f32.mrf.mxu0
        %8155 = vdwg.mxu0
        %8156 = vmatprep.subr.bf16.mxu0 0
        %8157 = vmatpush1.bf16.msra.mxu0 0
        %8158 = vmatprep.subr.bf16.mxu0 0
        %8159 = vmatpush1.bf16.msra.mxu0 0
        %8160 = vmatprep.subr.bf16.mxu0 0
        %8161 = vmatpush1.bf16.msra.mxu0 0
        %8162 = vmatprep.subr.bf16.mxu0 0
        %8163 = vmatpush1.bf16.msra.mxu0 0
        %8164 = vmatprep.subr.bf16.mxu0 0
        %8165 = vmatpush1.bf16.msra.mxu0 %v7977
        %8166 = vmatprep.subr.bf16.mxu0 0
        %8167 = vmatpush1.bf16.msra.mxu0 %v7976
        %8168 = vmatprep.subr.bf16.mxu0 0
        %8169 = vmatpush1.bf16.msra.mxu0 %v7975
        %8170 = vmatprep.subr.bf16.mxu0 0
        %8171 = vmatpush1.bf16.msra.mxu0 %v7974
        %8172 = vmatprep.subr.bf16.mxu0 0
        %8173 = vmatpush2.bf16.msra.mxu0 0
        %8174 = vmatprep.subr.bf16.mxu0 0
        %8175 = vmatpush2.bf16.msra.mxu0 0
        %8176 = vmatprep.subr.bf16.mxu0 0
        %8177 = vmatpush2.bf16.msra.mxu0 0
        %8178 = vmatprep.subr.bf16.mxu0 0
        %8179 = vmatpush2.bf16.msra.mxu0 0
        %8180 = vmatprep.subr.bf16.mxu0 0
        %8181 = vmatpush2.bf16.msra.mxu0 0
        %8182 = vmatprep.subr.bf16.mxu0 0
        %8183 = vmatpush2.bf16.msra.mxu0 0
        %8184 = vmatprep.subr.bf16.mxu0 0
        %8185 = vmatpush2.bf16.msra.mxu0 0
        %8186 = vmatprep.subr.bf16.mxu0 0
        %8187 = vmatpush2.bf16.msra.mxu0 0
        %8188 = vmatprep.mubr.bf16.mxu0 0
        %8189 = vmatmul.mubr.bf16.gmra.mxu0 %v8015
        %v8190 = vpop.f32.mrf.mxu0
        %v8191 = vadd.f32 %v8126, %v8190
        %v8192 = vpop.f32.mrf.mxu0
        %v8193 = vpop.f32.mrf.mxu0
        %v8194 = vadd.f32 %v8129, %v8193
        %v8195 = vpop.f32.mrf.mxu0
        %8196 = vmatprep.mubr.bf16.mxu0 0
        %8197 = vmatmul.mubr.bf16.gmra.mxu0 %v8018
        %v8198 = vpop.f32.mrf.mxu0
        %v8199 = vadd.f32 %v8134, %v8198
        %v8200 = vpop.f32.mrf.mxu0
        %v8201 = vpop.f32.mrf.mxu0
        %v8202 = vadd.f32 %v8137, %v8201
        %v8203 = vpop.f32.mrf.mxu0
        %8204 = vmatprep.mubr.bf16.mxu0 0
        %8205 = vmatmul.mubr.bf16.gmra.mxu0 %v8021
        %v8206 = vpop.f32.mrf.mxu0
        %v8207 = vadd.f32 %v8142, %v8206
        %v8208 = vpop.f32.mrf.mxu0
        %v8209 = vpop.f32.mrf.mxu0
        %v8210 = vadd.f32 %v8145, %v8209
        %v8211 = vpop.f32.mrf.mxu0
        %8212 = vmatprep.mubr.bf16.mxu0 0
        %8213 = vmatmul.mubr.bf16.gmra.mxu0 %v8024
        %v8214 = vpop.f32.mrf.mxu0
        %v8215 = vadd.f32 %v8150, %v8214
        %v8216 = vpop.f32.mrf.mxu0
        %v8217 = vpop.f32.mrf.mxu0
        %v8218 = vadd.f32 %v8153, %v8217
        %v8219 = vpop.f32.mrf.mxu0
        %8220 = vdwg.mxu0
        %8221 = vst [vmem:[%s444] sm:$0xff] %v8191
        %8222 = vst [vmem:[%s444 + $0x8] sm:$0xff] %v8194
        %8223 = vst [vmem:[%s444 + $0x10] sm:$0xff] %v8199
        %8224 = vst [vmem:[%s444 + $0x18] sm:$0xff] %v8202
        %8225 = vst [vmem:[%s444 + $0x20] sm:$0xff] %v8207
        %8226 = vst [vmem:[%s444 + $0x28] sm:$0xff] %v8210
        %8227 = vst [vmem:[%s444 + $0x30] sm:$0xff] %v8215
        %8228 = vst [vmem:[%s444 + $0x38] sm:$0xff] %v8218
        %v8229 = vmax.f32 %v8191, 0.0
        %v8230 = vmax.f32 %v8194, 0.0
        %v8231 = vmax.f32 %v8199, 0.0
        %v8232 = vmax.f32 %v8202, 0.0
        %v8233 = vmax.f32 %v8207, 0.0
        %v8234 = vmax.f32 %v8210, 0.0
        %v8235 = vmax.f32 %v8215, 0.0
        %v8236 = vmax.f32 %v8218, 0.0
        %8237 = vst [vmem:[#allocation6] sm:$0xf] 0
        %8238 = vst [vmem:[#allocation6 + $0x4] sm:$0x1] 0
        %8239 = vst [vmem:[#allocation6 + $0x8] sm:$0xf] 0
        %8240 = vst [vmem:[#allocation6 + $0xc] sm:$0x1] 0
        %8241 = vst [vmem:[#allocation6 + $0x10] sm:$0xf] 0
        %8242 = vst [vmem:[#allocation6 + $0x14] sm:$0x1] 0
        %8243 = vst [vmem:[#allocation6 + $0x18] sm:$0xf] 0
        %8244 = vst [vmem:[#allocation6 + $0x1c] sm:$0x1] 0
        %8245 = vst [vmem:[#allocation6 + $0x20] sm:$0xf] 0
        %8246 = vst [vmem:[#allocation6 + $0x24] sm:$0x1] 0
        %8247 = vst [vmem:[#allocation6 + $0x28] sm:$0xf] 0
        %8248 = vst [vmem:[#allocation6 + $0x2c] sm:$0x1] 0
        %8249 = vst [vmem:[#allocation6 + $0x30] sm:$0xf] 0
        %8250 = vst [vmem:[#allocation6 + $0x34] sm:$0x1] 0
        %8251 = vst [vmem:[#allocation6 + $0x38] sm:$0xf] 0
        %8252 = vst [vmem:[#allocation6 + $0x3c] sm:$0x1] 0
        %8253 = vst [vmem:[#allocation6 + $0x40] sm:$0xf] 0
        %8254 = vst [vmem:[#allocation6 + $0x44] sm:$0x1] 0
        %8255 = vst [vmem:[#allocation6 + $0x48] sm:$0xf] 0
        %8256 = vst [vmem:[#allocation6 + $0x4c] sm:$0x1] 0
        %v8257 = vpack.c.bf16 %v8229, %v8229
        %v8258 = vpack.c.bf16 %v8230, %v8230
        %v8259 = vpack.c.bf16 %v8231, %v8231
        %v8260 = vpack.c.bf16 %v8232, %v8232
        %v8261 = vpack.c.bf16 %v8233, %v8233
        %v8262 = vpack.c.bf16 %v8234, %v8234
        %v8263 = vpack.c.bf16 %v8235, %v8235
        %v8264 = vpack.c.bf16 %v8236, %v8236
        %v8273 = vunpack.c.l.b16 %v8257
        %v8274 = vunpack.c.l.b16 %v8258
        %v8275 = vunpack.c.l.b16 %v8259
        %v8276 = vunpack.c.l.b16 %v8260
        %v8277 = vunpack.c.l.b16 %v8261
        %v8278 = vunpack.c.l.b16 %v8262
        %v8279 = vunpack.c.l.b16 %v8263
        %v8280 = vunpack.c.l.b16 %v8264
        %v8281 = vpack.c.b16 %v8273, %v8273
        %v8282 = vpack.c.b16 %v8274, %v8274
        %v8283 = vpack.c.b16 %v8275, %v8275
        %v8284 = vpack.c.b16 %v8276, %v8276
        %v8285 = vpack.c.b16 %v8277, %v8277
        %v8286 = vpack.c.b16 %v8278, %v8278
        %v8287 = vpack.c.b16 %v8279, %v8279
        %v8288 = vpack.c.b16 %v8280, %v8280
        %v8290 = vshrl.u32 %v8281, 16
        %v8292 = vrot.slane %v8290, 7
        %v8293 = vshll.u32 %v8281, 16
        %v8295 = vor.u32 %v8292, %v8293
        %v8296 = vrot.slane %v8292, 4
        %v8298 = vshrl.u32 %v8282, 16
        %v8300 = vrot.slane %v8298, 7
        %v8301 = vshll.u32 %v8282, 16
        %v8303 = vor.u32 %v8300, %v8301
        %v8304 = vrot.slane %v8300, 4
        %v8306 = vshrl.u32 %v8283, 16
        %v8308 = vrot.slane %v8306, 7
        %v8309 = vshll.u32 %v8283, 16
        %v8311 = vor.u32 %v8308, %v8309
        %v8312 = vrot.slane %v8308, 4
        %v8314 = vshrl.u32 %v8284, 16
        %v8316 = vrot.slane %v8314, 7
        %v8317 = vshll.u32 %v8284, 16
        %v8319 = vor.u32 %v8316, %v8317
        %v8320 = vrot.slane %v8316, 4
        %v8322 = vshrl.u32 %v8285, 16
        %v8324 = vrot.slane %v8322, 7
        %v8325 = vshll.u32 %v8285, 16
        %v8327 = vor.u32 %v8324, %v8325
        %v8328 = vrot.slane %v8324, 4
        %v8330 = vshrl.u32 %v8286, 16
        %v8332 = vrot.slane %v8330, 7
        %v8333 = vshll.u32 %v8286, 16
        %v8335 = vor.u32 %v8332, %v8333
        %v8336 = vrot.slane %v8332, 4
        %v8338 = vshrl.u32 %v8287, 16
        %v8340 = vrot.slane %v8338, 7
        %v8341 = vshll.u32 %v8287, 16
        %v8343 = vor.u32 %v8340, %v8341
        %v8344 = vrot.slane %v8340, 4
        %v8346 = vshrl.u32 %v8288, 16
        %v8348 = vrot.slane %v8346, 7
        %v8349 = vshll.u32 %v8288, 16
        %v8351 = vor.u32 %v8348, %v8349
        %v8352 = vrot.slane %v8348, 4
        %s8369 = scalar_lea.vmem [#allocation6], 8
        %vm8370 = vcmask 1043456
        %vm8371 = vmand %vm8370, %vm1345
        %v8372 = vld [vmem:[%s8369] sm:$0xf]
        %v8373 = vsel %vm8371, %v8295, %v8372
        %8374 = vst [vmem:[%s8369] sm:$0xf] %v8373
        %vm8375 = vcmask 1040384
        %vm8376 = vmand %vm8375, %vm1020
        %v8377 = vld [vmem:[%s8369 + $0x4] sm:$0x1]
        %v8378 = vsel %vm8376, %v8296, %v8377
        %8379 = vst [vmem:[%s8369 + $0x4] sm:$0x1] %v8378
        %v8380 = vld [vmem:[%s8369 + $0x8] sm:$0xf]
        %v8381 = vsel %vm8371, %v8303, %v8380
        %8382 = vst [vmem:[%s8369 + $0x8] sm:$0xf] %v8381
        %v8383 = vld [vmem:[%s8369 + $0xc] sm:$0x1]
        %v8384 = vsel %vm8376, %v8304, %v8383
        %8385 = vst [vmem:[%s8369 + $0xc] sm:$0x1] %v8384
        %v8386 = vld [vmem:[%s8369 + $0x10] sm:$0xf]
        %v8387 = vsel %vm8371, %v8311, %v8386
        %8388 = vst [vmem:[%s8369 + $0x10] sm:$0xf] %v8387
        %v8389 = vld [vmem:[%s8369 + $0x14] sm:$0x1]
        %v8390 = vsel %vm8376, %v8312, %v8389
        %8391 = vst [vmem:[%s8369 + $0x14] sm:$0x1] %v8390
        %v8392 = vld [vmem:[%s8369 + $0x18] sm:$0xf]
        %v8393 = vsel %vm8371, %v8319, %v8392
        %8394 = vst [vmem:[%s8369 + $0x18] sm:$0xf] %v8393
        %v8395 = vld [vmem:[%s8369 + $0x1c] sm:$0x1]
        %v8396 = vsel %vm8376, %v8320, %v8395
        %8397 = vst [vmem:[%s8369 + $0x1c] sm:$0x1] %v8396
        %v8398 = vld [vmem:[%s8369 + $0x20] sm:$0xf]
        %v8399 = vsel %vm8371, %v8327, %v8398
        %8400 = vst [vmem:[%s8369 + $0x20] sm:$0xf] %v8399
        %v8401 = vld [vmem:[%s8369 + $0x24] sm:$0x1]
        %v8402 = vsel %vm8376, %v8328, %v8401
        %8403 = vst [vmem:[%s8369 + $0x24] sm:$0x1] %v8402
        %v8404 = vld [vmem:[%s8369 + $0x28] sm:$0xf]
        %v8405 = vsel %vm8371, %v8335, %v8404
        %8406 = vst [vmem:[%s8369 + $0x28] sm:$0xf] %v8405
        %v8407 = vld [vmem:[%s8369 + $0x2c] sm:$0x1]
        %v8408 = vsel %vm8376, %v8336, %v8407
        %8409 = vst [vmem:[%s8369 + $0x2c] sm:$0x1] %v8408
        %v8410 = vld [vmem:[%s8369 + $0x30] sm:$0xf]
        %v8411 = vsel %vm8371, %v8343, %v8410
        %8412 = vst [vmem:[%s8369 + $0x30] sm:$0xf] %v8411
        %v8413 = vld [vmem:[%s8369 + $0x34] sm:$0x1]
        %v8414 = vsel %vm8376, %v8344, %v8413
        %8415 = vst [vmem:[%s8369 + $0x34] sm:$0x1] %v8414
        %v8416 = vld [vmem:[%s8369 + $0x38] sm:$0xf]
        %v8417 = vsel %vm8371, %v8351, %v8416
        %8418 = vst [vmem:[%s8369 + $0x38] sm:$0xf] %v8417
        %v8419 = vld [vmem:[%s8369 + $0x3c] sm:$0x1]
        %v8420 = vsel %vm8376, %v8352, %v8419
        %8421 = vst [vmem:[%s8369 + $0x3c] sm:$0x1] %v8420
        %v8422 = vld [vmem:[#allocation6] sm:$0xf]
        %v8423 = vld [vmem:[#allocation6 + $0x8] sm:$0xf]
        %v8424 = vld [vmem:[#allocation6 + $0x10] sm:$0xf]
        %v8425 = vld [vmem:[#allocation6 + $0x18] sm:$0xf]
        %v8426 = vld [vmem:[#allocation6 + $0x20] sm:$0xf]
        %v8427 = vld [vmem:[#allocation6 + $0x28] sm:$0xf]
        %v8428 = vld [vmem:[#allocation6 + $0x30] sm:$0xf]
        %v8429 = vld [vmem:[#allocation6 + $0x38] sm:$0xf]
        %8430 = vst [vmem:[#allocation7] sm:$0xf] %v8422
        %8431 = vst [vmem:[#allocation7 + $0x24] sm:$0xf] %v8423
        %8432 = vst [vmem:[#allocation7 + $0x48] sm:$0xf] %v8424
        %8433 = vst [vmem:[#allocation7 + $0x6c] sm:$0xf] %v8425
        %8434 = vst [vmem:[#allocation7 + $0x90] sm:$0xf] %v8426
        %8435 = vst [vmem:[#allocation7 + $0xb4] sm:$0xf] %v8427
        %8436 = vst [vmem:[#allocation7 + $0xd8] sm:$0xf] %v8428
        %8437 = vst [vmem:[#allocation7 + $0xfc] sm:$0xf] %v8429
        %v8438 = vld [vmem:[#allocation6] sm:$0xf]
        %v8439 = vld [vmem:[#allocation6 + $0x4] sm:$0x1]
        %v8440 = vld [vmem:[#allocation6 + $0x8] sm:$0xf]
        %v8441 = vld [vmem:[#allocation6 + $0xc] sm:$0x1]
        %v8442 = vld [vmem:[#allocation6 + $0x10] sm:$0xf]
        %v8443 = vld [vmem:[#allocation6 + $0x14] sm:$0x1]
        %v8444 = vld [vmem:[#allocation6 + $0x18] sm:$0xf]
        %v8445 = vld [vmem:[#allocation6 + $0x1c] sm:$0x1]
        %v8446 = vld [vmem:[#allocation6 + $0x20] sm:$0xf]
        %v8447 = vld [vmem:[#allocation6 + $0x24] sm:$0x1]
        %v8448 = vld [vmem:[#allocation6 + $0x28] sm:$0xf]
        %v8449 = vld [vmem:[#allocation6 + $0x2c] sm:$0x1]
        %v8450 = vld [vmem:[#allocation6 + $0x30] sm:$0xf]
        %v8451 = vld [vmem:[#allocation6 + $0x34] sm:$0x1]
        %v8452 = vld [vmem:[#allocation6 + $0x38] sm:$0xf]
        %v8453 = vld [vmem:[#allocation6 + $0x3c] sm:$0x1]
        %v8455 = vshrl.u32 %v8438, 16
        %v8457 = vrot.slane %v8455, 4
        %v8458 = vshll.u32 %v8438, 16
        %v8460 = vrot.slane %v8458, 5
        %v8461 = vor.u32 %v8457, %v8460
        %v8462 = vrot.slane %v8461, 4
        %v8464 = vshll.u32 %v8439, 16
        %v8466 = vrot.slane %v8464, 5
        %v8467 = vsel %vm1575, %v8462, %v8466
        %v8469 = vshrl.u32 %v8440, 16
        %v8471 = vrot.slane %v8469, 4
        %v8472 = vshll.u32 %v8440, 16
        %v8474 = vrot.slane %v8472, 5
        %v8475 = vor.u32 %v8471, %v8474
        %v8476 = vrot.slane %v8475, 4
        %v8478 = vshll.u32 %v8441, 16
        %v8480 = vrot.slane %v8478, 5
        %v8481 = vsel %vm1575, %v8476, %v8480
        %v8483 = vshrl.u32 %v8442, 16
        %v8485 = vrot.slane %v8483, 4
        %v8486 = vshll.u32 %v8442, 16
        %v8488 = vrot.slane %v8486, 5
        %v8489 = vor.u32 %v8485, %v8488
        %v8490 = vrot.slane %v8489, 4
        %v8492 = vshll.u32 %v8443, 16
        %v8494 = vrot.slane %v8492, 5
        %v8495 = vsel %vm1575, %v8490, %v8494
        %v8497 = vshrl.u32 %v8444, 16
        %v8499 = vrot.slane %v8497, 4
        %v8500 = vshll.u32 %v8444, 16
        %v8502 = vrot.slane %v8500, 5
        %v8503 = vor.u32 %v8499, %v8502
        %v8504 = vrot.slane %v8503, 4
        %v8506 = vshll.u32 %v8445, 16
        %v8508 = vrot.slane %v8506, 5
        %v8509 = vsel %vm1575, %v8504, %v8508
        %v8511 = vshrl.u32 %v8446, 16
        %v8513 = vrot.slane %v8511, 4
        %v8514 = vshll.u32 %v8446, 16
        %v8516 = vrot.slane %v8514, 5
        %v8517 = vor.u32 %v8513, %v8516
        %v8518 = vrot.slane %v8517, 4
        %v8520 = vshll.u32 %v8447, 16
        %v8522 = vrot.slane %v8520, 5
        %v8523 = vsel %vm1575, %v8518, %v8522
        %v8525 = vshrl.u32 %v8448, 16
        %v8527 = vrot.slane %v8525, 4
        %v8528 = vshll.u32 %v8448, 16
        %v8530 = vrot.slane %v8528, 5
        %v8531 = vor.u32 %v8527, %v8530
        %v8532 = vrot.slane %v8531, 4
        %v8534 = vshll.u32 %v8449, 16
        %v8536 = vrot.slane %v8534, 5
        %v8537 = vsel %vm1575, %v8532, %v8536
        %v8539 = vshrl.u32 %v8450, 16
        %v8541 = vrot.slane %v8539, 4
        %v8542 = vshll.u32 %v8450, 16
        %v8544 = vrot.slane %v8542, 5
        %v8545 = vor.u32 %v8541, %v8544
        %v8546 = vrot.slane %v8545, 4
        %v8548 = vshll.u32 %v8451, 16
        %v8550 = vrot.slane %v8548, 5
        %v8551 = vsel %vm1575, %v8546, %v8550
        %v8553 = vshrl.u32 %v8452, 16
        %v8555 = vrot.slane %v8553, 4
        %v8556 = vshll.u32 %v8452, 16
        %v8558 = vrot.slane %v8556, 5
        %v8559 = vor.u32 %v8555, %v8558
        %v8560 = vrot.slane %v8559, 4
        %v8562 = vshll.u32 %v8453, 16
        %v8564 = vrot.slane %v8562, 5
        %v8565 = vsel %vm1575, %v8560, %v8564
        %8574 = vst [vmem:[#allocation7 + $0x4] sm:$0xf] %v8467
        %8575 = vst [vmem:[#allocation7 + $0x28] sm:$0xf] %v8481
        %8576 = vst [vmem:[#allocation7 + $0x4c] sm:$0xf] %v8495
        %8577 = vst [vmem:[#allocation7 + $0x70] sm:$0xf] %v8509
        %8578 = vst [vmem:[#allocation7 + $0x94] sm:$0xf] %v8523
        %8579 = vst [vmem:[#allocation7 + $0xb8] sm:$0xf] %v8537
        %8580 = vst [vmem:[#allocation7 + $0xdc] sm:$0xf] %v8551
        %8581 = vst [vmem:[#allocation7 + $0x100] sm:$0xf] %v8565
        %v8582 = vld [vmem:[#allocation6] sm:$0xe]
        %v8583 = vld [vmem:[#allocation6 + $0x4] sm:$0x1]
        %v8584 = vld [vmem:[#allocation6 + $0x8] sm:$0xe]
        %v8585 = vld [vmem:[#allocation6 + $0xc] sm:$0x1]
        %v8586 = vld [vmem:[#allocation6 + $0x10] sm:$0xe]
        %v8587 = vld [vmem:[#allocation6 + $0x14] sm:$0x1]
        %v8588 = vld [vmem:[#allocation6 + $0x18] sm:$0xe]
        %v8589 = vld [vmem:[#allocation6 + $0x1c] sm:$0x1]
        %v8590 = vld [vmem:[#allocation6 + $0x20] sm:$0xe]
        %v8591 = vld [vmem:[#allocation6 + $0x24] sm:$0x1]
        %v8592 = vld [vmem:[#allocation6 + $0x28] sm:$0xe]
        %v8593 = vld [vmem:[#allocation6 + $0x2c] sm:$0x1]
        %v8594 = vld [vmem:[#allocation6 + $0x30] sm:$0xe]
        %v8595 = vld [vmem:[#allocation6 + $0x34] sm:$0x1]
        %v8596 = vld [vmem:[#allocation6 + $0x38] sm:$0xe]
        %v8597 = vld [vmem:[#allocation6 + $0x3c] sm:$0x1]
        %v8614 = vrot.slane %v8582, 5
        %v8615 = vrot.slane %v8614, 4
        %v8616 = vrot.slane %v8583, 5
        %v8617 = vsel %vm2187, %v8615, %v8616
        %v8618 = vrot.slane %v8584, 5
        %v8619 = vrot.slane %v8618, 4
        %v8620 = vrot.slane %v8585, 5
        %v8621 = vsel %vm2187, %v8619, %v8620
        %v8622 = vrot.slane %v8586, 5
        %v8623 = vrot.slane %v8622, 4
        %v8624 = vrot.slane %v8587, 5
        %v8625 = vsel %vm2187, %v8623, %v8624
        %v8626 = vrot.slane %v8588, 5
        %v8627 = vrot.slane %v8626, 4
        %v8628 = vrot.slane %v8589, 5
        %v8629 = vsel %vm2187, %v8627, %v8628
        %v8630 = vrot.slane %v8590, 5
        %v8631 = vrot.slane %v8630, 4
        %v8632 = vrot.slane %v8591, 5
        %v8633 = vsel %vm2187, %v8631, %v8632
        %v8634 = vrot.slane %v8592, 5
        %v8635 = vrot.slane %v8634, 4
        %v8636 = vrot.slane %v8593, 5
        %v8637 = vsel %vm2187, %v8635, %v8636
        %v8638 = vrot.slane %v8594, 5
        %v8639 = vrot.slane %v8638, 4
        %v8640 = vrot.slane %v8595, 5
        %v8641 = vsel %vm2187, %v8639, %v8640
        %v8642 = vrot.slane %v8596, 5
        %v8643 = vrot.slane %v8642, 4
        %v8644 = vrot.slane %v8597, 5
        %v8645 = vsel %vm2187, %v8643, %v8644
        %8654 = vst [vmem:[#allocation7 + $0x8] sm:$0xf] %v8617
        %8655 = vst [vmem:[#allocation7 + $0x2c] sm:$0xf] %v8621
        %8656 = vst [vmem:[#allocation7 + $0x50] sm:$0xf] %v8625
        %8657 = vst [vmem:[#allocation7 + $0x74] sm:$0xf] %v8629
        %8658 = vst [vmem:[#allocation7 + $0x98] sm:$0xf] %v8633
        %8659 = vst [vmem:[#allocation7 + $0xbc] sm:$0xf] %v8637
        %8660 = vst [vmem:[#allocation7 + $0xe0] sm:$0xf] %v8641
        %8661 = vst [vmem:[#allocation7 + $0x104] sm:$0xf] %v8645
        %v8662 = vld [vmem:[%s8369] sm:$0xf]
        %v8663 = vld [vmem:[%s8369 + $0x8] sm:$0xf]
        %v8664 = vld [vmem:[%s8369 + $0x10] sm:$0xf]
        %v8665 = vld [vmem:[%s8369 + $0x18] sm:$0xf]
        %v8666 = vld [vmem:[%s8369 + $0x20] sm:$0xf]
        %v8667 = vld [vmem:[%s8369 + $0x28] sm:$0xf]
        %v8668 = vld [vmem:[%s8369 + $0x30] sm:$0xf]
        %v8669 = vld [vmem:[%s8369 + $0x38] sm:$0xf]
        %8670 = vst [vmem:[#allocation7 + $0xc] sm:$0xf] %v8662
        %8671 = vst [vmem:[#allocation7 + $0x30] sm:$0xf] %v8663
        %8672 = vst [vmem:[#allocation7 + $0x54] sm:$0xf] %v8664
        %8673 = vst [vmem:[#allocation7 + $0x78] sm:$0xf] %v8665
        %8674 = vst [vmem:[#allocation7 + $0x9c] sm:$0xf] %v8666
        %8675 = vst [vmem:[#allocation7 + $0xc0] sm:$0xf] %v8667
        %8676 = vst [vmem:[#allocation7 + $0xe4] sm:$0xf] %v8668
        %8677 = vst [vmem:[#allocation7 + $0x108] sm:$0xf] %v8669
        %v8678 = vld [vmem:[%s8369] sm:$0xf]
        %v8679 = vld [vmem:[%s8369 + $0x4] sm:$0x1]
        %v8680 = vld [vmem:[%s8369 + $0x8] sm:$0xf]
        %v8681 = vld [vmem:[%s8369 + $0xc] sm:$0x1]
        %v8682 = vld [vmem:[%s8369 + $0x10] sm:$0xf]
        %v8683 = vld [vmem:[%s8369 + $0x14] sm:$0x1]
        %v8684 = vld [vmem:[%s8369 + $0x18] sm:$0xf]
        %v8685 = vld [vmem:[%s8369 + $0x1c] sm:$0x1]
        %v8686 = vld [vmem:[%s8369 + $0x20] sm:$0xf]
        %v8687 = vld [vmem:[%s8369 + $0x24] sm:$0x1]
        %v8688 = vld [vmem:[%s8369 + $0x28] sm:$0xf]
        %v8689 = vld [vmem:[%s8369 + $0x2c] sm:$0x1]
        %v8690 = vld [vmem:[%s8369 + $0x30] sm:$0xf]
        %v8691 = vld [vmem:[%s8369 + $0x34] sm:$0x1]
        %v8692 = vld [vmem:[%s8369 + $0x38] sm:$0xf]
        %v8693 = vld [vmem:[%s8369 + $0x3c] sm:$0x1]
        %v8695 = vshrl.u32 %v8678, 16
        %v8697 = vrot.slane %v8695, 4
        %v8698 = vshll.u32 %v8678, 16
        %v8700 = vrot.slane %v8698, 5
        %v8701 = vor.u32 %v8697, %v8700
        %v8702 = vrot.slane %v8701, 4
        %v8704 = vshll.u32 %v8679, 16
        %v8706 = vrot.slane %v8704, 5
        %v8707 = vsel %vm1575, %v8702, %v8706
        %v8709 = vshrl.u32 %v8680, 16
        %v8711 = vrot.slane %v8709, 4
        %v8712 = vshll.u32 %v8680, 16
        %v8714 = vrot.slane %v8712, 5
        %v8715 = vor.u32 %v8711, %v8714
        %v8716 = vrot.slane %v8715, 4
        %v8718 = vshll.u32 %v8681, 16
        %v8720 = vrot.slane %v8718, 5
        %v8721 = vsel %vm1575, %v8716, %v8720
        %v8723 = vshrl.u32 %v8682, 16
        %v8725 = vrot.slane %v8723, 4
        %v8726 = vshll.u32 %v8682, 16
        %v8728 = vrot.slane %v8726, 5
        %v8729 = vor.u32 %v8725, %v8728
        %v8730 = vrot.slane %v8729, 4
        %v8732 = vshll.u32 %v8683, 16
        %v8734 = vrot.slane %v8732, 5
        %v8735 = vsel %vm1575, %v8730, %v8734
        %v8737 = vshrl.u32 %v8684, 16
        %v8739 = vrot.slane %v8737, 4
        %v8740 = vshll.u32 %v8684, 16
        %v8742 = vrot.slane %v8740, 5
        %v8743 = vor.u32 %v8739, %v8742
        %v8744 = vrot.slane %v8743, 4
        %v8746 = vshll.u32 %v8685, 16
        %v8748 = vrot.slane %v8746, 5
        %v8749 = vsel %vm1575, %v8744, %v8748
        %v8751 = vshrl.u32 %v8686, 16
        %v8753 = vrot.slane %v8751, 4
        %v8754 = vshll.u32 %v8686, 16
        %v8756 = vrot.slane %v8754, 5
        %v8757 = vor.u32 %v8753, %v8756
        %v8758 = vrot.slane %v8757, 4
        %v8760 = vshll.u32 %v8687, 16
        %v8762 = vrot.slane %v8760, 5
        %v8763 = vsel %vm1575, %v8758, %v8762
        %v8765 = vshrl.u32 %v8688, 16
        %v8767 = vrot.slane %v8765, 4
        %v8768 = vshll.u32 %v8688, 16
        %v8770 = vrot.slane %v8768, 5
        %v8771 = vor.u32 %v8767, %v8770
        %v8772 = vrot.slane %v8771, 4
        %v8774 = vshll.u32 %v8689, 16
        %v8776 = vrot.slane %v8774, 5
        %v8777 = vsel %vm1575, %v8772, %v8776
        %v8779 = vshrl.u32 %v8690, 16
        %v8781 = vrot.slane %v8779, 4
        %v8782 = vshll.u32 %v8690, 16
        %v8784 = vrot.slane %v8782, 5
        %v8785 = vor.u32 %v8781, %v8784
        %v8786 = vrot.slane %v8785, 4
        %v8788 = vshll.u32 %v8691, 16
        %v8790 = vrot.slane %v8788, 5
        %v8791 = vsel %vm1575, %v8786, %v8790
        %v8793 = vshrl.u32 %v8692, 16
        %v8795 = vrot.slane %v8793, 4
        %v8796 = vshll.u32 %v8692, 16
        %v8798 = vrot.slane %v8796, 5
        %v8799 = vor.u32 %v8795, %v8798
        %v8800 = vrot.slane %v8799, 4
        %v8802 = vshll.u32 %v8693, 16
        %v8804 = vrot.slane %v8802, 5
        %v8805 = vsel %vm1575, %v8800, %v8804
        %8814 = vst [vmem:[#allocation7 + $0x10] sm:$0xf] %v8707
        %8815 = vst [vmem:[#allocation7 + $0x34] sm:$0xf] %v8721
        %8816 = vst [vmem:[#allocation7 + $0x58] sm:$0xf] %v8735
        %8817 = vst [vmem:[#allocation7 + $0x7c] sm:$0xf] %v8749
        %8818 = vst [vmem:[#allocation7 + $0xa0] sm:$0xf] %v8763
        %8819 = vst [vmem:[#allocation7 + $0xc4] sm:$0xf] %v8777
        %8820 = vst [vmem:[#allocation7 + $0xe8] sm:$0xf] %v8791
        %8821 = vst [vmem:[#allocation7 + $0x10c] sm:$0xf] %v8805
        %v8822 = vld [vmem:[%s8369] sm:$0xe]
        %v8823 = vld [vmem:[%s8369 + $0x4] sm:$0x1]
        %v8824 = vld [vmem:[%s8369 + $0x8] sm:$0xe]
        %v8825 = vld [vmem:[%s8369 + $0xc] sm:$0x1]
        %v8826 = vld [vmem:[%s8369 + $0x10] sm:$0xe]
        %v8827 = vld [vmem:[%s8369 + $0x14] sm:$0x1]
        %v8828 = vld [vmem:[%s8369 + $0x18] sm:$0xe]
        %v8829 = vld [vmem:[%s8369 + $0x1c] sm:$0x1]
        %v8830 = vld [vmem:[%s8369 + $0x20] sm:$0xe]
        %v8831 = vld [vmem:[%s8369 + $0x24] sm:$0x1]
        %v8832 = vld [vmem:[%s8369 + $0x28] sm:$0xe]
        %v8833 = vld [vmem:[%s8369 + $0x2c] sm:$0x1]
        %v8834 = vld [vmem:[%s8369 + $0x30] sm:$0xe]
        %v8835 = vld [vmem:[%s8369 + $0x34] sm:$0x1]
        %v8836 = vld [vmem:[%s8369 + $0x38] sm:$0xe]
        %v8837 = vld [vmem:[%s8369 + $0x3c] sm:$0x1]
        %v8854 = vrot.slane %v8822, 5
        %v8855 = vrot.slane %v8854, 4
        %v8856 = vrot.slane %v8823, 5
        %v8857 = vsel %vm2187, %v8855, %v8856
        %v8858 = vrot.slane %v8824, 5
        %v8859 = vrot.slane %v8858, 4
        %v8860 = vrot.slane %v8825, 5
        %v8861 = vsel %vm2187, %v8859, %v8860
        %v8862 = vrot.slane %v8826, 5
        %v8863 = vrot.slane %v8862, 4
        %v8864 = vrot.slane %v8827, 5
        %v8865 = vsel %vm2187, %v8863, %v8864
        %v8866 = vrot.slane %v8828, 5
        %v8867 = vrot.slane %v8866, 4
        %v8868 = vrot.slane %v8829, 5
        %v8869 = vsel %vm2187, %v8867, %v8868
        %v8870 = vrot.slane %v8830, 5
        %v8871 = vrot.slane %v8870, 4
        %v8872 = vrot.slane %v8831, 5
        %v8873 = vsel %vm2187, %v8871, %v8872
        %v8874 = vrot.slane %v8832, 5
        %v8875 = vrot.slane %v8874, 4
        %v8876 = vrot.slane %v8833, 5
        %v8877 = vsel %vm2187, %v8875, %v8876
        %v8878 = vrot.slane %v8834, 5
        %v8879 = vrot.slane %v8878, 4
        %v8880 = vrot.slane %v8835, 5
        %v8881 = vsel %vm2187, %v8879, %v8880
        %v8882 = vrot.slane %v8836, 5
        %v8883 = vrot.slane %v8882, 4
        %v8884 = vrot.slane %v8837, 5
        %v8885 = vsel %vm2187, %v8883, %v8884
        %8894 = vst [vmem:[#allocation7 + $0x14] sm:$0xf] %v8857
        %8895 = vst [vmem:[#allocation7 + $0x38] sm:$0xf] %v8861
        %8896 = vst [vmem:[#allocation7 + $0x5c] sm:$0xf] %v8865
        %8897 = vst [vmem:[#allocation7 + $0x80] sm:$0xf] %v8869
        %8898 = vst [vmem:[#allocation7 + $0xa4] sm:$0xf] %v8873
        %8899 = vst [vmem:[#allocation7 + $0xc8] sm:$0xf] %v8877
        %8900 = vst [vmem:[#allocation7 + $0xec] sm:$0xf] %v8881
        %8901 = vst [vmem:[#allocation7 + $0x110] sm:$0xf] %v8885
        %s8902 = scalar_lea.vmem [#allocation6], 16
        %v8903 = vld [vmem:[%s8902] sm:$0xf]
        %v8904 = vld [vmem:[%s8902 + $0x8] sm:$0xf]
        %v8905 = vld [vmem:[%s8902 + $0x10] sm:$0xf]
        %v8906 = vld [vmem:[%s8902 + $0x18] sm:$0xf]
        %v8907 = vld [vmem:[%s8902 + $0x20] sm:$0xf]
        %v8908 = vld [vmem:[%s8902 + $0x28] sm:$0xf]
        %v8909 = vld [vmem:[%s8902 + $0x30] sm:$0xf]
        %v8910 = vld [vmem:[%s8902 + $0x38] sm:$0xf]
        %8911 = vst [vmem:[#allocation7 + $0x18] sm:$0xf] %v8903
        %8912 = vst [vmem:[#allocation7 + $0x3c] sm:$0xf] %v8904
        %8913 = vst [vmem:[#allocation7 + $0x60] sm:$0xf] %v8905
        %8914 = vst [vmem:[#allocation7 + $0x84] sm:$0xf] %v8906
        %8915 = vst [vmem:[#allocation7 + $0xa8] sm:$0xf] %v8907
        %8916 = vst [vmem:[#allocation7 + $0xcc] sm:$0xf] %v8908
        %8917 = vst [vmem:[#allocation7 + $0xf0] sm:$0xf] %v8909
        %8918 = vst [vmem:[#allocation7 + $0x114] sm:$0xf] %v8910
        %v8919 = vld [vmem:[%s8902] sm:$0xf]
        %v8920 = vld [vmem:[%s8902 + $0x4] sm:$0x1]
        %v8921 = vld [vmem:[%s8902 + $0x8] sm:$0xf]
        %v8922 = vld [vmem:[%s8902 + $0xc] sm:$0x1]
        %v8923 = vld [vmem:[%s8902 + $0x10] sm:$0xf]
        %v8924 = vld [vmem:[%s8902 + $0x14] sm:$0x1]
        %v8925 = vld [vmem:[%s8902 + $0x18] sm:$0xf]
        %v8926 = vld [vmem:[%s8902 + $0x1c] sm:$0x1]
        %v8927 = vld [vmem:[%s8902 + $0x20] sm:$0xf]
        %v8928 = vld [vmem:[%s8902 + $0x24] sm:$0x1]
        %v8929 = vld [vmem:[%s8902 + $0x28] sm:$0xf]
        %v8930 = vld [vmem:[%s8902 + $0x2c] sm:$0x1]
        %v8931 = vld [vmem:[%s8902 + $0x30] sm:$0xf]
        %v8932 = vld [vmem:[%s8902 + $0x34] sm:$0x1]
        %v8933 = vld [vmem:[%s8902 + $0x38] sm:$0xf]
        %v8934 = vld [vmem:[%s8902 + $0x3c] sm:$0x1]
        %v8936 = vshrl.u32 %v8919, 16
        %v8938 = vrot.slane %v8936, 4
        %v8939 = vshll.u32 %v8919, 16
        %v8941 = vrot.slane %v8939, 5
        %v8942 = vor.u32 %v8938, %v8941
        %v8943 = vrot.slane %v8942, 4
        %v8945 = vshll.u32 %v8920, 16
        %v8947 = vrot.slane %v8945, 5
        %v8948 = vsel %vm1575, %v8943, %v8947
        %v8950 = vshrl.u32 %v8921, 16
        %v8952 = vrot.slane %v8950, 4
        %v8953 = vshll.u32 %v8921, 16
        %v8955 = vrot.slane %v8953, 5
        %v8956 = vor.u32 %v8952, %v8955
        %v8957 = vrot.slane %v8956, 4
        %v8959 = vshll.u32 %v8922, 16
        %v8961 = vrot.slane %v8959, 5
        %v8962 = vsel %vm1575, %v8957, %v8961
        %v8964 = vshrl.u32 %v8923, 16
        %v8966 = vrot.slane %v8964, 4
        %v8967 = vshll.u32 %v8923, 16
        %v8969 = vrot.slane %v8967, 5
        %v8970 = vor.u32 %v8966, %v8969
        %v8971 = vrot.slane %v8970, 4
        %v8973 = vshll.u32 %v8924, 16
        %v8975 = vrot.slane %v8973, 5
        %v8976 = vsel %vm1575, %v8971, %v8975
        %v8978 = vshrl.u32 %v8925, 16
        %v8980 = vrot.slane %v8978, 4
        %v8981 = vshll.u32 %v8925, 16
        %v8983 = vrot.slane %v8981, 5
        %v8984 = vor.u32 %v8980, %v8983
        %v8985 = vrot.slane %v8984, 4
        %v8987 = vshll.u32 %v8926, 16
        %v8989 = vrot.slane %v8987, 5
        %v8990 = vsel %vm1575, %v8985, %v8989
        %v8992 = vshrl.u32 %v8927, 16
        %v8994 = vrot.slane %v8992, 4
        %v8995 = vshll.u32 %v8927, 16
        %v8997 = vrot.slane %v8995, 5
        %v8998 = vor.u32 %v8994, %v8997
        %v8999 = vrot.slane %v8998, 4
        %v9001 = vshll.u32 %v8928, 16
        %v9003 = vrot.slane %v9001, 5
        %v9004 = vsel %vm1575, %v8999, %v9003
        %v9006 = vshrl.u32 %v8929, 16
        %v9008 = vrot.slane %v9006, 4
        %v9009 = vshll.u32 %v8929, 16
        %v9011 = vrot.slane %v9009, 5
        %v9012 = vor.u32 %v9008, %v9011
        %v9013 = vrot.slane %v9012, 4
        %v9015 = vshll.u32 %v8930, 16
        %v9017 = vrot.slane %v9015, 5
        %v9018 = vsel %vm1575, %v9013, %v9017
        %v9020 = vshrl.u32 %v8931, 16
        %v9022 = vrot.slane %v9020, 4
        %v9023 = vshll.u32 %v8931, 16
        %v9025 = vrot.slane %v9023, 5
        %v9026 = vor.u32 %v9022, %v9025
        %v9027 = vrot.slane %v9026, 4
        %v9029 = vshll.u32 %v8932, 16
        %v9031 = vrot.slane %v9029, 5
        %v9032 = vsel %vm1575, %v9027, %v9031
        %v9034 = vshrl.u32 %v8933, 16
        %v9036 = vrot.slane %v9034, 4
        %v9037 = vshll.u32 %v8933, 16
        %v9039 = vrot.slane %v9037, 5
        %v9040 = vor.u32 %v9036, %v9039
        %v9041 = vrot.slane %v9040, 4
        %v9043 = vshll.u32 %v8934, 16
        %v9045 = vrot.slane %v9043, 5
        %v9046 = vsel %vm1575, %v9041, %v9045
        %9055 = vst [vmem:[#allocation7 + $0x1c] sm:$0xf] %v8948
        %9056 = vst [vmem:[#allocation7 + $0x40] sm:$0xf] %v8962
        %9057 = vst [vmem:[#allocation7 + $0x64] sm:$0xf] %v8976
        %9058 = vst [vmem:[#allocation7 + $0x88] sm:$0xf] %v8990
        %9059 = vst [vmem:[#allocation7 + $0xac] sm:$0xf] %v9004
        %9060 = vst [vmem:[#allocation7 + $0xd0] sm:$0xf] %v9018
        %9061 = vst [vmem:[#allocation7 + $0xf4] sm:$0xf] %v9032
        %9062 = vst [vmem:[#allocation7 + $0x118] sm:$0xf] %v9046
        %v9063 = vld [vmem:[%s8902] sm:$0xe]
        %v9064 = vld [vmem:[%s8902 + $0x4] sm:$0x1]
        %v9065 = vld [vmem:[%s8902 + $0x8] sm:$0xe]
        %v9066 = vld [vmem:[%s8902 + $0xc] sm:$0x1]
        %v9067 = vld [vmem:[%s8902 + $0x10] sm:$0xe]
        %v9068 = vld [vmem:[%s8902 + $0x14] sm:$0x1]
        %v9069 = vld [vmem:[%s8902 + $0x18] sm:$0xe]
        %v9070 = vld [vmem:[%s8902 + $0x1c] sm:$0x1]
        %v9071 = vld [vmem:[%s8902 + $0x20] sm:$0xe]
        %v9072 = vld [vmem:[%s8902 + $0x24] sm:$0x1]
        %v9073 = vld [vmem:[%s8902 + $0x28] sm:$0xe]
        %v9074 = vld [vmem:[%s8902 + $0x2c] sm:$0x1]
        %v9075 = vld [vmem:[%s8902 + $0x30] sm:$0xe]
        %v9076 = vld [vmem:[%s8902 + $0x34] sm:$0x1]
        %v9077 = vld [vmem:[%s8902 + $0x38] sm:$0xe]
        %v9078 = vld [vmem:[%s8902 + $0x3c] sm:$0x1]
        %v9095 = vrot.slane %v9063, 5
        %v9096 = vrot.slane %v9095, 4
        %v9097 = vrot.slane %v9064, 5
        %v9098 = vsel %vm2187, %v9096, %v9097
        %v9099 = vrot.slane %v9065, 5
        %v9100 = vrot.slane %v9099, 4
        %v9101 = vrot.slane %v9066, 5
        %v9102 = vsel %vm2187, %v9100, %v9101
        %v9103 = vrot.slane %v9067, 5
        %v9104 = vrot.slane %v9103, 4
        %v9105 = vrot.slane %v9068, 5
        %v9106 = vsel %vm2187, %v9104, %v9105
        %v9107 = vrot.slane %v9069, 5
        %v9108 = vrot.slane %v9107, 4
        %v9109 = vrot.slane %v9070, 5
        %v9110 = vsel %vm2187, %v9108, %v9109
        %v9111 = vrot.slane %v9071, 5
        %v9112 = vrot.slane %v9111, 4
        %v9113 = vrot.slane %v9072, 5
        %v9114 = vsel %vm2187, %v9112, %v9113
        %v9115 = vrot.slane %v9073, 5
        %v9116 = vrot.slane %v9115, 4
        %v9117 = vrot.slane %v9074, 5
        %v9118 = vsel %vm2187, %v9116, %v9117
        %v9119 = vrot.slane %v9075, 5
        %v9120 = vrot.slane %v9119, 4
        %v9121 = vrot.slane %v9076, 5
        %v9122 = vsel %vm2187, %v9120, %v9121
        %v9123 = vrot.slane %v9077, 5
        %v9124 = vrot.slane %v9123, 4
        %v9125 = vrot.slane %v9078, 5
        %v9126 = vsel %vm2187, %v9124, %v9125
        %9135 = vst [vmem:[#allocation7 + $0x20] sm:$0xf] %v9098
        %9136 = vst [vmem:[#allocation7 + $0x44] sm:$0xf] %v9102
        %9137 = vst [vmem:[#allocation7 + $0x68] sm:$0xf] %v9106
        %9138 = vst [vmem:[#allocation7 + $0x8c] sm:$0xf] %v9110
        %9139 = vst [vmem:[#allocation7 + $0xb0] sm:$0xf] %v9114
        %9140 = vst [vmem:[#allocation7 + $0xd4] sm:$0xf] %v9118
        %9141 = vst [vmem:[#allocation7 + $0xf8] sm:$0xf] %v9122
        %9142 = vst [vmem:[#allocation7 + $0x11c] sm:$0xf] %v9126
        %v9143 = vld [vmem:[#allocation7] sm:$0xff]
        %v9144 = vld [vmem:[#allocation7 + $0x8] sm:$0xff]
        %v9145 = vld [vmem:[#allocation7 + $0x10] sm:$0xff]
        %v9146 = vld [vmem:[#allocation7 + $0x18] sm:$0xff]
        %v9147 = vld [vmem:[#allocation7 + $0x20] sm:$0xf]
        %v9148 = vld [vmem:[#allocation7 + $0x24] sm:$0xff]
        %v9149 = vld [vmem:[#allocation7 + $0x2c] sm:$0xff]
        %v9150 = vld [vmem:[#allocation7 + $0x34] sm:$0xff]
        %v9151 = vld [vmem:[#allocation7 + $0x3c] sm:$0xff]
        %v9152 = vld [vmem:[#allocation7 + $0x44] sm:$0xf]
        %v9153 = vld [vmem:[#allocation7 + $0x48] sm:$0xff]
        %v9154 = vld [vmem:[#allocation7 + $0x50] sm:$0xff]
        %v9155 = vld [vmem:[#allocation7 + $0x58] sm:$0xff]
        %v9156 = vld [vmem:[#allocation7 + $0x60] sm:$0xff]
        %v9157 = vld [vmem:[#allocation7 + $0x68] sm:$0xf]
        %v9158 = vld [vmem:[#allocation7 + $0x6c] sm:$0xff]
        %v9159 = vld [vmem:[#allocation7 + $0x74] sm:$0xff]
        %v9160 = vld [vmem:[#allocation7 + $0x7c] sm:$0xff]
        %v9161 = vld [vmem:[#allocation7 + $0x84] sm:$0xff]
        %v9162 = vld [vmem:[#allocation7 + $0x8c] sm:$0xf]
        %v9163 = vld [vmem:[#allocation7 + $0x90] sm:$0xff]
        %v9164 = vld [vmem:[#allocation7 + $0x98] sm:$0xff]
        %v9165 = vld [vmem:[#allocation7 + $0xa0] sm:$0xff]
        %v9166 = vld [vmem:[#allocation7 + $0xa8] sm:$0xff]
        %v9167 = vld [vmem:[#allocation7 + $0xb0] sm:$0xf]
        %v9168 = vld [vmem:[#allocation7 + $0xb4] sm:$0xff]
        %v9169 = vld [vmem:[#allocation7 + $0xbc] sm:$0xff]
        %v9170 = vld [vmem:[#allocation7 + $0xc4] sm:$0xff]
        %v9171 = vld [vmem:[#allocation7 + $0xcc] sm:$0xff]
        %v9172 = vld [vmem:[#allocation7 + $0xd4] sm:$0xf]
        %v9173 = vld [vmem:[#allocation7 + $0xd8] sm:$0xff]
        %v9174 = vld [vmem:[#allocation7 + $0xe0] sm:$0xff]
        %v9175 = vld [vmem:[#allocation7 + $0xe8] sm:$0xff]
        %v9176 = vld [vmem:[#allocation7 + $0xf0] sm:$0xff]
        %v9177 = vld [vmem:[#allocation7 + $0xf8] sm:$0xf]
        %v9178 = vld [vmem:[#allocation7 + $0xfc] sm:$0xff]
        %v9179 = vld [vmem:[#allocation7 + $0x104] sm:$0xff]
        %v9180 = vld [vmem:[#allocation7 + $0x10c] sm:$0xff]
        %v9181 = vld [vmem:[#allocation7 + $0x114] sm:$0xff]
        %v9182 = vld [vmem:[#allocation7 + $0x11c] sm:$0xf]
        %v9183 = vld [vmem:[%s7] sm:$0xf]
        %v9184 = vld [vmem:[%s7 + $0x4] sm:$0xf]
        %v9185 = vld [vmem:[%s7 + $0x8] sm:$0xf]
        %v9186 = vld [vmem:[%s7 + $0xc] sm:$0xf]
        %v9187 = vld [vmem:[%s7 + $0x10] sm:$0xf]
        %v9188 = vld [vmem:[%s7 + $0x14] sm:$0xf]
        %v9189 = vld [vmem:[%s7 + $0x18] sm:$0xf]
        %v9190 = vld [vmem:[%s7 + $0x1c] sm:$0xf]
        %v9191 = vld [vmem:[%s7 + $0x20] sm:$0xf]
        %v9192 = vld [vmem:[%s7 + $0x24] sm:$0xf]
        %v9193 = vld [vmem:[%s7 + $0x28] sm:$0xf]
        %v9194 = vld [vmem:[%s7 + $0x2c] sm:$0xf]
        %v9195 = vld [vmem:[%s7 + $0x30] sm:$0xf]
        %v9196 = vld [vmem:[%s7 + $0x34] sm:$0xf]
        %v9197 = vld [vmem:[%s7 + $0x38] sm:$0xf]
        %v9198 = vld [vmem:[%s7 + $0x3c] sm:$0xf]
        %v9199 = vld [vmem:[%s7 + $0x40] sm:$0xf]
        %v9200 = vld [vmem:[%s7 + $0x44] sm:$0xf]
        %v9201 = vld [vmem:[%s7 + $0x48] sm:$0xf]
        %v9202 = vld [vmem:[%s7 + $0x4c] sm:$0xf]
        %v9203 = vld [vmem:[%s7 + $0x50] sm:$0xf]
        %v9204 = vld [vmem:[%s7 + $0x54] sm:$0xf]
        %v9205 = vld [vmem:[%s7 + $0x58] sm:$0xf]
        %v9206 = vld [vmem:[%s7 + $0x5c] sm:$0xf]
        %v9207 = vld [vmem:[%s7 + $0x60] sm:$0xf]
        %v9208 = vld [vmem:[%s7 + $0x64] sm:$0xf]
        %v9209 = vld [vmem:[%s7 + $0x68] sm:$0xf]
        %v9210 = vld [vmem:[%s7 + $0x6c] sm:$0xf]
        %v9211 = vld [vmem:[%s7 + $0x70] sm:$0xf]
        %v9212 = vld [vmem:[%s7 + $0x74] sm:$0xf]
        %v9213 = vld [vmem:[%s7 + $0x78] sm:$0xf]
        %v9214 = vld [vmem:[%s7 + $0x7c] sm:$0xf]
        %v9215 = vld [vmem:[%s7 + $0x80] sm:$0xf]
        %v9216 = vld [vmem:[%s7 + $0x84] sm:$0xf]
        %v9217 = vld [vmem:[%s7 + $0x88] sm:$0xf]
        %v9218 = vld [vmem:[%s7 + $0x8c] sm:$0xf]
        %v9219 = vld [vmem:[%s7 + $0x90] sm:$0xf]
        %v9220 = vld [vmem:[%s7 + $0x94] sm:$0xf]
        %v9221 = vld [vmem:[%s7 + $0x98] sm:$0xf]
        %v9222 = vld [vmem:[%s7 + $0x9c] sm:$0xf]
        %v9223 = vld [vmem:[%s7 + $0xa0] sm:$0xf]
        %v9224 = vld [vmem:[%s7 + $0xa4] sm:$0xf]
        %v9225 = vld [vmem:[%s7 + $0xa8] sm:$0xf]
        %v9226 = vld [vmem:[%s7 + $0xac] sm:$0xf]
        %v9227 = vld [vmem:[%s7 + $0xb0] sm:$0xf]
        %v9228 = vld [vmem:[%s7 + $0xb4] sm:$0xf]
        %v9229 = vld [vmem:[%s7 + $0xb8] sm:$0xf]
        %v9230 = vld [vmem:[%s7 + $0xbc] sm:$0xf]
        %v9231 = vld [vmem:[%s7 + $0xc0] sm:$0xf]
        %v9232 = vld [vmem:[%s7 + $0xc4] sm:$0xf]
        %v9233 = vld [vmem:[%s7 + $0xc8] sm:$0xf]
        %v9234 = vld [vmem:[%s7 + $0xcc] sm:$0xf]
        %v9235 = vld [vmem:[%s7 + $0xd0] sm:$0xf]
        %v9236 = vld [vmem:[%s7 + $0xd4] sm:$0xf]
        %v9237 = vld [vmem:[%s7 + $0xd8] sm:$0xf]
        %v9238 = vld [vmem:[%s7 + $0xdc] sm:$0xf]
        %v9239 = vld [vmem:[%s7 + $0xe0] sm:$0xf]
        %v9240 = vld [vmem:[%s7 + $0xe4] sm:$0xf]
        %v9241 = vld [vmem:[%s7 + $0xe8] sm:$0xf]
        %v9242 = vld [vmem:[%s7 + $0xec] sm:$0xf]
        %v9243 = vld [vmem:[%s7 + $0xf0] sm:$0xf]
        %v9244 = vld [vmem:[%s7 + $0xf4] sm:$0xf]
        %v9245 = vld [vmem:[%s7 + $0xf8] sm:$0xf]
        %v9246 = vld [vmem:[%s7 + $0xfc] sm:$0xf]
        %v9247 = vld [vmem:[%s7 + $0x100] sm:$0xf]
        %v9248 = vld [vmem:[%s7 + $0x104] sm:$0xf]
        %v9249 = vld [vmem:[%s7 + $0x108] sm:$0xf]
        %v9250 = vld [vmem:[%s7 + $0x10c] sm:$0xf]
        %v9251 = vld [vmem:[%s7 + $0x110] sm:$0xf]
        %v9252 = vld [vmem:[%s7 + $0x114] sm:$0xf]
        %v9253 = vld [vmem:[%s7 + $0x118] sm:$0xf]
        %v9254 = vld [vmem:[%s7 + $0x11c] sm:$0xf]
        %v9255 = vld [vmem:[%s7 + $0x120] sm:$0xf]
        %v9256 = vld [vmem:[%s7 + $0x124] sm:$0xf]
        %v9257 = vld [vmem:[%s7 + $0x128] sm:$0xf]
        %v9258 = vld [vmem:[%s7 + $0x12c] sm:$0xf]
        %v9259 = vld [vmem:[%s7 + $0x130] sm:$0xf]
        %v9260 = vld [vmem:[%s7 + $0x134] sm:$0xf]
        %v9261 = vld [vmem:[%s7 + $0x138] sm:$0xf]
        %v9262 = vld [vmem:[%s7 + $0x13c] sm:$0xf]
        %v9263 = vld [vmem:[%s7 + $0x140] sm:$0xf]
        %v9264 = vld [vmem:[%s7 + $0x144] sm:$0xf]
        %v9265 = vld [vmem:[%s7 + $0x148] sm:$0xf]
        %v9266 = vld [vmem:[%s7 + $0x14c] sm:$0xf]
        %v9267 = vld [vmem:[%s7 + $0x150] sm:$0xf]
        %v9268 = vld [vmem:[%s7 + $0x154] sm:$0xf]
        %v9269 = vld [vmem:[%s7 + $0x158] sm:$0xf]
        %v9270 = vld [vmem:[%s7 + $0x15c] sm:$0xf]
        %v9271 = vld [vmem:[%s7 + $0x160] sm:$0xf]
        %v9272 = vld [vmem:[%s7 + $0x164] sm:$0xf]
        %v9273 = vld [vmem:[%s7 + $0x168] sm:$0xf]
        %v9274 = vld [vmem:[%s7 + $0x16c] sm:$0xf]
        %v9275 = vld [vmem:[%s7 + $0x170] sm:$0xf]
        %v9276 = vld [vmem:[%s7 + $0x174] sm:$0xf]
        %v9277 = vld [vmem:[%s7 + $0x178] sm:$0xf]
        %v9278 = vld [vmem:[%s7 + $0x17c] sm:$0xf]
        %v9279 = vld [vmem:[%s7 + $0x180] sm:$0xf]
        %v9280 = vld [vmem:[%s7 + $0x184] sm:$0xf]
        %v9281 = vld [vmem:[%s7 + $0x188] sm:$0xf]
        %v9282 = vld [vmem:[%s7 + $0x18c] sm:$0xf]
        %v9283 = vld [vmem:[%s7 + $0x190] sm:$0xf]
        %v9284 = vld [vmem:[%s7 + $0x194] sm:$0xf]
        %v9285 = vld [vmem:[%s7 + $0x198] sm:$0xf]
        %v9286 = vld [vmem:[%s7 + $0x19c] sm:$0xf]
        %v9287 = vld [vmem:[%s7 + $0x1a0] sm:$0xf]
        %v9288 = vld [vmem:[%s7 + $0x1a4] sm:$0xf]
        %v9289 = vld [vmem:[%s7 + $0x1a8] sm:$0xf]
        %v9290 = vld [vmem:[%s7 + $0x1ac] sm:$0xf]
        %v9291 = vld [vmem:[%s7 + $0x1b0] sm:$0xf]
        %v9292 = vld [vmem:[%s7 + $0x1b4] sm:$0xf]
        %v9293 = vld [vmem:[%s7 + $0x1b8] sm:$0xf]
        %v9294 = vld [vmem:[%s7 + $0x1bc] sm:$0xf]
        %v9295 = vld [vmem:[%s7 + $0x1c0] sm:$0xf]
        %v9296 = vld [vmem:[%s7 + $0x1c4] sm:$0xf]
        %v9297 = vld [vmem:[%s7 + $0x1c8] sm:$0xf]
        %v9298 = vld [vmem:[%s7 + $0x1cc] sm:$0xf]
        %v9299 = vld [vmem:[%s7 + $0x1d0] sm:$0xf]
        %v9300 = vld [vmem:[%s7 + $0x1d4] sm:$0xf]
        %v9301 = vld [vmem:[%s7 + $0x1d8] sm:$0xf]
        %v9302 = vld [vmem:[%s7 + $0x1dc] sm:$0xf]
        %v9303 = vld [vmem:[%s7 + $0x1e0] sm:$0xf]
        %v9304 = vld [vmem:[%s7 + $0x1e4] sm:$0xf]
        %v9305 = vld [vmem:[%s7 + $0x1e8] sm:$0xf]
        %v9306 = vld [vmem:[%s7 + $0x1ec] sm:$0xf]
        %v9307 = vld [vmem:[%s7 + $0x1f0] sm:$0xf]
        %v9308 = vld [vmem:[%s7 + $0x1f4] sm:$0xf]
        %v9309 = vld [vmem:[%s7 + $0x1f8] sm:$0xf]
        %v9310 = vld [vmem:[%s7 + $0x1fc] sm:$0xf]
        %v9311 = vld [vmem:[%s7 + $0x200] sm:$0xf]
        %v9312 = vld [vmem:[%s7 + $0x204] sm:$0xf]
        %v9313 = vld [vmem:[%s7 + $0x208] sm:$0xf]
        %v9314 = vld [vmem:[%s7 + $0x20c] sm:$0xf]
        %v9315 = vld [vmem:[%s7 + $0x210] sm:$0xf]
        %v9316 = vld [vmem:[%s7 + $0x214] sm:$0xf]
        %v9317 = vld [vmem:[%s7 + $0x218] sm:$0xf]
        %v9318 = vld [vmem:[%s7 + $0x21c] sm:$0xf]
        %v9319 = vld [vmem:[%s7 + $0x220] sm:$0xf]
        %v9320 = vld [vmem:[%s7 + $0x224] sm:$0xf]
        %v9321 = vld [vmem:[%s7 + $0x228] sm:$0xf]
        %v9322 = vld [vmem:[%s7 + $0x22c] sm:$0xf]
        %v9323 = vld [vmem:[%s7 + $0x230] sm:$0xf]
        %v9324 = vld [vmem:[%s7 + $0x234] sm:$0xf]
        %v9325 = vld [vmem:[%s7 + $0x238] sm:$0xf]
        %v9326 = vld [vmem:[%s7 + $0x23c] sm:$0xf]
        %v9327 = vld [vmem:[%s8] sm:$0x1]
        %v9329 = vlaneseq
        %v9330 = vshrl.u32 %v9329, 7
        %v9331 = vsub.s32 0, %v9330
        %v9332 = vrot.slane %v9327, %v9331
        %v9374 = vunpack.c.l.b16 %v9143
        %v9375 = vunpack.c.h.b16 %v9143
        %v9376 = vunpack.c.l.b16 %v9144
        %v9377 = vunpack.c.h.b16 %v9144
        %v9378 = vunpack.c.l.b16 %v9145
        %v9379 = vunpack.c.h.b16 %v9145
        %v9380 = vunpack.c.l.b16 %v9146
        %v9381 = vunpack.c.h.b16 %v9146
        %v9382 = vunpack.c.l.b16 %v9147
        %v9383 = vunpack.c.l.b16 %v9148
        %v9384 = vunpack.c.h.b16 %v9148
        %v9385 = vunpack.c.l.b16 %v9149
        %v9386 = vunpack.c.h.b16 %v9149
        %v9387 = vunpack.c.l.b16 %v9150
        %v9388 = vunpack.c.h.b16 %v9150
        %v9389 = vunpack.c.l.b16 %v9151
        %v9390 = vunpack.c.h.b16 %v9151
        %v9391 = vunpack.c.l.b16 %v9152
        %v9392 = vunpack.c.l.b16 %v9153
        %v9393 = vunpack.c.h.b16 %v9153
        %v9394 = vunpack.c.l.b16 %v9154
        %v9395 = vunpack.c.h.b16 %v9154
        %v9396 = vunpack.c.l.b16 %v9155
        %v9397 = vunpack.c.h.b16 %v9155
        %v9398 = vunpack.c.l.b16 %v9156
        %v9399 = vunpack.c.h.b16 %v9156
        %v9400 = vunpack.c.l.b16 %v9157
        %v9401 = vunpack.c.l.b16 %v9158
        %v9402 = vunpack.c.h.b16 %v9158
        %v9403 = vunpack.c.l.b16 %v9159
        %v9404 = vunpack.c.h.b16 %v9159
        %v9405 = vunpack.c.l.b16 %v9160
        %v9406 = vunpack.c.h.b16 %v9160
        %v9407 = vunpack.c.l.b16 %v9161
        %v9408 = vunpack.c.h.b16 %v9161
        %v9409 = vunpack.c.l.b16 %v9162
        %v9410 = vunpack.c.l.b16 %v9163
        %v9411 = vunpack.c.h.b16 %v9163
        %v9412 = vunpack.c.l.b16 %v9164
        %v9413 = vunpack.c.h.b16 %v9164
        %v9414 = vunpack.c.l.b16 %v9165
        %v9415 = vunpack.c.h.b16 %v9165
        %v9416 = vunpack.c.l.b16 %v9166
        %v9417 = vunpack.c.h.b16 %v9166
        %v9418 = vunpack.c.l.b16 %v9167
        %v9419 = vunpack.c.l.b16 %v9168
        %v9420 = vunpack.c.h.b16 %v9168
        %v9421 = vunpack.c.l.b16 %v9169
        %v9422 = vunpack.c.h.b16 %v9169
        %v9423 = vunpack.c.l.b16 %v9170
        %v9424 = vunpack.c.h.b16 %v9170
        %v9425 = vunpack.c.l.b16 %v9171
        %v9426 = vunpack.c.h.b16 %v9171
        %v9427 = vunpack.c.l.b16 %v9172
        %v9428 = vunpack.c.l.b16 %v9173
        %v9429 = vunpack.c.h.b16 %v9173
        %v9430 = vunpack.c.l.b16 %v9174
        %v9431 = vunpack.c.h.b16 %v9174
        %v9432 = vunpack.c.l.b16 %v9175
        %v9433 = vunpack.c.h.b16 %v9175
        %v9434 = vunpack.c.l.b16 %v9176
        %v9435 = vunpack.c.h.b16 %v9176
        %v9436 = vunpack.c.l.b16 %v9177
        %v9437 = vunpack.c.l.b16 %v9178
        %v9438 = vunpack.c.h.b16 %v9178
        %v9439 = vunpack.c.l.b16 %v9179
        %v9440 = vunpack.c.h.b16 %v9179
        %v9441 = vunpack.c.l.b16 %v9180
        %v9442 = vunpack.c.h.b16 %v9180
        %v9443 = vunpack.c.l.b16 %v9181
        %v9444 = vunpack.c.h.b16 %v9181
        %v9445 = vunpack.c.l.b16 %v9182
        %v9446 = vpack.c.b16 %v9383, %v9374
        %v9447 = vpack.c.b16 %v9384, %v9375
        %v9448 = vpack.c.b16 %v9385, %v9376
        %v9449 = vpack.c.b16 %v9386, %v9377
        %v9450 = vpack.c.b16 %v9387, %v9378
        %v9451 = vpack.c.b16 %v9388, %v9379
        %v9452 = vpack.c.b16 %v9389, %v9380
        %v9453 = vpack.c.b16 %v9390, %v9381
        %v9454 = vpack.c.b16 %v9391, %v9382
        %v9455 = vpack.c.b16 %v9401, %v9392
        %v9456 = vpack.c.b16 %v9402, %v9393
        %v9457 = vpack.c.b16 %v9403, %v9394
        %v9458 = vpack.c.b16 %v9404, %v9395
        %v9459 = vpack.c.b16 %v9405, %v9396
        %v9460 = vpack.c.b16 %v9406, %v9397
        %v9461 = vpack.c.b16 %v9407, %v9398
        %v9462 = vpack.c.b16 %v9408, %v9399
        %v9463 = vpack.c.b16 %v9409, %v9400
        %v9464 = vpack.c.b16 %v9419, %v9410
        %v9465 = vpack.c.b16 %v9420, %v9411
        %v9466 = vpack.c.b16 %v9421, %v9412
        %v9467 = vpack.c.b16 %v9422, %v9413
        %v9468 = vpack.c.b16 %v9423, %v9414
        %v9469 = vpack.c.b16 %v9424, %v9415
        %v9470 = vpack.c.b16 %v9425, %v9416
        %v9471 = vpack.c.b16 %v9426, %v9417
        %v9472 = vpack.c.b16 %v9427, %v9418
        %v9473 = vpack.c.b16 %v9437, %v9428
        %v9474 = vpack.c.b16 %v9438, %v9429
        %v9475 = vpack.c.b16 %v9439, %v9430
        %v9476 = vpack.c.b16 %v9440, %v9431
        %v9477 = vpack.c.b16 %v9441, %v9432
        %v9478 = vpack.c.b16 %v9442, %v9433
        %v9479 = vpack.c.b16 %v9443, %v9434
        %v9480 = vpack.c.b16 %v9444, %v9435
        %v9481 = vpack.c.b16 %v9445, %v9436
        %v9662 = vunpack.c.l.b16 %v9183
        %v9663 = vunpack.c.l.b16 %v9184
        %v9664 = vunpack.c.l.b16 %v9185
        %v9665 = vunpack.c.l.b16 %v9186
        %v9666 = vunpack.c.l.b16 %v9187
        %v9667 = vunpack.c.l.b16 %v9188
        %v9668 = vunpack.c.l.b16 %v9189
        %v9669 = vunpack.c.l.b16 %v9190
        %v9670 = vunpack.c.l.b16 %v9191
        %v9671 = vunpack.c.l.b16 %v9192
        %v9672 = vunpack.c.l.b16 %v9193
        %v9673 = vunpack.c.l.b16 %v9194
        %v9674 = vunpack.c.l.b16 %v9195
        %v9675 = vunpack.c.l.b16 %v9196
        %v9676 = vunpack.c.l.b16 %v9197
        %v9677 = vunpack.c.l.b16 %v9198
        %v9678 = vunpack.c.l.b16 %v9199
        %v9679 = vunpack.c.l.b16 %v9200
        %v9680 = vunpack.c.l.b16 %v9201
        %v9681 = vunpack.c.l.b16 %v9202
        %v9682 = vunpack.c.l.b16 %v9203
        %v9683 = vunpack.c.l.b16 %v9204
        %v9684 = vunpack.c.l.b16 %v9205
        %v9685 = vunpack.c.l.b16 %v9206
        %v9686 = vunpack.c.l.b16 %v9207
        %v9687 = vunpack.c.l.b16 %v9208
        %v9688 = vunpack.c.l.b16 %v9209
        %v9689 = vunpack.c.l.b16 %v9210
        %v9690 = vunpack.c.l.b16 %v9211
        %v9691 = vunpack.c.l.b16 %v9212
        %v9692 = vunpack.c.l.b16 %v9213
        %v9693 = vunpack.c.l.b16 %v9214
        %v9694 = vunpack.c.l.b16 %v9215
        %v9695 = vunpack.c.l.b16 %v9216
        %v9696 = vunpack.c.l.b16 %v9217
        %v9697 = vunpack.c.l.b16 %v9218
        %v9698 = vunpack.c.l.b16 %v9219
        %v9699 = vunpack.c.l.b16 %v9220
        %v9700 = vunpack.c.l.b16 %v9221
        %v9701 = vunpack.c.l.b16 %v9222
        %v9702 = vunpack.c.l.b16 %v9223
        %v9703 = vunpack.c.l.b16 %v9224
        %v9704 = vunpack.c.l.b16 %v9225
        %v9705 = vunpack.c.l.b16 %v9226
        %v9706 = vunpack.c.l.b16 %v9227
        %v9707 = vunpack.c.l.b16 %v9228
        %v9708 = vunpack.c.l.b16 %v9229
        %v9709 = vunpack.c.l.b16 %v9230
        %v9710 = vunpack.c.l.b16 %v9231
        %v9711 = vunpack.c.l.b16 %v9232
        %v9712 = vunpack.c.l.b16 %v9233
        %v9713 = vunpack.c.l.b16 %v9234
        %v9714 = vunpack.c.l.b16 %v9235
        %v9715 = vunpack.c.l.b16 %v9236
        %v9716 = vunpack.c.l.b16 %v9237
        %v9717 = vunpack.c.l.b16 %v9238
        %v9718 = vunpack.c.l.b16 %v9239
        %v9719 = vunpack.c.l.b16 %v9240
        %v9720 = vunpack.c.l.b16 %v9241
        %v9721 = vunpack.c.l.b16 %v9242
        %v9722 = vunpack.c.l.b16 %v9243
        %v9723 = vunpack.c.l.b16 %v9244
        %v9724 = vunpack.c.l.b16 %v9245
        %v9725 = vunpack.c.l.b16 %v9246
        %v9726 = vunpack.c.l.b16 %v9247
        %v9727 = vunpack.c.l.b16 %v9248
        %v9728 = vunpack.c.l.b16 %v9249
        %v9729 = vunpack.c.l.b16 %v9250
        %v9730 = vunpack.c.l.b16 %v9251
        %v9731 = vunpack.c.l.b16 %v9252
        %v9732 = vunpack.c.l.b16 %v9253
        %v9733 = vunpack.c.l.b16 %v9254
        %v9734 = vunpack.c.l.b16 %v9255
        %v9735 = vunpack.c.l.b16 %v9256
        %v9736 = vunpack.c.l.b16 %v9257
        %v9737 = vunpack.c.l.b16 %v9258
        %v9738 = vunpack.c.l.b16 %v9259
        %v9739 = vunpack.c.l.b16 %v9260
        %v9740 = vunpack.c.l.b16 %v9261
        %v9741 = vunpack.c.l.b16 %v9262
        %v9742 = vunpack.c.l.b16 %v9263
        %v9743 = vunpack.c.l.b16 %v9264
        %v9744 = vunpack.c.l.b16 %v9265
        %v9745 = vunpack.c.l.b16 %v9266
        %v9746 = vunpack.c.l.b16 %v9267
        %v9747 = vunpack.c.l.b16 %v9268
        %v9748 = vunpack.c.l.b16 %v9269
        %v9749 = vunpack.c.l.b16 %v9270
        %v9750 = vunpack.c.l.b16 %v9271
        %v9751 = vunpack.c.l.b16 %v9272
        %v9752 = vunpack.c.l.b16 %v9273
        %v9753 = vunpack.c.l.b16 %v9274
        %v9754 = vunpack.c.l.b16 %v9275
        %v9755 = vunpack.c.l.b16 %v9276
        %v9756 = vunpack.c.l.b16 %v9277
        %v9757 = vunpack.c.l.b16 %v9278
        %v9758 = vunpack.c.l.b16 %v9279
        %v9759 = vunpack.c.l.b16 %v9280
        %v9760 = vunpack.c.l.b16 %v9281
        %v9761 = vunpack.c.l.b16 %v9282
        %v9762 = vunpack.c.l.b16 %v9283
        %v9763 = vunpack.c.l.b16 %v9284
        %v9764 = vunpack.c.l.b16 %v9285
        %v9765 = vunpack.c.l.b16 %v9286
        %v9766 = vunpack.c.l.b16 %v9287
        %v9767 = vunpack.c.l.b16 %v9288
        %v9768 = vunpack.c.l.b16 %v9289
        %v9769 = vunpack.c.l.b16 %v9290
        %v9770 = vunpack.c.l.b16 %v9291
        %v9771 = vunpack.c.l.b16 %v9292
        %v9772 = vunpack.c.l.b16 %v9293
        %v9773 = vunpack.c.l.b16 %v9294
        %v9774 = vunpack.c.l.b16 %v9295
        %v9775 = vunpack.c.l.b16 %v9296
        %v9776 = vunpack.c.l.b16 %v9297
        %v9777 = vunpack.c.l.b16 %v9298
        %v9778 = vunpack.c.l.b16 %v9299
        %v9779 = vunpack.c.l.b16 %v9300
        %v9780 = vunpack.c.l.b16 %v9301
        %v9781 = vunpack.c.l.b16 %v9302
        %v9782 = vunpack.c.l.b16 %v9303
        %v9783 = vunpack.c.l.b16 %v9304
        %v9784 = vunpack.c.l.b16 %v9305
        %v9785 = vunpack.c.l.b16 %v9306
        %v9786 = vunpack.c.l.b16 %v9307
        %v9787 = vunpack.c.l.b16 %v9308
        %v9788 = vunpack.c.l.b16 %v9309
        %v9789 = vunpack.c.l.b16 %v9310
        %v9790 = vunpack.c.l.b16 %v9311
        %v9791 = vunpack.c.l.b16 %v9312
        %v9792 = vunpack.c.l.b16 %v9313
        %v9793 = vunpack.c.l.b16 %v9314
        %v9794 = vunpack.c.l.b16 %v9315
        %v9795 = vunpack.c.l.b16 %v9316
        %v9796 = vunpack.c.l.b16 %v9317
        %v9797 = vunpack.c.l.b16 %v9318
        %v9798 = vunpack.c.l.b16 %v9319
        %v9799 = vunpack.c.l.b16 %v9320
        %v9800 = vunpack.c.l.b16 %v9321
        %v9801 = vunpack.c.l.b16 %v9322
        %v9802 = vunpack.c.l.b16 %v9323
        %v9803 = vunpack.c.l.b16 %v9324
        %v9804 = vunpack.c.l.b16 %v9325
        %v9805 = vunpack.c.l.b16 %v9326
        %v9806 = vpack.c.b16 %v9663, %v9662
        %v9807 = vpack.c.b16 %v9665, %v9664
        %v9808 = vpack.c.b16 %v9667, %v9666
        %v9809 = vpack.c.b16 %v9669, %v9668
        %v9810 = vpack.c.b16 %v9671, %v9670
        %v9811 = vpack.c.b16 %v9673, %v9672
        %v9812 = vpack.c.b16 %v9675, %v9674
        %v9813 = vpack.c.b16 %v9677, %v9676
        %v9814 = vpack.c.b16 %v9679, %v9678
        %v9815 = vpack.c.b16 %v9681, %v9680
        %v9816 = vpack.c.b16 %v9683, %v9682
        %v9817 = vpack.c.b16 %v9685, %v9684
        %v9818 = vpack.c.b16 %v9687, %v9686
        %v9819 = vpack.c.b16 %v9689, %v9688
        %v9820 = vpack.c.b16 %v9691, %v9690
        %v9821 = vpack.c.b16 %v9693, %v9692
        %v9822 = vpack.c.b16 %v9695, %v9694
        %v9823 = vpack.c.b16 %v9697, %v9696
        %v9824 = vpack.c.b16 %v9699, %v9698
        %v9825 = vpack.c.b16 %v9701, %v9700
        %v9826 = vpack.c.b16 %v9703, %v9702
        %v9827 = vpack.c.b16 %v9705, %v9704
        %v9828 = vpack.c.b16 %v9707, %v9706
        %v9829 = vpack.c.b16 %v9709, %v9708
        %v9830 = vpack.c.b16 %v9711, %v9710
        %v9831 = vpack.c.b16 %v9713, %v9712
        %v9832 = vpack.c.b16 %v9715, %v9714
        %v9833 = vpack.c.b16 %v9717, %v9716
        %v9834 = vpack.c.b16 %v9719, %v9718
        %v9835 = vpack.c.b16 %v9721, %v9720
        %v9836 = vpack.c.b16 %v9723, %v9722
        %v9837 = vpack.c.b16 %v9725, %v9724
        %v9838 = vpack.c.b16 %v9727, %v9726
        %v9839 = vpack.c.b16 %v9729, %v9728
        %v9840 = vpack.c.b16 %v9731, %v9730
        %v9841 = vpack.c.b16 %v9733, %v9732
        %v9842 = vpack.c.b16 %v9735, %v9734
        %v9843 = vpack.c.b16 %v9737, %v9736
        %v9844 = vpack.c.b16 %v9739, %v9738
        %v9845 = vpack.c.b16 %v9741, %v9740
        %v9846 = vpack.c.b16 %v9743, %v9742
        %v9847 = vpack.c.b16 %v9745, %v9744
        %v9848 = vpack.c.b16 %v9747, %v9746
        %v9849 = vpack.c.b16 %v9749, %v9748
        %v9850 = vpack.c.b16 %v9751, %v9750
        %v9851 = vpack.c.b16 %v9753, %v9752
        %v9852 = vpack.c.b16 %v9755, %v9754
        %v9853 = vpack.c.b16 %v9757, %v9756
        %v9854 = vpack.c.b16 %v9759, %v9758
        %v9855 = vpack.c.b16 %v9761, %v9760
        %v9856 = vpack.c.b16 %v9763, %v9762
        %v9857 = vpack.c.b16 %v9765, %v9764
        %v9858 = vpack.c.b16 %v9767, %v9766
        %v9859 = vpack.c.b16 %v9769, %v9768
        %v9860 = vpack.c.b16 %v9771, %v9770
        %v9861 = vpack.c.b16 %v9773, %v9772
        %v9862 = vpack.c.b16 %v9775, %v9774
        %v9863 = vpack.c.b16 %v9777, %v9776
        %v9864 = vpack.c.b16 %v9779, %v9778
        %v9865 = vpack.c.b16 %v9781, %v9780
        %v9866 = vpack.c.b16 %v9783, %v9782
        %v9867 = vpack.c.b16 %v9785, %v9784
        %v9868 = vpack.c.b16 %v9787, %v9786
        %v9869 = vpack.c.b16 %v9789, %v9788
        %v9870 = vpack.c.b16 %v9791, %v9790
        %v9871 = vpack.c.b16 %v9793, %v9792
        %v9872 = vpack.c.b16 %v9795, %v9794
        %v9873 = vpack.c.b16 %v9797, %v9796
        %v9874 = vpack.c.b16 %v9799, %v9798
        %v9875 = vpack.c.b16 %v9801, %v9800
        %v9876 = vpack.c.b16 %v9803, %v9802
        %v9877 = vpack.c.b16 %v9805, %v9804
        %9950 = vmatprep.subr.bf16.mxu0 0
        %9951 = vmatpush1.bf16.msra.mxu0 %v9813
        %9952 = vmatprep.subr.bf16.mxu0 0
        %9953 = vmatpush1.bf16.msra.mxu0 %v9812
        %9954 = vmatprep.subr.bf16.mxu0 0
        %9955 = vmatpush1.bf16.msra.mxu0 %v9811
        %9956 = vmatprep.subr.bf16.mxu0 0
        %9957 = vmatpush1.bf16.msra.mxu0 %v9810
        %9958 = vmatprep.subr.bf16.mxu0 0
        %9959 = vmatpush1.bf16.msra.mxu0 %v9809
        %9960 = vmatprep.subr.bf16.mxu0 0
        %9961 = vmatpush1.bf16.msra.mxu0 %v9808
        %9962 = vmatprep.subr.bf16.mxu0 0
        %9963 = vmatpush1.bf16.msra.mxu0 %v9807
        %9964 = vmatprep.subr.bf16.mxu0 0
        %9965 = vmatpush1.bf16.msra.mxu0 %v9806
        %9966 = vmatprep.subr.bf16.mxu0 0
        %9967 = vmatpush2.bf16.msra.mxu0 %v9821
        %9968 = vmatprep.subr.bf16.mxu0 0
        %9969 = vmatpush2.bf16.msra.mxu0 %v9820
        %9970 = vmatprep.subr.bf16.mxu0 0
        %9971 = vmatpush2.bf16.msra.mxu0 %v9819
        %9972 = vmatprep.subr.bf16.mxu0 0
        %9973 = vmatpush2.bf16.msra.mxu0 %v9818
        %9974 = vmatprep.subr.bf16.mxu0 0
        %9975 = vmatpush2.bf16.msra.mxu0 %v9817
        %9976 = vmatprep.subr.bf16.mxu0 0
        %9977 = vmatpush2.bf16.msra.mxu0 %v9816
        %9978 = vmatprep.subr.bf16.mxu0 0
        %9979 = vmatpush2.bf16.msra.mxu0 %v9815
        %9980 = vmatprep.subr.bf16.mxu0 0
        %9981 = vmatpush2.bf16.msra.mxu0 %v9814
        %9982 = vmatprep.mubr.bf16.mxu0 %v9447
        %9983 = vmatmul.mubr.bf16.gmra.mxu0 %v9446
        %v9984 = vpop.f32.mrf.mxu0
        %v9985 = vadd.f32 %v9332, %v9984
        %v9986 = vpop.f32.mrf.mxu0
        %v9987 = vpop.f32.mrf.mxu0
        %v9988 = vadd.f32 %v9332, %v9987
        %v9989 = vpop.f32.mrf.mxu0
        %9990 = vmatprep.mubr.bf16.mxu0 %v9456
        %9991 = vmatmul.mubr.bf16.gmra.mxu0 %v9455
        %v9992 = vpop.f32.mrf.mxu0
        %v9993 = vadd.f32 %v9332, %v9992
        %v9994 = vpop.f32.mrf.mxu0
        %v9995 = vpop.f32.mrf.mxu0
        %v9996 = vadd.f32 %v9332, %v9995
        %v9997 = vpop.f32.mrf.mxu0
        %9998 = vmatprep.mubr.bf16.mxu0 %v9465
        %9999 = vmatmul.mubr.bf16.gmra.mxu0 %v9464
        %v10000 = vpop.f32.mrf.mxu0
        %v10001 = vadd.f32 %v9332, %v10000
        %v10002 = vpop.f32.mrf.mxu0
        %v10003 = vpop.f32.mrf.mxu0
        %v10004 = vadd.f32 %v9332, %v10003
        %v10005 = vpop.f32.mrf.mxu0
        %10006 = vmatprep.mubr.bf16.mxu0 %v9474
        %10007 = vmatmul.mubr.bf16.gmra.mxu0 %v9473
        %v10008 = vpop.f32.mrf.mxu0
        %v10009 = vadd.f32 %v9332, %v10008
        %v10010 = vpop.f32.mrf.mxu0
        %v10011 = vpop.f32.mrf.mxu0
        %v10012 = vadd.f32 %v9332, %v10011
        %v10013 = vpop.f32.mrf.mxu0
        %10014 = vdwg.mxu0
        %10015 = vmatprep.subr.bf16.mxu0 0
        %10016 = vmatpush1.bf16.msra.mxu0 %v9829
        %10017 = vmatprep.subr.bf16.mxu0 0
        %10018 = vmatpush1.bf16.msra.mxu0 %v9828
        %10019 = vmatprep.subr.bf16.mxu0 0
        %10020 = vmatpush1.bf16.msra.mxu0 %v9827
        %10021 = vmatprep.subr.bf16.mxu0 0
        %10022 = vmatpush1.bf16.msra.mxu0 %v9826
        %10023 = vmatprep.subr.bf16.mxu0 0
        %10024 = vmatpush1.bf16.msra.mxu0 %v9825
        %10025 = vmatprep.subr.bf16.mxu0 0
        %10026 = vmatpush1.bf16.msra.mxu0 %v9824
        %10027 = vmatprep.subr.bf16.mxu0 0
        %10028 = vmatpush1.bf16.msra.mxu0 %v9823
        %10029 = vmatprep.subr.bf16.mxu0 0
        %10030 = vmatpush1.bf16.msra.mxu0 %v9822
        %10031 = vmatprep.subr.bf16.mxu0 0
        %10032 = vmatpush2.bf16.msra.mxu0 %v9837
        %10033 = vmatprep.subr.bf16.mxu0 0
        %10034 = vmatpush2.bf16.msra.mxu0 %v9836
        %10035 = vmatprep.subr.bf16.mxu0 0
        %10036 = vmatpush2.bf16.msra.mxu0 %v9835
        %10037 = vmatprep.subr.bf16.mxu0 0
        %10038 = vmatpush2.bf16.msra.mxu0 %v9834
        %10039 = vmatprep.subr.bf16.mxu0 0
        %10040 = vmatpush2.bf16.msra.mxu0 %v9833
        %10041 = vmatprep.subr.bf16.mxu0 0
        %10042 = vmatpush2.bf16.msra.mxu0 %v9832
        %10043 = vmatprep.subr.bf16.mxu0 0
        %10044 = vmatpush2.bf16.msra.mxu0 %v9831
        %10045 = vmatprep.subr.bf16.mxu0 0
        %10046 = vmatpush2.bf16.msra.mxu0 %v9830
        %10047 = vmatprep.mubr.bf16.mxu0 %v9449
        %10048 = vmatmul.mubr.bf16.gmra.mxu0 %v9448
        %v10049 = vpop.f32.mrf.mxu0
        %v10050 = vadd.f32 %v9985, %v10049
        %v10051 = vpop.f32.mrf.mxu0
        %v10052 = vpop.f32.mrf.mxu0
        %v10053 = vadd.f32 %v9988, %v10052
        %v10054 = vpop.f32.mrf.mxu0
        %10055 = vmatprep.mubr.bf16.mxu0 %v9458
        %10056 = vmatmul.mubr.bf16.gmra.mxu0 %v9457
        %v10057 = vpop.f32.mrf.mxu0
        %v10058 = vadd.f32 %v9993, %v10057
        %v10059 = vpop.f32.mrf.mxu0
        %v10060 = vpop.f32.mrf.mxu0
        %v10061 = vadd.f32 %v9996, %v10060
        %v10062 = vpop.f32.mrf.mxu0
        %10063 = vmatprep.mubr.bf16.mxu0 %v9467
        %10064 = vmatmul.mubr.bf16.gmra.mxu0 %v9466
        %v10065 = vpop.f32.mrf.mxu0
        %v10066 = vadd.f32 %v10001, %v10065
        %v10067 = vpop.f32.mrf.mxu0
        %v10068 = vpop.f32.mrf.mxu0
        %v10069 = vadd.f32 %v10004, %v10068
        %v10070 = vpop.f32.mrf.mxu0
        %10071 = vmatprep.mubr.bf16.mxu0 %v9476
        %10072 = vmatmul.mubr.bf16.gmra.mxu0 %v9475
        %v10073 = vpop.f32.mrf.mxu0
        %v10074 = vadd.f32 %v10009, %v10073
        %v10075 = vpop.f32.mrf.mxu0
        %v10076 = vpop.f32.mrf.mxu0
        %v10077 = vadd.f32 %v10012, %v10076
        %v10078 = vpop.f32.mrf.mxu0
        %10079 = vdwg.mxu0
        %10080 = vmatprep.subr.bf16.mxu0 0
        %10081 = vmatpush1.bf16.msra.mxu0 %v9845
        %10082 = vmatprep.subr.bf16.mxu0 0
        %10083 = vmatpush1.bf16.msra.mxu0 %v9844
        %10084 = vmatprep.subr.bf16.mxu0 0
        %10085 = vmatpush1.bf16.msra.mxu0 %v9843
        %10086 = vmatprep.subr.bf16.mxu0 0
        %10087 = vmatpush1.bf16.msra.mxu0 %v9842
        %10088 = vmatprep.subr.bf16.mxu0 0
        %10089 = vmatpush1.bf16.msra.mxu0 %v9841
        %10090 = vmatprep.subr.bf16.mxu0 0
        %10091 = vmatpush1.bf16.msra.mxu0 %v9840
        %10092 = vmatprep.subr.bf16.mxu0 0
        %10093 = vmatpush1.bf16.msra.mxu0 %v9839
        %10094 = vmatprep.subr.bf16.mxu0 0
        %10095 = vmatpush1.bf16.msra.mxu0 %v9838
        %10096 = vmatprep.subr.bf16.mxu0 0
        %10097 = vmatpush2.bf16.msra.mxu0 %v9853
        %10098 = vmatprep.subr.bf16.mxu0 0
        %10099 = vmatpush2.bf16.msra.mxu0 %v9852
        %10100 = vmatprep.subr.bf16.mxu0 0
        %10101 = vmatpush2.bf16.msra.mxu0 %v9851
        %10102 = vmatprep.subr.bf16.mxu0 0
        %10103 = vmatpush2.bf16.msra.mxu0 %v9850
        %10104 = vmatprep.subr.bf16.mxu0 0
        %10105 = vmatpush2.bf16.msra.mxu0 %v9849
        %10106 = vmatprep.subr.bf16.mxu0 0
        %10107 = vmatpush2.bf16.msra.mxu0 %v9848
        %10108 = vmatprep.subr.bf16.mxu0 0
        %10109 = vmatpush2.bf16.msra.mxu0 %v9847
        %10110 = vmatprep.subr.bf16.mxu0 0
        %10111 = vmatpush2.bf16.msra.mxu0 %v9846
        %10112 = vmatprep.mubr.bf16.mxu0 %v9451
        %10113 = vmatmul.mubr.bf16.gmra.mxu0 %v9450
        %v10114 = vpop.f32.mrf.mxu0
        %v10115 = vadd.f32 %v10050, %v10114
        %v10116 = vpop.f32.mrf.mxu0
        %v10117 = vpop.f32.mrf.mxu0
        %v10118 = vadd.f32 %v10053, %v10117
        %v10119 = vpop.f32.mrf.mxu0
        %10120 = vmatprep.mubr.bf16.mxu0 %v9460
        %10121 = vmatmul.mubr.bf16.gmra.mxu0 %v9459
        %v10122 = vpop.f32.mrf.mxu0
        %v10123 = vadd.f32 %v10058, %v10122
        %v10124 = vpop.f32.mrf.mxu0
        %v10125 = vpop.f32.mrf.mxu0
        %v10126 = vadd.f32 %v10061, %v10125
        %v10127 = vpop.f32.mrf.mxu0
        %10128 = vmatprep.mubr.bf16.mxu0 %v9469
        %10129 = vmatmul.mubr.bf16.gmra.mxu0 %v9468
        %v10130 = vpop.f32.mrf.mxu0
        %v10131 = vadd.f32 %v10066, %v10130
        %v10132 = vpop.f32.mrf.mxu0
        %v10133 = vpop.f32.mrf.mxu0
        %v10134 = vadd.f32 %v10069, %v10133
        %v10135 = vpop.f32.mrf.mxu0
        %10136 = vmatprep.mubr.bf16.mxu0 %v9478
        %10137 = vmatmul.mubr.bf16.gmra.mxu0 %v9477
        %v10138 = vpop.f32.mrf.mxu0
        %v10139 = vadd.f32 %v10074, %v10138
        %v10140 = vpop.f32.mrf.mxu0
        %v10141 = vpop.f32.mrf.mxu0
        %v10142 = vadd.f32 %v10077, %v10141
        %v10143 = vpop.f32.mrf.mxu0
        %10144 = vdwg.mxu0
        %10145 = vmatprep.subr.bf16.mxu0 0
        %10146 = vmatpush1.bf16.msra.mxu0 %v9861
        %10147 = vmatprep.subr.bf16.mxu0 0
        %10148 = vmatpush1.bf16.msra.mxu0 %v9860
        %10149 = vmatprep.subr.bf16.mxu0 0
        %10150 = vmatpush1.bf16.msra.mxu0 %v9859
        %10151 = vmatprep.subr.bf16.mxu0 0
        %10152 = vmatpush1.bf16.msra.mxu0 %v9858
        %10153 = vmatprep.subr.bf16.mxu0 0
        %10154 = vmatpush1.bf16.msra.mxu0 %v9857
        %10155 = vmatprep.subr.bf16.mxu0 0
        %10156 = vmatpush1.bf16.msra.mxu0 %v9856
        %10157 = vmatprep.subr.bf16.mxu0 0
        %10158 = vmatpush1.bf16.msra.mxu0 %v9855
        %10159 = vmatprep.subr.bf16.mxu0 0
        %10160 = vmatpush1.bf16.msra.mxu0 %v9854
        %10161 = vmatprep.subr.bf16.mxu0 0
        %10162 = vmatpush2.bf16.msra.mxu0 %v9869
        %10163 = vmatprep.subr.bf16.mxu0 0
        %10164 = vmatpush2.bf16.msra.mxu0 %v9868
        %10165 = vmatprep.subr.bf16.mxu0 0
        %10166 = vmatpush2.bf16.msra.mxu0 %v9867
        %10167 = vmatprep.subr.bf16.mxu0 0
        %10168 = vmatpush2.bf16.msra.mxu0 %v9866
        %10169 = vmatprep.subr.bf16.mxu0 0
        %10170 = vmatpush2.bf16.msra.mxu0 %v9865
        %10171 = vmatprep.subr.bf16.mxu0 0
        %10172 = vmatpush2.bf16.msra.mxu0 %v9864
        %10173 = vmatprep.subr.bf16.mxu0 0
        %10174 = vmatpush2.bf16.msra.mxu0 %v9863
        %10175 = vmatprep.subr.bf16.mxu0 0
        %10176 = vmatpush2.bf16.msra.mxu0 %v9862
        %10177 = vmatprep.mubr.bf16.mxu0 %v9453
        %10178 = vmatmul.mubr.bf16.gmra.mxu0 %v9452
        %v10179 = vpop.f32.mrf.mxu0
        %v10180 = vadd.f32 %v10115, %v10179
        %v10181 = vpop.f32.mrf.mxu0
        %v10182 = vpop.f32.mrf.mxu0
        %v10183 = vadd.f32 %v10118, %v10182
        %v10184 = vpop.f32.mrf.mxu0
        %10185 = vmatprep.mubr.bf16.mxu0 %v9462
        %10186 = vmatmul.mubr.bf16.gmra.mxu0 %v9461
        %v10187 = vpop.f32.mrf.mxu0
        %v10188 = vadd.f32 %v10123, %v10187
        %v10189 = vpop.f32.mrf.mxu0
        %v10190 = vpop.f32.mrf.mxu0
        %v10191 = vadd.f32 %v10126, %v10190
        %v10192 = vpop.f32.mrf.mxu0
        %10193 = vmatprep.mubr.bf16.mxu0 %v9471
        %10194 = vmatmul.mubr.bf16.gmra.mxu0 %v9470
        %v10195 = vpop.f32.mrf.mxu0
        %v10196 = vadd.f32 %v10131, %v10195
        %v10197 = vpop.f32.mrf.mxu0
        %v10198 = vpop.f32.mrf.mxu0
        %v10199 = vadd.f32 %v10134, %v10198
        %v10200 = vpop.f32.mrf.mxu0
        %10201 = vmatprep.mubr.bf16.mxu0 %v9480
        %10202 = vmatmul.mubr.bf16.gmra.mxu0 %v9479
        %v10203 = vpop.f32.mrf.mxu0
        %v10204 = vadd.f32 %v10139, %v10203
        %v10205 = vpop.f32.mrf.mxu0
        %v10206 = vpop.f32.mrf.mxu0
        %v10207 = vadd.f32 %v10142, %v10206
        %v10208 = vpop.f32.mrf.mxu0
        %10209 = vdwg.mxu0
        %10210 = vmatprep.subr.bf16.mxu0 0
        %10211 = vmatpush1.bf16.msra.mxu0 %v9877
        %10212 = vmatprep.subr.bf16.mxu0 0
        %10213 = vmatpush1.bf16.msra.mxu0 %v9876
        %10214 = vmatprep.subr.bf16.mxu0 0
        %10215 = vmatpush1.bf16.msra.mxu0 %v9875
        %10216 = vmatprep.subr.bf16.mxu0 0
        %10217 = vmatpush1.bf16.msra.mxu0 %v9874
        %10218 = vmatprep.subr.bf16.mxu0 0
        %10219 = vmatpush1.bf16.msra.mxu0 %v9873
        %10220 = vmatprep.subr.bf16.mxu0 0
        %10221 = vmatpush1.bf16.msra.mxu0 %v9872
        %10222 = vmatprep.subr.bf16.mxu0 0
        %10223 = vmatpush1.bf16.msra.mxu0 %v9871
        %10224 = vmatprep.subr.bf16.mxu0 0
        %10225 = vmatpush1.bf16.msra.mxu0 %v9870
        %10226 = vmatprep.subr.bf16.mxu0 0
        %10227 = vmatpush2.bf16.msra.mxu0 0
        %10228 = vmatprep.subr.bf16.mxu0 0
        %10229 = vmatpush2.bf16.msra.mxu0 0
        %10230 = vmatprep.subr.bf16.mxu0 0
        %10231 = vmatpush2.bf16.msra.mxu0 0
        %10232 = vmatprep.subr.bf16.mxu0 0
        %10233 = vmatpush2.bf16.msra.mxu0 0
        %10234 = vmatprep.subr.bf16.mxu0 0
        %10235 = vmatpush2.bf16.msra.mxu0 0
        %10236 = vmatprep.subr.bf16.mxu0 0
        %10237 = vmatpush2.bf16.msra.mxu0 0
        %10238 = vmatprep.subr.bf16.mxu0 0
        %10239 = vmatpush2.bf16.msra.mxu0 0
        %10240 = vmatprep.subr.bf16.mxu0 0
        %10241 = vmatpush2.bf16.msra.mxu0 0
        %10242 = vmatprep.mubr.bf16.mxu0 0
        %10243 = vmatmul.mubr.bf16.gmra.mxu0 %v9454
        %v10244 = vpop.f32.mrf.mxu0
        %v10245 = vadd.f32 %v10180, %v10244
        %v10246 = vpop.f32.mrf.mxu0
        %v10247 = vpop.f32.mrf.mxu0
        %v10248 = vadd.f32 %v10183, %v10247
        %v10249 = vpop.f32.mrf.mxu0
        %10250 = vmatprep.mubr.bf16.mxu0 0
        %10251 = vmatmul.mubr.bf16.gmra.mxu0 %v9463
        %v10252 = vpop.f32.mrf.mxu0
        %v10253 = vadd.f32 %v10188, %v10252
        %v10254 = vpop.f32.mrf.mxu0
        %v10255 = vpop.f32.mrf.mxu0
        %v10256 = vadd.f32 %v10191, %v10255
        %v10257 = vpop.f32.mrf.mxu0
        %10258 = vmatprep.mubr.bf16.mxu0 0
        %10259 = vmatmul.mubr.bf16.gmra.mxu0 %v9472
        %v10260 = vpop.f32.mrf.mxu0
        %v10261 = vadd.f32 %v10196, %v10260
        %v10262 = vpop.f32.mrf.mxu0
        %v10263 = vpop.f32.mrf.mxu0
        %v10264 = vadd.f32 %v10199, %v10263
        %v10265 = vpop.f32.mrf.mxu0
        %10266 = vmatprep.mubr.bf16.mxu0 0
        %10267 = vmatmul.mubr.bf16.gmra.mxu0 %v9481
        %v10268 = vpop.f32.mrf.mxu0
        %v10269 = vadd.f32 %v10204, %v10268
        %v10270 = vpop.f32.mrf.mxu0
        %v10271 = vpop.f32.mrf.mxu0
        %v10272 = vadd.f32 %v10207, %v10271
        %v10273 = vpop.f32.mrf.mxu0
        %10274 = vdwg.mxu0
        %v10275 = vmax.f32 %v10245, 0.0
        %v10276 = vmax.f32 %v10248, 0.0
        %v10277 = vmax.f32 %v10253, 0.0
        %v10278 = vmax.f32 %v10256, 0.0
        %v10279 = vmax.f32 %v10261, 0.0
        %v10280 = vmax.f32 %v10264, 0.0
        %v10281 = vmax.f32 %v10269, 0.0
        %v10282 = vmax.f32 %v10272, 0.0
        %v10283 = vmax.f32 %v10275, %v10276
        %v10284 = vmax.f32 %v10277, %v10278
        %v10285 = vmax.f32 %v10279, %v10280
        %v10286 = vmax.f32 %v10281, %v10282
        %v10291 = vcombine.high %v10283, %v10283
        %v10293 = vunpack.c.l.s4 1983009808
        %v10294 = vunpack.c.0.s8 %v10293
        %v10295 = vlaneseq
        %v10296 = vshrl.u32 %v10295, 7
        %v10297 = vsub.s32 %v10294, %v10296
        %v10298 = vrot.slane %v10283, %v10297
        %v10300 = vunpack.c.l.s4 1983009808
        %v10301 = vunpack.c.0.s8 %v10300
        %v10302 = vlaneseq
        %v10303 = vshrl.u32 %v10302, 7
        %v10304 = vsub.s32 %v10301, %v10303
        %v10305 = vrot.slane %v10291, %v10304
        %v10306 = vcombine.high %v10298, %v10298
        %v10307 = vcombine.high %v10305, %v10305
        %v10308 = vcombine.high %v10284, %v10284
        %v10310 = vunpack.c.l.s4 1983009808
        %v10311 = vunpack.c.0.s8 %v10310
        %v10312 = vlaneseq
        %v10313 = vshrl.u32 %v10312, 7
        %v10314 = vsub.s32 %v10311, %v10313
        %v10315 = vrot.slane %v10284, %v10314
        %v10317 = vunpack.c.l.s4 1983009808
        %v10318 = vunpack.c.0.s8 %v10317
        %v10319 = vlaneseq
        %v10320 = vshrl.u32 %v10319, 7
        %v10321 = vsub.s32 %v10318, %v10320
        %v10322 = vrot.slane %v10308, %v10321
        %v10323 = vcombine.high %v10315, %v10315
        %v10324 = vcombine.high %v10322, %v10322
        %v10325 = vcombine.high %v10285, %v10285
        %v10327 = vunpack.c.l.s4 1983009808
        %v10328 = vunpack.c.0.s8 %v10327
        %v10329 = vlaneseq
        %v10330 = vshrl.u32 %v10329, 7
        %v10331 = vsub.s32 %v10328, %v10330
        %v10332 = vrot.slane %v10285, %v10331
        %v10334 = vunpack.c.l.s4 1983009808
        %v10335 = vunpack.c.0.s8 %v10334
        %v10336 = vlaneseq
        %v10337 = vshrl.u32 %v10336, 7
        %v10338 = vsub.s32 %v10335, %v10337
        %v10339 = vrot.slane %v10325, %v10338
        %v10340 = vcombine.high %v10332, %v10332
        %v10341 = vcombine.high %v10339, %v10339
        %v10342 = vcombine.high %v10286, %v10286
        %v10344 = vunpack.c.l.s4 1983009808
        %v10345 = vunpack.c.0.s8 %v10344
        %v10346 = vlaneseq
        %v10347 = vshrl.u32 %v10346, 7
        %v10348 = vsub.s32 %v10345, %v10347
        %v10349 = vrot.slane %v10286, %v10348
        %v10351 = vunpack.c.l.s4 1983009808
        %v10352 = vunpack.c.0.s8 %v10351
        %v10353 = vlaneseq
        %v10354 = vshrl.u32 %v10353, 7
        %v10355 = vsub.s32 %v10352, %v10354
        %v10356 = vrot.slane %v10342, %v10355
        %v10357 = vcombine.high %v10349, %v10349
        %v10358 = vcombine.high %v10356, %v10356
        %v10375 = vrot.slane %v10298, 7
        %v10376 = vrot.slane %v10375, 2
        %v10377 = vrot.slane %v10306, 7
        %v10378 = vrot.slane %v10377, 2
        %v10379 = vrot.slane %v10305, 7
        %v10380 = vrot.slane %v10379, 2
        %v10381 = vrot.slane %v10307, 7
        %v10382 = vrot.slane %v10381, 2
        %v10383 = vrot.slane %v10315, 7
        %v10384 = vrot.slane %v10383, 2
        %v10385 = vrot.slane %v10323, 7
        %v10386 = vrot.slane %v10385, 2
        %v10387 = vrot.slane %v10322, 7
        %v10388 = vrot.slane %v10387, 2
        %v10389 = vrot.slane %v10324, 7
        %v10390 = vrot.slane %v10389, 2
        %v10391 = vrot.slane %v10332, 7
        %v10392 = vrot.slane %v10391, 2
        %v10393 = vrot.slane %v10340, 7
        %v10394 = vrot.slane %v10393, 2
        %v10395 = vrot.slane %v10339, 7
        %v10396 = vrot.slane %v10395, 2
        %v10397 = vrot.slane %v10341, 7
        %v10398 = vrot.slane %v10397, 2
        %v10399 = vrot.slane %v10349, 7
        %v10400 = vrot.slane %v10399, 2
        %v10401 = vrot.slane %v10357, 7
        %v10402 = vrot.slane %v10401, 2
        %v10403 = vrot.slane %v10356, 7
        %v10404 = vrot.slane %v10403, 2
        %v10405 = vrot.slane %v10358, 7
        %v10406 = vrot.slane %v10405, 2
        %v10423 = vmax.f32 %v10298, %v10376
        %v10424 = vmax.f32 %v10306, %v10378
        %v10425 = vmax.f32 %v10305, %v10380
        %v10426 = vmax.f32 %v10307, %v10382
        %v10427 = vmax.f32 %v10315, %v10384
        %v10428 = vmax.f32 %v10323, %v10386
        %v10429 = vmax.f32 %v10322, %v10388
        %v10430 = vmax.f32 %v10324, %v10390
        %v10431 = vmax.f32 %v10332, %v10392
        %v10432 = vmax.f32 %v10340, %v10394
        %v10433 = vmax.f32 %v10339, %v10396
        %v10434 = vmax.f32 %v10341, %v10398
        %v10435 = vmax.f32 %v10349, %v10400
        %v10436 = vmax.f32 %v10357, %v10402
        %v10437 = vmax.f32 %v10356, %v10404
        %v10438 = vmax.f32 %v10358, %v10406
        %10439 = vst [vmem:[#allocation8] sm:$0x7] 0
        %10440 = vst [vmem:[#allocation8 + $0x4] sm:$0x7] 0
        %10441 = vst [vmem:[#allocation8 + $0x8] sm:$0x7] 0
        %10442 = vst [vmem:[#allocation8 + $0xc] sm:$0x7] 0
        %10443 = vst [vmem:[#allocation8 + $0x10] sm:$0x7] 0
        %10444 = vst [vmem:[#allocation8 + $0x14] sm:$0x7] 0
        %v10445 = vpack.c.bf16 %v10423, %v10423
        %v10446 = vpack.c.bf16 %v10424, %v10424
        %v10447 = vpack.c.bf16 %v10425, %v10425
        %v10448 = vpack.c.bf16 %v10426, %v10426
        %v10449 = vpack.c.bf16 %v10427, %v10427
        %v10450 = vpack.c.bf16 %v10428, %v10428
        %v10451 = vpack.c.bf16 %v10429, %v10429
        %v10452 = vpack.c.bf16 %v10430, %v10430
        %v10453 = vpack.c.bf16 %v10431, %v10431
        %v10454 = vpack.c.bf16 %v10432, %v10432
        %v10455 = vpack.c.bf16 %v10433, %v10433
        %v10456 = vpack.c.bf16 %v10434, %v10434
        %v10457 = vpack.c.bf16 %v10435, %v10435
        %v10458 = vpack.c.bf16 %v10436, %v10436
        %v10459 = vpack.c.bf16 %v10437, %v10437
        %v10460 = vpack.c.bf16 %v10438, %v10438
        %v10477 = vunpack.c.l.b16 %v10445
        %v10478 = vunpack.c.l.b16 %v10446
        %v10479 = vunpack.c.l.b16 %v10447
        %v10480 = vunpack.c.l.b16 %v10448
        %v10481 = vunpack.c.l.b16 %v10449
        %v10482 = vunpack.c.l.b16 %v10450
        %v10483 = vunpack.c.l.b16 %v10451
        %v10484 = vunpack.c.l.b16 %v10452
        %v10485 = vunpack.c.l.b16 %v10453
        %v10486 = vunpack.c.l.b16 %v10454
        %v10487 = vunpack.c.l.b16 %v10455
        %v10488 = vunpack.c.l.b16 %v10456
        %v10489 = vunpack.c.l.b16 %v10457
        %v10490 = vunpack.c.l.b16 %v10458
        %v10491 = vunpack.c.l.b16 %v10459
        %v10492 = vunpack.c.l.b16 %v10460
        %v10493 = vpack.c.b16 %v10477, %v10477
        %v10494 = vpack.c.b16 %v10478, %v10478
        %v10495 = vpack.c.b16 %v10479, %v10479
        %v10496 = vpack.c.b16 %v10480, %v10480
        %v10497 = vpack.c.b16 %v10481, %v10481
        %v10498 = vpack.c.b16 %v10482, %v10482
        %v10499 = vpack.c.b16 %v10483, %v10483
        %v10500 = vpack.c.b16 %v10484, %v10484
        %v10501 = vpack.c.b16 %v10485, %v10485
        %v10502 = vpack.c.b16 %v10486, %v10486
        %v10503 = vpack.c.b16 %v10487, %v10487
        %v10504 = vpack.c.b16 %v10488, %v10488
        %v10505 = vpack.c.b16 %v10489, %v10489
        %v10506 = vpack.c.b16 %v10490, %v10490
        %v10507 = vpack.c.b16 %v10491, %v10491
        %v10508 = vpack.c.b16 %v10492, %v10492
        %v10509 = vunpack.c.l.b16 %v10493
        %v10510 = vunpack.c.l.b16 %v10494
        %v10511 = vunpack.c.l.b16 %v10495
        %v10512 = vunpack.c.l.b16 %v10496
        %v10513 = vunpack.c.l.b16 %v10497
        %v10514 = vunpack.c.l.b16 %v10498
        %v10515 = vunpack.c.l.b16 %v10499
        %v10516 = vunpack.c.l.b16 %v10500
        %v10517 = vunpack.c.l.b16 %v10501
        %v10518 = vunpack.c.l.b16 %v10502
        %v10519 = vunpack.c.l.b16 %v10503
        %v10520 = vunpack.c.l.b16 %v10504
        %v10521 = vunpack.c.l.b16 %v10505
        %v10522 = vunpack.c.l.b16 %v10506
        %v10523 = vunpack.c.l.b16 %v10507
        %v10524 = vunpack.c.l.b16 %v10508
        %v10525 = vrot.slane %v10509, 7
        %v10526 = vrot.slane %v10510, 6
        %v10527 = vsel %vm6605, %v10526, %v10525
        %v10528 = vrot.slane %v10511, 5
        %v10529 = vsel %vm6608, %v10528, %v10527
        %v10530 = vrot.slane %v10512, 4
        %v10531 = vsel %vm6611, %v10530, %v10529
        %v10532 = vrot.slane %v10513, 7
        %v10533 = vrot.slane %v10514, 6
        %v10534 = vsel %vm6605, %v10533, %v10532
        %v10535 = vrot.slane %v10515, 5
        %v10536 = vsel %vm6608, %v10535, %v10534
        %v10537 = vrot.slane %v10516, 4
        %v10538 = vsel %vm6611, %v10537, %v10536
        %v10539 = vrot.slane %v10517, 7
        %v10540 = vrot.slane %v10518, 6
        %v10541 = vsel %vm6605, %v10540, %v10539
        %v10542 = vrot.slane %v10519, 5
        %v10543 = vsel %vm6608, %v10542, %v10541
        %v10544 = vrot.slane %v10520, 4
        %v10545 = vsel %vm6611, %v10544, %v10543
        %v10546 = vrot.slane %v10521, 7
        %v10547 = vrot.slane %v10522, 6
        %v10548 = vsel %vm6605, %v10547, %v10546
        %v10549 = vrot.slane %v10523, 5
        %v10550 = vsel %vm6608, %v10549, %v10548
        %v10551 = vrot.slane %v10524, 4
        %v10552 = vsel %vm6611, %v10551, %v10550
        %v10553 = vpack.c.b16 %v10531, %v10531
        %v10554 = vpack.c.b16 %v10538, %v10538
        %v10555 = vpack.c.b16 %v10545, %v10545
        %v10556 = vpack.c.b16 %v10552, %v10552
        %s10561 = scalar_lea.vmem [#allocation8], 4
        %vm10562 = vsmask.f32 2306
        %vm10563 = vmand %vm2185, %vm10562
        %v10564 = vld [vmem:[%s10561] sm:$0x7]
        %v10565 = vsel %vm10563, %v10553, %v10564
        %10566 = vst [vmem:[%s10561] sm:$0x7] %v10565
        %v10567 = vld [vmem:[%s10561 + $0x4] sm:$0x7]
        %v10568 = vsel %vm10563, %v10554, %v10567
        %10569 = vst [vmem:[%s10561 + $0x4] sm:$0x7] %v10568
        %v10570 = vld [vmem:[%s10561 + $0x8] sm:$0x7]
        %v10571 = vsel %vm10563, %v10555, %v10570
        %10572 = vst [vmem:[%s10561 + $0x8] sm:$0x7] %v10571
        %v10573 = vld [vmem:[%s10561 + $0xc] sm:$0x7]
        %v10574 = vsel %vm10563, %v10556, %v10573
        %10575 = vst [vmem:[%s10561 + $0xc] sm:$0x7] %v10574
        %v10576 = vld [vmem:[#allocation8] sm:$0x3]
        %v10577 = vld [vmem:[#allocation8 + $0x4] sm:$0x3]
        %v10578 = vld [vmem:[#allocation8 + $0x8] sm:$0x3]
        %v10579 = vld [vmem:[#allocation8 + $0xc] sm:$0x3]
        %v10584 = vcombine.low %v10576, %v10577
        %v10586 = vunpack.c.l.s4 1983009808
        %v10587 = vunpack.c.0.s8 %v10586
        %v10588 = vlaneseq
        %v10589 = vshrl.u32 %v10588, 7
        %v10590 = vsub.s32 %v10587, %v10589
        %v10591 = vrot.slane %v10584, %v10590
        %v10592 = vcombine.low %v10578, %v10579
        %v10594 = vunpack.c.l.s4 1983009808
        %v10595 = vunpack.c.0.s8 %v10594
        %v10596 = vlaneseq
        %v10597 = vshrl.u32 %v10596, 7
        %v10598 = vsub.s32 %v10595, %v10597
        %v10599 = vrot.slane %v10592, %v10598
        %10602 = vst [vmem:[#allocation9] sm:$0xf] %v10591
        %10603 = vst [vmem:[#allocation9 + $0x24] sm:$0xf] %v10599
        %v10604 = vld [vmem:[#allocation8] sm:$0x7]
        %v10605 = vld [vmem:[#allocation8 + $0x4] sm:$0x7]
        %v10606 = vld [vmem:[#allocation8 + $0x8] sm:$0x7]
        %v10607 = vld [vmem:[#allocation8 + $0xc] sm:$0x7]
        %v10613 = vunpack.c.l.s4 1983009808
        %v10614 = vunpack.c.0.s8 %v10613
        %v10615 = vlaneseq
        %v10616 = vshrl.u32 %v10615, 7
        %v10617 = vsub.s32 %v10614, %v10616
        %v10618 = vrot.slane %v10604, %v10617
        %v10619 = vcombine.high %v10618, %v10618
        %v10621 = vunpack.c.l.s4 1983009808
        %v10622 = vunpack.c.0.s8 %v10621
        %v10623 = vlaneseq
        %v10624 = vshrl.u32 %v10623, 7
        %v10625 = vsub.s32 %v10622, %v10624
        %v10626 = vrot.slane %v10605, %v10625
        %v10627 = vcombine.high %v10626, %v10626
        %v10629 = vunpack.c.l.s4 1983009808
        %v10630 = vunpack.c.0.s8 %v10629
        %v10631 = vlaneseq
        %v10632 = vshrl.u32 %v10631, 7
        %v10633 = vsub.s32 %v10630, %v10632
        %v10634 = vrot.slane %v10606, %v10633
        %v10635 = vcombine.high %v10634, %v10634
        %v10637 = vunpack.c.l.s4 1983009808
        %v10638 = vunpack.c.0.s8 %v10637
        %v10639 = vlaneseq
        %v10640 = vshrl.u32 %v10639, 7
        %v10641 = vsub.s32 %v10638, %v10640
        %v10642 = vrot.slane %v10607, %v10641
        %v10643 = vcombine.high %v10642, %v10642
        %vm10644 = vsmask.f32 1280
        %vm10645 = vsmask.f32 3336
        %vm10646 = vmor %vm10644, %vm10645
        %vm10647 = vsmask.f32 5392
        %vm10648 = vmor %vm10646, %vm10647
        %vm10649 = vsmask.f32 7448
        %vm10650 = vmor %vm10648, %vm10649
        %v10652 = vshrl.u32 %v10618, 16
        %v10654 = vrot.slane %v10652, 6
        %v10655 = vshll.u32 %v10618, 16
        %v10657 = vrot.slane %v10655, 7
        %v10658 = vor.u32 %v10654, %v10657
        %v10659 = vrot.slane %v10658, 2
        %v10661 = vshll.u32 %v10619, 16
        %v10663 = vrot.slane %v10661, 7
        %v10664 = vsel %vm10650, %v10659, %v10663
        %v10666 = vshrl.u32 %v10626, 16
        %v10668 = vrot.slane %v10666, 6
        %v10669 = vshll.u32 %v10626, 16
        %v10671 = vrot.slane %v10669, 7
        %v10672 = vor.u32 %v10668, %v10671
        %v10673 = vrot.slane %v10672, 2
        %v10675 = vshll.u32 %v10627, 16
        %v10677 = vrot.slane %v10675, 7
        %v10678 = vsel %vm10650, %v10673, %v10677
        %v10680 = vshrl.u32 %v10634, 16
        %v10682 = vrot.slane %v10680, 6
        %v10683 = vshll.u32 %v10634, 16
        %v10685 = vrot.slane %v10683, 7
        %v10686 = vor.u32 %v10682, %v10685
        %v10687 = vrot.slane %v10686, 2
        %v10689 = vshll.u32 %v10635, 16
        %v10691 = vrot.slane %v10689, 7
        %v10692 = vsel %vm10650, %v10687, %v10691
        %v10694 = vshrl.u32 %v10642, 16
        %v10696 = vrot.slane %v10694, 6
        %v10697 = vshll.u32 %v10642, 16
        %v10699 = vrot.slane %v10697, 7
        %v10700 = vor.u32 %v10696, %v10699
        %v10701 = vrot.slane %v10700, 2
        %v10703 = vshll.u32 %v10643, 16
        %v10705 = vrot.slane %v10703, 7
        %v10706 = vsel %vm10650, %v10701, %v10705
        %v10707 = vcombine.low %v10664, %v10678
        %v10709 = vunpack.c.l.s4 1983009808
        %v10710 = vunpack.c.0.s8 %v10709
        %v10711 = vlaneseq
        %v10712 = vshrl.u32 %v10711, 7
        %v10713 = vsub.s32 %v10710, %v10712
        %v10714 = vrot.slane %v10707, %v10713
        %v10715 = vcombine.low %v10692, %v10706
        %v10717 = vunpack.c.l.s4 1983009808
        %v10718 = vunpack.c.0.s8 %v10717
        %v10719 = vlaneseq
        %v10720 = vshrl.u32 %v10719, 7
        %v10721 = vsub.s32 %v10718, %v10720
        %v10722 = vrot.slane %v10715, %v10721
        %10725 = vst [vmem:[#allocation9 + $0x4] sm:$0xf] %v10714
        %10726 = vst [vmem:[#allocation9 + $0x28] sm:$0xf] %v10722
        %v10727 = vld [vmem:[#allocation8] sm:$0x6]
        %v10728 = vld [vmem:[#allocation8 + $0x4] sm:$0x6]
        %v10729 = vld [vmem:[#allocation8 + $0x8] sm:$0x6]
        %v10730 = vld [vmem:[#allocation8 + $0xc] sm:$0x6]
        %v10736 = vunpack.c.l.s4 1983009808
        %v10737 = vunpack.c.0.s8 %v10736
        %v10738 = vlaneseq
        %v10739 = vshrl.u32 %v10738, 7
        %v10740 = vsub.s32 %v10737, %v10739
        %v10741 = vrot.slane %v10727, %v10740
        %v10742 = vcombine.high %v10741, %v10741
        %v10744 = vunpack.c.l.s4 1983009808
        %v10745 = vunpack.c.0.s8 %v10744
        %v10746 = vlaneseq
        %v10747 = vshrl.u32 %v10746, 7
        %v10748 = vsub.s32 %v10745, %v10747
        %v10749 = vrot.slane %v10728, %v10748
        %v10750 = vcombine.high %v10749, %v10749
        %v10752 = vunpack.c.l.s4 1983009808
        %v10753 = vunpack.c.0.s8 %v10752
        %v10754 = vlaneseq
        %v10755 = vshrl.u32 %v10754, 7
        %v10756 = vsub.s32 %v10753, %v10755
        %v10757 = vrot.slane %v10729, %v10756
        %v10758 = vcombine.high %v10757, %v10757
        %v10760 = vunpack.c.l.s4 1983009808
        %v10761 = vunpack.c.0.s8 %v10760
        %v10762 = vlaneseq
        %v10763 = vshrl.u32 %v10762, 7
        %v10764 = vsub.s32 %v10761, %v10763
        %v10765 = vrot.slane %v10730, %v10764
        %v10766 = vcombine.high %v10765, %v10765
        %vm10767 = vcmask 1042434
        %vm10768 = vmor %vm8375, %vm10767
        %vm10769 = vcmask 1044484
        %vm10770 = vmor %vm10768, %vm10769
        %vm10771 = vcmask 1046534
        %vm10772 = vmor %vm10770, %vm10771
        %v10773 = vrot.slane %v10741, 7
        %v10774 = vrot.slane %v10773, 2
        %v10775 = vrot.slane %v10742, 7
        %v10776 = vsel %vm10772, %v10774, %v10775
        %v10777 = vrot.slane %v10749, 7
        %v10778 = vrot.slane %v10777, 2
        %v10779 = vrot.slane %v10750, 7
        %v10780 = vsel %vm10772, %v10778, %v10779
        %v10781 = vrot.slane %v10757, 7
        %v10782 = vrot.slane %v10781, 2
        %v10783 = vrot.slane %v10758, 7
        %v10784 = vsel %vm10772, %v10782, %v10783
        %v10785 = vrot.slane %v10765, 7
        %v10786 = vrot.slane %v10785, 2
        %v10787 = vrot.slane %v10766, 7
        %v10788 = vsel %vm10772, %v10786, %v10787
        %v10789 = vcombine.low %v10776, %v10780
        %v10791 = vunpack.c.l.s4 1983009808
        %v10792 = vunpack.c.0.s8 %v10791
        %v10793 = vlaneseq
        %v10794 = vshrl.u32 %v10793, 7
        %v10795 = vsub.s32 %v10792, %v10794
        %v10796 = vrot.slane %v10789, %v10795
        %v10797 = vcombine.low %v10784, %v10788
        %v10799 = vunpack.c.l.s4 1983009808
        %v10800 = vunpack.c.0.s8 %v10799
        %v10801 = vlaneseq
        %v10802 = vshrl.u32 %v10801, 7
        %v10803 = vsub.s32 %v10800, %v10802
        %v10804 = vrot.slane %v10797, %v10803
        %10807 = vst [vmem:[#allocation9 + $0x8] sm:$0xf] %v10796
        %10808 = vst [vmem:[#allocation9 + $0x2c] sm:$0xf] %v10804
        %v10809 = vld [vmem:[%s10561] sm:$0x3]
        %v10810 = vld [vmem:[%s10561 + $0x4] sm:$0x3]
        %v10811 = vld [vmem:[%s10561 + $0x8] sm:$0x3]
        %v10812 = vld [vmem:[%s10561 + $0xc] sm:$0x3]
        %v10817 = vcombine.low %v10809, %v10810
        %v10819 = vunpack.c.l.s4 1983009808
        %v10820 = vunpack.c.0.s8 %v10819
        %v10821 = vlaneseq
        %v10822 = vshrl.u32 %v10821, 7
        %v10823 = vsub.s32 %v10820, %v10822
        %v10824 = vrot.slane %v10817, %v10823
        %v10825 = vcombine.low %v10811, %v10812
        %v10827 = vunpack.c.l.s4 1983009808
        %v10828 = vunpack.c.0.s8 %v10827
        %v10829 = vlaneseq
        %v10830 = vshrl.u32 %v10829, 7
        %v10831 = vsub.s32 %v10828, %v10830
        %v10832 = vrot.slane %v10825, %v10831
        %10835 = vst [vmem:[#allocation9 + $0xc] sm:$0xf] %v10824
        %10836 = vst [vmem:[#allocation9 + $0x30] sm:$0xf] %v10832
        %v10837 = vld [vmem:[%s10561] sm:$0x7]
        %v10838 = vld [vmem:[%s10561 + $0x4] sm:$0x7]
        %v10839 = vld [vmem:[%s10561 + $0x8] sm:$0x7]
        %v10840 = vld [vmem:[%s10561 + $0xc] sm:$0x7]
        %v10846 = vunpack.c.l.s4 1983009808
        %v10847 = vunpack.c.0.s8 %v10846
        %v10848 = vlaneseq
        %v10849 = vshrl.u32 %v10848, 7
        %v10850 = vsub.s32 %v10847, %v10849
        %v10851 = vrot.slane %v10837, %v10850
        %v10852 = vcombine.high %v10851, %v10851
        %v10854 = vunpack.c.l.s4 1983009808
        %v10855 = vunpack.c.0.s8 %v10854
        %v10856 = vlaneseq
        %v10857 = vshrl.u32 %v10856, 7
        %v10858 = vsub.s32 %v10855, %v10857
        %v10859 = vrot.slane %v10838, %v10858
        %v10860 = vcombine.high %v10859, %v10859
        %v10862 = vunpack.c.l.s4 1983009808
        %v10863 = vunpack.c.0.s8 %v10862
        %v10864 = vlaneseq
        %v10865 = vshrl.u32 %v10864, 7
        %v10866 = vsub.s32 %v10863, %v10865
        %v10867 = vrot.slane %v10839, %v10866
        %v10868 = vcombine.high %v10867, %v10867
        %v10870 = vunpack.c.l.s4 1983009808
        %v10871 = vunpack.c.0.s8 %v10870
        %v10872 = vlaneseq
        %v10873 = vshrl.u32 %v10872, 7
        %v10874 = vsub.s32 %v10871, %v10873
        %v10875 = vrot.slane %v10840, %v10874
        %v10876 = vcombine.high %v10875, %v10875
        %v10878 = vshrl.u32 %v10851, 16
        %v10880 = vrot.slane %v10878, 6
        %v10881 = vshll.u32 %v10851, 16
        %v10883 = vrot.slane %v10881, 7
        %v10884 = vor.u32 %v10880, %v10883
        %v10885 = vrot.slane %v10884, 2
        %v10887 = vshll.u32 %v10852, 16
        %v10889 = vrot.slane %v10887, 7
        %v10890 = vsel %vm10650, %v10885, %v10889
        %v10892 = vshrl.u32 %v10859, 16
        %v10894 = vrot.slane %v10892, 6
        %v10895 = vshll.u32 %v10859, 16
        %v10897 = vrot.slane %v10895, 7
        %v10898 = vor.u32 %v10894, %v10897
        %v10899 = vrot.slane %v10898, 2
        %v10901 = vshll.u32 %v10860, 16
        %v10903 = vrot.slane %v10901, 7
        %v10904 = vsel %vm10650, %v10899, %v10903
        %v10906 = vshrl.u32 %v10867, 16
        %v10908 = vrot.slane %v10906, 6
        %v10909 = vshll.u32 %v10867, 16
        %v10911 = vrot.slane %v10909, 7
        %v10912 = vor.u32 %v10908, %v10911
        %v10913 = vrot.slane %v10912, 2
        %v10915 = vshll.u32 %v10868, 16
        %v10917 = vrot.slane %v10915, 7
        %v10918 = vsel %vm10650, %v10913, %v10917
        %v10920 = vshrl.u32 %v10875, 16
        %v10922 = vrot.slane %v10920, 6
        %v10923 = vshll.u32 %v10875, 16
        %v10925 = vrot.slane %v10923, 7
        %v10926 = vor.u32 %v10922, %v10925
        %v10927 = vrot.slane %v10926, 2
        %v10929 = vshll.u32 %v10876, 16
        %v10931 = vrot.slane %v10929, 7
        %v10932 = vsel %vm10650, %v10927, %v10931
        %v10933 = vcombine.low %v10890, %v10904
        %v10935 = vunpack.c.l.s4 1983009808
        %v10936 = vunpack.c.0.s8 %v10935
        %v10937 = vlaneseq
        %v10938 = vshrl.u32 %v10937, 7
        %v10939 = vsub.s32 %v10936, %v10938
        %v10940 = vrot.slane %v10933, %v10939
        %v10941 = vcombine.low %v10918, %v10932
        %v10943 = vunpack.c.l.s4 1983009808
        %v10944 = vunpack.c.0.s8 %v10943
        %v10945 = vlaneseq
        %v10946 = vshrl.u32 %v10945, 7
        %v10947 = vsub.s32 %v10944, %v10946
        %v10948 = vrot.slane %v10941, %v10947
        %10951 = vst [vmem:[#allocation9 + $0x10] sm:$0xf] %v10940
        %10952 = vst [vmem:[#allocation9 + $0x34] sm:$0xf] %v10948
        %v10953 = vld [vmem:[%s10561] sm:$0x6]
        %v10954 = vld [vmem:[%s10561 + $0x4] sm:$0x6]
        %v10955 = vld [vmem:[%s10561 + $0x8] sm:$0x6]
        %v10956 = vld [vmem:[%s10561 + $0xc] sm:$0x6]
        %v10962 = vunpack.c.l.s4 1983009808
        %v10963 = vunpack.c.0.s8 %v10962
        %v10964 = vlaneseq
        %v10965 = vshrl.u32 %v10964, 7
        %v10966 = vsub.s32 %v10963, %v10965
        %v10967 = vrot.slane %v10953, %v10966
        %v10968 = vcombine.high %v10967, %v10967
        %v10970 = vunpack.c.l.s4 1983009808
        %v10971 = vunpack.c.0.s8 %v10970
        %v10972 = vlaneseq
        %v10973 = vshrl.u32 %v10972, 7
        %v10974 = vsub.s32 %v10971, %v10973
        %v10975 = vrot.slane %v10954, %v10974
        %v10976 = vcombine.high %v10975, %v10975
        %v10978 = vunpack.c.l.s4 1983009808
        %v10979 = vunpack.c.0.s8 %v10978
        %v10980 = vlaneseq
        %v10981 = vshrl.u32 %v10980, 7
        %v10982 = vsub.s32 %v10979, %v10981
        %v10983 = vrot.slane %v10955, %v10982
        %v10984 = vcombine.high %v10983, %v10983
        %v10986 = vunpack.c.l.s4 1983009808
        %v10987 = vunpack.c.0.s8 %v10986
        %v10988 = vlaneseq
        %v10989 = vshrl.u32 %v10988, 7
        %v10990 = vsub.s32 %v10987, %v10989
        %v10991 = vrot.slane %v10956, %v10990
        %v10992 = vcombine.high %v10991, %v10991
        %v10993 = vrot.slane %v10967, 7
        %v10994 = vrot.slane %v10993, 2
        %v10995 = vrot.slane %v10968, 7
        %v10996 = vsel %vm10772, %v10994, %v10995
        %v10997 = vrot.slane %v10975, 7
        %v10998 = vrot.slane %v10997, 2
        %v10999 = vrot.slane %v10976, 7
        %v11000 = vsel %vm10772, %v10998, %v10999
        %v11001 = vrot.slane %v10983, 7
        %v11002 = vrot.slane %v11001, 2
        %v11003 = vrot.slane %v10984, 7
        %v11004 = vsel %vm10772, %v11002, %v11003
        %v11005 = vrot.slane %v10991, 7
        %v11006 = vrot.slane %v11005, 2
        %v11007 = vrot.slane %v10992, 7
        %v11008 = vsel %vm10772, %v11006, %v11007
        %v11009 = vcombine.low %v10996, %v11000
        %v11011 = vunpack.c.l.s4 1983009808
        %v11012 = vunpack.c.0.s8 %v11011
        %v11013 = vlaneseq
        %v11014 = vshrl.u32 %v11013, 7
        %v11015 = vsub.s32 %v11012, %v11014
        %v11016 = vrot.slane %v11009, %v11015
        %v11017 = vcombine.low %v11004, %v11008
        %v11019 = vunpack.c.l.s4 1983009808
        %v11020 = vunpack.c.0.s8 %v11019
        %v11021 = vlaneseq
        %v11022 = vshrl.u32 %v11021, 7
        %v11023 = vsub.s32 %v11020, %v11022
        %v11024 = vrot.slane %v11017, %v11023
        %11027 = vst [vmem:[#allocation9 + $0x14] sm:$0xf] %v11016
        %11028 = vst [vmem:[#allocation9 + $0x38] sm:$0xf] %v11024
        %s11029 = scalar_lea.vmem [#allocation8], 8
        %v11030 = vld [vmem:[%s11029] sm:$0x3]
        %v11031 = vld [vmem:[%s11029 + $0x4] sm:$0x3]
        %v11032 = vld [vmem:[%s11029 + $0x8] sm:$0x3]
        %v11033 = vld [vmem:[%s11029 + $0xc] sm:$0x3]
        %v11038 = vcombine.low %v11030, %v11031
        %v11040 = vunpack.c.l.s4 1983009808
        %v11041 = vunpack.c.0.s8 %v11040
        %v11042 = vlaneseq
        %v11043 = vshrl.u32 %v11042, 7
        %v11044 = vsub.s32 %v11041, %v11043
        %v11045 = vrot.slane %v11038, %v11044
        %v11046 = vcombine.low %v11032, %v11033
        %v11048 = vunpack.c.l.s4 1983009808
        %v11049 = vunpack.c.0.s8 %v11048
        %v11050 = vlaneseq
        %v11051 = vshrl.u32 %v11050, 7
        %v11052 = vsub.s32 %v11049, %v11051
        %v11053 = vrot.slane %v11046, %v11052
        %11056 = vst [vmem:[#allocation9 + $0x18] sm:$0xf] %v11045
        %11057 = vst [vmem:[#allocation9 + $0x3c] sm:$0xf] %v11053
        %v11058 = vld [vmem:[%s11029] sm:$0x7]
        %v11059 = vld [vmem:[%s11029 + $0x4] sm:$0x7]
        %v11060 = vld [vmem:[%s11029 + $0x8] sm:$0x7]
        %v11061 = vld [vmem:[%s11029 + $0xc] sm:$0x7]
        %v11067 = vunpack.c.l.s4 1983009808
        %v11068 = vunpack.c.0.s8 %v11067
        %v11069 = vlaneseq
        %v11070 = vshrl.u32 %v11069, 7
        %v11071 = vsub.s32 %v11068, %v11070
        %v11072 = vrot.slane %v11058, %v11071
        %v11073 = vcombine.high %v11072, %v11072
        %v11075 = vunpack.c.l.s4 1983009808
        %v11076 = vunpack.c.0.s8 %v11075
        %v11077 = vlaneseq
        %v11078 = vshrl.u32 %v11077, 7
        %v11079 = vsub.s32 %v11076, %v11078
        %v11080 = vrot.slane %v11059, %v11079
        %v11081 = vcombine.high %v11080, %v11080
        %v11083 = vunpack.c.l.s4 1983009808
        %v11084 = vunpack.c.0.s8 %v11083
        %v11085 = vlaneseq
        %v11086 = vshrl.u32 %v11085, 7
        %v11087 = vsub.s32 %v11084, %v11086
        %v11088 = vrot.slane %v11060, %v11087
        %v11089 = vcombine.high %v11088, %v11088
        %v11091 = vunpack.c.l.s4 1983009808
        %v11092 = vunpack.c.0.s8 %v11091
        %v11093 = vlaneseq
        %v11094 = vshrl.u32 %v11093, 7
        %v11095 = vsub.s32 %v11092, %v11094
        %v11096 = vrot.slane %v11061, %v11095
        %v11097 = vcombine.high %v11096, %v11096
        %v11099 = vshrl.u32 %v11072, 16
        %v11101 = vrot.slane %v11099, 6
        %v11102 = vshll.u32 %v11072, 16
        %v11104 = vrot.slane %v11102, 7
        %v11105 = vor.u32 %v11101, %v11104
        %v11106 = vrot.slane %v11105, 2
        %v11108 = vshll.u32 %v11073, 16
        %v11110 = vrot.slane %v11108, 7
        %v11111 = vsel %vm10650, %v11106, %v11110
        %v11113 = vshrl.u32 %v11080, 16
        %v11115 = vrot.slane %v11113, 6
        %v11116 = vshll.u32 %v11080, 16
        %v11118 = vrot.slane %v11116, 7
        %v11119 = vor.u32 %v11115, %v11118
        %v11120 = vrot.slane %v11119, 2
        %v11122 = vshll.u32 %v11081, 16
        %v11124 = vrot.slane %v11122, 7
        %v11125 = vsel %vm10650, %v11120, %v11124
        %v11127 = vshrl.u32 %v11088, 16
        %v11129 = vrot.slane %v11127, 6
        %v11130 = vshll.u32 %v11088, 16
        %v11132 = vrot.slane %v11130, 7
        %v11133 = vor.u32 %v11129, %v11132
        %v11134 = vrot.slane %v11133, 2
        %v11136 = vshll.u32 %v11089, 16
        %v11138 = vrot.slane %v11136, 7
        %v11139 = vsel %vm10650, %v11134, %v11138
        %v11141 = vshrl.u32 %v11096, 16
        %v11143 = vrot.slane %v11141, 6
        %v11144 = vshll.u32 %v11096, 16
        %v11146 = vrot.slane %v11144, 7
        %v11147 = vor.u32 %v11143, %v11146
        %v11148 = vrot.slane %v11147, 2
        %v11150 = vshll.u32 %v11097, 16
        %v11152 = vrot.slane %v11150, 7
        %v11153 = vsel %vm10650, %v11148, %v11152
        %v11154 = vcombine.low %v11111, %v11125
        %v11156 = vunpack.c.l.s4 1983009808
        %v11157 = vunpack.c.0.s8 %v11156
        %v11158 = vlaneseq
        %v11159 = vshrl.u32 %v11158, 7
        %v11160 = vsub.s32 %v11157, %v11159
        %v11161 = vrot.slane %v11154, %v11160
        %v11162 = vcombine.low %v11139, %v11153
        %v11164 = vunpack.c.l.s4 1983009808
        %v11165 = vunpack.c.0.s8 %v11164
        %v11166 = vlaneseq
        %v11167 = vshrl.u32 %v11166, 7
        %v11168 = vsub.s32 %v11165, %v11167
        %v11169 = vrot.slane %v11162, %v11168
        %11172 = vst [vmem:[#allocation9 + $0x1c] sm:$0xf] %v11161
        %11173 = vst [vmem:[#allocation9 + $0x40] sm:$0xf] %v11169
        %v11174 = vld [vmem:[%s11029] sm:$0x6]
        %v11175 = vld [vmem:[%s11029 + $0x4] sm:$0x6]
        %v11176 = vld [vmem:[%s11029 + $0x8] sm:$0x6]
        %v11177 = vld [vmem:[%s11029 + $0xc] sm:$0x6]
        %v11183 = vunpack.c.l.s4 1983009808
        %v11184 = vunpack.c.0.s8 %v11183
        %v11185 = vlaneseq
        %v11186 = vshrl.u32 %v11185, 7
        %v11187 = vsub.s32 %v11184, %v11186
        %v11188 = vrot.slane %v11174, %v11187
        %v11189 = vcombine.high %v11188, %v11188
        %v11191 = vunpack.c.l.s4 1983009808
        %v11192 = vunpack.c.0.s8 %v11191
        %v11193 = vlaneseq
        %v11194 = vshrl.u32 %v11193, 7
        %v11195 = vsub.s32 %v11192, %v11194
        %v11196 = vrot.slane %v11175, %v11195
        %v11197 = vcombine.high %v11196, %v11196
        %v11199 = vunpack.c.l.s4 1983009808
        %v11200 = vunpack.c.0.s8 %v11199
        %v11201 = vlaneseq
        %v11202 = vshrl.u32 %v11201, 7
        %v11203 = vsub.s32 %v11200, %v11202
        %v11204 = vrot.slane %v11176, %v11203
        %v11205 = vcombine.high %v11204, %v11204
        %v11207 = vunpack.c.l.s4 1983009808
        %v11208 = vunpack.c.0.s8 %v11207
        %v11209 = vlaneseq
        %v11210 = vshrl.u32 %v11209, 7
        %v11211 = vsub.s32 %v11208, %v11210
        %v11212 = vrot.slane %v11177, %v11211
        %v11213 = vcombine.high %v11212, %v11212
        %v11214 = vrot.slane %v11188, 7
        %v11215 = vrot.slane %v11214, 2
        %v11216 = vrot.slane %v11189, 7
        %v11217 = vsel %vm10772, %v11215, %v11216
        %v11218 = vrot.slane %v11196, 7
        %v11219 = vrot.slane %v11218, 2
        %v11220 = vrot.slane %v11197, 7
        %v11221 = vsel %vm10772, %v11219, %v11220
        %v11222 = vrot.slane %v11204, 7
        %v11223 = vrot.slane %v11222, 2
        %v11224 = vrot.slane %v11205, 7
        %v11225 = vsel %vm10772, %v11223, %v11224
        %v11226 = vrot.slane %v11212, 7
        %v11227 = vrot.slane %v11226, 2
        %v11228 = vrot.slane %v11213, 7
        %v11229 = vsel %vm10772, %v11227, %v11228
        %v11230 = vcombine.low %v11217, %v11221
        %v11232 = vunpack.c.l.s4 1983009808
        %v11233 = vunpack.c.0.s8 %v11232
        %v11234 = vlaneseq
        %v11235 = vshrl.u32 %v11234, 7
        %v11236 = vsub.s32 %v11233, %v11235
        %v11237 = vrot.slane %v11230, %v11236
        %v11238 = vcombine.low %v11225, %v11229
        %v11240 = vunpack.c.l.s4 1983009808
        %v11241 = vunpack.c.0.s8 %v11240
        %v11242 = vlaneseq
        %v11243 = vshrl.u32 %v11242, 7
        %v11244 = vsub.s32 %v11241, %v11243
        %v11245 = vrot.slane %v11238, %v11244
        %11248 = vst [vmem:[#allocation9 + $0x20] sm:$0xf] %v11237
        %11249 = vst [vmem:[#allocation9 + $0x44] sm:$0xf] %v11245
        %v11250 = vld [vmem:[#allocation9] sm:$0xff]
        %v11251 = vld [vmem:[#allocation9 + $0x8] sm:$0xff]
        %v11252 = vld [vmem:[#allocation9 + $0x10] sm:$0xff]
        %v11253 = vld [vmem:[#allocation9 + $0x18] sm:$0xff]
        %v11254 = vld [vmem:[#allocation9 + $0x20] sm:$0xf]
        %v11255 = vld [vmem:[#allocation9 + $0x24] sm:$0xff]
        %v11256 = vld [vmem:[#allocation9 + $0x2c] sm:$0xff]
        %v11257 = vld [vmem:[#allocation9 + $0x34] sm:$0xff]
        %v11258 = vld [vmem:[#allocation9 + $0x3c] sm:$0xff]
        %v11259 = vld [vmem:[#allocation9 + $0x44] sm:$0xf]
        %v11260 = vld [vmem:[%s9] sm:$0xff]
        %v11261 = vld [vmem:[%s9 + $0x8] sm:$0xff]
        %v11262 = vld [vmem:[%s9 + $0x10] sm:$0xff]
        %v11263 = vld [vmem:[%s9 + $0x18] sm:$0xff]
        %v11264 = vld [vmem:[%s9 + $0x20] sm:$0xff]
        %v11265 = vld [vmem:[%s9 + $0x28] sm:$0xff]
        %v11266 = vld [vmem:[%s9 + $0x30] sm:$0xff]
        %v11267 = vld [vmem:[%s9 + $0x38] sm:$0xff]
        %v11268 = vld [vmem:[%s9 + $0x40] sm:$0xff]
        %v11269 = vld [vmem:[%s9 + $0x48] sm:$0xff]
        %v11270 = vld [vmem:[%s9 + $0x50] sm:$0xff]
        %v11271 = vld [vmem:[%s9 + $0x58] sm:$0xff]
        %v11272 = vld [vmem:[%s9 + $0x60] sm:$0xff]
        %v11273 = vld [vmem:[%s9 + $0x68] sm:$0xff]
        %v11274 = vld [vmem:[%s9 + $0x70] sm:$0xff]
        %v11275 = vld [vmem:[%s9 + $0x78] sm:$0xff]
        %v11276 = vld [vmem:[%s9 + $0x80] sm:$0xff]
        %v11277 = vld [vmem:[%s9 + $0x88] sm:$0xff]
        %v11278 = vld [vmem:[%s9 + $0x90] sm:$0xff]
        %v11279 = vld [vmem:[%s9 + $0x98] sm:$0xff]
        %v11280 = vld [vmem:[%s9 + $0xa0] sm:$0xff]
        %v11281 = vld [vmem:[%s9 + $0xa8] sm:$0xff]
        %v11282 = vld [vmem:[%s9 + $0xb0] sm:$0xff]
        %v11283 = vld [vmem:[%s9 + $0xb8] sm:$0xff]
        %v11284 = vld [vmem:[%s9 + $0xc0] sm:$0xff]
        %v11285 = vld [vmem:[%s9 + $0xc8] sm:$0xff]
        %v11286 = vld [vmem:[%s9 + $0xd0] sm:$0xff]
        %v11287 = vld [vmem:[%s9 + $0xd8] sm:$0xff]
        %v11288 = vld [vmem:[%s9 + $0xe0] sm:$0xff]
        %v11289 = vld [vmem:[%s9 + $0xe8] sm:$0xff]
        %v11290 = vld [vmem:[%s9 + $0xf0] sm:$0xff]
        %v11291 = vld [vmem:[%s9 + $0xf8] sm:$0xff]
        %v11292 = vld [vmem:[%s9 + $0x100] sm:$0xff]
        %v11293 = vld [vmem:[%s9 + $0x108] sm:$0xff]
        %v11294 = vld [vmem:[%s9 + $0x110] sm:$0xff]
        %v11295 = vld [vmem:[%s9 + $0x118] sm:$0xff]
        %v11296 = vld [vmem:[%s9 + $0x120] sm:$0xff]
        %v11297 = vld [vmem:[%s9 + $0x128] sm:$0xff]
        %v11298 = vld [vmem:[%s9 + $0x130] sm:$0xff]
        %v11299 = vld [vmem:[%s9 + $0x138] sm:$0xff]
        %v11300 = vld [vmem:[%s9 + $0x140] sm:$0xff]
        %v11301 = vld [vmem:[%s9 + $0x148] sm:$0xff]
        %v11302 = vld [vmem:[%s9 + $0x150] sm:$0xff]
        %v11303 = vld [vmem:[%s9 + $0x158] sm:$0xff]
        %v11304 = vld [vmem:[%s9 + $0x160] sm:$0xff]
        %v11305 = vld [vmem:[%s9 + $0x168] sm:$0xff]
        %v11306 = vld [vmem:[%s9 + $0x170] sm:$0xff]
        %v11307 = vld [vmem:[%s9 + $0x178] sm:$0xff]
        %v11308 = vld [vmem:[%s9 + $0x180] sm:$0xff]
        %v11309 = vld [vmem:[%s9 + $0x188] sm:$0xff]
        %v11310 = vld [vmem:[%s9 + $0x190] sm:$0xff]
        %v11311 = vld [vmem:[%s9 + $0x198] sm:$0xff]
        %v11312 = vld [vmem:[%s9 + $0x1a0] sm:$0xff]
        %v11313 = vld [vmem:[%s9 + $0x1a8] sm:$0xff]
        %v11314 = vld [vmem:[%s9 + $0x1b0] sm:$0xff]
        %v11315 = vld [vmem:[%s9 + $0x1b8] sm:$0xff]
        %v11316 = vld [vmem:[%s9 + $0x1c0] sm:$0xff]
        %v11317 = vld [vmem:[%s9 + $0x1c8] sm:$0xff]
        %v11318 = vld [vmem:[%s9 + $0x1d0] sm:$0xff]
        %v11319 = vld [vmem:[%s9 + $0x1d8] sm:$0xff]
        %v11320 = vld [vmem:[%s9 + $0x1e0] sm:$0xff]
        %v11321 = vld [vmem:[%s9 + $0x1e8] sm:$0xff]
        %v11322 = vld [vmem:[%s9 + $0x1f0] sm:$0xff]
        %v11323 = vld [vmem:[%s9 + $0x1f8] sm:$0xff]
        %v11324 = vld [vmem:[%s9 + $0x200] sm:$0xff]
        %v11325 = vld [vmem:[%s9 + $0x208] sm:$0xff]
        %v11326 = vld [vmem:[%s9 + $0x210] sm:$0xff]
        %v11327 = vld [vmem:[%s9 + $0x218] sm:$0xff]
        %v11328 = vld [vmem:[%s9 + $0x220] sm:$0xff]
        %v11329 = vld [vmem:[%s9 + $0x228] sm:$0xff]
        %v11330 = vld [vmem:[%s9 + $0x230] sm:$0xff]
        %v11331 = vld [vmem:[%s9 + $0x238] sm:$0xff]
        %v11332 = vld [vmem:[%s9 + $0x240] sm:$0xff]
        %v11333 = vld [vmem:[%s9 + $0x248] sm:$0xff]
        %v11334 = vld [vmem:[%s9 + $0x250] sm:$0xff]
        %v11335 = vld [vmem:[%s9 + $0x258] sm:$0xff]
        %v11336 = vld [vmem:[%s9 + $0x260] sm:$0xff]
        %v11337 = vld [vmem:[%s9 + $0x268] sm:$0xff]
        %v11338 = vld [vmem:[%s9 + $0x270] sm:$0xff]
        %v11339 = vld [vmem:[%s9 + $0x278] sm:$0xff]
        %v11340 = vld [vmem:[%s9 + $0x280] sm:$0xff]
        %v11341 = vld [vmem:[%s9 + $0x288] sm:$0xff]
        %v11342 = vld [vmem:[%s9 + $0x290] sm:$0xff]
        %v11343 = vld [vmem:[%s9 + $0x298] sm:$0xff]
        %v11344 = vld [vmem:[%s9 + $0x2a0] sm:$0xff]
        %v11345 = vld [vmem:[%s9 + $0x2a8] sm:$0xff]
        %v11346 = vld [vmem:[%s9 + $0x2b0] sm:$0xff]
        %v11347 = vld [vmem:[%s9 + $0x2b8] sm:$0xff]
        %v11348 = vld [vmem:[%s9 + $0x2c0] sm:$0xff]
        %v11349 = vld [vmem:[%s9 + $0x2c8] sm:$0xff]
        %v11350 = vld [vmem:[%s9 + $0x2d0] sm:$0xff]
        %v11351 = vld [vmem:[%s9 + $0x2d8] sm:$0xff]
        %v11352 = vld [vmem:[%s9 + $0x2e0] sm:$0xff]
        %v11353 = vld [vmem:[%s9 + $0x2e8] sm:$0xff]
        %v11354 = vld [vmem:[%s9 + $0x2f0] sm:$0xff]
        %v11355 = vld [vmem:[%s9 + $0x2f8] sm:$0xff]
        %v11356 = vld [vmem:[%s9 + $0x300] sm:$0xff]
        %v11357 = vld [vmem:[%s9 + $0x308] sm:$0xff]
        %v11358 = vld [vmem:[%s9 + $0x310] sm:$0xff]
        %v11359 = vld [vmem:[%s9 + $0x318] sm:$0xff]
        %v11360 = vld [vmem:[%s9 + $0x320] sm:$0xff]
        %v11361 = vld [vmem:[%s9 + $0x328] sm:$0xff]
        %v11362 = vld [vmem:[%s9 + $0x330] sm:$0xff]
        %v11363 = vld [vmem:[%s9 + $0x338] sm:$0xff]
        %v11364 = vld [vmem:[%s9 + $0x340] sm:$0xff]
        %v11365 = vld [vmem:[%s9 + $0x348] sm:$0xff]
        %v11366 = vld [vmem:[%s9 + $0x350] sm:$0xff]
        %v11367 = vld [vmem:[%s9 + $0x358] sm:$0xff]
        %v11368 = vld [vmem:[%s9 + $0x360] sm:$0xff]
        %v11369 = vld [vmem:[%s9 + $0x368] sm:$0xff]
        %v11370 = vld [vmem:[%s9 + $0x370] sm:$0xff]
        %v11371 = vld [vmem:[%s9 + $0x378] sm:$0xff]
        %v11372 = vld [vmem:[%s9 + $0x380] sm:$0xff]
        %v11373 = vld [vmem:[%s9 + $0x388] sm:$0xff]
        %v11374 = vld [vmem:[%s9 + $0x390] sm:$0xff]
        %v11375 = vld [vmem:[%s9 + $0x398] sm:$0xff]
        %v11376 = vld [vmem:[%s9 + $0x3a0] sm:$0xff]
        %v11377 = vld [vmem:[%s9 + $0x3a8] sm:$0xff]
        %v11378 = vld [vmem:[%s9 + $0x3b0] sm:$0xff]
        %v11379 = vld [vmem:[%s9 + $0x3b8] sm:$0xff]
        %v11380 = vld [vmem:[%s9 + $0x3c0] sm:$0xff]
        %v11381 = vld [vmem:[%s9 + $0x3c8] sm:$0xff]
        %v11382 = vld [vmem:[%s9 + $0x3d0] sm:$0xff]
        %v11383 = vld [vmem:[%s9 + $0x3d8] sm:$0xff]
        %v11384 = vld [vmem:[%s9 + $0x3e0] sm:$0xff]
        %v11385 = vld [vmem:[%s9 + $0x3e8] sm:$0xff]
        %v11386 = vld [vmem:[%s9 + $0x3f0] sm:$0xff]
        %v11387 = vld [vmem:[%s9 + $0x3f8] sm:$0xff]
        %v11388 = vld [vmem:[%s9 + $0x400] sm:$0xff]
        %v11389 = vld [vmem:[%s9 + $0x408] sm:$0xff]
        %v11390 = vld [vmem:[%s9 + $0x410] sm:$0xff]
        %v11391 = vld [vmem:[%s9 + $0x418] sm:$0xff]
        %v11392 = vld [vmem:[%s9 + $0x420] sm:$0xff]
        %v11393 = vld [vmem:[%s9 + $0x428] sm:$0xff]
        %v11394 = vld [vmem:[%s9 + $0x430] sm:$0xff]
        %v11395 = vld [vmem:[%s9 + $0x438] sm:$0xff]
        %v11396 = vld [vmem:[%s9 + $0x440] sm:$0xff]
        %v11397 = vld [vmem:[%s9 + $0x448] sm:$0xff]
        %v11398 = vld [vmem:[%s9 + $0x450] sm:$0xff]
        %v11399 = vld [vmem:[%s9 + $0x458] sm:$0xff]
        %v11400 = vld [vmem:[%s9 + $0x460] sm:$0xff]
        %v11401 = vld [vmem:[%s9 + $0x468] sm:$0xff]
        %v11402 = vld [vmem:[%s9 + $0x470] sm:$0xff]
        %v11403 = vld [vmem:[%s9 + $0x478] sm:$0xff]
        %v11404 = vld [vmem:[%s10] sm:$0x3]
        %v11406 = vlaneseq
        %v11407 = vshrl.u32 %v11406, 7
        %v11408 = vsub.s32 0, %v11407
        %v11409 = vrot.slane %v11404, %v11408
        %v11410 = vlaneseq
        %v11411 = vshrl.u32 %v11410, 7
        %v11412 = vsub.s32 1, %v11411
        %v11413 = vrot.slane %v11404, %v11412
        %v11426 = vunpack.c.l.b16 %v11250
        %v11427 = vunpack.c.h.b16 %v11250
        %v11428 = vunpack.c.l.b16 %v11251
        %v11429 = vunpack.c.h.b16 %v11251
        %v11430 = vunpack.c.l.b16 %v11252
        %v11431 = vunpack.c.h.b16 %v11252
        %v11432 = vunpack.c.l.b16 %v11253
        %v11433 = vunpack.c.h.b16 %v11253
        %v11434 = vunpack.c.l.b16 %v11254
        %v11435 = vunpack.c.l.b16 %v11255
        %v11436 = vunpack.c.h.b16 %v11255
        %v11437 = vunpack.c.l.b16 %v11256
        %v11438 = vunpack.c.h.b16 %v11256
        %v11439 = vunpack.c.l.b16 %v11257
        %v11440 = vunpack.c.h.b16 %v11257
        %v11441 = vunpack.c.l.b16 %v11258
        %v11442 = vunpack.c.h.b16 %v11258
        %v11443 = vunpack.c.l.b16 %v11259
        %v11444 = vpack.c.b16 %v11435, %v11426
        %v11445 = vpack.c.b16 %v11436, %v11427
        %v11446 = vpack.c.b16 %v11437, %v11428
        %v11447 = vpack.c.b16 %v11438, %v11429
        %v11448 = vpack.c.b16 %v11439, %v11430
        %v11449 = vpack.c.b16 %v11440, %v11431
        %v11450 = vpack.c.b16 %v11441, %v11432
        %v11451 = vpack.c.b16 %v11442, %v11433
        %v11452 = vpack.c.b16 %v11443, %v11434
        %v11606 = vunpack.c.l.b16 %v11260
        %v11607 = vunpack.c.h.b16 %v11260
        %v11608 = vunpack.c.l.b16 %v11261
        %v11609 = vunpack.c.h.b16 %v11261
        %v11610 = vunpack.c.l.b16 %v11262
        %v11611 = vunpack.c.h.b16 %v11262
        %v11612 = vunpack.c.l.b16 %v11263
        %v11613 = vunpack.c.h.b16 %v11263
        %v11614 = vunpack.c.l.b16 %v11264
        %v11615 = vunpack.c.h.b16 %v11264
        %v11616 = vunpack.c.l.b16 %v11265
        %v11617 = vunpack.c.h.b16 %v11265
        %v11618 = vunpack.c.l.b16 %v11266
        %v11619 = vunpack.c.h.b16 %v11266
        %v11620 = vunpack.c.l.b16 %v11267
        %v11621 = vunpack.c.h.b16 %v11267
        %v11622 = vunpack.c.l.b16 %v11268
        %v11623 = vunpack.c.h.b16 %v11268
        %v11624 = vunpack.c.l.b16 %v11269
        %v11625 = vunpack.c.h.b16 %v11269
        %v11626 = vunpack.c.l.b16 %v11270
        %v11627 = vunpack.c.h.b16 %v11270
        %v11628 = vunpack.c.l.b16 %v11271
        %v11629 = vunpack.c.h.b16 %v11271
        %v11630 = vunpack.c.l.b16 %v11272
        %v11631 = vunpack.c.h.b16 %v11272
        %v11632 = vunpack.c.l.b16 %v11273
        %v11633 = vunpack.c.h.b16 %v11273
        %v11634 = vunpack.c.l.b16 %v11274
        %v11635 = vunpack.c.h.b16 %v11274
        %v11636 = vunpack.c.l.b16 %v11275
        %v11637 = vunpack.c.h.b16 %v11275
        %v11638 = vunpack.c.l.b16 %v11276
        %v11639 = vunpack.c.h.b16 %v11276
        %v11640 = vunpack.c.l.b16 %v11277
        %v11641 = vunpack.c.h.b16 %v11277
        %v11642 = vunpack.c.l.b16 %v11278
        %v11643 = vunpack.c.h.b16 %v11278
        %v11644 = vunpack.c.l.b16 %v11279
        %v11645 = vunpack.c.h.b16 %v11279
        %v11646 = vunpack.c.l.b16 %v11280
        %v11647 = vunpack.c.h.b16 %v11280
        %v11648 = vunpack.c.l.b16 %v11281
        %v11649 = vunpack.c.h.b16 %v11281
        %v11650 = vunpack.c.l.b16 %v11282
        %v11651 = vunpack.c.h.b16 %v11282
        %v11652 = vunpack.c.l.b16 %v11283
        %v11653 = vunpack.c.h.b16 %v11283
        %v11654 = vunpack.c.l.b16 %v11284
        %v11655 = vunpack.c.h.b16 %v11284
        %v11656 = vunpack.c.l.b16 %v11285
        %v11657 = vunpack.c.h.b16 %v11285
        %v11658 = vunpack.c.l.b16 %v11286
        %v11659 = vunpack.c.h.b16 %v11286
        %v11660 = vunpack.c.l.b16 %v11287
        %v11661 = vunpack.c.h.b16 %v11287
        %v11662 = vunpack.c.l.b16 %v11288
        %v11663 = vunpack.c.h.b16 %v11288
        %v11664 = vunpack.c.l.b16 %v11289
        %v11665 = vunpack.c.h.b16 %v11289
        %v11666 = vunpack.c.l.b16 %v11290
        %v11667 = vunpack.c.h.b16 %v11290
        %v11668 = vunpack.c.l.b16 %v11291
        %v11669 = vunpack.c.h.b16 %v11291
        %v11670 = vunpack.c.l.b16 %v11292
        %v11671 = vunpack.c.h.b16 %v11292
        %v11672 = vunpack.c.l.b16 %v11293
        %v11673 = vunpack.c.h.b16 %v11293
        %v11674 = vunpack.c.l.b16 %v11294
        %v11675 = vunpack.c.h.b16 %v11294
        %v11676 = vunpack.c.l.b16 %v11295
        %v11677 = vunpack.c.h.b16 %v11295
        %v11678 = vunpack.c.l.b16 %v11296
        %v11679 = vunpack.c.h.b16 %v11296
        %v11680 = vunpack.c.l.b16 %v11297
        %v11681 = vunpack.c.h.b16 %v11297
        %v11682 = vunpack.c.l.b16 %v11298
        %v11683 = vunpack.c.h.b16 %v11298
        %v11684 = vunpack.c.l.b16 %v11299
        %v11685 = vunpack.c.h.b16 %v11299
        %v11686 = vunpack.c.l.b16 %v11300
        %v11687 = vunpack.c.h.b16 %v11300
        %v11688 = vunpack.c.l.b16 %v11301
        %v11689 = vunpack.c.h.b16 %v11301
        %v11690 = vunpack.c.l.b16 %v11302
        %v11691 = vunpack.c.h.b16 %v11302
        %v11692 = vunpack.c.l.b16 %v11303
        %v11693 = vunpack.c.h.b16 %v11303
        %v11694 = vunpack.c.l.b16 %v11304
        %v11695 = vunpack.c.h.b16 %v11304
        %v11696 = vunpack.c.l.b16 %v11305
        %v11697 = vunpack.c.h.b16 %v11305
        %v11698 = vunpack.c.l.b16 %v11306
        %v11699 = vunpack.c.h.b16 %v11306
        %v11700 = vunpack.c.l.b16 %v11307
        %v11701 = vunpack.c.h.b16 %v11307
        %v11702 = vunpack.c.l.b16 %v11308
        %v11703 = vunpack.c.h.b16 %v11308
        %v11704 = vunpack.c.l.b16 %v11309
        %v11705 = vunpack.c.h.b16 %v11309
        %v11706 = vunpack.c.l.b16 %v11310
        %v11707 = vunpack.c.h.b16 %v11310
        %v11708 = vunpack.c.l.b16 %v11311
        %v11709 = vunpack.c.h.b16 %v11311
        %v11710 = vunpack.c.l.b16 %v11312
        %v11711 = vunpack.c.h.b16 %v11312
        %v11712 = vunpack.c.l.b16 %v11313
        %v11713 = vunpack.c.h.b16 %v11313
        %v11714 = vunpack.c.l.b16 %v11314
        %v11715 = vunpack.c.h.b16 %v11314
        %v11716 = vunpack.c.l.b16 %v11315
        %v11717 = vunpack.c.h.b16 %v11315
        %v11718 = vunpack.c.l.b16 %v11316
        %v11719 = vunpack.c.h.b16 %v11316
        %v11720 = vunpack.c.l.b16 %v11317
        %v11721 = vunpack.c.h.b16 %v11317
        %v11722 = vunpack.c.l.b16 %v11318
        %v11723 = vunpack.c.h.b16 %v11318
        %v11724 = vunpack.c.l.b16 %v11319
        %v11725 = vunpack.c.h.b16 %v11319
        %v11726 = vunpack.c.l.b16 %v11320
        %v11727 = vunpack.c.h.b16 %v11320
        %v11728 = vunpack.c.l.b16 %v11321
        %v11729 = vunpack.c.h.b16 %v11321
        %v11730 = vunpack.c.l.b16 %v11322
        %v11731 = vunpack.c.h.b16 %v11322
        %v11732 = vunpack.c.l.b16 %v11323
        %v11733 = vunpack.c.h.b16 %v11323
        %v11734 = vunpack.c.l.b16 %v11324
        %v11735 = vunpack.c.h.b16 %v11324
        %v11736 = vunpack.c.l.b16 %v11325
        %v11737 = vunpack.c.h.b16 %v11325
        %v11738 = vunpack.c.l.b16 %v11326
        %v11739 = vunpack.c.h.b16 %v11326
        %v11740 = vunpack.c.l.b16 %v11327
        %v11741 = vunpack.c.h.b16 %v11327
        %v11742 = vunpack.c.l.b16 %v11328
        %v11743 = vunpack.c.h.b16 %v11328
        %v11744 = vunpack.c.l.b16 %v11329
        %v11745 = vunpack.c.h.b16 %v11329
        %v11746 = vunpack.c.l.b16 %v11330
        %v11747 = vunpack.c.h.b16 %v11330
        %v11748 = vunpack.c.l.b16 %v11331
        %v11749 = vunpack.c.h.b16 %v11331
        %v11750 = vunpack.c.l.b16 %v11332
        %v11751 = vunpack.c.h.b16 %v11332
        %v11752 = vunpack.c.l.b16 %v11333
        %v11753 = vunpack.c.h.b16 %v11333
        %v11754 = vunpack.c.l.b16 %v11334
        %v11755 = vunpack.c.h.b16 %v11334
        %v11756 = vunpack.c.l.b16 %v11335
        %v11757 = vunpack.c.h.b16 %v11335
        %v11758 = vunpack.c.l.b16 %v11336
        %v11759 = vunpack.c.h.b16 %v11336
        %v11760 = vunpack.c.l.b16 %v11337
        %v11761 = vunpack.c.h.b16 %v11337
        %v11762 = vunpack.c.l.b16 %v11338
        %v11763 = vunpack.c.h.b16 %v11338
        %v11764 = vunpack.c.l.b16 %v11339
        %v11765 = vunpack.c.h.b16 %v11339
        %v11766 = vunpack.c.l.b16 %v11340
        %v11767 = vunpack.c.h.b16 %v11340
        %v11768 = vunpack.c.l.b16 %v11341
        %v11769 = vunpack.c.h.b16 %v11341
        %v11770 = vunpack.c.l.b16 %v11342
        %v11771 = vunpack.c.h.b16 %v11342
        %v11772 = vunpack.c.l.b16 %v11343
        %v11773 = vunpack.c.h.b16 %v11343
        %v11774 = vunpack.c.l.b16 %v11344
        %v11775 = vunpack.c.h.b16 %v11344
        %v11776 = vunpack.c.l.b16 %v11345
        %v11777 = vunpack.c.h.b16 %v11345
        %v11778 = vunpack.c.l.b16 %v11346
        %v11779 = vunpack.c.h.b16 %v11346
        %v11780 = vunpack.c.l.b16 %v11347
        %v11781 = vunpack.c.h.b16 %v11347
        %v11782 = vunpack.c.l.b16 %v11348
        %v11783 = vunpack.c.h.b16 %v11348
        %v11784 = vunpack.c.l.b16 %v11349
        %v11785 = vunpack.c.h.b16 %v11349
        %v11786 = vunpack.c.l.b16 %v11350
        %v11787 = vunpack.c.h.b16 %v11350
        %v11788 = vunpack.c.l.b16 %v11351
        %v11789 = vunpack.c.h.b16 %v11351
        %v11790 = vunpack.c.l.b16 %v11352
        %v11791 = vunpack.c.h.b16 %v11352
        %v11792 = vunpack.c.l.b16 %v11353
        %v11793 = vunpack.c.h.b16 %v11353
        %v11794 = vunpack.c.l.b16 %v11354
        %v11795 = vunpack.c.h.b16 %v11354
        %v11796 = vunpack.c.l.b16 %v11355
        %v11797 = vunpack.c.h.b16 %v11355
        %v11798 = vunpack.c.l.b16 %v11356
        %v11799 = vunpack.c.h.b16 %v11356
        %v11800 = vunpack.c.l.b16 %v11357
        %v11801 = vunpack.c.h.b16 %v11357
        %v11802 = vunpack.c.l.b16 %v11358
        %v11803 = vunpack.c.h.b16 %v11358
        %v11804 = vunpack.c.l.b16 %v11359
        %v11805 = vunpack.c.h.b16 %v11359
        %v11806 = vunpack.c.l.b16 %v11360
        %v11807 = vunpack.c.h.b16 %v11360
        %v11808 = vunpack.c.l.b16 %v11361
        %v11809 = vunpack.c.h.b16 %v11361
        %v11810 = vunpack.c.l.b16 %v11362
        %v11811 = vunpack.c.h.b16 %v11362
        %v11812 = vunpack.c.l.b16 %v11363
        %v11813 = vunpack.c.h.b16 %v11363
        %v11814 = vunpack.c.l.b16 %v11364
        %v11815 = vunpack.c.h.b16 %v11364
        %v11816 = vunpack.c.l.b16 %v11365
        %v11817 = vunpack.c.h.b16 %v11365
        %v11818 = vunpack.c.l.b16 %v11366
        %v11819 = vunpack.c.h.b16 %v11366
        %v11820 = vunpack.c.l.b16 %v11367
        %v11821 = vunpack.c.h.b16 %v11367
        %v11822 = vunpack.c.l.b16 %v11368
        %v11823 = vunpack.c.h.b16 %v11368
        %v11824 = vunpack.c.l.b16 %v11369
        %v11825 = vunpack.c.h.b16 %v11369
        %v11826 = vunpack.c.l.b16 %v11370
        %v11827 = vunpack.c.h.b16 %v11370
        %v11828 = vunpack.c.l.b16 %v11371
        %v11829 = vunpack.c.h.b16 %v11371
        %v11830 = vunpack.c.l.b16 %v11372
        %v11831 = vunpack.c.h.b16 %v11372
        %v11832 = vunpack.c.l.b16 %v11373
        %v11833 = vunpack.c.h.b16 %v11373
        %v11834 = vunpack.c.l.b16 %v11374
        %v11835 = vunpack.c.h.b16 %v11374
        %v11836 = vunpack.c.l.b16 %v11375
        %v11837 = vunpack.c.h.b16 %v11375
        %v11838 = vunpack.c.l.b16 %v11376
        %v11839 = vunpack.c.h.b16 %v11376
        %v11840 = vunpack.c.l.b16 %v11377
        %v11841 = vunpack.c.h.b16 %v11377
        %v11842 = vunpack.c.l.b16 %v11378
        %v11843 = vunpack.c.h.b16 %v11378
        %v11844 = vunpack.c.l.b16 %v11379
        %v11845 = vunpack.c.h.b16 %v11379
        %v11846 = vunpack.c.l.b16 %v11380
        %v11847 = vunpack.c.h.b16 %v11380
        %v11848 = vunpack.c.l.b16 %v11381
        %v11849 = vunpack.c.h.b16 %v11381
        %v11850 = vunpack.c.l.b16 %v11382
        %v11851 = vunpack.c.h.b16 %v11382
        %v11852 = vunpack.c.l.b16 %v11383
        %v11853 = vunpack.c.h.b16 %v11383
        %v11854 = vunpack.c.l.b16 %v11384
        %v11855 = vunpack.c.h.b16 %v11384
        %v11856 = vunpack.c.l.b16 %v11385
        %v11857 = vunpack.c.h.b16 %v11385
        %v11858 = vunpack.c.l.b16 %v11386
        %v11859 = vunpack.c.h.b16 %v11386
        %v11860 = vunpack.c.l.b16 %v11387
        %v11861 = vunpack.c.h.b16 %v11387
        %v11862 = vunpack.c.l.b16 %v11388
        %v11863 = vunpack.c.h.b16 %v11388
        %v11864 = vunpack.c.l.b16 %v11389
        %v11865 = vunpack.c.h.b16 %v11389
        %v11866 = vunpack.c.l.b16 %v11390
        %v11867 = vunpack.c.h.b16 %v11390
        %v11868 = vunpack.c.l.b16 %v11391
        %v11869 = vunpack.c.h.b16 %v11391
        %v11870 = vunpack.c.l.b16 %v11392
        %v11871 = vunpack.c.h.b16 %v11392
        %v11872 = vunpack.c.l.b16 %v11393
        %v11873 = vunpack.c.h.b16 %v11393
        %v11874 = vunpack.c.l.b16 %v11394
        %v11875 = vunpack.c.h.b16 %v11394
        %v11876 = vunpack.c.l.b16 %v11395
        %v11877 = vunpack.c.h.b16 %v11395
        %v11878 = vunpack.c.l.b16 %v11396
        %v11879 = vunpack.c.h.b16 %v11396
        %v11880 = vunpack.c.l.b16 %v11397
        %v11881 = vunpack.c.h.b16 %v11397
        %v11882 = vunpack.c.l.b16 %v11398
        %v11883 = vunpack.c.h.b16 %v11398
        %v11884 = vunpack.c.l.b16 %v11399
        %v11885 = vunpack.c.h.b16 %v11399
        %v11886 = vunpack.c.l.b16 %v11400
        %v11887 = vunpack.c.h.b16 %v11400
        %v11888 = vunpack.c.l.b16 %v11401
        %v11889 = vunpack.c.h.b16 %v11401
        %v11890 = vunpack.c.l.b16 %v11402
        %v11891 = vunpack.c.h.b16 %v11402
        %v11892 = vunpack.c.l.b16 %v11403
        %v11893 = vunpack.c.h.b16 %v11403
        %v11894 = vpack.c.b16 %v11608, %v11606
        %v11895 = vpack.c.b16 %v11609, %v11607
        %v11896 = vpack.c.b16 %v11612, %v11610
        %v11897 = vpack.c.b16 %v11613, %v11611
        %v11898 = vpack.c.b16 %v11616, %v11614
        %v11899 = vpack.c.b16 %v11617, %v11615
        %v11900 = vpack.c.b16 %v11620, %v11618
        %v11901 = vpack.c.b16 %v11621, %v11619
        %v11902 = vpack.c.b16 %v11624, %v11622
        %v11903 = vpack.c.b16 %v11625, %v11623
        %v11904 = vpack.c.b16 %v11628, %v11626
        %v11905 = vpack.c.b16 %v11629, %v11627
        %v11906 = vpack.c.b16 %v11632, %v11630
        %v11907 = vpack.c.b16 %v11633, %v11631
        %v11908 = vpack.c.b16 %v11636, %v11634
        %v11909 = vpack.c.b16 %v11637, %v11635
        %v11910 = vpack.c.b16 %v11640, %v11638
        %v11911 = vpack.c.b16 %v11641, %v11639
        %v11912 = vpack.c.b16 %v11644, %v11642
        %v11913 = vpack.c.b16 %v11645, %v11643
        %v11914 = vpack.c.b16 %v11648, %v11646
        %v11915 = vpack.c.b16 %v11649, %v11647
        %v11916 = vpack.c.b16 %v11652, %v11650
        %v11917 = vpack.c.b16 %v11653, %v11651
        %v11918 = vpack.c.b16 %v11656, %v11654
        %v11919 = vpack.c.b16 %v11657, %v11655
        %v11920 = vpack.c.b16 %v11660, %v11658
        %v11921 = vpack.c.b16 %v11661, %v11659
        %v11922 = vpack.c.b16 %v11664, %v11662
        %v11923 = vpack.c.b16 %v11665, %v11663
        %v11924 = vpack.c.b16 %v11668, %v11666
        %v11925 = vpack.c.b16 %v11669, %v11667
        %v11926 = vpack.c.b16 %v11672, %v11670
        %v11927 = vpack.c.b16 %v11673, %v11671
        %v11928 = vpack.c.b16 %v11676, %v11674
        %v11929 = vpack.c.b16 %v11677, %v11675
        %v11930 = vpack.c.b16 %v11680, %v11678
        %v11931 = vpack.c.b16 %v11681, %v11679
        %v11932 = vpack.c.b16 %v11684, %v11682
        %v11933 = vpack.c.b16 %v11685, %v11683
        %v11934 = vpack.c.b16 %v11688, %v11686
        %v11935 = vpack.c.b16 %v11689, %v11687
        %v11936 = vpack.c.b16 %v11692, %v11690
        %v11937 = vpack.c.b16 %v11693, %v11691
        %v11938 = vpack.c.b16 %v11696, %v11694
        %v11939 = vpack.c.b16 %v11697, %v11695
        %v11940 = vpack.c.b16 %v11700, %v11698
        %v11941 = vpack.c.b16 %v11701, %v11699
        %v11942 = vpack.c.b16 %v11704, %v11702
        %v11943 = vpack.c.b16 %v11705, %v11703
        %v11944 = vpack.c.b16 %v11708, %v11706
        %v11945 = vpack.c.b16 %v11709, %v11707
        %v11946 = vpack.c.b16 %v11712, %v11710
        %v11947 = vpack.c.b16 %v11713, %v11711
        %v11948 = vpack.c.b16 %v11716, %v11714
        %v11949 = vpack.c.b16 %v11717, %v11715
        %v11950 = vpack.c.b16 %v11720, %v11718
        %v11951 = vpack.c.b16 %v11721, %v11719
        %v11952 = vpack.c.b16 %v11724, %v11722
        %v11953 = vpack.c.b16 %v11725, %v11723
        %v11954 = vpack.c.b16 %v11728, %v11726
        %v11955 = vpack.c.b16 %v11729, %v11727
        %v11956 = vpack.c.b16 %v11732, %v11730
        %v11957 = vpack.c.b16 %v11733, %v11731
        %v11958 = vpack.c.b16 %v11736, %v11734
        %v11959 = vpack.c.b16 %v11737, %v11735
        %v11960 = vpack.c.b16 %v11740, %v11738
        %v11961 = vpack.c.b16 %v11741, %v11739
        %v11962 = vpack.c.b16 %v11744, %v11742
        %v11963 = vpack.c.b16 %v11745, %v11743
        %v11964 = vpack.c.b16 %v11748, %v11746
        %v11965 = vpack.c.b16 %v11749, %v11747
        %v11966 = vpack.c.b16 %v11752, %v11750
        %v11967 = vpack.c.b16 %v11753, %v11751
        %v11968 = vpack.c.b16 %v11756, %v11754
        %v11969 = vpack.c.b16 %v11757, %v11755
        %v11970 = vpack.c.b16 %v11760, %v11758
        %v11971 = vpack.c.b16 %v11761, %v11759
        %v11972 = vpack.c.b16 %v11764, %v11762
        %v11973 = vpack.c.b16 %v11765, %v11763
        %v11974 = vpack.c.b16 %v11768, %v11766
        %v11975 = vpack.c.b16 %v11769, %v11767
        %v11976 = vpack.c.b16 %v11772, %v11770
        %v11977 = vpack.c.b16 %v11773, %v11771
        %v11978 = vpack.c.b16 %v11776, %v11774
        %v11979 = vpack.c.b16 %v11777, %v11775
        %v11980 = vpack.c.b16 %v11780, %v11778
        %v11981 = vpack.c.b16 %v11781, %v11779
        %v11982 = vpack.c.b16 %v11784, %v11782
        %v11983 = vpack.c.b16 %v11785, %v11783
        %v11984 = vpack.c.b16 %v11788, %v11786
        %v11985 = vpack.c.b16 %v11789, %v11787
        %v11986 = vpack.c.b16 %v11792, %v11790
        %v11987 = vpack.c.b16 %v11793, %v11791
        %v11988 = vpack.c.b16 %v11796, %v11794
        %v11989 = vpack.c.b16 %v11797, %v11795
        %v11990 = vpack.c.b16 %v11800, %v11798
        %v11991 = vpack.c.b16 %v11801, %v11799
        %v11992 = vpack.c.b16 %v11804, %v11802
        %v11993 = vpack.c.b16 %v11805, %v11803
        %v11994 = vpack.c.b16 %v11808, %v11806
        %v11995 = vpack.c.b16 %v11809, %v11807
        %v11996 = vpack.c.b16 %v11812, %v11810
        %v11997 = vpack.c.b16 %v11813, %v11811
        %v11998 = vpack.c.b16 %v11816, %v11814
        %v11999 = vpack.c.b16 %v11817, %v11815
        %v12000 = vpack.c.b16 %v11820, %v11818
        %v12001 = vpack.c.b16 %v11821, %v11819
        %v12002 = vpack.c.b16 %v11824, %v11822
        %v12003 = vpack.c.b16 %v11825, %v11823
        %v12004 = vpack.c.b16 %v11828, %v11826
        %v12005 = vpack.c.b16 %v11829, %v11827
        %v12006 = vpack.c.b16 %v11832, %v11830
        %v12007 = vpack.c.b16 %v11833, %v11831
        %v12008 = vpack.c.b16 %v11836, %v11834
        %v12009 = vpack.c.b16 %v11837, %v11835
        %v12010 = vpack.c.b16 %v11840, %v11838
        %v12011 = vpack.c.b16 %v11841, %v11839
        %v12012 = vpack.c.b16 %v11844, %v11842
        %v12013 = vpack.c.b16 %v11845, %v11843
        %v12014 = vpack.c.b16 %v11848, %v11846
        %v12015 = vpack.c.b16 %v11849, %v11847
        %v12016 = vpack.c.b16 %v11852, %v11850
        %v12017 = vpack.c.b16 %v11853, %v11851
        %v12018 = vpack.c.b16 %v11856, %v11854
        %v12019 = vpack.c.b16 %v11857, %v11855
        %v12020 = vpack.c.b16 %v11860, %v11858
        %v12021 = vpack.c.b16 %v11861, %v11859
        %v12022 = vpack.c.b16 %v11864, %v11862
        %v12023 = vpack.c.b16 %v11865, %v11863
        %v12024 = vpack.c.b16 %v11868, %v11866
        %v12025 = vpack.c.b16 %v11869, %v11867
        %v12026 = vpack.c.b16 %v11872, %v11870
        %v12027 = vpack.c.b16 %v11873, %v11871
        %v12028 = vpack.c.b16 %v11876, %v11874
        %v12029 = vpack.c.b16 %v11877, %v11875
        %v12030 = vpack.c.b16 %v11880, %v11878
        %v12031 = vpack.c.b16 %v11881, %v11879
        %v12032 = vpack.c.b16 %v11884, %v11882
        %v12033 = vpack.c.b16 %v11885, %v11883
        %v12034 = vpack.c.b16 %v11888, %v11886
        %v12035 = vpack.c.b16 %v11889, %v11887
        %v12036 = vpack.c.b16 %v11892, %v11890
        %v12037 = vpack.c.b16 %v11893, %v11891
        %12182 = vmatprep.subr.bf16.mxu0 %v11909
        %12183 = vmatpush1.bf16.msra.mxu0 %v11908
        %12184 = vmatprep.subr.bf16.mxu0 %v11907
        %12185 = vmatpush1.bf16.msra.mxu0 %v11906
        %12186 = vmatprep.subr.bf16.mxu0 %v11905
        %12187 = vmatpush1.bf16.msra.mxu0 %v11904
        %12188 = vmatprep.subr.bf16.mxu0 %v11903
        %12189 = vmatpush1.bf16.msra.mxu0 %v11902
        %12190 = vmatprep.subr.bf16.mxu0 %v11901
        %12191 = vmatpush1.bf16.msra.mxu0 %v11900
        %12192 = vmatprep.subr.bf16.mxu0 %v11899
        %12193 = vmatpush1.bf16.msra.mxu0 %v11898
        %12194 = vmatprep.subr.bf16.mxu0 %v11897
        %12195 = vmatpush1.bf16.msra.mxu0 %v11896
        %12196 = vmatprep.subr.bf16.mxu0 %v11895
        %12197 = vmatpush1.bf16.msra.mxu0 %v11894
        %12198 = vmatprep.subr.bf16.mxu0 %v11925
        %12199 = vmatpush2.bf16.msra.mxu0 %v11924
        %12200 = vmatprep.subr.bf16.mxu0 %v11923
        %12201 = vmatpush2.bf16.msra.mxu0 %v11922
        %12202 = vmatprep.subr.bf16.mxu0 %v11921
        %12203 = vmatpush2.bf16.msra.mxu0 %v11920
        %12204 = vmatprep.subr.bf16.mxu0 %v11919
        %12205 = vmatpush2.bf16.msra.mxu0 %v11918
        %12206 = vmatprep.subr.bf16.mxu0 %v11917
        %12207 = vmatpush2.bf16.msra.mxu0 %v11916
        %12208 = vmatprep.subr.bf16.mxu0 %v11915
        %12209 = vmatpush2.bf16.msra.mxu0 %v11914
        %12210 = vmatprep.subr.bf16.mxu0 %v11913
        %12211 = vmatpush2.bf16.msra.mxu0 %v11912
        %12212 = vmatprep.subr.bf16.mxu0 %v11911
        %12213 = vmatpush2.bf16.msra.mxu0 %v11910
        %12214 = vmatprep.mubr.bf16.mxu0 %v11445
        %12215 = vmatmul.mubr.bf16.gmra.mxu0 %v11444
        %v12216 = vpop.f32.mrf.mxu0
        %v12217 = vadd.f32 %v11409, %v12216
        %v12218 = vpop.f32.mrf.mxu0
        %v12219 = vadd.f32 %v11413, %v12218
        %v12220 = vpop.f32.mrf.mxu0
        %v12221 = vadd.f32 %v11409, %v12220
        %v12222 = vpop.f32.mrf.mxu0
        %v12223 = vadd.f32 %v11413, %v12222
        %12224 = vdwg.mxu0
        %12225 = vmatprep.subr.bf16.mxu0 %v11941
        %12226 = vmatpush1.bf16.msra.mxu0 %v11940
        %12227 = vmatprep.subr.bf16.mxu0 %v11939
        %12228 = vmatpush1.bf16.msra.mxu0 %v11938
        %12229 = vmatprep.subr.bf16.mxu0 %v11937
        %12230 = vmatpush1.bf16.msra.mxu0 %v11936
        %12231 = vmatprep.subr.bf16.mxu0 %v11935
        %12232 = vmatpush1.bf16.msra.mxu0 %v11934
        %12233 = vmatprep.subr.bf16.mxu0 %v11933
        %12234 = vmatpush1.bf16.msra.mxu0 %v11932
        %12235 = vmatprep.subr.bf16.mxu0 %v11931
        %12236 = vmatpush1.bf16.msra.mxu0 %v11930
        %12237 = vmatprep.subr.bf16.mxu0 %v11929
        %12238 = vmatpush1.bf16.msra.mxu0 %v11928
        %12239 = vmatprep.subr.bf16.mxu0 %v11927
        %12240 = vmatpush1.bf16.msra.mxu0 %v11926
        %12241 = vmatprep.subr.bf16.mxu0 %v11957
        %12242 = vmatpush2.bf16.msra.mxu0 %v11956
        %12243 = vmatprep.subr.bf16.mxu0 %v11955
        %12244 = vmatpush2.bf16.msra.mxu0 %v11954
        %12245 = vmatprep.subr.bf16.mxu0 %v11953
        %12246 = vmatpush2.bf16.msra.mxu0 %v11952
        %12247 = vmatprep.subr.bf16.mxu0 %v11951
        %12248 = vmatpush2.bf16.msra.mxu0 %v11950
        %12249 = vmatprep.subr.bf16.mxu0 %v11949
        %12250 = vmatpush2.bf16.msra.mxu0 %v11948
        %12251 = vmatprep.subr.bf16.mxu0 %v11947
        %12252 = vmatpush2.bf16.msra.mxu0 %v11946
        %12253 = vmatprep.subr.bf16.mxu0 %v11945
        %12254 = vmatpush2.bf16.msra.mxu0 %v11944
        %12255 = vmatprep.subr.bf16.mxu0 %v11943
        %12256 = vmatpush2.bf16.msra.mxu0 %v11942
        %12257 = vmatprep.mubr.bf16.mxu0 %v11447
        %12258 = vmatmul.mubr.bf16.gmra.mxu0 %v11446
        %v12259 = vpop.f32.mrf.mxu0
        %v12260 = vadd.f32 %v12217, %v12259
        %v12261 = vpop.f32.mrf.mxu0
        %v12262 = vadd.f32 %v12219, %v12261
        %v12263 = vpop.f32.mrf.mxu0
        %v12264 = vadd.f32 %v12221, %v12263
        %v12265 = vpop.f32.mrf.mxu0
        %v12266 = vadd.f32 %v12223, %v12265
        %12267 = vdwg.mxu0
        %12268 = vmatprep.subr.bf16.mxu0 %v11973
        %12269 = vmatpush1.bf16.msra.mxu0 %v11972
        %12270 = vmatprep.subr.bf16.mxu0 %v11971
        %12271 = vmatpush1.bf16.msra.mxu0 %v11970
        %12272 = vmatprep.subr.bf16.mxu0 %v11969
        %12273 = vmatpush1.bf16.msra.mxu0 %v11968
        %12274 = vmatprep.subr.bf16.mxu0 %v11967
        %12275 = vmatpush1.bf16.msra.mxu0 %v11966
        %12276 = vmatprep.subr.bf16.mxu0 %v11965
        %12277 = vmatpush1.bf16.msra.mxu0 %v11964
        %12278 = vmatprep.subr.bf16.mxu0 %v11963
        %12279 = vmatpush1.bf16.msra.mxu0 %v11962
        %12280 = vmatprep.subr.bf16.mxu0 %v11961
        %12281 = vmatpush1.bf16.msra.mxu0 %v11960
        %12282 = vmatprep.subr.bf16.mxu0 %v11959
        %12283 = vmatpush1.bf16.msra.mxu0 %v11958
        %12284 = vmatprep.subr.bf16.mxu0 %v11989
        %12285 = vmatpush2.bf16.msra.mxu0 %v11988
        %12286 = vmatprep.subr.bf16.mxu0 %v11987
        %12287 = vmatpush2.bf16.msra.mxu0 %v11986
        %12288 = vmatprep.subr.bf16.mxu0 %v11985
        %12289 = vmatpush2.bf16.msra.mxu0 %v11984
        %12290 = vmatprep.subr.bf16.mxu0 %v11983
        %12291 = vmatpush2.bf16.msra.mxu0 %v11982
        %12292 = vmatprep.subr.bf16.mxu0 %v11981
        %12293 = vmatpush2.bf16.msra.mxu0 %v11980
        %12294 = vmatprep.subr.bf16.mxu0 %v11979
        %12295 = vmatpush2.bf16.msra.mxu0 %v11978
        %12296 = vmatprep.subr.bf16.mxu0 %v11977
        %12297 = vmatpush2.bf16.msra.mxu0 %v11976
        %12298 = vmatprep.subr.bf16.mxu0 %v11975
        %12299 = vmatpush2.bf16.msra.mxu0 %v11974
        %12300 = vmatprep.mubr.bf16.mxu0 %v11449
        %12301 = vmatmul.mubr.bf16.gmra.mxu0 %v11448
        %v12302 = vpop.f32.mrf.mxu0
        %v12303 = vadd.f32 %v12260, %v12302
        %v12304 = vpop.f32.mrf.mxu0
        %v12305 = vadd.f32 %v12262, %v12304
        %v12306 = vpop.f32.mrf.mxu0
        %v12307 = vadd.f32 %v12264, %v12306
        %v12308 = vpop.f32.mrf.mxu0
        %v12309 = vadd.f32 %v12266, %v12308
        %12310 = vdwg.mxu0
        %12311 = vmatprep.subr.bf16.mxu0 %v12005
        %12312 = vmatpush1.bf16.msra.mxu0 %v12004
        %12313 = vmatprep.subr.bf16.mxu0 %v12003
        %12314 = vmatpush1.bf16.msra.mxu0 %v12002
        %12315 = vmatprep.subr.bf16.mxu0 %v12001
        %12316 = vmatpush1.bf16.msra.mxu0 %v12000
        %12317 = vmatprep.subr.bf16.mxu0 %v11999
        %12318 = vmatpush1.bf16.msra.mxu0 %v11998
        %12319 = vmatprep.subr.bf16.mxu0 %v11997
        %12320 = vmatpush1.bf16.msra.mxu0 %v11996
        %12321 = vmatprep.subr.bf16.mxu0 %v11995
        %12322 = vmatpush1.bf16.msra.mxu0 %v11994
        %12323 = vmatprep.subr.bf16.mxu0 %v11993
        %12324 = vmatpush1.bf16.msra.mxu0 %v11992
        %12325 = vmatprep.subr.bf16.mxu0 %v11991
        %12326 = vmatpush1.bf16.msra.mxu0 %v11990
        %12327 = vmatprep.subr.bf16.mxu0 %v12021
        %12328 = vmatpush2.bf16.msra.mxu0 %v12020
        %12329 = vmatprep.subr.bf16.mxu0 %v12019
        %12330 = vmatpush2.bf16.msra.mxu0 %v12018
        %12331 = vmatprep.subr.bf16.mxu0 %v12017
        %12332 = vmatpush2.bf16.msra.mxu0 %v12016
        %12333 = vmatprep.subr.bf16.mxu0 %v12015
        %12334 = vmatpush2.bf16.msra.mxu0 %v12014
        %12335 = vmatprep.subr.bf16.mxu0 %v12013
        %12336 = vmatpush2.bf16.msra.mxu0 %v12012
        %12337 = vmatprep.subr.bf16.mxu0 %v12011
        %12338 = vmatpush2.bf16.msra.mxu0 %v12010
        %12339 = vmatprep.subr.bf16.mxu0 %v12009
        %12340 = vmatpush2.bf16.msra.mxu0 %v12008
        %12341 = vmatprep.subr.bf16.mxu0 %v12007
        %12342 = vmatpush2.bf16.msra.mxu0 %v12006
        %12343 = vmatprep.mubr.bf16.mxu0 %v11451
        %12344 = vmatmul.mubr.bf16.gmra.mxu0 %v11450
        %v12345 = vpop.f32.mrf.mxu0
        %v12346 = vadd.f32 %v12303, %v12345
        %v12347 = vpop.f32.mrf.mxu0
        %v12348 = vadd.f32 %v12305, %v12347
        %v12349 = vpop.f32.mrf.mxu0
        %v12350 = vadd.f32 %v12307, %v12349
        %v12351 = vpop.f32.mrf.mxu0
        %v12352 = vadd.f32 %v12309, %v12351
        %12353 = vdwg.mxu0
        %12354 = vmatprep.subr.bf16.mxu0 %v12037
        %12355 = vmatpush1.bf16.msra.mxu0 %v12036
        %12356 = vmatprep.subr.bf16.mxu0 %v12035
        %12357 = vmatpush1.bf16.msra.mxu0 %v12034
        %12358 = vmatprep.subr.bf16.mxu0 %v12033
        %12359 = vmatpush1.bf16.msra.mxu0 %v12032
        %12360 = vmatprep.subr.bf16.mxu0 %v12031
        %12361 = vmatpush1.bf16.msra.mxu0 %v12030
        %12362 = vmatprep.subr.bf16.mxu0 %v12029
        %12363 = vmatpush1.bf16.msra.mxu0 %v12028
        %12364 = vmatprep.subr.bf16.mxu0 %v12027
        %12365 = vmatpush1.bf16.msra.mxu0 %v12026
        %12366 = vmatprep.subr.bf16.mxu0 %v12025
        %12367 = vmatpush1.bf16.msra.mxu0 %v12024
        %12368 = vmatprep.subr.bf16.mxu0 %v12023
        %12369 = vmatpush1.bf16.msra.mxu0 %v12022
        %12370 = vmatprep.subr.bf16.mxu0 0
        %12371 = vmatpush2.bf16.msra.mxu0 0
        %12372 = vmatprep.subr.bf16.mxu0 0
        %12373 = vmatpush2.bf16.msra.mxu0 0
        %12374 = vmatprep.subr.bf16.mxu0 0
        %12375 = vmatpush2.bf16.msra.mxu0 0
        %12376 = vmatprep.subr.bf16.mxu0 0
        %12377 = vmatpush2.bf16.msra.mxu0 0
        %12378 = vmatprep.subr.bf16.mxu0 0
        %12379 = vmatpush2.bf16.msra.mxu0 0
        %12380 = vmatprep.subr.bf16.mxu0 0
        %12381 = vmatpush2.bf16.msra.mxu0 0
        %12382 = vmatprep.subr.bf16.mxu0 0
        %12383 = vmatpush2.bf16.msra.mxu0 0
        %12384 = vmatprep.subr.bf16.mxu0 0
        %12385 = vmatpush2.bf16.msra.mxu0 0
        %12386 = vmatprep.mubr.bf16.mxu0 0
        %12387 = vmatmul.mubr.bf16.gmra.mxu0 %v11452
        %v12388 = vpop.f32.mrf.mxu0
        %v12389 = vadd.f32 %v12346, %v12388
        %v12390 = vpop.f32.mrf.mxu0
        %v12391 = vadd.f32 %v12348, %v12390
        %v12392 = vpop.f32.mrf.mxu0
        %v12393 = vadd.f32 %v12350, %v12392
        %v12394 = vpop.f32.mrf.mxu0
        %v12395 = vadd.f32 %v12352, %v12394
        %12396 = vdwg.mxu0
        %v12401 = vcombine.low %v12389, %v12391
        %v12402 = vcombine.high %v12389, %v12391
        %v12403 = vcombine.low %v12393, %v12395
        %v12404 = vcombine.high %v12393, %v12395
        %12409 = vst [vmem:[%s451] sm:$0xff] %v12401
        %12410 = vst [vmem:[%s451 + $0x8] sm:$0xff] %v12402
        %12411 = vst [vmem:[%s451 + $0x10] sm:$0xff] %v12403
        %12412 = vst [vmem:[%s451 + $0x18] sm:$0xff] %v12404
        %s12413 = sand.u32 %s275, 1
        %s12414 = scalar_lea.sflag [#allocation11], %s12413
        %s12415 = sand.u32 %s275, 1
        %s12416 = smul.addr %s12415, 256
        %s12417 = scalar_lea.vmem [#allocation10], %s12416
        %s12418 = sand.u32 %s31, 1
        %s12419 = scalar_lea.sflag [#allocation13], %s12418
        %s12420 = sand.u32 %s301, 1
        %s12421 = smul.addr %s12420, 64
        %s12422 = scalar_lea.vmem [#allocation12], %s12421
        %s12423 = sand.u32 %s31, 1
        %s12424 = scalar_lea.sflag [#allocation13], %s12423
        %s12425 = sand.u32 %s327, 1
        %s12426 = smul.addr %s12425, 32
        %s12427 = scalar_lea.vmem [#allocation14], %s12426
        // Predicated region
        $region65: #{vgg_features.1} parent=63 // pred_check
          %p12428 = pneg %p285
        $region66: #{vgg_features.1} parent=63 // pred_check_branch
          %12430 = sbr.rel (%p12428) target = $region68
        $region67: #{vgg_features.1} parent=63 // pred_region
          %s12432 = ssub.s32 4096, 4096
          %12433 = vsyncadd %s12414, %s12432
          %s12434 = smul.addr %s31, 32
          %s12435 = smul.addr %s12434, 128
          %s12436 = scalar_lea.hbm %s11, %s12435
          %s12437 = sshll.u32 %s12417, 4
          %s12438 = int_to_ptr.vmem [resolvable:$true] %s12437
          %12443 = dma.vmem_to_hbm [thread:$0]  %s12438, 4096, %s12436, %s12414, 128, 128, 8
        $region68: #{vgg_features.1} parent=63 // pred_fallthru
          _
        // Predicated region
        $region69: #{vgg_features.1} parent=63 // pred_check
          %p12444 = pneg %p311
        $region70: #{vgg_features.1} parent=63 // pred_check_branch
          %12446 = sbr.rel (%p12444) target = $region72
        $region71: #{vgg_features.1} parent=63 // pred_region
          %s12448 = ssub.s32 1024, 1024
          %12449 = vsyncadd %s12419, %s12448
          %s12450 = smul.addr %s31, 8
          %s12451 = smul.addr %s12450, 128
          %s12452 = scalar_lea.hbm %s12, %s12451
          %s12453 = sshll.u32 %s12422, 4
          %s12454 = int_to_ptr.vmem [resolvable:$true] %s12453
          %12459 = dma.vmem_to_hbm [thread:$0]  %s12454, 1024, %s12452, %s12419, 128, 128, 8
        $region72: #{vgg_features.1} parent=63 // pred_fallthru
          _
        // Predicated region
        $region73: #{vgg_features.1} parent=63 // pred_check
          %p12460 = pneg %p337
        $region74: #{vgg_features.1} parent=63 // pred_check_branch
          %12462 = sbr.rel (%p12460) target = $region76
        $region75: #{vgg_features.1} parent=63 // pred_region
          %s12464 = ssub.s32 512, 512
          %12465 = vsyncadd %s12424, %s12464
          %s12466 = smul.addr %s31, 8
          %s12467 = smul.addr %s12466, 64
          %s12468 = scalar_lea.hbm %s13, %s12467
          %s12469 = sshll.u32 %s12427, 4
          %s12470 = int_to_ptr.vmem [resolvable:$true] %s12469
          %12475 = dma.vmem_to_hbm [thread:$0]  %s12470, 512, %s12468, %s12424, 128, 128, 8
        $region76: #{vgg_features.1} parent=63 // pred_fallthru
          _
      $region64: #{vgg_features.1} parent=5 // pred_fallthru
        _
      %p12476 = scmp.le.s32.totalorder 2, %s26
      // Predicated region
      $region77: #{vgg_features.1} parent=5 // pred_check
        %p12477 = pneg %p12476
      $region78: #{vgg_features.1} parent=5 // pred_check_branch
        %12479 = sbr.rel (%p12477) target = $region80
      $region79: #{vgg_features.1} parent=5 // pred_region
        %s12480 = ssub.s32 %s26, 2
        // Predicated region
        $region81: #{vgg_features.1} parent=79 // pred_check
          %p12481 = pneg %p291
        $region82: #{vgg_features.1} parent=79 // pred_check_branch
          %12483 = sbr.rel (%p12481) target = $region84
        $region83: #{vgg_features.1} parent=79 // pred_region
          %s12484 = sand.u32 %s276, 1
          %s12485 = scalar_lea.sflag [#allocation11], %s12484
          %s12486 = sand.u32 %s276, 1
          %s12487 = smul.addr %s12486, 256
          %s12488 = scalar_lea.vmem [#allocation10], %s12487
          %12489 = dma.done %s12485, 4096
        $region84: #{vgg_features.1} parent=79 // pred_fallthru
          _
        // Predicated region
        $region85: #{vgg_features.1} parent=79 // pred_check
          %p12490 = pneg %p317
        $region86: #{vgg_features.1} parent=79 // pred_check_branch
          %12492 = sbr.rel (%p12490) target = $region88
        $region87: #{vgg_features.1} parent=79 // pred_region
          %s12493 = sand.u32 %s32, 1
          %s12494 = scalar_lea.sflag [#allocation13], %s12493
          %s12495 = sand.u32 %s302, 1
          %s12496 = smul.addr %s12495, 64
          %s12497 = scalar_lea.vmem [#allocation12], %s12496
          %12498 = dma.done %s12494, 1024
        $region88: #{vgg_features.1} parent=79 // pred_fallthru
          _
        // Predicated region
        $region89: #{vgg_features.1} parent=79 // pred_check
          %p12499 = pneg %p343
        $region90: #{vgg_features.1} parent=79 // pred_check_branch
          %12501 = sbr.rel (%p12499) target = $region92
        $region91: #{vgg_features.1} parent=79 // pred_region
          %s12502 = sand.u32 %s32, 1
          %s12503 = scalar_lea.sflag [#allocation13], %s12502
          %s12504 = sand.u32 %s328, 1
          %s12505 = smul.addr %s12504, 32
          %s12506 = scalar_lea.vmem [#allocation14], %s12505
          %12507 = dma.done %s12503, 512
        $region92: #{vgg_features.1} parent=79 // pred_fallthru
          _
      $region80: #{vgg_features.1} parent=5 // pred_fallthru
        _
    $region6: #{vgg_features.1} parent=1 // loop_footer
      %s30 = sadd.s32 1, %s26
    $region7: #{vgg_features.1} parent=1 // loop_footer_branch
      %25 = sbr.rel target = $region3
    $region8: #{vgg_features.1} parent=1 // loop_exit
      _
    %12508 = vsyncpa [#allocation11], 1
    %s12509 = scalar_lea.sflag [#allocation11], 1
    %12510 = vsyncpa %s12509, 1
    %12511 = vsyncpa [#allocation13], 1
    %s12512 = scalar_lea.sflag [#allocation13], 1
    %12513 = vsyncpa %s12512, 1

</llo_original>
